<compile_context>
chip_gen: v5e
topology: v5e:2x2
jax: 0.10.0
libtpu: 0.0.40
codegen_flags: <defaults>
</compile_context>

<pallas_src>
import functools

import jax
import jax.numpy as jnp
from jax.experimental import pallas as pl
from jax.experimental.pallas import tpu as pltpu

NEG_SLOPE = 0.01   # default negative_slope of F.leaky_relu_ / nn.LeakyReLU
BN_EPS = 1e-5

LPAD = 128         # zero halo on each side of the flattened (C, H*W) scratch
PMAX = 2           # max conv halo (5x5 -> 2); needs 2*W + 2 <= LPAD


def _leaky(x):
    return jnp.where(x > 0, x, NEG_SLOPE * x)


# ---------------------------------------------------------------------------
# Fused LuxNet forward kernel: one batch element per grid step.
# ---------------------------------------------------------------------------
def lux_net_kernel(*refs, H, W, layers, filters, cin0):
    HW = H * W
    x_ref, cm_ref = refs[0], refs[1]
    out_ref, act_ref, patch_ref = refs[-3], refs[-2], refs[-1]
    prm = iter(refs[2:-3])

    conv0 = (next(prm), next(prm), next(prm))
    blocks = [(next(prm), next(prm), next(prm)) for _ in range(layers)]
    bneck1 = (next(prm), next(prm), next(prm))
    bneck2 = (next(prm), next(prm), next(prm))
    glw, glb = next(prm), next(prm)
    l1wa, l1wb, l1wc, l1b = next(prm), next(prm), next(prm), next(prm)
    l2w, l2b = next(prm), next(prm)
    l3w = next(prm)

    cact = act_ref.shape[0]
    # Zero only the halo strips once per image; the interior is overwritten
    # (rows [0:Cin]) by every layer, the halo is never written again.
    act_ref[:, 0:LPAD] = jnp.zeros((cact, LPAD), jnp.bfloat16)
    act_ref[:, LPAD + HW:] = jnp.zeros(
        (cact, act_ref.shape[1] - LPAD - HW), jnp.bfloat16)

    def conv_bn_act(h, w_ref, s_ref, t_ref, K, Cin, residual=None):
        """'same' KxK conv + folded BN (+ residual) + LeakyReLU, channel-major.

        h: (Cin, H*W) f32.  Returns (Cout, H*W) f32.
        One im2col matmul per layer: (Cout, K*K*Cin) @ (K*K*Cin, H*W) in bf16
        with f32 accumulation.
        """
        p = K // 2
        # bf16 copy of the activation inside the zero-haloed flattened scratch
        # (dense, 128-lane-aligned store); the f32 value `h` stays live for the
        # residual / masked-sum paths.
        act_ref[0:Cin, LPAD:LPAD + HW] = h.astype(jnp.bfloat16)
        xp = act_ref[0:Cin, :]                          # (Cin, LPAD+HW+LPAD) bf16
        for i in range(K):
            for j in range(K):
                di, dj = i - p, j - p
                start = LPAD + di * W + dj
                win = xp[:, start:start + HW]           # (Cin, HW) bf16
                if dj != 0:
                    # zero taps that would wrap across an image row
                    win = win * cm_ref[dj + PMAX:dj + PMAX + 1, :]
                k = i * K + j
                patch_ref[k * Cin:(k + 1) * Cin, :] = win
        y = jnp.dot(w_ref[...], patch_ref[0:K * K * Cin, :],
                    preferred_element_type=jnp.float32)  # (Cout, HW) f32
        y = y * s_ref[...] + t_ref[...]                  # folded BN (+ conv bias)
        if residual is not None:
            y = y + residual                             # h + block(h)
        return _leaky(y)

    x = x_ref[0]                                         # (cin0, HW) f32
    mask = x[0:1, :]                                     # x[:, :1] in the reference

    # conv0 + BN + LeakyReLU (input channels zero-padded to cin0=32)
    h = conv_bn_act(x, *conv0, 3, cin0)

    # residual blocks: h = leaky_relu(h + BN(conv3x3(h)))
    for blk in blocks:
        h = conv_bn_act(h, *blk, 3, filters, residual=h)

    # f1 = per-channel masked spatial sum (h never leaves VMEM)
    f1 = jnp.sum(h * mask, axis=1, keepdims=True)        # (filters, 1)

    # bottleneck: (conv5x5 + BN, LeakyReLU) x 2
    h = conv_bn_act(h, *bneck1, 5, filters)
    h = conv_bn_act(h, *bneck2, 5, filters // 2)

    f2 = jnp.sum(h * mask, axis=1, keepdims=True)        # (filters//4, 1)

    # global features: spatial mean of input channels 16..19 -> global_linear.
    # TODO(synk): `global_linear` is used in forward() but never defined in the
    # reference __init__; modeled here as a deterministic Linear(4, 4).
    gmean = jnp.sum(x[16:20, :], axis=1, keepdims=True) * (1.0 / HW)   # (4, 1)
    f3 = jnp.dot(glw[...], gmean, preferred_element_type=jnp.float32) + glb[...]

    # MLP head in column-vector form (first linear is split over [f1; f2; f3],
    # so no concat is needed).
    # TODO(synk): nn.Dropout / nn.Dropout(p=0.6) are identity in eval mode;
    # training-mode dropout is not implemented.
    z = (jnp.dot(l1wa[...], f1, preferred_element_type=jnp.float32)
         + jnp.dot(l1wb[...], f2, preferred_element_type=jnp.float32)
         + jnp.dot(l1wc[...], f3, preferred_element_type=jnp.float32)
         + l1b[...])
    z = _leaky(z)
    z = _leaky(jnp.dot(l2w[...], z, preferred_element_type=jnp.float32) + l2b[...])
    out_ref[0] = jnp.dot(l3w[...], z, preferred_element_type=jnp.float32)  # (5, 1)


# ---------------------------------------------------------------------------
# Wrapper: one pallas_call for the full forward.
# ---------------------------------------------------------------------------
def _const_spec(shape):
    nd = len(shape)
    return pl.BlockSpec(shape, lambda b, _nd=nd: (0,) * _nd)


def lux_net_forward(x_nchw, params):
    B, C0, H, W = x_nchw.shape
    HW = H * W
    filters = params["conv0"]["w"].shape[-1]
    layers = len(params["blocks"])
    assert HW % 128 == 0 and 2 * W + 2 <= LPAD

    cin0 = 32   # conv0 input channels zero-padded 20 -> 32 for tile alignment
    x = x_nchw.reshape(B, C0, HW).astype(jnp.float32)
    x = jnp.concatenate(
        [x, jnp.zeros((B, cin0 - C0, HW), jnp.float32)], axis=1)

    # Column-validity masks for dj in [-2, 2]: zero the taps whose flattened
    # window would wrap across an image row (vertical taps hit the zero halo).
    col = jnp.arange(HW, dtype=jnp.int32) % W
    djs = jnp.arange(-PMAX, PMAX + 1, dtype=jnp.int32)
    cm = ((col[None, :] + djs[:, None] >= 0)
          & (col[None, :] + djs[:, None] < W)).astype(jnp.bfloat16)

    def conv_args(p, cin_pad=None):
        kh, kw, ci, co = p["w"].shape
        w = p["w"]
        if cin_pad is not None and cin_pad != ci:
            w = jnp.concatenate(
                [w, jnp.zeros((kh, kw, cin_pad - ci, co), w.dtype)], axis=2)
            ci = cin_pad
        # (kh, kw, ci, co) -> (co, kh*kw*ci), matching patch row = k*Cin + ci
        w_t = jnp.transpose(w, (3, 0, 1, 2)).reshape(co, kh * kw * ci)
        return [w_t.astype(jnp.bfloat16),
                p["scale"].reshape(co, 1).astype(jnp.float32),
                p["shift"].reshape(co, 1).astype(jnp.float32)]

    args = [x, cm]
    args += conv_args(params["conv0"], cin_pad=cin0)
    for blkp in params["blocks"]:
        args += conv_args(blkp)
    args += conv_args(params["bneck1"])
    args += conv_args(params["bneck2"])

    l1w_t = params["l1_w"].T.astype(jnp.float32)   # (D1, filters + filters//4 + 4)
    args += [params["gl_w"].T.astype(jnp.float32),               # (4, 4)
             params["gl_b"].reshape(-1, 1).astype(jnp.float32),  # (4, 1)
             l1w_t[:, :filters],                                 # (D1, filters)
             l1w_t[:, filters:filters + filters // 4],           # (D1, filters//4)
             l1w_t[:, filters + filters // 4:],                  # (D1, 4)
             params["l1_b"].reshape(-1, 1).astype(jnp.float32),
             params["l2_w"].T.astype(jnp.float32),
             params["l2_b"].reshape(-1, 1).astype(jnp.float32),
             params["l3_w"].T.astype(jnp.float32)]               # (5, D2)

    in_specs = [pl.BlockSpec((1, cin0, HW), lambda b: (b, 0, 0))]
    in_specs += [_const_spec(a.shape) for a in args[1:]]

    cact = max(cin0, filters)
    patch_rows = max(9 * cin0, 9 * filters, 25 * filters, 25 * (filters // 2))

    kernel = functools.partial(lux_net_kernel, H=H, W=W,
                               layers=layers, filters=filters, cin0=cin0)

    out = pl.pallas_call(
        kernel,
        out_shape=jax.ShapeDtypeStruct((B, 5, 1), jnp.float32),
        grid=(B,),
        in_specs=in_specs,
        out_specs=pl.BlockSpec((1, 5, 1), lambda b: (b, 0, 0)),
        scratch_shapes=[
            pltpu.VMEM((cact, LPAD + HW + LPAD), jnp.bfloat16),  # padded activation
            pltpu.VMEM((patch_rows, HW), jnp.bfloat16),          # im2col patch
        ],
        compiler_params=pltpu.CompilerParams(
            dimension_semantics=("parallel",)),
    )(*args)
    return out.reshape(B, 5)


# ---------------------------------------------------------------------------
# Deterministic parameter construction (synthetic; no checkpoint load).
# ---------------------------------------------------------------------------
def _fold_bn(bias, gamma, beta, mean, var):
    scale = gamma / jnp.sqrt(var + BN_EPS)
    shift = (bias - mean) * scale + beta
    return scale, shift


def init_params(key, filters=32, layers=2, linear_dims=(64, 32)):
    keys = iter(jax.random.split(key, 64))

    def conv_layer(cin, cout, k):
        w = jax.random.normal(next(keys), (k, k, cin, cout), jnp.float32)
        w = w * (0.1 / (k * k * cin) ** 0.5)
        bias = jax.random.normal(next(keys), (cout,), jnp.float32) * 0.05
        gamma = 1.0 + 0.05 * jax.random.normal(next(keys), (cout,), jnp.float32)
        beta = 0.05 * jax.random.normal(next(keys), (cout,), jnp.float32)
        mean = 0.05 * jax.random.normal(next(keys), (cout,), jnp.float32)
        var = jnp.ones((cout,), jnp.float32)
        scale, shift = _fold_bn(bias, gamma, beta, mean, var)
        return {"w": w, "scale": scale, "shift": shift}

    def lin(din, dout):
        w = jax.random.normal(next(keys), (din, dout), jnp.float32) / (din ** 0.5)
        b = 0.05 * jax.random.normal(next(keys), (dout,), jnp.float32)
        return w, b

    params = {
        "conv0": conv_layer(20, filters, 3),
        "blocks": [conv_layer(filters, filters, 3) for _ in range(layers)],
        "bneck1": conv_layer(filters, filters // 2, 5),
        "bneck2": conv_layer(filters // 2, filters // 4, 5),
    }
    params["gl_w"], params["gl_b"] = lin(4, 4)
    fin = filters + filters // 4 + 4
    params["l1_w"], params["l1_b"] = lin(fin, linear_dims[0])
    params["l2_w"], params["l2_b"] = lin(linear_dims[0], linear_dims[1])
    params["l3_w"], _ = lin(linear_dims[1], 5)   # final linear has no bias
    return params


if __name__ == "__main__":
    key = jax.random.PRNGKey(0)
    pkey, xkey = jax.random.split(key)

    FILTERS, LAYERS, LINEAR_DIMS = 32, 2, (64, 32)
    params = init_params(pkey, filters=FILTERS, layers=LAYERS,
                         linear_dims=LINEAR_DIMS)

    # Input in PyTorch NCHW convention: (batch=2, channels=20, H=16, W=16)
    x = jax.random.normal(xkey, (2, 20, 16, 16), jnp.float32)

    fwd = jax.jit(lux_net_forward)
    out = fwd(x, params)
    out = jax.block_until_ready(out)
    assert out.shape == (2, 5) and out.dtype == jnp.float32
    assert bool(jnp.all(jnp.isfinite(out)))
    print("KERNEL_OK")
</pallas_src>

<mosaic_0001>
module attributes {stable_mosaic.version = 11 : i64} {
  func.func @lux_net_kernel(%arg0: i32, %arg1: memref<1x32x256xf32, #tpu.memory_space<vmem>>, %arg2: memref<5x256xbf16, #tpu.memory_space<vmem>>, %arg3: memref<32x288xbf16, #tpu.memory_space<vmem>>, %arg4: memref<32x1xf32, #tpu.memory_space<vmem>>, %arg5: memref<32x1xf32, #tpu.memory_space<vmem>>, %arg6: memref<32x288xbf16, #tpu.memory_space<vmem>>, %arg7: memref<32x1xf32, #tpu.memory_space<vmem>>, %arg8: memref<32x1xf32, #tpu.memory_space<vmem>>, %arg9: memref<32x288xbf16, #tpu.memory_space<vmem>>, %arg10: memref<32x1xf32, #tpu.memory_space<vmem>>, %arg11: memref<32x1xf32, #tpu.memory_space<vmem>>, %arg12: memref<16x800xbf16, #tpu.memory_space<vmem>>, %arg13: memref<16x1xf32, #tpu.memory_space<vmem>>, %arg14: memref<16x1xf32, #tpu.memory_space<vmem>>, %arg15: memref<8x400xbf16, #tpu.memory_space<vmem>>, %arg16: memref<8x1xf32, #tpu.memory_space<vmem>>, %arg17: memref<8x1xf32, #tpu.memory_space<vmem>>, %arg18: memref<4x4xf32, #tpu.memory_space<vmem>>, %arg19: memref<4x1xf32, #tpu.memory_space<vmem>>, %arg20: memref<64x32xf32, #tpu.memory_space<vmem>>, %arg21: memref<64x8xf32, #tpu.memory_space<vmem>>, %arg22: memref<64x4xf32, #tpu.memory_space<vmem>>, %arg23: memref<64x1xf32, #tpu.memory_space<vmem>>, %arg24: memref<32x64xf32, #tpu.memory_space<vmem>>, %arg25: memref<32x1xf32, #tpu.memory_space<vmem>>, %arg26: memref<5x32xf32, #tpu.memory_space<vmem>>, %arg27: memref<1x5x1xf32, #tpu.memory_space<vmem>>, %arg28: memref<32x512xbf16, #tpu.memory_space<vmem>>, %arg29: memref<800x256xbf16, #tpu.memory_space<vmem>>) attributes {dimension_semantics = [#tpu.dimension_semantics<parallel>], iteration_bounds = array<i64: 2>, scalar_prefetch = 0 : i64, scratch_operands = 2 : i64, tpu.core_type = #tpu.core_type<tc>, window_params = [{transform_indices = @transform_0, window_bounds = array<i64: 1, 32, 256>}, {pipeline_mode = #tpu.pipeline_mode<synchronous>, transform_indices = @transform_1, window_bounds = array<i64: 5, 256>}, {pipeline_mode = #tpu.pipeline_mode<synchronous>, transform_indices = @transform_2, window_bounds = array<i64: 32, 288>}, {pipeline_mode = #tpu.pipeline_mode<synchronous>, transform_indices = @transform_3, window_bounds = array<i64: 32, 1>}, {pipeline_mode = #tpu.pipeline_mode<synchronous>, transform_indices = @transform_4, window_bounds = array<i64: 32, 1>}, {pipeline_mode = #tpu.pipeline_mode<synchronous>, transform_indices = @transform_5, window_bounds = array<i64: 32, 288>}, {pipeline_mode = #tpu.pipeline_mode<synchronous>, transform_indices = @transform_6, window_bounds = array<i64: 32, 1>}, {pipeline_mode = #tpu.pipeline_mode<synchronous>, transform_indices = @transform_7, window_bounds = array<i64: 32, 1>}, {pipeline_mode = #tpu.pipeline_mode<synchronous>, transform_indices = @transform_8, window_bounds = array<i64: 32, 288>}, {pipeline_mode = #tpu.pipeline_mode<synchronous>, transform_indices = @transform_9, window_bounds = array<i64: 32, 1>}, {pipeline_mode = #tpu.pipeline_mode<synchronous>, transform_indices = @transform_10, window_bounds = array<i64: 32, 1>}, {pipeline_mode = #tpu.pipeline_mode<synchronous>, transform_indices = @transform_11, window_bounds = array<i64: 16, 800>}, {pipeline_mode = #tpu.pipeline_mode<synchronous>, transform_indices = @transform_12, window_bounds = array<i64: 16, 1>}, {pipeline_mode = #tpu.pipeline_mode<synchronous>, transform_indices = @transform_13, window_bounds = array<i64: 16, 1>}, {pipeline_mode = #tpu.pipeline_mode<synchronous>, transform_indices = @transform_14, window_bounds = array<i64: 8, 400>}, {pipeline_mode = #tpu.pipeline_mode<synchronous>, transform_indices = @transform_15, window_bounds = array<i64: 8, 1>}, {pipeline_mode = #tpu.pipeline_mode<synchronous>, transform_indices = @transform_16, window_bounds = array<i64: 8, 1>}, {pipeline_mode = #tpu.pipeline_mode<synchronous>, transform_indices = @transform_17, window_bounds = array<i64: 4, 4>}, {pipeline_mode = #tpu.pipeline_mode<synchronous>, transform_indices = @transform_18, window_bounds = array<i64: 4, 1>}, {pipeline_mode = #tpu.pipeline_mode<synchronous>, transform_indices = @transform_19, window_bounds = array<i64: 64, 32>}, {pipeline_mode = #tpu.pipeline_mode<synchronous>, transform_indices = @transform_20, window_bounds = array<i64: 64, 8>}, {pipeline_mode = #tpu.pipeline_mode<synchronous>, transform_indices = @transform_21, window_bounds = array<i64: 64, 4>}, {pipeline_mode = #tpu.pipeline_mode<synchronous>, transform_indices = @transform_22, window_bounds = array<i64: 64, 1>}, {pipeline_mode = #tpu.pipeline_mode<synchronous>, transform_indices = @transform_23, window_bounds = array<i64: 32, 64>}, {pipeline_mode = #tpu.pipeline_mode<synchronous>, transform_indices = @transform_24, window_bounds = array<i64: 32, 1>}, {pipeline_mode = #tpu.pipeline_mode<synchronous>, transform_indices = @transform_25, window_bounds = array<i64: 5, 32>}, {transform_indices = @transform_26, window_bounds = array<i64: 1, 5, 1>}]} {
    %cst = arith.constant 0.000000e+00 : bf16
    %0 = vector.broadcast %cst : bf16 to vector<32x128xbf16>
    %c0 = arith.constant 0 : index
    %c0_0 = arith.constant 0 : index
    %1 = vector.load %arg28[%c0, %c0_0] : memref<32x512xbf16, #tpu.memory_space<vmem>>, vector<32x128xbf16>
    tpu.vector_store %arg28[%c0, %c0_0], %0 {strides = array<i32>} : memref<32x512xbf16, #tpu.memory_space<vmem>>, vector<32x128xbf16>,
    %cst_1 = arith.constant 0.000000e+00 : bf16
    %2 = vector.broadcast %cst_1 : bf16 to vector<32x128xbf16>
    %c0_2 = arith.constant 0 : index
    %c384 = arith.constant 384 : index
    %3 = vector.load %arg28[%c0_2, %c384] : memref<32x512xbf16, #tpu.memory_space<vmem>>, vector<32x128xbf16>
    tpu.vector_store %arg28[%c0_2, %c384], %2 {strides = array<i32>} : memref<32x512xbf16, #tpu.memory_space<vmem>>, vector<32x128xbf16>,
    %c0_3 = arith.constant 0 : index
    %c0_4 = arith.constant 0 : index
    %c0_5 = arith.constant 0 : index
    %4 = vector.load %arg1[%c0_3, %c0_4, %c0_5] : memref<1x32x256xf32, #tpu.memory_space<vmem>>, vector<1x32x256xf32>
    %5 = vector.shape_cast %4 : vector<1x32x256xf32> to vector<32x256xf32>
    %6 = vector.extract_strided_slice %5 {offsets = [0, 0], sizes = [1, 256], strides = [1, 1]} : vector<32x256xf32> to vector<1x256xf32>
    %7 = arith.truncf %5 : vector<32x256xf32> to vector<32x256xbf16>
    %c0_6 = arith.constant 0 : index
    %c128 = arith.constant 128 : index
    %8 = vector.load %arg28[%c0_6, %c128] : memref<32x512xbf16, #tpu.memory_space<vmem>>, vector<32x256xbf16>
    tpu.vector_store %arg28[%c0_6, %c128], %7 {strides = array<i32>} : memref<32x512xbf16, #tpu.memory_space<vmem>>, vector<32x256xbf16>,
    %c0_7 = arith.constant 0 : index
    %c0_8 = arith.constant 0 : index
    %9 = vector.load %arg28[%c0_7, %c0_8] : memref<32x512xbf16, #tpu.memory_space<vmem>>, vector<32x512xbf16>
    %10 = vector.extract_strided_slice %9 {offsets = [0, 111], sizes = [32, 256], strides = [1, 1]} : vector<32x512xbf16> to vector<32x256xbf16>
    %c1 = arith.constant 1 : index
    %c0_9 = arith.constant 0 : index
    %11 = vector.load %arg2[%c1, %c0_9] : memref<5x256xbf16, #tpu.memory_space<vmem>>, vector<1x256xbf16>
    %12 = vector.broadcast %11 : vector<1x256xbf16> to vector<32x256xbf16>
    %13 = arith.mulf %10, %12 : vector<32x256xbf16>
    %c0_10 = arith.constant 0 : index
    %c0_11 = arith.constant 0 : index
    %14 = vector.load %arg29[%c0_10, %c0_11] : memref<800x256xbf16, #tpu.memory_space<vmem>>, vector<32x256xbf16>
    tpu.vector_store %arg29[%c0_10, %c0_11], %13 {strides = array<i32>} : memref<800x256xbf16, #tpu.memory_space<vmem>>, vector<32x256xbf16>,
    %15 = vector.extract_strided_slice %9 {offsets = [0, 112], sizes = [32, 256], strides = [1, 1]} : vector<32x512xbf16> to vector<32x256xbf16>
    %c32 = arith.constant 32 : index
    %c0_12 = arith.constant 0 : index
    %16 = vector.load %arg29[%c32, %c0_12] : memref<800x256xbf16, #tpu.memory_space<vmem>>, vector<32x256xbf16>
    tpu.vector_store %arg29[%c32, %c0_12], %15 {strides = array<i32>} : memref<800x256xbf16, #tpu.memory_space<vmem>>, vector<32x256xbf16>,
    %17 = vector.extract_strided_slice %9 {offsets = [0, 113], sizes = [32, 256], strides = [1, 1]} : vector<32x512xbf16> to vector<32x256xbf16>
    %c3 = arith.constant 3 : index
    %c0_13 = arith.constant 0 : index
    %18 = vector.load %arg2[%c3, %c0_13] : memref<5x256xbf16, #tpu.memory_space<vmem>>, vector<1x256xbf16>
    %19 = vector.broadcast %18 : vector<1x256xbf16> to vector<32x256xbf16>
    %20 = arith.mulf %17, %19 : vector<32x256xbf16>
    %c64 = arith.constant 64 : index
    %c0_14 = arith.constant 0 : index
    %21 = vector.load %arg29[%c64, %c0_14] : memref<800x256xbf16, #tpu.memory_space<vmem>>, vector<32x256xbf16>
    tpu.vector_store %arg29[%c64, %c0_14], %20 {strides = array<i32>} : memref<800x256xbf16, #tpu.memory_space<vmem>>, vector<32x256xbf16>,
    %22 = vector.extract_strided_slice %9 {offsets = [0, 127], sizes = [32, 256], strides = [1, 1]} : vector<32x512xbf16> to vector<32x256xbf16>
    %c1_15 = arith.constant 1 : index
    %c0_16 = arith.constant 0 : index
    %23 = vector.load %arg2[%c1_15, %c0_16] : memref<5x256xbf16, #tpu.memory_space<vmem>>, vector<1x256xbf16>
    %24 = vector.broadcast %23 : vector<1x256xbf16> to vector<32x256xbf16>
    %25 = arith.mulf %22, %24 : vector<32x256xbf16>
    %c96 = arith.constant 96 : index
    %c0_17 = arith.constant 0 : index
    %26 = vector.load %arg29[%c96, %c0_17] : memref<800x256xbf16, #tpu.memory_space<vmem>>, vector<32x256xbf16>
    tpu.vector_store %arg29[%c96, %c0_17], %25 {strides = array<i32>} : memref<800x256xbf16, #tpu.memory_space<vmem>>, vector<32x256xbf16>,
    %27 = vector.extract_strided_slice %9 {offsets = [0, 128], sizes = [32, 256], strides = [1, 1]} : vector<32x512xbf16> to vector<32x256xbf16>
    %c128_18 = arith.constant 128 : index
    %c0_19 = arith.constant 0 : index
    %28 = vector.load %arg29[%c128_18, %c0_19] : memref<800x256xbf16, #tpu.memory_space<vmem>>, vector<32x256xbf16>
    tpu.vector_store %arg29[%c128_18, %c0_19], %27 {strides = array<i32>} : memref<800x256xbf16, #tpu.memory_space<vmem>>, vector<32x256xbf16>,
    %29 = vector.extract_strided_slice %9 {offsets = [0, 129], sizes = [32, 256], strides = [1, 1]} : vector<32x512xbf16> to vector<32x256xbf16>
    %c3_20 = arith.constant 3 : index
    %c0_21 = arith.constant 0 : index
    %30 = vector.load %arg2[%c3_20, %c0_21] : memref<5x256xbf16, #tpu.memory_space<vmem>>, vector<1x256xbf16>
    %31 = vector.broadcast %30 : vector<1x256xbf16> to vector<32x256xbf16>
    %32 = arith.mulf %29, %31 : vector<32x256xbf16>
    %c160 = arith.constant 160 : index
    %c0_22 = arith.constant 0 : index
    %33 = vector.load %arg29[%c160, %c0_22] : memref<800x256xbf16, #tpu.memory_space<vmem>>, vector<32x256xbf16>
    tpu.vector_store %arg29[%c160, %c0_22], %32 {strides = array<i32>} : memref<800x256xbf16, #tpu.memory_space<vmem>>, vector<32x256xbf16>,
    %34 = vector.extract_strided_slice %9 {offsets = [0, 143], sizes = [32, 256], strides = [1, 1]} : vector<32x512xbf16> to vector<32x256xbf16>
    %c1_23 = arith.constant 1 : index
    %c0_24 = arith.constant 0 : index
    %35 = vector.load %arg2[%c1_23, %c0_24] : memref<5x256xbf16, #tpu.memory_space<vmem>>, vector<1x256xbf16>
    %36 = vector.broadcast %35 : vector<1x256xbf16> to vector<32x256xbf16>
    %37 = arith.mulf %34, %36 : vector<32x256xbf16>
    %c192 = arith.constant 192 : index
    %c0_25 = arith.constant 0 : index
    %38 = vector.load %arg29[%c192, %c0_25] : memref<800x256xbf16, #tpu.memory_space<vmem>>, vector<32x256xbf16>
    tpu.vector_store %arg29[%c192, %c0_25], %37 {strides = array<i32>} : memref<800x256xbf16, #tpu.memory_space<vmem>>, vector<32x256xbf16>,
    %39 = vector.extract_strided_slice %9 {offsets = [0, 144], sizes = [32, 256], strides = [1, 1]} : vector<32x512xbf16> to vector<32x256xbf16>
    %c224 = arith.constant 224 : index
    %c0_26 = arith.constant 0 : index
    %40 = vector.load %arg29[%c224, %c0_26] : memref<800x256xbf16, #tpu.memory_space<vmem>>, vector<32x256xbf16>
    tpu.vector_store %arg29[%c224, %c0_26], %39 {strides = array<i32>} : memref<800x256xbf16, #tpu.memory_space<vmem>>, vector<32x256xbf16>,
    %41 = vector.extract_strided_slice %9 {offsets = [0, 145], sizes = [32, 256], strides = [1, 1]} : vector<32x512xbf16> to vector<32x256xbf16>
    %c3_27 = arith.constant 3 : index
    %c0_28 = arith.constant 0 : index
    %42 = vector.load %arg2[%c3_27, %c0_28] : memref<5x256xbf16, #tpu.memory_space<vmem>>, vector<1x256xbf16>
    %43 = vector.broadcast %42 : vector<1x256xbf16> to vector<32x256xbf16>
    %44 = arith.mulf %41, %43 : vector<32x256xbf16>
    %c256 = arith.constant 256 : index
    %c0_29 = arith.constant 0 : index
    %45 = vector.load %arg29[%c256, %c0_29] : memref<800x256xbf16, #tpu.memory_space<vmem>>, vector<32x256xbf16>
    tpu.vector_store %arg29[%c256, %c0_29], %44 {strides = array<i32>} : memref<800x256xbf16, #tpu.memory_space<vmem>>, vector<32x256xbf16>,
    %c0_30 = arith.constant 0 : index
    %c0_31 = arith.constant 0 : index
    %46 = vector.load %arg3[%c0_30, %c0_31] : memref<32x288xbf16, #tpu.memory_space<vmem>>, vector<32x288xbf16>
    %c0_32 = arith.constant 0 : index
    %c0_33 = arith.constant 0 : index
    %47 = vector.load %arg29[%c0_32, %c0_33] : memref<800x256xbf16, #tpu.memory_space<vmem>>, vector<288x256xbf16>
    %cst_34 = arith.constant dense<0.000000e+00> : vector<32x256xf32>
    %48 = tpu.matmul %46, %47, %cst_34 {dimension_numbers = #tpu.dot_dimension_numbers<[1], [0], [0], [1], [0, 0, 1, 1], [], []>} : vector<32x288xbf16>, vector<288x256xbf16>, vector<32x256xf32> -> vector<32x256xf32>
    %c0_35 = arith.constant 0 : index
    %c0_36 = arith.constant 0 : index
    %49 = vector.load %arg4[%c0_35, %c0_36] : memref<32x1xf32, #tpu.memory_space<vmem>>, vector<32x1xf32>
    %50 = vector.broadcast %49 : vector<32x1xf32> to vector<32x256xf32>
    %51 = arith.mulf %48, %50 : vector<32x256xf32>
    %c0_37 = arith.constant 0 : index
    %c0_38 = arith.constant 0 : index
    %52 = vector.load %arg5[%c0_37, %c0_38] : memref<32x1xf32, #tpu.memory_space<vmem>>, vector<32x1xf32>
    %53 = vector.broadcast %52 : vector<32x1xf32> to vector<32x256xf32>
    %54 = arith.addf %51, %53 : vector<32x256xf32>
    %cst_39 = arith.constant 0.000000e+00 : f32
    %55 = vector.broadcast %cst_39 : f32 to vector<32x256xf32>
    %56 = arith.cmpf ogt, %54, %55 : vector<32x256xf32>
    %cst_40 = arith.constant 0.00999999977 : f32
    %57 = vector.broadcast %cst_40 : f32 to vector<32x256xf32>
    %58 = arith.mulf %57, %54 : vector<32x256xf32>
    %59 = arith.select %56, %54, %58 : vector<32x256xi1>, vector<32x256xf32>
    %60 = arith.truncf %59 : vector<32x256xf32> to vector<32x256xbf16>
    %c0_41 = arith.constant 0 : index
    %c128_42 = arith.constant 128 : index
    %61 = vector.load %arg28[%c0_41, %c128_42] : memref<32x512xbf16, #tpu.memory_space<vmem>>, vector<32x256xbf16>
    tpu.vector_store %arg28[%c0_41, %c128_42], %60 {strides = array<i32>} : memref<32x512xbf16, #tpu.memory_space<vmem>>, vector<32x256xbf16>,
    %c0_43 = arith.constant 0 : index
    %c0_44 = arith.constant 0 : index
    %62 = vector.load %arg28[%c0_43, %c0_44] : memref<32x512xbf16, #tpu.memory_space<vmem>>, vector<32x512xbf16>
    %63 = vector.extract_strided_slice %62 {offsets = [0, 111], sizes = [32, 256], strides = [1, 1]} : vector<32x512xbf16> to vector<32x256xbf16>
    %c1_45 = arith.constant 1 : index
    %c0_46 = arith.constant 0 : index
    %64 = vector.load %arg2[%c1_45, %c0_46] : memref<5x256xbf16, #tpu.memory_space<vmem>>, vector<1x256xbf16>
    %65 = vector.broadcast %64 : vector<1x256xbf16> to vector<32x256xbf16>
    %66 = arith.mulf %63, %65 : vector<32x256xbf16>
    %c0_47 = arith.constant 0 : index
    %c0_48 = arith.constant 0 : index
    %67 = vector.load %arg29[%c0_47, %c0_48] : memref<800x256xbf16, #tpu.memory_space<vmem>>, vector<32x256xbf16>
    tpu.vector_store %arg29[%c0_47, %c0_48], %66 {strides = array<i32>} : memref<800x256xbf16, #tpu.memory_space<vmem>>, vector<32x256xbf16>,
    %68 = vector.extract_strided_slice %62 {offsets = [0, 112], sizes = [32, 256], strides = [1, 1]} : vector<32x512xbf16> to vector<32x256xbf16>
    %c32_49 = arith.constant 32 : index
    %c0_50 = arith.constant 0 : index
    %69 = vector.load %arg29[%c32_49, %c0_50] : memref<800x256xbf16, #tpu.memory_space<vmem>>, vector<32x256xbf16>
    tpu.vector_store %arg29[%c32_49, %c0_50], %68 {strides = array<i32>} : memref<800x256xbf16, #tpu.memory_space<vmem>>, vector<32x256xbf16>,
    %70 = vector.extract_strided_slice %62 {offsets = [0, 113], sizes = [32, 256], strides = [1, 1]} : vector<32x512xbf16> to vector<32x256xbf16>
    %c3_51 = arith.constant 3 : index
    %c0_52 = arith.constant 0 : index
    %71 = vector.load %arg2[%c3_51, %c0_52] : memref<5x256xbf16, #tpu.memory_space<vmem>>, vector<1x256xbf16>
    %72 = vector.broadcast %71 : vector<1x256xbf16> to vector<32x256xbf16>
    %73 = arith.mulf %70, %72 : vector<32x256xbf16>
    %c64_53 = arith.constant 64 : index
    %c0_54 = arith.constant 0 : index
    %74 = vector.load %arg29[%c64_53, %c0_54] : memref<800x256xbf16, #tpu.memory_space<vmem>>, vector<32x256xbf16>
    tpu.vector_store %arg29[%c64_53, %c0_54], %73 {strides = array<i32>} : memref<800x256xbf16, #tpu.memory_space<vmem>>, vector<32x256xbf16>,
    %75 = vector.extract_strided_slice %62 {offsets = [0, 127], sizes = [32, 256], strides = [1, 1]} : vector<32x512xbf16> to vector<32x256xbf16>
    %c1_55 = arith.constant 1 : index
    %c0_56 = arith.constant 0 : index
    %76 = vector.load %arg2[%c1_55, %c0_56] : memref<5x256xbf16, #tpu.memory_space<vmem>>, vector<1x256xbf16>
    %77 = vector.broadcast %76 : vector<1x256xbf16> to vector<32x256xbf16>
    %78 = arith.mulf %75, %77 : vector<32x256xbf16>
    %c96_57 = arith.constant 96 : index
    %c0_58 = arith.constant 0 : index
    %79 = vector.load %arg29[%c96_57, %c0_58] : memref<800x256xbf16, #tpu.memory_space<vmem>>, vector<32x256xbf16>
    tpu.vector_store %arg29[%c96_57, %c0_58], %78 {strides = array<i32>} : memref<800x256xbf16, #tpu.memory_space<vmem>>, vector<32x256xbf16>,
    %80 = vector.extract_strided_slice %62 {offsets = [0, 128], sizes = [32, 256], strides = [1, 1]} : vector<32x512xbf16> to vector<32x256xbf16>
    %c128_59 = arith.constant 128 : index
    %c0_60 = arith.constant 0 : index
    %81 = vector.load %arg29[%c128_59, %c0_60] : memref<800x256xbf16, #tpu.memory_space<vmem>>, vector<32x256xbf16>
    tpu.vector_store %arg29[%c128_59, %c0_60], %80 {strides = array<i32>} : memref<800x256xbf16, #tpu.memory_space<vmem>>, vector<32x256xbf16>,
    %82 = vector.extract_strided_slice %62 {offsets = [0, 129], sizes = [32, 256], strides = [1, 1]} : vector<32x512xbf16> to vector<32x256xbf16>
    %c3_61 = arith.constant 3 : index
    %c0_62 = arith.constant 0 : index
    %83 = vector.load %arg2[%c3_61, %c0_62] : memref<5x256xbf16, #tpu.memory_space<vmem>>, vector<1x256xbf16>
    %84 = vector.broadcast %83 : vector<1x256xbf16> to vector<32x256xbf16>
    %85 = arith.mulf %82, %84 : vector<32x256xbf16>
    %c160_63 = arith.constant 160 : index
    %c0_64 = arith.constant 0 : index
    %86 = vector.load %arg29[%c160_63, %c0_64] : memref<800x256xbf16, #tpu.memory_space<vmem>>, vector<32x256xbf16>
    tpu.vector_store %arg29[%c160_63, %c0_64], %85 {strides = array<i32>} : memref<800x256xbf16, #tpu.memory_space<vmem>>, vector<32x256xbf16>,
    %87 = vector.extract_strided_slice %62 {offsets = [0, 143], sizes = [32, 256], strides = [1, 1]} : vector<32x512xbf16> to vector<32x256xbf16>
    %c1_65 = arith.constant 1 : index
    %c0_66 = arith.constant 0 : index
    %88 = vector.load %arg2[%c1_65, %c0_66] : memref<5x256xbf16, #tpu.memory_space<vmem>>, vector<1x256xbf16>
    %89 = vector.broadcast %88 : vector<1x256xbf16> to vector<32x256xbf16>
    %90 = arith.mulf %87, %89 : vector<32x256xbf16>
    %c192_67 = arith.constant 192 : index
    %c0_68 = arith.constant 0 : index
    %91 = vector.load %arg29[%c192_67, %c0_68] : memref<800x256xbf16, #tpu.memory_space<vmem>>, vector<32x256xbf16>
    tpu.vector_store %arg29[%c192_67, %c0_68], %90 {strides = array<i32>} : memref<800x256xbf16, #tpu.memory_space<vmem>>, vector<32x256xbf16>,
    %92 = vector.extract_strided_slice %62 {offsets = [0, 144], sizes = [32, 256], strides = [1, 1]} : vector<32x512xbf16> to vector<32x256xbf16>
    %c224_69 = arith.constant 224 : index
    %c0_70 = arith.constant 0 : index
    %93 = vector.load %arg29[%c224_69, %c0_70] : memref<800x256xbf16, #tpu.memory_space<vmem>>, vector<32x256xbf16>
    tpu.vector_store %arg29[%c224_69, %c0_70], %92 {strides = array<i32>} : memref<800x256xbf16, #tpu.memory_space<vmem>>, vector<32x256xbf16>,
    %94 = vector.extract_strided_slice %62 {offsets = [0, 145], sizes = [32, 256], strides = [1, 1]} : vector<32x512xbf16> to vector<32x256xbf16>
    %c3_71 = arith.constant 3 : index
    %c0_72 = arith.constant 0 : index
    %95 = vector.load %arg2[%c3_71, %c0_72] : memref<5x256xbf16, #tpu.memory_space<vmem>>, vector<1x256xbf16>
    %96 = vector.broadcast %95 : vector<1x256xbf16> to vector<32x256xbf16>
    %97 = arith.mulf %94, %96 : vector<32x256xbf16>
    %c256_73 = arith.constant 256 : index
    %c0_74 = arith.constant 0 : index
    %98 = vector.load %arg29[%c256_73, %c0_74] : memref<800x256xbf16, #tpu.memory_space<vmem>>, vector<32x256xbf16>
    tpu.vector_store %arg29[%c256_73, %c0_74], %97 {strides = array<i32>} : memref<800x256xbf16, #tpu.memory_space<vmem>>, vector<32x256xbf16>,
    %c0_75 = arith.constant 0 : index
    %c0_76 = arith.constant 0 : index
    %99 = vector.load %arg6[%c0_75, %c0_76] : memref<32x288xbf16, #tpu.memory_space<vmem>>, vector<32x288xbf16>
    %c0_77 = arith.constant 0 : index
    %c0_78 = arith.constant 0 : index
    %100 = vector.load %arg29[%c0_77, %c0_78] : memref<800x256xbf16, #tpu.memory_space<vmem>>, vector<288x256xbf16>
    %cst_79 = arith.constant dense<0.000000e+00> : vector<32x256xf32>
    %101 = tpu.matmul %99, %100, %cst_79 {dimension_numbers = #tpu.dot_dimension_numbers<[1], [0], [0], [1], [0, 0, 1, 1], [], []>} : vector<32x288xbf16>, vector<288x256xbf16>, vector<32x256xf32> -> vector<32x256xf32>
    %c0_80 = arith.constant 0 : index
    %c0_81 = arith.constant 0 : index
    %102 = vector.load %arg7[%c0_80, %c0_81] : memref<32x1xf32, #tpu.memory_space<vmem>>, vector<32x1xf32>
    %103 = vector.broadcast %102 : vector<32x1xf32> to vector<32x256xf32>
    %104 = arith.mulf %101, %103 : vector<32x256xf32>
    %c0_82 = arith.constant 0 : index
    %c0_83 = arith.constant 0 : index
    %105 = vector.load %arg8[%c0_82, %c0_83] : memref<32x1xf32, #tpu.memory_space<vmem>>, vector<32x1xf32>
    %106 = vector.broadcast %105 : vector<32x1xf32> to vector<32x256xf32>
    %107 = arith.addf %104, %106 : vector<32x256xf32>
    %108 = arith.addf %107, %59 : vector<32x256xf32>
    %cst_84 = arith.constant 0.000000e+00 : f32
    %109 = vector.broadcast %cst_84 : f32 to vector<32x256xf32>
    %110 = arith.cmpf ogt, %108, %109 : vector<32x256xf32>
    %cst_85 = arith.constant 0.00999999977 : f32
    %111 = vector.broadcast %cst_85 : f32 to vector<32x256xf32>
    %112 = arith.mulf %111, %108 : vector<32x256xf32>
    %113 = arith.select %110, %108, %112 : vector<32x256xi1>, vector<32x256xf32>
    %114 = arith.truncf %113 : vector<32x256xf32> to vector<32x256xbf16>
    %c0_86 = arith.constant 0 : index
    %c128_87 = arith.constant 128 : index
    %115 = vector.load %arg28[%c0_86, %c128_87] : memref<32x512xbf16, #tpu.memory_space<vmem>>, vector<32x256xbf16>
    tpu.vector_store %arg28[%c0_86, %c128_87], %114 {strides = array<i32>} : memref<32x512xbf16, #tpu.memory_space<vmem>>, vector<32x256xbf16>,
    %c0_88 = arith.constant 0 : index
    %c0_89 = arith.constant 0 : index
    %116 = vector.load %arg28[%c0_88, %c0_89] : memref<32x512xbf16, #tpu.memory_space<vmem>>, vector<32x512xbf16>
    %117 = vector.extract_strided_slice %116 {offsets = [0, 111], sizes = [32, 256], strides = [1, 1]} : vector<32x512xbf16> to vector<32x256xbf16>
    %c1_90 = arith.constant 1 : index
    %c0_91 = arith.constant 0 : index
    %118 = vector.load %arg2[%c1_90, %c0_91] : memref<5x256xbf16, #tpu.memory_space<vmem>>, vector<1x256xbf16>
    %119 = vector.broadcast %118 : vector<1x256xbf16> to vector<32x256xbf16>
    %120 = arith.mulf %117, %119 : vector<32x256xbf16>
    %c0_92 = arith.constant 0 : index
    %c0_93 = arith.constant 0 : index
    %121 = vector.load %arg29[%c0_92, %c0_93] : memref<800x256xbf16, #tpu.memory_space<vmem>>, vector<32x256xbf16>
    tpu.vector_store %arg29[%c0_92, %c0_93], %120 {strides = array<i32>} : memref<800x256xbf16, #tpu.memory_space<vmem>>, vector<32x256xbf16>,
    %122 = vector.extract_strided_slice %116 {offsets = [0, 112], sizes = [32, 256], strides = [1, 1]} : vector<32x512xbf16> to vector<32x256xbf16>
    %c32_94 = arith.constant 32 : index
    %c0_95 = arith.constant 0 : index
    %123 = vector.load %arg29[%c32_94, %c0_95] : memref<800x256xbf16, #tpu.memory_space<vmem>>, vector<32x256xbf16>
    tpu.vector_store %arg29[%c32_94, %c0_95], %122 {strides = array<i32>} : memref<800x256xbf16, #tpu.memory_space<vmem>>, vector<32x256xbf16>,
    %124 = vector.extract_strided_slice %116 {offsets = [0, 113], sizes = [32, 256], strides = [1, 1]} : vector<32x512xbf16> to vector<32x256xbf16>
    %c3_96 = arith.constant 3 : index
    %c0_97 = arith.constant 0 : index
    %125 = vector.load %arg2[%c3_96, %c0_97] : memref<5x256xbf16, #tpu.memory_space<vmem>>, vector<1x256xbf16>
    %126 = vector.broadcast %125 : vector<1x256xbf16> to vector<32x256xbf16>
    %127 = arith.mulf %124, %126 : vector<32x256xbf16>
    %c64_98 = arith.constant 64 : index
    %c0_99 = arith.constant 0 : index
    %128 = vector.load %arg29[%c64_98, %c0_99] : memref<800x256xbf16, #tpu.memory_space<vmem>>, vector<32x256xbf16>
    tpu.vector_store %arg29[%c64_98, %c0_99], %127 {strides = array<i32>} : memref<800x256xbf16, #tpu.memory_space<vmem>>, vector<32x256xbf16>,
    %129 = vector.extract_strided_slice %116 {offsets = [0, 127], sizes = [32, 256], strides = [1, 1]} : vector<32x512xbf16> to vector<32x256xbf16>
    %c1_100 = arith.constant 1 : index
    %c0_101 = arith.constant 0 : index
    %130 = vector.load %arg2[%c1_100, %c0_101] : memref<5x256xbf16, #tpu.memory_space<vmem>>, vector<1x256xbf16>
    %131 = vector.broadcast %130 : vector<1x256xbf16> to vector<32x256xbf16>
    %132 = arith.mulf %129, %131 : vector<32x256xbf16>
    %c96_102 = arith.constant 96 : index
    %c0_103 = arith.constant 0 : index
    %133 = vector.load %arg29[%c96_102, %c0_103] : memref<800x256xbf16, #tpu.memory_space<vmem>>, vector<32x256xbf16>
    tpu.vector_store %arg29[%c96_102, %c0_103], %132 {strides = array<i32>} : memref<800x256xbf16, #tpu.memory_space<vmem>>, vector<32x256xbf16>,
    %134 = vector.extract_strided_slice %116 {offsets = [0, 128], sizes = [32, 256], strides = [1, 1]} : vector<32x512xbf16> to vector<32x256xbf16>
    %c128_104 = arith.constant 128 : index
    %c0_105 = arith.constant 0 : index
    %135 = vector.load %arg29[%c128_104, %c0_105] : memref<800x256xbf16, #tpu.memory_space<vmem>>, vector<32x256xbf16>
    tpu.vector_store %arg29[%c128_104, %c0_105], %134 {strides = array<i32>} : memref<800x256xbf16, #tpu.memory_space<vmem>>, vector<32x256xbf16>,
    %136 = vector.extract_strided_slice %116 {offsets = [0, 129], sizes = [32, 256], strides = [1, 1]} : vector<32x512xbf16> to vector<32x256xbf16>
    %c3_106 = arith.constant 3 : index
    %c0_107 = arith.constant 0 : index
    %137 = vector.load %arg2[%c3_106, %c0_107] : memref<5x256xbf16, #tpu.memory_space<vmem>>, vector<1x256xbf16>
    %138 = vector.broadcast %137 : vector<1x256xbf16> to vector<32x256xbf16>
    %139 = arith.mulf %136, %138 : vector<32x256xbf16>
    %c160_108 = arith.constant 160 : index
    %c0_109 = arith.constant 0 : index
    %140 = vector.load %arg29[%c160_108, %c0_109] : memref<800x256xbf16, #tpu.memory_space<vmem>>, vector<32x256xbf16>
    tpu.vector_store %arg29[%c160_108, %c0_109], %139 {strides = array<i32>} : memref<800x256xbf16, #tpu.memory_space<vmem>>, vector<32x256xbf16>,
    %141 = vector.extract_strided_slice %116 {offsets = [0, 143], sizes = [32, 256], strides = [1, 1]} : vector<32x512xbf16> to vector<32x256xbf16>
    %c1_110 = arith.constant 1 : index
    %c0_111 = arith.constant 0 : index
    %142 = vector.load %arg2[%c1_110, %c0_111] : memref<5x256xbf16, #tpu.memory_space<vmem>>, vector<1x256xbf16>
    %143 = vector.broadcast %142 : vector<1x256xbf16> to vector<32x256xbf16>
    %144 = arith.mulf %141, %143 : vector<32x256xbf16>
    %c192_112 = arith.constant 192 : index
    %c0_113 = arith.constant 0 : index
    %145 = vector.load %arg29[%c192_112, %c0_113] : memref<800x256xbf16, #tpu.memory_space<vmem>>, vector<32x256xbf16>
    tpu.vector_store %arg29[%c192_112, %c0_113], %144 {strides = array<i32>} : memref<800x256xbf16, #tpu.memory_space<vmem>>, vector<32x256xbf16>,
    %146 = vector.extract_strided_slice %116 {offsets = [0, 144], sizes = [32, 256], strides = [1, 1]} : vector<32x512xbf16> to vector<32x256xbf16>
    %c224_114 = arith.constant 224 : index
    %c0_115 = arith.constant 0 : index
    %147 = vector.load %arg29[%c224_114, %c0_115] : memref<800x256xbf16, #tpu.memory_space<vmem>>, vector<32x256xbf16>
    tpu.vector_store %arg29[%c224_114, %c0_115], %146 {strides = array<i32>} : memref<800x256xbf16, #tpu.memory_space<vmem>>, vector<32x256xbf16>,
    %148 = vector.extract_strided_slice %116 {offsets = [0, 145], sizes = [32, 256], strides = [1, 1]} : vector<32x512xbf16> to vector<32x256xbf16>
    %c3_116 = arith.constant 3 : index
    %c0_117 = arith.constant 0 : index
    %149 = vector.load %arg2[%c3_116, %c0_117] : memref<5x256xbf16, #tpu.memory_space<vmem>>, vector<1x256xbf16>
    %150 = vector.broadcast %149 : vector<1x256xbf16> to vector<32x256xbf16>
    %151 = arith.mulf %148, %150 : vector<32x256xbf16>
    %c256_118 = arith.constant 256 : index
    %c0_119 = arith.constant 0 : index
    %152 = vector.load %arg29[%c256_118, %c0_119] : memref<800x256xbf16, #tpu.memory_space<vmem>>, vector<32x256xbf16>
    tpu.vector_store %arg29[%c256_118, %c0_119], %151 {strides = array<i32>} : memref<800x256xbf16, #tpu.memory_space<vmem>>, vector<32x256xbf16>,
    %c0_120 = arith.constant 0 : index
    %c0_121 = arith.constant 0 : index
    %153 = vector.load %arg9[%c0_120, %c0_121] : memref<32x288xbf16, #tpu.memory_space<vmem>>, vector<32x288xbf16>
    %c0_122 = arith.constant 0 : index
    %c0_123 = arith.constant 0 : index
    %154 = vector.load %arg29[%c0_122, %c0_123] : memref<800x256xbf16, #tpu.memory_space<vmem>>, vector<288x256xbf16>
    %cst_124 = arith.constant dense<0.000000e+00> : vector<32x256xf32>
    %155 = tpu.matmul %153, %154, %cst_124 {dimension_numbers = #tpu.dot_dimension_numbers<[1], [0], [0], [1], [0, 0, 1, 1], [], []>} : vector<32x288xbf16>, vector<288x256xbf16>, vector<32x256xf32> -> vector<32x256xf32>
    %c0_125 = arith.constant 0 : index
    %c0_126 = arith.constant 0 : index
    %156 = vector.load %arg10[%c0_125, %c0_126] : memref<32x1xf32, #tpu.memory_space<vmem>>, vector<32x1xf32>
    %157 = vector.broadcast %156 : vector<32x1xf32> to vector<32x256xf32>
    %158 = arith.mulf %155, %157 : vector<32x256xf32>
    %c0_127 = arith.constant 0 : index
    %c0_128 = arith.constant 0 : index
    %159 = vector.load %arg11[%c0_127, %c0_128] : memref<32x1xf32, #tpu.memory_space<vmem>>, vector<32x1xf32>
    %160 = vector.broadcast %159 : vector<32x1xf32> to vector<32x256xf32>
    %161 = arith.addf %158, %160 : vector<32x256xf32>
    %162 = arith.addf %161, %113 : vector<32x256xf32>
    %cst_129 = arith.constant 0.000000e+00 : f32
    %163 = vector.broadcast %cst_129 : f32 to vector<32x256xf32>
    %164 = arith.cmpf ogt, %162, %163 : vector<32x256xf32>
    %cst_130 = arith.constant 0.00999999977 : f32
    %165 = vector.broadcast %cst_130 : f32 to vector<32x256xf32>
    %166 = arith.mulf %165, %162 : vector<32x256xf32>
    %167 = arith.select %164, %162, %166 : vector<32x256xi1>, vector<32x256xf32>
    %168 = vector.broadcast %6 : vector<1x256xf32> to vector<32x256xf32>
    %169 = arith.mulf %167, %168 : vector<32x256xf32>
    %cst_131 = arith.constant dense<0.000000e+00> : vector<32xf32>
    %170 = vector.multi_reduction <add>, %169, %cst_131 [1] : vector<32x256xf32> to vector<32xf32>
    %171 = vector.shape_cast %170 : vector<32xf32> to vector<32x1xf32>
    %172 = arith.truncf %167 : vector<32x256xf32> to vector<32x256xbf16>
    %c0_132 = arith.constant 0 : index
    %c128_133 = arith.constant 128 : index
    %173 = vector.load %arg28[%c0_132, %c128_133] : memref<32x512xbf16, #tpu.memory_space<vmem>>, vector<32x256xbf16>
    tpu.vector_store %arg28[%c0_132, %c128_133], %172 {strides = array<i32>} : memref<32x512xbf16, #tpu.memory_space<vmem>>, vector<32x256xbf16>,
    %c0_134 = arith.constant 0 : index
    %c0_135 = arith.constant 0 : index
    %174 = vector.load %arg28[%c0_134, %c0_135] : memref<32x512xbf16, #tpu.memory_space<vmem>>, vector<32x512xbf16>
    %175 = vector.extract_strided_slice %174 {offsets = [0, 94], sizes = [32, 256], strides = [1, 1]} : vector<32x512xbf16> to vector<32x256xbf16>
    %c0_136 = arith.constant 0 : index
    %c0_137 = arith.constant 0 : index
    %176 = vector.load %arg2[%c0_136, %c0_137] : memref<5x256xbf16, #tpu.memory_space<vmem>>, vector<1x256xbf16>
    %177 = vector.broadcast %176 : vector<1x256xbf16> to vector<32x256xbf16>
    %178 = arith.mulf %175, %177 : vector<32x256xbf16>
    %c0_138 = arith.constant 0 : index
    %c0_139 = arith.constant 0 : index
    %179 = vector.load %arg29[%c0_138, %c0_139] : memref<800x256xbf16, #tpu.memory_space<vmem>>, vector<32x256xbf16>
    tpu.vector_store %arg29[%c0_138, %c0_139], %178 {strides = array<i32>} : memref<800x256xbf16, #tpu.memory_space<vmem>>, vector<32x256xbf16>,
    %180 = vector.extract_strided_slice %174 {offsets = [0, 95], sizes = [32, 256], strides = [1, 1]} : vector<32x512xbf16> to vector<32x256xbf16>
    %c1_140 = arith.constant 1 : index
    %c0_141 = arith.constant 0 : index
    %181 = vector.load %arg2[%c1_140, %c0_141] : memref<5x256xbf16, #tpu.memory_space<vmem>>, vector<1x256xbf16>
    %182 = vector.broadcast %181 : vector<1x256xbf16> to vector<32x256xbf16>
    %183 = arith.mulf %180, %182 : vector<32x256xbf16>
    %c32_142 = arith.constant 32 : index
    %c0_143 = arith.constant 0 : index
    %184 = vector.load %arg29[%c32_142, %c0_143] : memref<800x256xbf16, #tpu.memory_space<vmem>>, vector<32x256xbf16>
    tpu.vector_store %arg29[%c32_142, %c0_143], %183 {strides = array<i32>} : memref<800x256xbf16, #tpu.memory_space<vmem>>, vector<32x256xbf16>,
    %185 = vector.extract_strided_slice %174 {offsets = [0, 96], sizes = [32, 256], strides = [1, 1]} : vector<32x512xbf16> to vector<32x256xbf16>
    %c64_144 = arith.constant 64 : index
    %c0_145 = arith.constant 0 : index
    %186 = vector.load %arg29[%c64_144, %c0_145] : memref<800x256xbf16, #tpu.memory_space<vmem>>, vector<32x256xbf16>
    tpu.vector_store %arg29[%c64_144, %c0_145], %185 {strides = array<i32>} : memref<800x256xbf16, #tpu.memory_space<vmem>>, vector<32x256xbf16>,
    %187 = vector.extract_strided_slice %174 {offsets = [0, 97], sizes = [32, 256], strides = [1, 1]} : vector<32x512xbf16> to vector<32x256xbf16>
    %c3_146 = arith.constant 3 : index
    %c0_147 = arith.constant 0 : index
    %188 = vector.load %arg2[%c3_146, %c0_147] : memref<5x256xbf16, #tpu.memory_space<vmem>>, vector<1x256xbf16>
    %189 = vector.broadcast %188 : vector<1x256xbf16> to vector<32x256xbf16>
    %190 = arith.mulf %187, %189 : vector<32x256xbf16>
    %c96_148 = arith.constant 96 : index
    %c0_149 = arith.constant 0 : index
    %191 = vector.load %arg29[%c96_148, %c0_149] : memref<800x256xbf16, #tpu.memory_space<vmem>>, vector<32x256xbf16>
    tpu.vector_store %arg29[%c96_148, %c0_149], %190 {strides = array<i32>} : memref<800x256xbf16, #tpu.memory_space<vmem>>, vector<32x256xbf16>,
    %192 = vector.extract_strided_slice %174 {offsets = [0, 98], sizes = [32, 256], strides = [1, 1]} : vector<32x512xbf16> to vector<32x256xbf16>
    %c4 = arith.constant 4 : index
    %c0_150 = arith.constant 0 : index
    %193 = vector.load %arg2[%c4, %c0_150] : memref<5x256xbf16, #tpu.memory_space<vmem>>, vector<1x256xbf16>
    %194 = vector.broadcast %193 : vector<1x256xbf16> to vector<32x256xbf16>
    %195 = arith.mulf %192, %194 : vector<32x256xbf16>
    %c128_151 = arith.constant 128 : index
    %c0_152 = arith.constant 0 : index
    %196 = vector.load %arg29[%c128_151, %c0_152] : memref<800x256xbf16, #tpu.memory_space<vmem>>, vector<32x256xbf16>
    tpu.vector_store %arg29[%c128_151, %c0_152], %195 {strides = array<i32>} : memref<800x256xbf16, #tpu.memory_space<vmem>>, vector<32x256xbf16>,
    %197 = vector.extract_strided_slice %174 {offsets = [0, 110], sizes = [32, 256], strides = [1, 1]} : vector<32x512xbf16> to vector<32x256xbf16>
    %c0_153 = arith.constant 0 : index
    %c0_154 = arith.constant 0 : index
    %198 = vector.load %arg2[%c0_153, %c0_154] : memref<5x256xbf16, #tpu.memory_space<vmem>>, vector<1x256xbf16>
    %199 = vector.broadcast %198 : vector<1x256xbf16> to vector<32x256xbf16>
    %200 = arith.mulf %197, %199 : vector<32x256xbf16>
    %c160_155 = arith.constant 160 : index
    %c0_156 = arith.constant 0 : index
    %201 = vector.load %arg29[%c160_155, %c0_156] : memref<800x256xbf16, #tpu.memory_space<vmem>>, vector<32x256xbf16>
    tpu.vector_store %arg29[%c160_155, %c0_156], %200 {strides = array<i32>} : memref<800x256xbf16, #tpu.memory_space<vmem>>, vector<32x256xbf16>,
    %202 = vector.extract_strided_slice %174 {offsets = [0, 111], sizes = [32, 256], strides = [1, 1]} : vector<32x512xbf16> to vector<32x256xbf16>
    %c1_157 = arith.constant 1 : index
    %c0_158 = arith.constant 0 : index
    %203 = vector.load %arg2[%c1_157, %c0_158] : memref<5x256xbf16, #tpu.memory_space<vmem>>, vector<1x256xbf16>
    %204 = vector.broadcast %203 : vector<1x256xbf16> to vector<32x256xbf16>
    %205 = arith.mulf %202, %204 : vector<32x256xbf16>
    %c192_159 = arith.constant 192 : index
    %c0_160 = arith.constant 0 : index
    %206 = vector.load %arg29[%c192_159, %c0_160] : memref<800x256xbf16, #tpu.memory_space<vmem>>, vector<32x256xbf16>
    tpu.vector_store %arg29[%c192_159, %c0_160], %205 {strides = array<i32>} : memref<800x256xbf16, #tpu.memory_space<vmem>>, vector<32x256xbf16>,
    %207 = vector.extract_strided_slice %174 {offsets = [0, 112], sizes = [32, 256], strides = [1, 1]} : vector<32x512xbf16> to vector<32x256xbf16>
    %c224_161 = arith.constant 224 : index
    %c0_162 = arith.constant 0 : index
    %208 = vector.load %arg29[%c224_161, %c0_162] : memref<800x256xbf16, #tpu.memory_space<vmem>>, vector<32x256xbf16>
    tpu.vector_store %arg29[%c224_161, %c0_162], %207 {strides = array<i32>} : memref<800x256xbf16, #tpu.memory_space<vmem>>, vector<32x256xbf16>,
    %209 = vector.extract_strided_slice %174 {offsets = [0, 113], sizes = [32, 256], strides = [1, 1]} : vector<32x512xbf16> to vector<32x256xbf16>
    %c3_163 = arith.constant 3 : index
    %c0_164 = arith.constant 0 : index
    %210 = vector.load %arg2[%c3_163, %c0_164] : memref<5x256xbf16, #tpu.memory_space<vmem>>, vector<1x256xbf16>
    %211 = vector.broadcast %210 : vector<1x256xbf16> to vector<32x256xbf16>
    %212 = arith.mulf %209, %211 : vector<32x256xbf16>
    %c256_165 = arith.constant 256 : index
    %c0_166 = arith.constant 0 : index
    %213 = vector.load %arg29[%c256_165, %c0_166] : memref<800x256xbf16, #tpu.memory_space<vmem>>, vector<32x256xbf16>
    tpu.vector_store %arg29[%c256_165, %c0_166], %212 {strides = array<i32>} : memref<800x256xbf16, #tpu.memory_space<vmem>>, vector<32x256xbf16>,
    %214 = vector.extract_strided_slice %174 {offsets = [0, 114], sizes = [32, 256], strides = [1, 1]} : vector<32x512xbf16> to vector<32x256xbf16>
    %c4_167 = arith.constant 4 : index
    %c0_168 = arith.constant 0 : index
    %215 = vector.load %arg2[%c4_167, %c0_168] : memref<5x256xbf16, #tpu.memory_space<vmem>>, vector<1x256xbf16>
    %216 = vector.broadcast %215 : vector<1x256xbf16> to vector<32x256xbf16>
    %217 = arith.mulf %214, %216 : vector<32x256xbf16>
    %c288 = arith.constant 288 : index
    %c0_169 = arith.constant 0 : index
    %218 = vector.load %arg29[%c288, %c0_169] : memref<800x256xbf16, #tpu.memory_space<vmem>>, vector<32x256xbf16>
    tpu.vector_store %arg29[%c288, %c0_169], %217 {strides = array<i32>} : memref<800x256xbf16, #tpu.memory_space<vmem>>, vector<32x256xbf16>,
    %219 = vector.extract_strided_slice %174 {offsets = [0, 126], sizes = [32, 256], strides = [1, 1]} : vector<32x512xbf16> to vector<32x256xbf16>
    %c0_170 = arith.constant 0 : index
    %c0_171 = arith.constant 0 : index
    %220 = vector.load %arg2[%c0_170, %c0_171] : memref<5x256xbf16, #tpu.memory_space<vmem>>, vector<1x256xbf16>
    %221 = vector.broadcast %220 : vector<1x256xbf16> to vector<32x256xbf16>
    %222 = arith.mulf %219, %221 : vector<32x256xbf16>
    %c320 = arith.constant 320 : index
    %c0_172 = arith.constant 0 : index
    %223 = vector.load %arg29[%c320, %c0_172] : memref<800x256xbf16, #tpu.memory_space<vmem>>, vector<32x256xbf16>
    tpu.vector_store %arg29[%c320, %c0_172], %222 {strides = array<i32>} : memref<800x256xbf16, #tpu.memory_space<vmem>>, vector<32x256xbf16>,
    %224 = vector.extract_strided_slice %174 {offsets = [0, 127], sizes = [32, 256], strides = [1, 1]} : vector<32x512xbf16> to vector<32x256xbf16>
    %c1_173 = arith.constant 1 : index
    %c0_174 = arith.constant 0 : index
    %225 = vector.load %arg2[%c1_173, %c0_174] : memref<5x256xbf16, #tpu.memory_space<vmem>>, vector<1x256xbf16>
    %226 = vector.broadcast %225 : vector<1x256xbf16> to vector<32x256xbf16>
    %227 = arith.mulf %224, %226 : vector<32x256xbf16>
    %c352 = arith.constant 352 : index
    %c0_175 = arith.constant 0 : index
    %228 = vector.load %arg29[%c352, %c0_175] : memref<800x256xbf16, #tpu.memory_space<vmem>>, vector<32x256xbf16>
    tpu.vector_store %arg29[%c352, %c0_175], %227 {strides = array<i32>} : memref<800x256xbf16, #tpu.memory_space<vmem>>, vector<32x256xbf16>,
    %229 = vector.extract_strided_slice %174 {offsets = [0, 128], sizes = [32, 256], strides = [1, 1]} : vector<32x512xbf16> to vector<32x256xbf16>
    %c384_176 = arith.constant 384 : index
    %c0_177 = arith.constant 0 : index
    %230 = vector.load %arg29[%c384_176, %c0_177] : memref<800x256xbf16, #tpu.memory_space<vmem>>, vector<32x256xbf16>
    tpu.vector_store %arg29[%c384_176, %c0_177], %229 {strides = array<i32>} : memref<800x256xbf16, #tpu.memory_space<vmem>>, vector<32x256xbf16>,
    %231 = vector.extract_strided_slice %174 {offsets = [0, 129], sizes = [32, 256], strides = [1, 1]} : vector<32x512xbf16> to vector<32x256xbf16>
    %c3_178 = arith.constant 3 : index
    %c0_179 = arith.constant 0 : index
    %232 = vector.load %arg2[%c3_178, %c0_179] : memref<5x256xbf16, #tpu.memory_space<vmem>>, vector<1x256xbf16>
    %233 = vector.broadcast %232 : vector<1x256xbf16> to vector<32x256xbf16>
    %234 = arith.mulf %231, %233 : vector<32x256xbf16>
    %c416 = arith.constant 416 : index
    %c0_180 = arith.constant 0 : index
    %235 = vector.load %arg29[%c416, %c0_180] : memref<800x256xbf16, #tpu.memory_space<vmem>>, vector<32x256xbf16>
    tpu.vector_store %arg29[%c416, %c0_180], %234 {strides = array<i32>} : memref<800x256xbf16, #tpu.memory_space<vmem>>, vector<32x256xbf16>,
    %236 = vector.extract_strided_slice %174 {offsets = [0, 130], sizes = [32, 256], strides = [1, 1]} : vector<32x512xbf16> to vector<32x256xbf16>
    %c4_181 = arith.constant 4 : index
    %c0_182 = arith.constant 0 : index
    %237 = vector.load %arg2[%c4_181, %c0_182] : memref<5x256xbf16, #tpu.memory_space<vmem>>, vector<1x256xbf16>
    %238 = vector.broadcast %237 : vector<1x256xbf16> to vector<32x256xbf16>
    %239 = arith.mulf %236, %238 : vector<32x256xbf16>
    %c448 = arith.constant 448 : index
    %c0_183 = arith.constant 0 : index
    %240 = vector.load %arg29[%c448, %c0_183] : memref<800x256xbf16, #tpu.memory_space<vmem>>, vector<32x256xbf16>
    tpu.vector_store %arg29[%c448, %c0_183], %239 {strides = array<i32>} : memref<800x256xbf16, #tpu.memory_space<vmem>>, vector<32x256xbf16>,
    %241 = vector.extract_strided_slice %174 {offsets = [0, 142], sizes = [32, 256], strides = [1, 1]} : vector<32x512xbf16> to vector<32x256xbf16>
    %c0_184 = arith.constant 0 : index
    %c0_185 = arith.constant 0 : index
    %242 = vector.load %arg2[%c0_184, %c0_185] : memref<5x256xbf16, #tpu.memory_space<vmem>>, vector<1x256xbf16>
    %243 = vector.broadcast %242 : vector<1x256xbf16> to vector<32x256xbf16>
    %244 = arith.mulf %241, %243 : vector<32x256xbf16>
    %c480 = arith.constant 480 : index
    %c0_186 = arith.constant 0 : index
    %245 = vector.load %arg29[%c480, %c0_186] : memref<800x256xbf16, #tpu.memory_space<vmem>>, vector<32x256xbf16>
    tpu.vector_store %arg29[%c480, %c0_186], %244 {strides = array<i32>} : memref<800x256xbf16, #tpu.memory_space<vmem>>, vector<32x256xbf16>,
    %246 = vector.extract_strided_slice %174 {offsets = [0, 143], sizes = [32, 256], strides = [1, 1]} : vector<32x512xbf16> to vector<32x256xbf16>
    %c1_187 = arith.constant 1 : index
    %c0_188 = arith.constant 0 : index
    %247 = vector.load %arg2[%c1_187, %c0_188] : memref<5x256xbf16, #tpu.memory_space<vmem>>, vector<1x256xbf16>
    %248 = vector.broadcast %247 : vector<1x256xbf16> to vector<32x256xbf16>
    %249 = arith.mulf %246, %248 : vector<32x256xbf16>
    %c512 = arith.constant 512 : index
    %c0_189 = arith.constant 0 : index
    %250 = vector.load %arg29[%c512, %c0_189] : memref<800x256xbf16, #tpu.memory_space<vmem>>, vector<32x256xbf16>
    tpu.vector_store %arg29[%c512, %c0_189], %249 {strides = array<i32>} : memref<800x256xbf16, #tpu.memory_space<vmem>>, vector<32x256xbf16>,
    %251 = vector.extract_strided_slice %174 {offsets = [0, 144], sizes = [32, 256], strides = [1, 1]} : vector<32x512xbf16> to vector<32x256xbf16>
    %c544 = arith.constant 544 : index
    %c0_190 = arith.constant 0 : index
    %252 = vector.load %arg29[%c544, %c0_190] : memref<800x256xbf16, #tpu.memory_space<vmem>>, vector<32x256xbf16>
    tpu.vector_store %arg29[%c544, %c0_190], %251 {strides = array<i32>} : memref<800x256xbf16, #tpu.memory_space<vmem>>, vector<32x256xbf16>,
    %253 = vector.extract_strided_slice %174 {offsets = [0, 145], sizes = [32, 256], strides = [1, 1]} : vector<32x512xbf16> to vector<32x256xbf16>
    %c3_191 = arith.constant 3 : index
    %c0_192 = arith.constant 0 : index
    %254 = vector.load %arg2[%c3_191, %c0_192] : memref<5x256xbf16, #tpu.memory_space<vmem>>, vector<1x256xbf16>
    %255 = vector.broadcast %254 : vector<1x256xbf16> to vector<32x256xbf16>
    %256 = arith.mulf %253, %255 : vector<32x256xbf16>
    %c576 = arith.constant 576 : index
    %c0_193 = arith.constant 0 : index
    %257 = vector.load %arg29[%c576, %c0_193] : memref<800x256xbf16, #tpu.memory_space<vmem>>, vector<32x256xbf16>
    tpu.vector_store %arg29[%c576, %c0_193], %256 {strides = array<i32>} : memref<800x256xbf16, #tpu.memory_space<vmem>>, vector<32x256xbf16>,
    %258 = vector.extract_strided_slice %174 {offsets = [0, 146], sizes = [32, 256], strides = [1, 1]} : vector<32x512xbf16> to vector<32x256xbf16>
    %c4_194 = arith.constant 4 : index
    %c0_195 = arith.constant 0 : index
    %259 = vector.load %arg2[%c4_194, %c0_195] : memref<5x256xbf16, #tpu.memory_space<vmem>>, vector<1x256xbf16>
    %260 = vector.broadcast %259 : vector<1x256xbf16> to vector<32x256xbf16>
    %261 = arith.mulf %258, %260 : vector<32x256xbf16>
    %c608 = arith.constant 608 : index
    %c0_196 = arith.constant 0 : index
    %262 = vector.load %arg29[%c608, %c0_196] : memref<800x256xbf16, #tpu.memory_space<vmem>>, vector<32x256xbf16>
    tpu.vector_store %arg29[%c608, %c0_196], %261 {strides = array<i32>} : memref<800x256xbf16, #tpu.memory_space<vmem>>, vector<32x256xbf16>,
    %263 = vector.extract_strided_slice %174 {offsets = [0, 158], sizes = [32, 256], strides = [1, 1]} : vector<32x512xbf16> to vector<32x256xbf16>
    %c0_197 = arith.constant 0 : index
    %c0_198 = arith.constant 0 : index
    %264 = vector.load %arg2[%c0_197, %c0_198] : memref<5x256xbf16, #tpu.memory_space<vmem>>, vector<1x256xbf16>
    %265 = vector.broadcast %264 : vector<1x256xbf16> to vector<32x256xbf16>
    %266 = arith.mulf %263, %265 : vector<32x256xbf16>
    %c640 = arith.constant 640 : index
    %c0_199 = arith.constant 0 : index
    %267 = vector.load %arg29[%c640, %c0_199] : memref<800x256xbf16, #tpu.memory_space<vmem>>, vector<32x256xbf16>
    tpu.vector_store %arg29[%c640, %c0_199], %266 {strides = array<i32>} : memref<800x256xbf16, #tpu.memory_space<vmem>>, vector<32x256xbf16>,
    %268 = vector.extract_strided_slice %174 {offsets = [0, 159], sizes = [32, 256], strides = [1, 1]} : vector<32x512xbf16> to vector<32x256xbf16>
    %c1_200 = arith.constant 1 : index
    %c0_201 = arith.constant 0 : index
    %269 = vector.load %arg2[%c1_200, %c0_201] : memref<5x256xbf16, #tpu.memory_space<vmem>>, vector<1x256xbf16>
    %270 = vector.broadcast %269 : vector<1x256xbf16> to vector<32x256xbf16>
    %271 = arith.mulf %268, %270 : vector<32x256xbf16>
    %c672 = arith.constant 672 : index
    %c0_202 = arith.constant 0 : index
    %272 = vector.load %arg29[%c672, %c0_202] : memref<800x256xbf16, #tpu.memory_space<vmem>>, vector<32x256xbf16>
    tpu.vector_store %arg29[%c672, %c0_202], %271 {strides = array<i32>} : memref<800x256xbf16, #tpu.memory_space<vmem>>, vector<32x256xbf16>,
    %273 = vector.extract_strided_slice %174 {offsets = [0, 160], sizes = [32, 256], strides = [1, 1]} : vector<32x512xbf16> to vector<32x256xbf16>
    %c704 = arith.constant 704 : index
    %c0_203 = arith.constant 0 : index
    %274 = vector.load %arg29[%c704, %c0_203] : memref<800x256xbf16, #tpu.memory_space<vmem>>, vector<32x256xbf16>
    tpu.vector_store %arg29[%c704, %c0_203], %273 {strides = array<i32>} : memref<800x256xbf16, #tpu.memory_space<vmem>>, vector<32x256xbf16>,
    %275 = vector.extract_strided_slice %174 {offsets = [0, 161], sizes = [32, 256], strides = [1, 1]} : vector<32x512xbf16> to vector<32x256xbf16>
    %c3_204 = arith.constant 3 : index
    %c0_205 = arith.constant 0 : index
    %276 = vector.load %arg2[%c3_204, %c0_205] : memref<5x256xbf16, #tpu.memory_space<vmem>>, vector<1x256xbf16>
    %277 = vector.broadcast %276 : vector<1x256xbf16> to vector<32x256xbf16>
    %278 = arith.mulf %275, %277 : vector<32x256xbf16>
    %c736 = arith.constant 736 : index
    %c0_206 = arith.constant 0 : index
    %279 = vector.load %arg29[%c736, %c0_206] : memref<800x256xbf16, #tpu.memory_space<vmem>>, vector<32x256xbf16>
    tpu.vector_store %arg29[%c736, %c0_206], %278 {strides = array<i32>} : memref<800x256xbf16, #tpu.memory_space<vmem>>, vector<32x256xbf16>,
    %280 = vector.extract_strided_slice %174 {offsets = [0, 162], sizes = [32, 256], strides = [1, 1]} : vector<32x512xbf16> to vector<32x256xbf16>
    %c4_207 = arith.constant 4 : index
    %c0_208 = arith.constant 0 : index
    %281 = vector.load %arg2[%c4_207, %c0_208] : memref<5x256xbf16, #tpu.memory_space<vmem>>, vector<1x256xbf16>
    %282 = vector.broadcast %281 : vector<1x256xbf16> to vector<32x256xbf16>
    %283 = arith.mulf %280, %282 : vector<32x256xbf16>
    %c768 = arith.constant 768 : index
    %c0_209 = arith.constant 0 : index
    %284 = vector.load %arg29[%c768, %c0_209] : memref<800x256xbf16, #tpu.memory_space<vmem>>, vector<32x256xbf16>
    tpu.vector_store %arg29[%c768, %c0_209], %283 {strides = array<i32>} : memref<800x256xbf16, #tpu.memory_space<vmem>>, vector<32x256xbf16>,
    %c0_210 = arith.constant 0 : index
    %c0_211 = arith.constant 0 : index
    %285 = vector.load %arg12[%c0_210, %c0_211] : memref<16x800xbf16, #tpu.memory_space<vmem>>, vector<16x800xbf16>
    %c0_212 = arith.constant 0 : index
    %c0_213 = arith.constant 0 : index
    %286 = vector.load %arg29[%c0_212, %c0_213] : memref<800x256xbf16, #tpu.memory_space<vmem>>, vector<800x256xbf16>
    %cst_214 = arith.constant dense<0.000000e+00> : vector<16x256xf32>
    %287 = tpu.matmul %285, %286, %cst_214 {dimension_numbers = #tpu.dot_dimension_numbers<[1], [0], [0], [1], [0, 0, 1, 1], [], []>} : vector<16x800xbf16>, vector<800x256xbf16>, vector<16x256xf32> -> vector<16x256xf32>
    %c0_215 = arith.constant 0 : index
    %c0_216 = arith.constant 0 : index
    %288 = vector.load %arg13[%c0_215, %c0_216] : memref<16x1xf32, #tpu.memory_space<vmem>>, vector<16x1xf32>
    %289 = vector.broadcast %288 : vector<16x1xf32> to vector<16x256xf32>
    %290 = arith.mulf %287, %289 : vector<16x256xf32>
    %c0_217 = arith.constant 0 : index
    %c0_218 = arith.constant 0 : index
    %291 = vector.load %arg14[%c0_217, %c0_218] : memref<16x1xf32, #tpu.memory_space<vmem>>, vector<16x1xf32>
    %292 = vector.broadcast %291 : vector<16x1xf32> to vector<16x256xf32>
    %293 = arith.addf %290, %292 : vector<16x256xf32>
    %cst_219 = arith.constant 0.000000e+00 : f32
    %294 = vector.broadcast %cst_219 : f32 to vector<16x256xf32>
    %295 = arith.cmpf ogt, %293, %294 : vector<16x256xf32>
    %cst_220 = arith.constant 0.00999999977 : f32
    %296 = vector.broadcast %cst_220 : f32 to vector<16x256xf32>
    %297 = arith.mulf %296, %293 : vector<16x256xf32>
    %298 = arith.select %295, %293, %297 : vector<16x256xi1>, vector<16x256xf32>
    %299 = arith.truncf %298 : vector<16x256xf32> to vector<16x256xbf16>
    %c0_221 = arith.constant 0 : index
    %c128_222 = arith.constant 128 : index
    %300 = vector.load %arg28[%c0_221, %c128_222] : memref<32x512xbf16, #tpu.memory_space<vmem>>, vector<16x256xbf16>
    tpu.vector_store %arg28[%c0_221, %c128_222], %299 {strides = array<i32>} : memref<32x512xbf16, #tpu.memory_space<vmem>>, vector<16x256xbf16>,
    %c0_223 = arith.constant 0 : index
    %c0_224 = arith.constant 0 : index
    %301 = vector.load %arg28[%c0_223, %c0_224] : memref<32x512xbf16, #tpu.memory_space<vmem>>, vector<16x512xbf16>
    %302 = vector.extract_strided_slice %301 {offsets = [0, 94], sizes = [16, 256], strides = [1, 1]} : vector<16x512xbf16> to vector<16x256xbf16>
    %c0_225 = arith.constant 0 : index
    %c0_226 = arith.constant 0 : index
    %303 = vector.load %arg2[%c0_225, %c0_226] : memref<5x256xbf16, #tpu.memory_space<vmem>>, vector<1x256xbf16>
    %304 = vector.broadcast %303 : vector<1x256xbf16> to vector<16x256xbf16>
    %305 = arith.mulf %302, %304 : vector<16x256xbf16>
    %c0_227 = arith.constant 0 : index
    %c0_228 = arith.constant 0 : index
    %306 = vector.load %arg29[%c0_227, %c0_228] : memref<800x256xbf16, #tpu.memory_space<vmem>>, vector<16x256xbf16>
    tpu.vector_store %arg29[%c0_227, %c0_228], %305 {strides = array<i32>} : memref<800x256xbf16, #tpu.memory_space<vmem>>, vector<16x256xbf16>,
    %307 = vector.extract_strided_slice %301 {offsets = [0, 95], sizes = [16, 256], strides = [1, 1]} : vector<16x512xbf16> to vector<16x256xbf16>
    %c1_229 = arith.constant 1 : index
    %c0_230 = arith.constant 0 : index
    %308 = vector.load %arg2[%c1_229, %c0_230] : memref<5x256xbf16, #tpu.memory_space<vmem>>, vector<1x256xbf16>
    %309 = vector.broadcast %308 : vector<1x256xbf16> to vector<16x256xbf16>
    %310 = arith.mulf %307, %309 : vector<16x256xbf16>
    %c16 = arith.constant 16 : index
    %c0_231 = arith.constant 0 : index
    %311 = vector.load %arg29[%c16, %c0_231] : memref<800x256xbf16, #tpu.memory_space<vmem>>, vector<16x256xbf16>
    tpu.vector_store %arg29[%c16, %c0_231], %310 {strides = array<i32>} : memref<800x256xbf16, #tpu.memory_space<vmem>>, vector<16x256xbf16>,
    %312 = vector.extract_strided_slice %301 {offsets = [0, 96], sizes = [16, 256], strides = [1, 1]} : vector<16x512xbf16> to vector<16x256xbf16>
    %c32_232 = arith.constant 32 : index
    %c0_233 = arith.constant 0 : index
    %313 = vector.load %arg29[%c32_232, %c0_233] : memref<800x256xbf16, #tpu.memory_space<vmem>>, vector<16x256xbf16>
    tpu.vector_store %arg29[%c32_232, %c0_233], %312 {strides = array<i32>} : memref<800x256xbf16, #tpu.memory_space<vmem>>, vector<16x256xbf16>,
    %314 = vector.extract_strided_slice %301 {offsets = [0, 97], sizes = [16, 256], strides = [1, 1]} : vector<16x512xbf16> to vector<16x256xbf16>
    %c3_234 = arith.constant 3 : index
    %c0_235 = arith.constant 0 : index
    %315 = vector.load %arg2[%c3_234, %c0_235] : memref<5x256xbf16, #tpu.memory_space<vmem>>, vector<1x256xbf16>
    %316 = vector.broadcast %315 : vector<1x256xbf16> to vector<16x256xbf16>
    %317 = arith.mulf %314, %316 : vector<16x256xbf16>
    %c48 = arith.constant 48 : index
    %c0_236 = arith.constant 0 : index
    %318 = vector.load %arg29[%c48, %c0_236] : memref<800x256xbf16, #tpu.memory_space<vmem>>, vector<16x256xbf16>
    tpu.vector_store %arg29[%c48, %c0_236], %317 {strides = array<i32>} : memref<800x256xbf16, #tpu.memory_space<vmem>>, vector<16x256xbf16>,
    %319 = vector.extract_strided_slice %301 {offsets = [0, 98], sizes = [16, 256], strides = [1, 1]} : vector<16x512xbf16> to vector<16x256xbf16>
    %c4_237 = arith.constant 4 : index
    %c0_238 = arith.constant 0 : index
    %320 = vector.load %arg2[%c4_237, %c0_238] : memref<5x256xbf16, #tpu.memory_space<vmem>>, vector<1x256xbf16>
    %321 = vector.broadcast %320 : vector<1x256xbf16> to vector<16x256xbf16>
    %322 = arith.mulf %319, %321 : vector<16x256xbf16>
    %c64_239 = arith.constant 64 : index
    %c0_240 = arith.constant 0 : index
    %323 = vector.load %arg29[%c64_239, %c0_240] : memref<800x256xbf16, #tpu.memory_space<vmem>>, vector<16x256xbf16>
    tpu.vector_store %arg29[%c64_239, %c0_240], %322 {strides = array<i32>} : memref<800x256xbf16, #tpu.memory_space<vmem>>, vector<16x256xbf16>,
    %324 = vector.extract_strided_slice %301 {offsets = [0, 110], sizes = [16, 256], strides = [1, 1]} : vector<16x512xbf16> to vector<16x256xbf16>
    %c0_241 = arith.constant 0 : index
    %c0_242 = arith.constant 0 : index
    %325 = vector.load %arg2[%c0_241, %c0_242] : memref<5x256xbf16, #tpu.memory_space<vmem>>, vector<1x256xbf16>
    %326 = vector.broadcast %325 : vector<1x256xbf16> to vector<16x256xbf16>
    %327 = arith.mulf %324, %326 : vector<16x256xbf16>
    %c80 = arith.constant 80 : index
    %c0_243 = arith.constant 0 : index
    %328 = vector.load %arg29[%c80, %c0_243] : memref<800x256xbf16, #tpu.memory_space<vmem>>, vector<16x256xbf16>
    tpu.vector_store %arg29[%c80, %c0_243], %327 {strides = array<i32>} : memref<800x256xbf16, #tpu.memory_space<vmem>>, vector<16x256xbf16>,
    %329 = vector.extract_strided_slice %301 {offsets = [0, 111], sizes = [16, 256], strides = [1, 1]} : vector<16x512xbf16> to vector<16x256xbf16>
    %c1_244 = arith.constant 1 : index
    %c0_245 = arith.constant 0 : index
    %330 = vector.load %arg2[%c1_244, %c0_245] : memref<5x256xbf16, #tpu.memory_space<vmem>>, vector<1x256xbf16>
    %331 = vector.broadcast %330 : vector<1x256xbf16> to vector<16x256xbf16>
    %332 = arith.mulf %329, %331 : vector<16x256xbf16>
    %c96_246 = arith.constant 96 : index
    %c0_247 = arith.constant 0 : index
    %333 = vector.load %arg29[%c96_246, %c0_247] : memref<800x256xbf16, #tpu.memory_space<vmem>>, vector<16x256xbf16>
    tpu.vector_store %arg29[%c96_246, %c0_247], %332 {strides = array<i32>} : memref<800x256xbf16, #tpu.memory_space<vmem>>, vector<16x256xbf16>,
    %334 = vector.extract_strided_slice %301 {offsets = [0, 112], sizes = [16, 256], strides = [1, 1]} : vector<16x512xbf16> to vector<16x256xbf16>
    %c112 = arith.constant 112 : index
    %c0_248 = arith.constant 0 : index
    %335 = vector.load %arg29[%c112, %c0_248] : memref<800x256xbf16, #tpu.memory_space<vmem>>, vector<16x256xbf16>
    tpu.vector_store %arg29[%c112, %c0_248], %334 {strides = array<i32>} : memref<800x256xbf16, #tpu.memory_space<vmem>>, vector<16x256xbf16>,
    %336 = vector.extract_strided_slice %301 {offsets = [0, 113], sizes = [16, 256], strides = [1, 1]} : vector<16x512xbf16> to vector<16x256xbf16>
    %c3_249 = arith.constant 3 : index
    %c0_250 = arith.constant 0 : index
    %337 = vector.load %arg2[%c3_249, %c0_250] : memref<5x256xbf16, #tpu.memory_space<vmem>>, vector<1x256xbf16>
    %338 = vector.broadcast %337 : vector<1x256xbf16> to vector<16x256xbf16>
    %339 = arith.mulf %336, %338 : vector<16x256xbf16>
    %c128_251 = arith.constant 128 : index
    %c0_252 = arith.constant 0 : index
    %340 = vector.load %arg29[%c128_251, %c0_252] : memref<800x256xbf16, #tpu.memory_space<vmem>>, vector<16x256xbf16>
    tpu.vector_store %arg29[%c128_251, %c0_252], %339 {strides = array<i32>} : memref<800x256xbf16, #tpu.memory_space<vmem>>, vector<16x256xbf16>,
    %341 = vector.extract_strided_slice %301 {offsets = [0, 114], sizes = [16, 256], strides = [1, 1]} : vector<16x512xbf16> to vector<16x256xbf16>
    %c4_253 = arith.constant 4 : index
    %c0_254 = arith.constant 0 : index
    %342 = vector.load %arg2[%c4_253, %c0_254] : memref<5x256xbf16, #tpu.memory_space<vmem>>, vector<1x256xbf16>
    %343 = vector.broadcast %342 : vector<1x256xbf16> to vector<16x256xbf16>
    %344 = arith.mulf %341, %343 : vector<16x256xbf16>
    %c144 = arith.constant 144 : index
    %c0_255 = arith.constant 0 : index
    %345 = vector.load %arg29[%c144, %c0_255] : memref<800x256xbf16, #tpu.memory_space<vmem>>, vector<16x256xbf16>
    tpu.vector_store %arg29[%c144, %c0_255], %344 {strides = array<i32>} : memref<800x256xbf16, #tpu.memory_space<vmem>>, vector<16x256xbf16>,
    %346 = vector.extract_strided_slice %301 {offsets = [0, 126], sizes = [16, 256], strides = [1, 1]} : vector<16x512xbf16> to vector<16x256xbf16>
    %c0_256 = arith.constant 0 : index
    %c0_257 = arith.constant 0 : index
    %347 = vector.load %arg2[%c0_256, %c0_257] : memref<5x256xbf16, #tpu.memory_space<vmem>>, vector<1x256xbf16>
    %348 = vector.broadcast %347 : vector<1x256xbf16> to vector<16x256xbf16>
    %349 = arith.mulf %346, %348 : vector<16x256xbf16>
    %c160_258 = arith.constant 160 : index
    %c0_259 = arith.constant 0 : index
    %350 = vector.load %arg29[%c160_258, %c0_259] : memref<800x256xbf16, #tpu.memory_space<vmem>>, vector<16x256xbf16>
    tpu.vector_store %arg29[%c160_258, %c0_259], %349 {strides = array<i32>} : memref<800x256xbf16, #tpu.memory_space<vmem>>, vector<16x256xbf16>,
    %351 = vector.extract_strided_slice %301 {offsets = [0, 127], sizes = [16, 256], strides = [1, 1]} : vector<16x512xbf16> to vector<16x256xbf16>
    %c1_260 = arith.constant 1 : index
    %c0_261 = arith.constant 0 : index
    %352 = vector.load %arg2[%c1_260, %c0_261] : memref<5x256xbf16, #tpu.memory_space<vmem>>, vector<1x256xbf16>
    %353 = vector.broadcast %352 : vector<1x256xbf16> to vector<16x256xbf16>
    %354 = arith.mulf %351, %353 : vector<16x256xbf16>
    %c176 = arith.constant 176 : index
    %c0_262 = arith.constant 0 : index
    %355 = vector.load %arg29[%c176, %c0_262] : memref<800x256xbf16, #tpu.memory_space<vmem>>, vector<16x256xbf16>
    tpu.vector_store %arg29[%c176, %c0_262], %354 {strides = array<i32>} : memref<800x256xbf16, #tpu.memory_space<vmem>>, vector<16x256xbf16>,
    %356 = vector.extract_strided_slice %301 {offsets = [0, 128], sizes = [16, 256], strides = [1, 1]} : vector<16x512xbf16> to vector<16x256xbf16>
    %c192_263 = arith.constant 192 : index
    %c0_264 = arith.constant 0 : index
    %357 = vector.load %arg29[%c192_263, %c0_264] : memref<800x256xbf16, #tpu.memory_space<vmem>>, vector<16x256xbf16>
    tpu.vector_store %arg29[%c192_263, %c0_264], %356 {strides = array<i32>} : memref<800x256xbf16, #tpu.memory_space<vmem>>, vector<16x256xbf16>,
    %358 = vector.extract_strided_slice %301 {offsets = [0, 129], sizes = [16, 256], strides = [1, 1]} : vector<16x512xbf16> to vector<16x256xbf16>
    %c3_265 = arith.constant 3 : index
    %c0_266 = arith.constant 0 : index
    %359 = vector.load %arg2[%c3_265, %c0_266] : memref<5x256xbf16, #tpu.memory_space<vmem>>, vector<1x256xbf16>
    %360 = vector.broadcast %359 : vector<1x256xbf16> to vector<16x256xbf16>
    %361 = arith.mulf %358, %360 : vector<16x256xbf16>
    %c208 = arith.constant 208 : index
    %c0_267 = arith.constant 0 : index
    %362 = vector.load %arg29[%c208, %c0_267] : memref<800x256xbf16, #tpu.memory_space<vmem>>, vector<16x256xbf16>
    tpu.vector_store %arg29[%c208, %c0_267], %361 {strides = array<i32>} : memref<800x256xbf16, #tpu.memory_space<vmem>>, vector<16x256xbf16>,
    %363 = vector.extract_strided_slice %301 {offsets = [0, 130], sizes = [16, 256], strides = [1, 1]} : vector<16x512xbf16> to vector<16x256xbf16>
    %c4_268 = arith.constant 4 : index
    %c0_269 = arith.constant 0 : index
    %364 = vector.load %arg2[%c4_268, %c0_269] : memref<5x256xbf16, #tpu.memory_space<vmem>>, vector<1x256xbf16>
    %365 = vector.broadcast %364 : vector<1x256xbf16> to vector<16x256xbf16>
    %366 = arith.mulf %363, %365 : vector<16x256xbf16>
    %c224_270 = arith.constant 224 : index
    %c0_271 = arith.constant 0 : index
    %367 = vector.load %arg29[%c224_270, %c0_271] : memref<800x256xbf16, #tpu.memory_space<vmem>>, vector<16x256xbf16>
    tpu.vector_store %arg29[%c224_270, %c0_271], %366 {strides = array<i32>} : memref<800x256xbf16, #tpu.memory_space<vmem>>, vector<16x256xbf16>,
    %368 = vector.extract_strided_slice %301 {offsets = [0, 142], sizes = [16, 256], strides = [1, 1]} : vector<16x512xbf16> to vector<16x256xbf16>
    %c0_272 = arith.constant 0 : index
    %c0_273 = arith.constant 0 : index
    %369 = vector.load %arg2[%c0_272, %c0_273] : memref<5x256xbf16, #tpu.memory_space<vmem>>, vector<1x256xbf16>
    %370 = vector.broadcast %369 : vector<1x256xbf16> to vector<16x256xbf16>
    %371 = arith.mulf %368, %370 : vector<16x256xbf16>
    %c240 = arith.constant 240 : index
    %c0_274 = arith.constant 0 : index
    %372 = vector.load %arg29[%c240, %c0_274] : memref<800x256xbf16, #tpu.memory_space<vmem>>, vector<16x256xbf16>
    tpu.vector_store %arg29[%c240, %c0_274], %371 {strides = array<i32>} : memref<800x256xbf16, #tpu.memory_space<vmem>>, vector<16x256xbf16>,
    %373 = vector.extract_strided_slice %301 {offsets = [0, 143], sizes = [16, 256], strides = [1, 1]} : vector<16x512xbf16> to vector<16x256xbf16>
    %c1_275 = arith.constant 1 : index
    %c0_276 = arith.constant 0 : index
    %374 = vector.load %arg2[%c1_275, %c0_276] : memref<5x256xbf16, #tpu.memory_space<vmem>>, vector<1x256xbf16>
    %375 = vector.broadcast %374 : vector<1x256xbf16> to vector<16x256xbf16>
    %376 = arith.mulf %373, %375 : vector<16x256xbf16>
    %c256_277 = arith.constant 256 : index
    %c0_278 = arith.constant 0 : index
    %377 = vector.load %arg29[%c256_277, %c0_278] : memref<800x256xbf16, #tpu.memory_space<vmem>>, vector<16x256xbf16>
    tpu.vector_store %arg29[%c256_277, %c0_278], %376 {strides = array<i32>} : memref<800x256xbf16, #tpu.memory_space<vmem>>, vector<16x256xbf16>,
    %378 = vector.extract_strided_slice %301 {offsets = [0, 144], sizes = [16, 256], strides = [1, 1]} : vector<16x512xbf16> to vector<16x256xbf16>
    %c272 = arith.constant 272 : index
    %c0_279 = arith.constant 0 : index
    %379 = vector.load %arg29[%c272, %c0_279] : memref<800x256xbf16, #tpu.memory_space<vmem>>, vector<16x256xbf16>
    tpu.vector_store %arg29[%c272, %c0_279], %378 {strides = array<i32>} : memref<800x256xbf16, #tpu.memory_space<vmem>>, vector<16x256xbf16>,
    %380 = vector.extract_strided_slice %301 {offsets = [0, 145], sizes = [16, 256], strides = [1, 1]} : vector<16x512xbf16> to vector<16x256xbf16>
    %c3_280 = arith.constant 3 : index
    %c0_281 = arith.constant 0 : index
    %381 = vector.load %arg2[%c3_280, %c0_281] : memref<5x256xbf16, #tpu.memory_space<vmem>>, vector<1x256xbf16>
    %382 = vector.broadcast %381 : vector<1x256xbf16> to vector<16x256xbf16>
    %383 = arith.mulf %380, %382 : vector<16x256xbf16>
    %c288_282 = arith.constant 288 : index
    %c0_283 = arith.constant 0 : index
    %384 = vector.load %arg29[%c288_282, %c0_283] : memref<800x256xbf16, #tpu.memory_space<vmem>>, vector<16x256xbf16>
    tpu.vector_store %arg29[%c288_282, %c0_283], %383 {strides = array<i32>} : memref<800x256xbf16, #tpu.memory_space<vmem>>, vector<16x256xbf16>,
    %385 = vector.extract_strided_slice %301 {offsets = [0, 146], sizes = [16, 256], strides = [1, 1]} : vector<16x512xbf16> to vector<16x256xbf16>
    %c4_284 = arith.constant 4 : index
    %c0_285 = arith.constant 0 : index
    %386 = vector.load %arg2[%c4_284, %c0_285] : memref<5x256xbf16, #tpu.memory_space<vmem>>, vector<1x256xbf16>
    %387 = vector.broadcast %386 : vector<1x256xbf16> to vector<16x256xbf16>
    %388 = arith.mulf %385, %387 : vector<16x256xbf16>
    %c304 = arith.constant 304 : index
    %c0_286 = arith.constant 0 : index
    %389 = vector.load %arg29[%c304, %c0_286] : memref<800x256xbf16, #tpu.memory_space<vmem>>, vector<16x256xbf16>
    tpu.vector_store %arg29[%c304, %c0_286], %388 {strides = array<i32>} : memref<800x256xbf16, #tpu.memory_space<vmem>>, vector<16x256xbf16>,
    %390 = vector.extract_strided_slice %301 {offsets = [0, 158], sizes = [16, 256], strides = [1, 1]} : vector<16x512xbf16> to vector<16x256xbf16>
    %c0_287 = arith.constant 0 : index
    %c0_288 = arith.constant 0 : index
    %391 = vector.load %arg2[%c0_287, %c0_288] : memref<5x256xbf16, #tpu.memory_space<vmem>>, vector<1x256xbf16>
    %392 = vector.broadcast %391 : vector<1x256xbf16> to vector<16x256xbf16>
    %393 = arith.mulf %390, %392 : vector<16x256xbf16>
    %c320_289 = arith.constant 320 : index
    %c0_290 = arith.constant 0 : index
    %394 = vector.load %arg29[%c320_289, %c0_290] : memref<800x256xbf16, #tpu.memory_space<vmem>>, vector<16x256xbf16>
    tpu.vector_store %arg29[%c320_289, %c0_290], %393 {strides = array<i32>} : memref<800x256xbf16, #tpu.memory_space<vmem>>, vector<16x256xbf16>,
    %395 = vector.extract_strided_slice %301 {offsets = [0, 159], sizes = [16, 256], strides = [1, 1]} : vector<16x512xbf16> to vector<16x256xbf16>
    %c1_291 = arith.constant 1 : index
    %c0_292 = arith.constant 0 : index
    %396 = vector.load %arg2[%c1_291, %c0_292] : memref<5x256xbf16, #tpu.memory_space<vmem>>, vector<1x256xbf16>
    %397 = vector.broadcast %396 : vector<1x256xbf16> to vector<16x256xbf16>
    %398 = arith.mulf %395, %397 : vector<16x256xbf16>
    %c336 = arith.constant 336 : index
    %c0_293 = arith.constant 0 : index
    %399 = vector.load %arg29[%c336, %c0_293] : memref<800x256xbf16, #tpu.memory_space<vmem>>, vector<16x256xbf16>
    tpu.vector_store %arg29[%c336, %c0_293], %398 {strides = array<i32>} : memref<800x256xbf16, #tpu.memory_space<vmem>>, vector<16x256xbf16>,
    %400 = vector.extract_strided_slice %301 {offsets = [0, 160], sizes = [16, 256], strides = [1, 1]} : vector<16x512xbf16> to vector<16x256xbf16>
    %c352_294 = arith.constant 352 : index
    %c0_295 = arith.constant 0 : index
    %401 = vector.load %arg29[%c352_294, %c0_295] : memref<800x256xbf16, #tpu.memory_space<vmem>>, vector<16x256xbf16>
    tpu.vector_store %arg29[%c352_294, %c0_295], %400 {strides = array<i32>} : memref<800x256xbf16, #tpu.memory_space<vmem>>, vector<16x256xbf16>,
    %402 = vector.extract_strided_slice %301 {offsets = [0, 161], sizes = [16, 256], strides = [1, 1]} : vector<16x512xbf16> to vector<16x256xbf16>
    %c3_296 = arith.constant 3 : index
    %c0_297 = arith.constant 0 : index
    %403 = vector.load %arg2[%c3_296, %c0_297] : memref<5x256xbf16, #tpu.memory_space<vmem>>, vector<1x256xbf16>
    %404 = vector.broadcast %403 : vector<1x256xbf16> to vector<16x256xbf16>
    %405 = arith.mulf %402, %404 : vector<16x256xbf16>
    %c368 = arith.constant 368 : index
    %c0_298 = arith.constant 0 : index
    %406 = vector.load %arg29[%c368, %c0_298] : memref<800x256xbf16, #tpu.memory_space<vmem>>, vector<16x256xbf16>
    tpu.vector_store %arg29[%c368, %c0_298], %405 {strides = array<i32>} : memref<800x256xbf16, #tpu.memory_space<vmem>>, vector<16x256xbf16>,
    %407 = vector.extract_strided_slice %301 {offsets = [0, 162], sizes = [16, 256], strides = [1, 1]} : vector<16x512xbf16> to vector<16x256xbf16>
    %c4_299 = arith.constant 4 : index
    %c0_300 = arith.constant 0 : index
    %408 = vector.load %arg2[%c4_299, %c0_300] : memref<5x256xbf16, #tpu.memory_space<vmem>>, vector<1x256xbf16>
    %409 = vector.broadcast %408 : vector<1x256xbf16> to vector<16x256xbf16>
    %410 = arith.mulf %407, %409 : vector<16x256xbf16>
    %c384_301 = arith.constant 384 : index
    %c0_302 = arith.constant 0 : index
    %411 = vector.load %arg29[%c384_301, %c0_302] : memref<800x256xbf16, #tpu.memory_space<vmem>>, vector<16x256xbf16>
    tpu.vector_store %arg29[%c384_301, %c0_302], %410 {strides = array<i32>} : memref<800x256xbf16, #tpu.memory_space<vmem>>, vector<16x256xbf16>,
    %c0_303 = arith.constant 0 : index
    %c0_304 = arith.constant 0 : index
    %412 = vector.load %arg15[%c0_303, %c0_304] : memref<8x400xbf16, #tpu.memory_space<vmem>>, vector<8x400xbf16>
    %c0_305 = arith.constant 0 : index
    %c0_306 = arith.constant 0 : index
    %413 = vector.load %arg29[%c0_305, %c0_306] : memref<800x256xbf16, #tpu.memory_space<vmem>>, vector<400x256xbf16>
    %cst_307 = arith.constant dense<0.000000e+00> : vector<8x256xf32>
    %414 = tpu.matmul %412, %413, %cst_307 {dimension_numbers = #tpu.dot_dimension_numbers<[1], [0], [0], [1], [0, 0, 1, 1], [], []>} : vector<8x400xbf16>, vector<400x256xbf16>, vector<8x256xf32> -> vector<8x256xf32>
    %c0_308 = arith.constant 0 : index
    %c0_309 = arith.constant 0 : index
    %415 = vector.load %arg16[%c0_308, %c0_309] : memref<8x1xf32, #tpu.memory_space<vmem>>, vector<8x1xf32>
    %416 = vector.broadcast %415 : vector<8x1xf32> to vector<8x256xf32>
    %417 = arith.mulf %414, %416 : vector<8x256xf32>
    %c0_310 = arith.constant 0 : index
    %c0_311 = arith.constant 0 : index
    %418 = vector.load %arg17[%c0_310, %c0_311] : memref<8x1xf32, #tpu.memory_space<vmem>>, vector<8x1xf32>
    %419 = vector.broadcast %418 : vector<8x1xf32> to vector<8x256xf32>
    %420 = arith.addf %417, %419 : vector<8x256xf32>
    %cst_312 = arith.constant 0.000000e+00 : f32
    %421 = vector.broadcast %cst_312 : f32 to vector<8x256xf32>
    %422 = arith.cmpf ogt, %420, %421 : vector<8x256xf32>
    %cst_313 = arith.constant 0.00999999977 : f32
    %423 = vector.broadcast %cst_313 : f32 to vector<8x256xf32>
    %424 = arith.mulf %423, %420 : vector<8x256xf32>
    %425 = arith.select %422, %420, %424 : vector<8x256xi1>, vector<8x256xf32>
    %426 = vector.broadcast %6 : vector<1x256xf32> to vector<8x256xf32>
    %427 = arith.mulf %425, %426 : vector<8x256xf32>
    %cst_314 = arith.constant dense<0.000000e+00> : vector<8xf32>
    %428 = vector.multi_reduction <add>, %427, %cst_314 [1] : vector<8x256xf32> to vector<8xf32>
    %429 = vector.shape_cast %428 : vector<8xf32> to vector<8x1xf32>
    %430 = vector.extract_strided_slice %5 {offsets = [16, 0], sizes = [4, 256], strides = [1, 1]} : vector<32x256xf32> to vector<4x256xf32>
    %cst_315 = arith.constant dense<0.000000e+00> : vector<4xf32>
    %431 = vector.multi_reduction <add>, %430, %cst_315 [1] : vector<4x256xf32> to vector<4xf32>
    %432 = vector.shape_cast %431 : vector<4xf32> to vector<4x1xf32>
    %cst_316 = arith.constant 3.906250e-03 : f32
    %433 = vector.broadcast %cst_316 : f32 to vector<4x1xf32>
    %434 = arith.mulf %432, %433 : vector<4x1xf32>
    %c0_317 = arith.constant 0 : index
    %c0_318 = arith.constant 0 : index
    %435 = vector.load %arg18[%c0_317, %c0_318] : memref<4x4xf32, #tpu.memory_space<vmem>>, vector<4x4xf32>
    %cst_319 = arith.constant dense<0.000000e+00> : vector<4x1xf32>
    %436 = tpu.matmul %435, %434, %cst_319 {dimension_numbers = #tpu.dot_dimension_numbers<[1], [0], [0], [1], [0, 0, 1, 1], [], []>} : vector<4x4xf32>, vector<4x1xf32>, vector<4x1xf32> -> vector<4x1xf32>
    %c0_320 = arith.constant 0 : index
    %c0_321 = arith.constant 0 : index
    %437 = vector.load %arg19[%c0_320, %c0_321] : memref<4x1xf32, #tpu.memory_space<vmem>>, vector<4x1xf32>
    %438 = arith.addf %436, %437 : vector<4x1xf32>
    %c0_322 = arith.constant 0 : index
    %c0_323 = arith.constant 0 : index
    %439 = vector.load %arg20[%c0_322, %c0_323] : memref<64x32xf32, #tpu.memory_space<vmem>>, vector<64x32xf32>
    %cst_324 = arith.constant dense<0.000000e+00> : vector<64x1xf32>
    %440 = tpu.matmul %439, %171, %cst_324 {dimension_numbers = #tpu.dot_dimension_numbers<[1], [0], [0], [1], [0, 0, 1, 1], [], []>} : vector<64x32xf32>, vector<32x1xf32>, vector<64x1xf32> -> vector<64x1xf32>
    %c0_325 = arith.constant 0 : index
    %c0_326 = arith.constant 0 : index
    %441 = vector.load %arg21[%c0_325, %c0_326] : memref<64x8xf32, #tpu.memory_space<vmem>>, vector<64x8xf32>
    %cst_327 = arith.constant dense<0.000000e+00> : vector<64x1xf32>
    %442 = tpu.matmul %441, %429, %cst_327 {dimension_numbers = #tpu.dot_dimension_numbers<[1], [0], [0], [1], [0, 0, 1, 1], [], []>} : vector<64x8xf32>, vector<8x1xf32>, vector<64x1xf32> -> vector<64x1xf32>
    %443 = arith.addf %440, %442 : vector<64x1xf32>
    %c0_328 = arith.constant 0 : index
    %c0_329 = arith.constant 0 : index
    %444 = vector.load %arg22[%c0_328, %c0_329] : memref<64x4xf32, #tpu.memory_space<vmem>>, vector<64x4xf32>
    %cst_330 = arith.constant dense<0.000000e+00> : vector<64x1xf32>
    %445 = tpu.matmul %444, %438, %cst_330 {dimension_numbers = #tpu.dot_dimension_numbers<[1], [0], [0], [1], [0, 0, 1, 1], [], []>} : vector<64x4xf32>, vector<4x1xf32>, vector<64x1xf32> -> vector<64x1xf32>
    %446 = arith.addf %443, %445 : vector<64x1xf32>
    %c0_331 = arith.constant 0 : index
    %c0_332 = arith.constant 0 : index
    %447 = vector.load %arg23[%c0_331, %c0_332] : memref<64x1xf32, #tpu.memory_space<vmem>>, vector<64x1xf32>
    %448 = arith.addf %446, %447 : vector<64x1xf32>
    %cst_333 = arith.constant 0.000000e+00 : f32
    %449 = vector.broadcast %cst_333 : f32 to vector<64x1xf32>
    %450 = arith.cmpf ogt, %448, %449 : vector<64x1xf32>
    %cst_334 = arith.constant 0.00999999977 : f32
    %451 = vector.broadcast %cst_334 : f32 to vector<64x1xf32>
    %452 = arith.mulf %451, %448 : vector<64x1xf32>
    %453 = arith.select %450, %448, %452 : vector<64x1xi1>, vector<64x1xf32>
    %c0_335 = arith.constant 0 : index
    %c0_336 = arith.constant 0 : index
    %454 = vector.load %arg24[%c0_335, %c0_336] : memref<32x64xf32, #tpu.memory_space<vmem>>, vector<32x64xf32>
    %cst_337 = arith.constant dense<0.000000e+00> : vector<32x1xf32>
    %455 = tpu.matmul %454, %453, %cst_337 {dimension_numbers = #tpu.dot_dimension_numbers<[1], [0], [0], [1], [0, 0, 1, 1], [], []>} : vector<32x64xf32>, vector<64x1xf32>, vector<32x1xf32> -> vector<32x1xf32>
    %c0_338 = arith.constant 0 : index
    %c0_339 = arith.constant 0 : index
    %456 = vector.load %arg25[%c0_338, %c0_339] : memref<32x1xf32, #tpu.memory_space<vmem>>, vector<32x1xf32>
    %457 = arith.addf %455, %456 : vector<32x1xf32>
    %cst_340 = arith.constant 0.000000e+00 : f32
    %458 = vector.broadcast %cst_340 : f32 to vector<32x1xf32>
    %459 = arith.cmpf ogt, %457, %458 : vector<32x1xf32>
    %cst_341 = arith.constant 0.00999999977 : f32
    %460 = vector.broadcast %cst_341 : f32 to vector<32x1xf32>
    %461 = arith.mulf %460, %457 : vector<32x1xf32>
    %462 = arith.select %459, %457, %461 : vector<32x1xi1>, vector<32x1xf32>
    %c0_342 = arith.constant 0 : index
    %c0_343 = arith.constant 0 : index
    %463 = vector.load %arg26[%c0_342, %c0_343] : memref<5x32xf32, #tpu.memory_space<vmem>>, vector<5x32xf32>
    %cst_344 = arith.constant dense<0.000000e+00> : vector<5x1xf32>
    %464 = tpu.matmul %463, %462, %cst_344 {dimension_numbers = #tpu.dot_dimension_numbers<[1], [0], [0], [1], [0, 0, 1, 1], [], []>} : vector<5x32xf32>, vector<32x1xf32>, vector<5x1xf32> -> vector<5x1xf32>
    %c0_345 = arith.constant 0 : index
    %c0_346 = arith.constant 0 : index
    %c0_347 = arith.constant 0 : index
    %465 = vector.load %arg27[%c0_345, %c0_346, %c0_347] : memref<1x5x1xf32, #tpu.memory_space<vmem>>, vector<1x5x1xf32>
    %466 = vector.shape_cast %465 : vector<1x5x1xf32> to vector<5x1xf32>
    %467 = vector.shape_cast %464 : vector<5x1xf32> to vector<1x5x1xf32>
    tpu.vector_store %arg27[%c0_345, %c0_346, %c0_347], %467 {strides = array<i32>} : memref<1x5x1xf32, #tpu.memory_space<vmem>>, vector<1x5x1xf32>,
    return
  }
  func.func @transform_0(%arg0: i32) -> (i32, i32, i32) {
    %c0_i32 = arith.constant 0 : i32
    %c0_i32_0 = arith.constant 0 : i32
    %c0_i32_1 = arith.constant 0 : i32
    return %arg0, %c0_i32, %c0_i32_0 : i32, i32, i32
  }
  func.func @transform_1(%arg0: i32) -> (i32, i32) {
    %c0_i32 = arith.constant 0 : i32
    %c0_i32_0 = arith.constant 0 : i32
    %c0_i32_1 = arith.constant 0 : i32
    return %c0_i32, %c0_i32_0 : i32, i32
  }
  func.func @transform_2(%arg0: i32) -> (i32, i32) {
    %c0_i32 = arith.constant 0 : i32
    %c0_i32_0 = arith.constant 0 : i32
    %c0_i32_1 = arith.constant 0 : i32
    return %c0_i32, %c0_i32_0 : i32, i32
  }
  func.func @transform_3(%arg0: i32) -> (i32, i32) {
    %c0_i32 = arith.constant 0 : i32
    %c0_i32_0 = arith.constant 0 : i32
    %c0_i32_1 = arith.constant 0 : i32
    return %c0_i32, %c0_i32_0 : i32, i32
  }
  func.func @transform_4(%arg0: i32) -> (i32, i32) {
    %c0_i32 = arith.constant 0 : i32
    %c0_i32_0 = arith.constant 0 : i32
    %c0_i32_1 = arith.constant 0 : i32
    return %c0_i32, %c0_i32_0 : i32, i32
  }
  func.func @transform_5(%arg0: i32) -> (i32, i32) {
    %c0_i32 = arith.constant 0 : i32
    %c0_i32_0 = arith.constant 0 : i32
    %c0_i32_1 = arith.constant 0 : i32
    return %c0_i32, %c0_i32_0 : i32, i32
  }
  func.func @transform_6(%arg0: i32) -> (i32, i32) {
    %c0_i32 = arith.constant 0 : i32
    %c0_i32_0 = arith.constant 0 : i32
    %c0_i32_1 = arith.constant 0 : i32
    return %c0_i32, %c0_i32_0 : i32, i32
  }
  func.func @transform_7(%arg0: i32) -> (i32, i32) {
    %c0_i32 = arith.constant 0 : i32
    %c0_i32_0 = arith.constant 0 : i32
    %c0_i32_1 = arith.constant 0 : i32
    return %c0_i32, %c0_i32_0 : i32, i32
  }
  func.func @transform_8(%arg0: i32) -> (i32, i32) {
    %c0_i32 = arith.constant 0 : i32
    %c0_i32_0 = arith.constant 0 : i32
    %c0_i32_1 = arith.constant 0 : i32
    return %c0_i32, %c0_i32_0 : i32, i32
  }
  func.func @transform_9(%arg0: i32) -> (i32, i32) {
    %c0_i32 = arith.constant 0 : i32
    %c0_i32_0 = arith.constant 0 : i32
    %c0_i32_1 = arith.constant 0 : i32
    return %c0_i32, %c0_i32_0 : i32, i32
  }
  func.func @transform_10(%arg0: i32) -> (i32, i32) {
    %c0_i32 = arith.constant 0 : i32
    %c0_i32_0 = arith.constant 0 : i32
    %c0_i32_1 = arith.constant 0 : i32
    return %c0_i32, %c0_i32_0 : i32, i32
  }
  func.func @transform_11(%arg0: i32) -> (i32, i32) {
    %c0_i32 = arith.constant 0 : i32
    %c0_i32_0 = arith.constant 0 : i32
    %c0_i32_1 = arith.constant 0 : i32
    return %c0_i32, %c0_i32_0 : i32, i32
  }
  func.func @transform_12(%arg0: i32) -> (i32, i32) {
    %c0_i32 = arith.constant 0 : i32
    %c0_i32_0 = arith.constant 0 : i32
    %c0_i32_1 = arith.constant 0 : i32
    return %c0_i32, %c0_i32_0 : i32, i32
  }
  func.func @transform_13(%arg0: i32) -> (i32, i32) {
    %c0_i32 = arith.constant 0 : i32
    %c0_i32_0 = arith.constant 0 : i32
    %c0_i32_1 = arith.constant 0 : i32
    return %c0_i32, %c0_i32_0 : i32, i32
  }
  func.func @transform_14(%arg0: i32) -> (i32, i32) {
    %c0_i32 = arith.constant 0 : i32
    %c0_i32_0 = arith.constant 0 : i32
    %c0_i32_1 = arith.constant 0 : i32
    return %c0_i32, %c0_i32_0 : i32, i32
  }
  func.func @transform_15(%arg0: i32) -> (i32, i32) {
    %c0_i32 = arith.constant 0 : i32
    %c0_i32_0 = arith.constant 0 : i32
    %c0_i32_1 = arith.constant 0 : i32
    return %c0_i32, %c0_i32_0 : i32, i32
  }
  func.func @transform_16(%arg0: i32) -> (i32, i32) {
    %c0_i32 = arith.constant 0 : i32
    %c0_i32_0 = arith.constant 0 : i32
    %c0_i32_1 = arith.constant 0 : i32
    return %c0_i32, %c0_i32_0 : i32, i32
  }
  func.func @transform_17(%arg0: i32) -> (i32, i32) {
    %c0_i32 = arith.constant 0 : i32
    %c0_i32_0 = arith.constant 0 : i32
    %c0_i32_1 = arith.constant 0 : i32
    return %c0_i32, %c0_i32_0 : i32, i32
  }
  func.func @transform_18(%arg0: i32) -> (i32, i32) {
    %c0_i32 = arith.constant 0 : i32
    %c0_i32_0 = arith.constant 0 : i32
    %c0_i32_1 = arith.constant 0 : i32
    return %c0_i32, %c0_i32_0 : i32, i32
  }
  func.func @transform_19(%arg0: i32) -> (i32, i32) {
    %c0_i32 = arith.constant 0 : i32
    %c0_i32_0 = arith.constant 0 : i32
    %c0_i32_1 = arith.constant 0 : i32
    return %c0_i32, %c0_i32_0 : i32, i32
  }
  func.func @transform_20(%arg0: i32) -> (i32, i32) {
    %c0_i32 = arith.constant 0 : i32
    %c0_i32_0 = arith.constant 0 : i32
    %c0_i32_1 = arith.constant 0 : i32
    return %c0_i32, %c0_i32_0 : i32, i32
  }
  func.func @transform_21(%arg0: i32) -> (i32, i32) {
    %c0_i32 = arith.constant 0 : i32
    %c0_i32_0 = arith.constant 0 : i32
    %c0_i32_1 = arith.constant 0 : i32
    return %c0_i32, %c0_i32_0 : i32, i32
  }
  func.func @transform_22(%arg0: i32) -> (i32, i32) {
    %c0_i32 = arith.constant 0 : i32
    %c0_i32_0 = arith.constant 0 : i32
    %c0_i32_1 = arith.constant 0 : i32
    return %c0_i32, %c0_i32_0 : i32, i32
  }
  func.func @transform_23(%arg0: i32) -> (i32, i32) {
    %c0_i32 = arith.constant 0 : i32
    %c0_i32_0 = arith.constant 0 : i32
    %c0_i32_1 = arith.constant 0 : i32
    return %c0_i32, %c0_i32_0 : i32, i32
  }
  func.func @transform_24(%arg0: i32) -> (i32, i32) {
    %c0_i32 = arith.constant 0 : i32
    %c0_i32_0 = arith.constant 0 : i32
    %c0_i32_1 = arith.constant 0 : i32
    return %c0_i32, %c0_i32_0 : i32, i32
  }
  func.func @transform_25(%arg0: i32) -> (i32, i32) {
    %c0_i32 = arith.constant 0 : i32
    %c0_i32_0 = arith.constant 0 : i32
    %c0_i32_1 = arith.constant 0 : i32
    return %c0_i32, %c0_i32_0 : i32, i32
  }
  func.func @transform_26(%arg0: i32) -> (i32, i32, i32) {
    %c0_i32 = arith.constant 0 : i32
    %c0_i32_0 = arith.constant 0 : i32
    %c0_i32_1 = arith.constant 0 : i32
    return %arg0, %c0_i32, %c0_i32_0 : i32, i32, i32
  }
}

</mosaic_0001>

<llo_original>
// kernel: lux_net_forward.1
$region0: #{lux_net_forward.1}
  #allocation0 [shape = 'u32[]', space=smem, size = 0x4, offset = 0x4, fixed_abs, tag = 'smem constant byte address 0x4 - core index']
  #allocation1 [shape = 'u32[72,128]{1,0:T(1,128)}', space=vmem, size = 0x9000, scoped, tag = 'internal scratch']
  #allocation2 [shape = 'bf16[32,512]{1,0:T(8,128)(2,1)}', space=vmem, size = 0x8000, scoped, tag = 'scratch operand']
  #allocation3 [shape = 'bf16[800,256]{1,0:T(8,128)(2,1)}', space=vmem, size = 0x64000, scoped, tag = 'scratch operand']
  %s0 = inlined_call_operand.vmem [shape: f32[2,32,256], index: 0, kind: input, shape index: {}]
  %s1 = inlined_call_operand.vmem [shape: bf16[5,256], index: 1, kind: input, shape index: {}]
  %s2 = inlined_call_operand.vmem [shape: bf16[32,288], index: 2, kind: input, shape index: {}]
  %s3 = inlined_call_operand.vmem [shape: f32[32,1], index: 3, kind: input, shape index: {}]
  %s4 = inlined_call_operand.vmem [shape: f32[32,1], index: 4, kind: input, shape index: {}]
  %s5 = inlined_call_operand.vmem [shape: bf16[32,288], index: 5, kind: input, shape index: {}]
  %s6 = inlined_call_operand.vmem [shape: f32[32,1], index: 6, kind: input, shape index: {}]
  %s7 = inlined_call_operand.vmem [shape: f32[32,1], index: 7, kind: input, shape index: {}]
  %s8 = inlined_call_operand.vmem [shape: bf16[32,288], index: 8, kind: input, shape index: {}]
  %s9 = inlined_call_operand.vmem [shape: f32[32,1], index: 9, kind: input, shape index: {}]
  %s10 = inlined_call_operand.vmem [shape: f32[32,1], index: 10, kind: input, shape index: {}]
  %s11 = inlined_call_operand.vmem [shape: bf16[16,800], index: 11, kind: input, shape index: {}]
  %s12 = inlined_call_operand.vmem [shape: f32[16,1], index: 12, kind: input, shape index: {}]
  %s13 = inlined_call_operand.vmem [shape: f32[16,1], index: 13, kind: input, shape index: {}]
  %s14 = inlined_call_operand.vmem [shape: bf16[8,400], index: 14, kind: input, shape index: {}]
  %s15 = inlined_call_operand.vmem [shape: f32[8,1], index: 15, kind: input, shape index: {}]
  %s16 = inlined_call_operand.vmem [shape: f32[8,1], index: 16, kind: input, shape index: {}]
  %s17 = inlined_call_operand.vmem [shape: f32[4,4], index: 17, kind: input, shape index: {}]
  %s18 = inlined_call_operand.vmem [shape: f32[4,1], index: 18, kind: input, shape index: {}]
  %s19 = inlined_call_operand.vmem [shape: f32[64,32], index: 19, kind: input, shape index: {}]
  %s20 = inlined_call_operand.vmem [shape: f32[64,8], index: 20, kind: input, shape index: {}]
  %s21 = inlined_call_operand.vmem [shape: f32[64,4], index: 21, kind: input, shape index: {}]
  %s22 = inlined_call_operand.vmem [shape: f32[64,1], index: 22, kind: input, shape index: {}]
  %s23 = inlined_call_operand.vmem [shape: f32[32,64], index: 23, kind: input, shape index: {}]
  %s24 = inlined_call_operand.vmem [shape: f32[32,1], index: 24, kind: input, shape index: {}]
  %s25 = inlined_call_operand.vmem [shape: f32[5,32], index: 25, kind: input, shape index: {}]
  %s26 = inlined_call_operand.vmem [shape: f32[2,5,1], index: 26, kind: output, shape index: {}]
  %s27 = sld [smem:[#allocation0]]
  $region137: #{lux_net_forward.1} parent=0
    _
  %s29 = ssub.s32 1, %s27
  %s30 = scalar_select 0, %s29, %s27
  loop: start=0, step=1, limit=4
  $region2: #{lux_net_forward.1} parent=0 // loop_pre_header
    _
  $region3: #{lux_net_forward.1} parent=0 // loop_header
    %s32 = sphi 0, %s36
    %p33 = scmp.ge.s32.totalorder %s32, 4
    %s42 = sphi 0, %s44
    %s45 = sphi 0, %s42
    %s46 = sphi 0, %s45
    %s62 = sphi 0, %s46
    %s66 = sphi 0, %s66
    %s68 = sphi 0, %s66
    %s69 = sphi 0, %s68
    %s83 = sphi 0, %s69
    %s87 = sphi 0, %s87
    %s89 = sphi 0, %s87
    %s90 = sphi 0, %s89
    %s104 = sphi 0, %s90
    %s108 = sphi 0, %s108
    %s110 = sphi 0, %s108
    %s111 = sphi 0, %s110
    %s125 = sphi 0, %s111
    %s129 = sphi 0, %s129
    %s131 = sphi 0, %s129
    %s132 = sphi 0, %s131
    %s146 = sphi 0, %s132
    %s150 = sphi 0, %s150
    %s152 = sphi 0, %s150
    %s153 = sphi 0, %s152
    %s167 = sphi 0, %s153
    %s171 = sphi 0, %s171
    %s173 = sphi 0, %s171
    %s174 = sphi 0, %s173
    %s188 = sphi 0, %s174
    %s192 = sphi 0, %s192
    %s194 = sphi 0, %s192
    %s195 = sphi 0, %s194
    %s209 = sphi 0, %s195
    %s213 = sphi 0, %s213
    %s215 = sphi 0, %s213
    %s216 = sphi 0, %s215
    %s230 = sphi 0, %s216
    %s234 = sphi 0, %s234
    %s236 = sphi 0, %s234
    %s237 = sphi 0, %s236
    %s251 = sphi 0, %s237
    %s255 = sphi 0, %s255
    %s257 = sphi 0, %s255
    %s258 = sphi 0, %s257
    %s272 = sphi 0, %s258
    %s276 = sphi 0, %s276
    %s278 = sphi 0, %s276
    %s279 = sphi 0, %s278
    %s293 = sphi 0, %s279
    %s297 = sphi 0, %s297
    %s299 = sphi 0, %s297
    %s300 = sphi 0, %s299
    %s314 = sphi 0, %s300
    %s318 = sphi 0, %s318
    %s320 = sphi 0, %s318
    %s321 = sphi 0, %s320
    %s335 = sphi 0, %s321
    %s339 = sphi 0, %s339
    %s341 = sphi 0, %s339
    %s342 = sphi 0, %s341
    %s356 = sphi 0, %s342
    %s360 = sphi 0, %s360
    %s362 = sphi 0, %s360
    %s363 = sphi 0, %s362
    %s377 = sphi 0, %s363
    %s381 = sphi 0, %s381
    %s383 = sphi 0, %s381
    %s384 = sphi 0, %s383
    %s398 = sphi 0, %s384
    %s402 = sphi 0, %s402
    %s404 = sphi 0, %s402
    %s405 = sphi 0, %s404
    %s419 = sphi 0, %s405
    %s423 = sphi 0, %s423
    %s425 = sphi 0, %s423
    %s426 = sphi 0, %s425
    %s440 = sphi 0, %s426
    %s444 = sphi 0, %s444
    %s446 = sphi 0, %s444
    %s447 = sphi 0, %s446
    %s461 = sphi 0, %s447
    %s465 = sphi 0, %s465
    %s467 = sphi 0, %s465
    %s468 = sphi 0, %s467
    %s482 = sphi 0, %s468
    %s486 = sphi 0, %s486
    %s488 = sphi 0, %s486
    %s489 = sphi 0, %s488
    %s503 = sphi 0, %s489
    %s507 = sphi 0, %s507
    %s509 = sphi 0, %s507
    %s510 = sphi 0, %s509
    %s524 = sphi 0, %s510
    %s528 = sphi 0, %s528
    %s530 = sphi 0, %s528
    %s531 = sphi 0, %s530
    %s545 = sphi 0, %s531
    %s549 = sphi 0, %s549
    %s551 = sphi 0, %s549
    %s552 = sphi 0, %s551
    %s566 = sphi 0, %s552
    %s570 = sphi 0, %s570
    %s572 = sphi 0, %s570
    %s573 = sphi 0, %s572
    %s587 = sphi 0, %s573
    %s593 = sphi 0, %s595
    %s596 = sphi 0, %s593
    %s597 = sphi 0, %s596
    %s613 = sphi 0, %s597
  $region4: #{lux_net_forward.1} parent=0 // loop_header_branch
    %35 = sbr.rel (%p33) target = $region8
  $region5: #{lux_net_forward.1} parent=0 // loop_body
    %s37 = ssub.s32 %s32, 1
    %s38 = ssub.s32 %s32, 2
    %s39 = sadd.s32 %s32, 1
    %s40 = ssub.s32 %s32, %s39
    %p41 = scmp.eq.s32.totalorder %s40, 0
    %s43 = sadd.s32 %s42, 1
    %s44 = scalar_select %p41, %s42, %s43
    %p47 = pneg %p41
    %p48 = scmp.eq.s32.totalorder %s32, 1
    %p49 = por %p47, %p48
    %p50 = scmp.ne.s32.totalorder %s42, %s45
    %p51 = scmp.eq.s32.totalorder %s32, 0
    %p52 = por %p50, %p51
    %p53 = scmp.ne.s32.totalorder %s42, %s45
    %p54 = scmp.eq.s32.totalorder %s37, 1
    %p55 = por %p53, %p54
    %p56 = scmp.ne.s32.totalorder %s45, %s46
    %p57 = scmp.eq.s32.totalorder %s37, 0
    %p58 = por %p56, %p57
    %p59 = scmp.ne.s32.totalorder %s45, %s46
    %p60 = scmp.eq.s32.totalorder %s38, 1
    %p61 = por %p59, %p60
    %p63 = scmp.ne.s32.totalorder %s46, %s62
    %p64 = scmp.eq.s32.totalorder %s38, 0
    %p65 = por %p63, %p64
    %s67 = sadd.s32 %s66, 1
    %p70 = scmp.eq.s32.totalorder %s32, 1
    %p71 = scmp.ne.s32.totalorder %s66, %s68
    %p72 = scmp.eq.s32.totalorder %s32, 0
    %p73 = por %p71, %p72
    %p74 = scmp.ne.s32.totalorder %s66, %s68
    %p75 = scmp.eq.s32.totalorder %s37, 1
    %p76 = por %p74, %p75
    %p77 = scmp.ne.s32.totalorder %s68, %s69
    %p78 = scmp.eq.s32.totalorder %s37, 0
    %p79 = por %p77, %p78
    %p80 = scmp.ne.s32.totalorder %s68, %s69
    %p81 = scmp.eq.s32.totalorder %s38, 1
    %p82 = por %p80, %p81
    %p84 = scmp.ne.s32.totalorder %s69, %s83
    %p85 = scmp.eq.s32.totalorder %s38, 0
    %p86 = por %p84, %p85
    %s88 = sadd.s32 %s87, 1
    %p91 = scmp.eq.s32.totalorder %s32, 1
    %p92 = scmp.ne.s32.totalorder %s87, %s89
    %p93 = scmp.eq.s32.totalorder %s32, 0
    %p94 = por %p92, %p93
    %p95 = scmp.ne.s32.totalorder %s87, %s89
    %p96 = scmp.eq.s32.totalorder %s37, 1
    %p97 = por %p95, %p96
    %p98 = scmp.ne.s32.totalorder %s89, %s90
    %p99 = scmp.eq.s32.totalorder %s37, 0
    %p100 = por %p98, %p99
    %p101 = scmp.ne.s32.totalorder %s89, %s90
    %p102 = scmp.eq.s32.totalorder %s38, 1
    %p103 = por %p101, %p102
    %p105 = scmp.ne.s32.totalorder %s90, %s104
    %p106 = scmp.eq.s32.totalorder %s38, 0
    %p107 = por %p105, %p106
    %s109 = sadd.s32 %s108, 1
    %p112 = scmp.eq.s32.totalorder %s32, 1
    %p113 = scmp.ne.s32.totalorder %s108, %s110
    %p114 = scmp.eq.s32.totalorder %s32, 0
    %p115 = por %p113, %p114
    %p116 = scmp.ne.s32.totalorder %s108, %s110
    %p117 = scmp.eq.s32.totalorder %s37, 1
    %p118 = por %p116, %p117
    %p119 = scmp.ne.s32.totalorder %s110, %s111
    %p120 = scmp.eq.s32.totalorder %s37, 0
    %p121 = por %p119, %p120
    %p122 = scmp.ne.s32.totalorder %s110, %s111
    %p123 = scmp.eq.s32.totalorder %s38, 1
    %p124 = por %p122, %p123
    %p126 = scmp.ne.s32.totalorder %s111, %s125
    %p127 = scmp.eq.s32.totalorder %s38, 0
    %p128 = por %p126, %p127
    %s130 = sadd.s32 %s129, 1
    %p133 = scmp.eq.s32.totalorder %s32, 1
    %p134 = scmp.ne.s32.totalorder %s129, %s131
    %p135 = scmp.eq.s32.totalorder %s32, 0
    %p136 = por %p134, %p135
    %p137 = scmp.ne.s32.totalorder %s129, %s131
    %p138 = scmp.eq.s32.totalorder %s37, 1
    %p139 = por %p137, %p138
    %p140 = scmp.ne.s32.totalorder %s131, %s132
    %p141 = scmp.eq.s32.totalorder %s37, 0
    %p142 = por %p140, %p141
    %p143 = scmp.ne.s32.totalorder %s131, %s132
    %p144 = scmp.eq.s32.totalorder %s38, 1
    %p145 = por %p143, %p144
    %p147 = scmp.ne.s32.totalorder %s132, %s146
    %p148 = scmp.eq.s32.totalorder %s38, 0
    %p149 = por %p147, %p148
    %s151 = sadd.s32 %s150, 1
    %p154 = scmp.eq.s32.totalorder %s32, 1
    %p155 = scmp.ne.s32.totalorder %s150, %s152
    %p156 = scmp.eq.s32.totalorder %s32, 0
    %p157 = por %p155, %p156
    %p158 = scmp.ne.s32.totalorder %s150, %s152
    %p159 = scmp.eq.s32.totalorder %s37, 1
    %p160 = por %p158, %p159
    %p161 = scmp.ne.s32.totalorder %s152, %s153
    %p162 = scmp.eq.s32.totalorder %s37, 0
    %p163 = por %p161, %p162
    %p164 = scmp.ne.s32.totalorder %s152, %s153
    %p165 = scmp.eq.s32.totalorder %s38, 1
    %p166 = por %p164, %p165
    %p168 = scmp.ne.s32.totalorder %s153, %s167
    %p169 = scmp.eq.s32.totalorder %s38, 0
    %p170 = por %p168, %p169
    %s172 = sadd.s32 %s171, 1
    %p175 = scmp.eq.s32.totalorder %s32, 1
    %p176 = scmp.ne.s32.totalorder %s171, %s173
    %p177 = scmp.eq.s32.totalorder %s32, 0
    %p178 = por %p176, %p177
    %p179 = scmp.ne.s32.totalorder %s171, %s173
    %p180 = scmp.eq.s32.totalorder %s37, 1
    %p181 = por %p179, %p180
    %p182 = scmp.ne.s32.totalorder %s173, %s174
    %p183 = scmp.eq.s32.totalorder %s37, 0
    %p184 = por %p182, %p183
    %p185 = scmp.ne.s32.totalorder %s173, %s174
    %p186 = scmp.eq.s32.totalorder %s38, 1
    %p187 = por %p185, %p186
    %p189 = scmp.ne.s32.totalorder %s174, %s188
    %p190 = scmp.eq.s32.totalorder %s38, 0
    %p191 = por %p189, %p190
    %s193 = sadd.s32 %s192, 1
    %p196 = scmp.eq.s32.totalorder %s32, 1
    %p197 = scmp.ne.s32.totalorder %s192, %s194
    %p198 = scmp.eq.s32.totalorder %s32, 0
    %p199 = por %p197, %p198
    %p200 = scmp.ne.s32.totalorder %s192, %s194
    %p201 = scmp.eq.s32.totalorder %s37, 1
    %p202 = por %p200, %p201
    %p203 = scmp.ne.s32.totalorder %s194, %s195
    %p204 = scmp.eq.s32.totalorder %s37, 0
    %p205 = por %p203, %p204
    %p206 = scmp.ne.s32.totalorder %s194, %s195
    %p207 = scmp.eq.s32.totalorder %s38, 1
    %p208 = por %p206, %p207
    %p210 = scmp.ne.s32.totalorder %s195, %s209
    %p211 = scmp.eq.s32.totalorder %s38, 0
    %p212 = por %p210, %p211
    %s214 = sadd.s32 %s213, 1
    %p217 = scmp.eq.s32.totalorder %s32, 1
    %p218 = scmp.ne.s32.totalorder %s213, %s215
    %p219 = scmp.eq.s32.totalorder %s32, 0
    %p220 = por %p218, %p219
    %p221 = scmp.ne.s32.totalorder %s213, %s215
    %p222 = scmp.eq.s32.totalorder %s37, 1
    %p223 = por %p221, %p222
    %p224 = scmp.ne.s32.totalorder %s215, %s216
    %p225 = scmp.eq.s32.totalorder %s37, 0
    %p226 = por %p224, %p225
    %p227 = scmp.ne.s32.totalorder %s215, %s216
    %p228 = scmp.eq.s32.totalorder %s38, 1
    %p229 = por %p227, %p228
    %p231 = scmp.ne.s32.totalorder %s216, %s230
    %p232 = scmp.eq.s32.totalorder %s38, 0
    %p233 = por %p231, %p232
    %s235 = sadd.s32 %s234, 1
    %p238 = scmp.eq.s32.totalorder %s32, 1
    %p239 = scmp.ne.s32.totalorder %s234, %s236
    %p240 = scmp.eq.s32.totalorder %s32, 0
    %p241 = por %p239, %p240
    %p242 = scmp.ne.s32.totalorder %s234, %s236
    %p243 = scmp.eq.s32.totalorder %s37, 1
    %p244 = por %p242, %p243
    %p245 = scmp.ne.s32.totalorder %s236, %s237
    %p246 = scmp.eq.s32.totalorder %s37, 0
    %p247 = por %p245, %p246
    %p248 = scmp.ne.s32.totalorder %s236, %s237
    %p249 = scmp.eq.s32.totalorder %s38, 1
    %p250 = por %p248, %p249
    %p252 = scmp.ne.s32.totalorder %s237, %s251
    %p253 = scmp.eq.s32.totalorder %s38, 0
    %p254 = por %p252, %p253
    %s256 = sadd.s32 %s255, 1
    %p259 = scmp.eq.s32.totalorder %s32, 1
    %p260 = scmp.ne.s32.totalorder %s255, %s257
    %p261 = scmp.eq.s32.totalorder %s32, 0
    %p262 = por %p260, %p261
    %p263 = scmp.ne.s32.totalorder %s255, %s257
    %p264 = scmp.eq.s32.totalorder %s37, 1
    %p265 = por %p263, %p264
    %p266 = scmp.ne.s32.totalorder %s257, %s258
    %p267 = scmp.eq.s32.totalorder %s37, 0
    %p268 = por %p266, %p267
    %p269 = scmp.ne.s32.totalorder %s257, %s258
    %p270 = scmp.eq.s32.totalorder %s38, 1
    %p271 = por %p269, %p270
    %p273 = scmp.ne.s32.totalorder %s258, %s272
    %p274 = scmp.eq.s32.totalorder %s38, 0
    %p275 = por %p273, %p274
    %s277 = sadd.s32 %s276, 1
    %p280 = scmp.eq.s32.totalorder %s32, 1
    %p281 = scmp.ne.s32.totalorder %s276, %s278
    %p282 = scmp.eq.s32.totalorder %s32, 0
    %p283 = por %p281, %p282
    %p284 = scmp.ne.s32.totalorder %s276, %s278
    %p285 = scmp.eq.s32.totalorder %s37, 1
    %p286 = por %p284, %p285
    %p287 = scmp.ne.s32.totalorder %s278, %s279
    %p288 = scmp.eq.s32.totalorder %s37, 0
    %p289 = por %p287, %p288
    %p290 = scmp.ne.s32.totalorder %s278, %s279
    %p291 = scmp.eq.s32.totalorder %s38, 1
    %p292 = por %p290, %p291
    %p294 = scmp.ne.s32.totalorder %s279, %s293
    %p295 = scmp.eq.s32.totalorder %s38, 0
    %p296 = por %p294, %p295
    %s298 = sadd.s32 %s297, 1
    %p301 = scmp.eq.s32.totalorder %s32, 1
    %p302 = scmp.ne.s32.totalorder %s297, %s299
    %p303 = scmp.eq.s32.totalorder %s32, 0
    %p304 = por %p302, %p303
    %p305 = scmp.ne.s32.totalorder %s297, %s299
    %p306 = scmp.eq.s32.totalorder %s37, 1
    %p307 = por %p305, %p306
    %p308 = scmp.ne.s32.totalorder %s299, %s300
    %p309 = scmp.eq.s32.totalorder %s37, 0
    %p310 = por %p308, %p309
    %p311 = scmp.ne.s32.totalorder %s299, %s300
    %p312 = scmp.eq.s32.totalorder %s38, 1
    %p313 = por %p311, %p312
    %p315 = scmp.ne.s32.totalorder %s300, %s314
    %p316 = scmp.eq.s32.totalorder %s38, 0
    %p317 = por %p315, %p316
    %s319 = sadd.s32 %s318, 1
    %p322 = scmp.eq.s32.totalorder %s32, 1
    %p323 = scmp.ne.s32.totalorder %s318, %s320
    %p324 = scmp.eq.s32.totalorder %s32, 0
    %p325 = por %p323, %p324
    %p326 = scmp.ne.s32.totalorder %s318, %s320
    %p327 = scmp.eq.s32.totalorder %s37, 1
    %p328 = por %p326, %p327
    %p329 = scmp.ne.s32.totalorder %s320, %s321
    %p330 = scmp.eq.s32.totalorder %s37, 0
    %p331 = por %p329, %p330
    %p332 = scmp.ne.s32.totalorder %s320, %s321
    %p333 = scmp.eq.s32.totalorder %s38, 1
    %p334 = por %p332, %p333
    %p336 = scmp.ne.s32.totalorder %s321, %s335
    %p337 = scmp.eq.s32.totalorder %s38, 0
    %p338 = por %p336, %p337
    %s340 = sadd.s32 %s339, 1
    %p343 = scmp.eq.s32.totalorder %s32, 1
    %p344 = scmp.ne.s32.totalorder %s339, %s341
    %p345 = scmp.eq.s32.totalorder %s32, 0
    %p346 = por %p344, %p345
    %p347 = scmp.ne.s32.totalorder %s339, %s341
    %p348 = scmp.eq.s32.totalorder %s37, 1
    %p349 = por %p347, %p348
    %p350 = scmp.ne.s32.totalorder %s341, %s342
    %p351 = scmp.eq.s32.totalorder %s37, 0
    %p352 = por %p350, %p351
    %p353 = scmp.ne.s32.totalorder %s341, %s342
    %p354 = scmp.eq.s32.totalorder %s38, 1
    %p355 = por %p353, %p354
    %p357 = scmp.ne.s32.totalorder %s342, %s356
    %p358 = scmp.eq.s32.totalorder %s38, 0
    %p359 = por %p357, %p358
    %s361 = sadd.s32 %s360, 1
    %p364 = scmp.eq.s32.totalorder %s32, 1
    %p365 = scmp.ne.s32.totalorder %s360, %s362
    %p366 = scmp.eq.s32.totalorder %s32, 0
    %p367 = por %p365, %p366
    %p368 = scmp.ne.s32.totalorder %s360, %s362
    %p369 = scmp.eq.s32.totalorder %s37, 1
    %p370 = por %p368, %p369
    %p371 = scmp.ne.s32.totalorder %s362, %s363
    %p372 = scmp.eq.s32.totalorder %s37, 0
    %p373 = por %p371, %p372
    %p374 = scmp.ne.s32.totalorder %s362, %s363
    %p375 = scmp.eq.s32.totalorder %s38, 1
    %p376 = por %p374, %p375
    %p378 = scmp.ne.s32.totalorder %s363, %s377
    %p379 = scmp.eq.s32.totalorder %s38, 0
    %p380 = por %p378, %p379
    %s382 = sadd.s32 %s381, 1
    %p385 = scmp.eq.s32.totalorder %s32, 1
    %p386 = scmp.ne.s32.totalorder %s381, %s383
    %p387 = scmp.eq.s32.totalorder %s32, 0
    %p388 = por %p386, %p387
    %p389 = scmp.ne.s32.totalorder %s381, %s383
    %p390 = scmp.eq.s32.totalorder %s37, 1
    %p391 = por %p389, %p390
    %p392 = scmp.ne.s32.totalorder %s383, %s384
    %p393 = scmp.eq.s32.totalorder %s37, 0
    %p394 = por %p392, %p393
    %p395 = scmp.ne.s32.totalorder %s383, %s384
    %p396 = scmp.eq.s32.totalorder %s38, 1
    %p397 = por %p395, %p396
    %p399 = scmp.ne.s32.totalorder %s384, %s398
    %p400 = scmp.eq.s32.totalorder %s38, 0
    %p401 = por %p399, %p400
    %s403 = sadd.s32 %s402, 1
    %p406 = scmp.eq.s32.totalorder %s32, 1
    %p407 = scmp.ne.s32.totalorder %s402, %s404
    %p408 = scmp.eq.s32.totalorder %s32, 0
    %p409 = por %p407, %p408
    %p410 = scmp.ne.s32.totalorder %s402, %s404
    %p411 = scmp.eq.s32.totalorder %s37, 1
    %p412 = por %p410, %p411
    %p413 = scmp.ne.s32.totalorder %s404, %s405
    %p414 = scmp.eq.s32.totalorder %s37, 0
    %p415 = por %p413, %p414
    %p416 = scmp.ne.s32.totalorder %s404, %s405
    %p417 = scmp.eq.s32.totalorder %s38, 1
    %p418 = por %p416, %p417
    %p420 = scmp.ne.s32.totalorder %s405, %s419
    %p421 = scmp.eq.s32.totalorder %s38, 0
    %p422 = por %p420, %p421
    %s424 = sadd.s32 %s423, 1
    %p427 = scmp.eq.s32.totalorder %s32, 1
    %p428 = scmp.ne.s32.totalorder %s423, %s425
    %p429 = scmp.eq.s32.totalorder %s32, 0
    %p430 = por %p428, %p429
    %p431 = scmp.ne.s32.totalorder %s423, %s425
    %p432 = scmp.eq.s32.totalorder %s37, 1
    %p433 = por %p431, %p432
    %p434 = scmp.ne.s32.totalorder %s425, %s426
    %p435 = scmp.eq.s32.totalorder %s37, 0
    %p436 = por %p434, %p435
    %p437 = scmp.ne.s32.totalorder %s425, %s426
    %p438 = scmp.eq.s32.totalorder %s38, 1
    %p439 = por %p437, %p438
    %p441 = scmp.ne.s32.totalorder %s426, %s440
    %p442 = scmp.eq.s32.totalorder %s38, 0
    %p443 = por %p441, %p442
    %s445 = sadd.s32 %s444, 1
    %p448 = scmp.eq.s32.totalorder %s32, 1
    %p449 = scmp.ne.s32.totalorder %s444, %s446
    %p450 = scmp.eq.s32.totalorder %s32, 0
    %p451 = por %p449, %p450
    %p452 = scmp.ne.s32.totalorder %s444, %s446
    %p453 = scmp.eq.s32.totalorder %s37, 1
    %p454 = por %p452, %p453
    %p455 = scmp.ne.s32.totalorder %s446, %s447
    %p456 = scmp.eq.s32.totalorder %s37, 0
    %p457 = por %p455, %p456
    %p458 = scmp.ne.s32.totalorder %s446, %s447
    %p459 = scmp.eq.s32.totalorder %s38, 1
    %p460 = por %p458, %p459
    %p462 = scmp.ne.s32.totalorder %s447, %s461
    %p463 = scmp.eq.s32.totalorder %s38, 0
    %p464 = por %p462, %p463
    %s466 = sadd.s32 %s465, 1
    %p469 = scmp.eq.s32.totalorder %s32, 1
    %p470 = scmp.ne.s32.totalorder %s465, %s467
    %p471 = scmp.eq.s32.totalorder %s32, 0
    %p472 = por %p470, %p471
    %p473 = scmp.ne.s32.totalorder %s465, %s467
    %p474 = scmp.eq.s32.totalorder %s37, 1
    %p475 = por %p473, %p474
    %p476 = scmp.ne.s32.totalorder %s467, %s468
    %p477 = scmp.eq.s32.totalorder %s37, 0
    %p478 = por %p476, %p477
    %p479 = scmp.ne.s32.totalorder %s467, %s468
    %p480 = scmp.eq.s32.totalorder %s38, 1
    %p481 = por %p479, %p480
    %p483 = scmp.ne.s32.totalorder %s468, %s482
    %p484 = scmp.eq.s32.totalorder %s38, 0
    %p485 = por %p483, %p484
    %s487 = sadd.s32 %s486, 1
    %p490 = scmp.eq.s32.totalorder %s32, 1
    %p491 = scmp.ne.s32.totalorder %s486, %s488
    %p492 = scmp.eq.s32.totalorder %s32, 0
    %p493 = por %p491, %p492
    %p494 = scmp.ne.s32.totalorder %s486, %s488
    %p495 = scmp.eq.s32.totalorder %s37, 1
    %p496 = por %p494, %p495
    %p497 = scmp.ne.s32.totalorder %s488, %s489
    %p498 = scmp.eq.s32.totalorder %s37, 0
    %p499 = por %p497, %p498
    %p500 = scmp.ne.s32.totalorder %s488, %s489
    %p501 = scmp.eq.s32.totalorder %s38, 1
    %p502 = por %p500, %p501
    %p504 = scmp.ne.s32.totalorder %s489, %s503
    %p505 = scmp.eq.s32.totalorder %s38, 0
    %p506 = por %p504, %p505
    %s508 = sadd.s32 %s507, 1
    %p511 = scmp.eq.s32.totalorder %s32, 1
    %p512 = scmp.ne.s32.totalorder %s507, %s509
    %p513 = scmp.eq.s32.totalorder %s32, 0
    %p514 = por %p512, %p513
    %p515 = scmp.ne.s32.totalorder %s507, %s509
    %p516 = scmp.eq.s32.totalorder %s37, 1
    %p517 = por %p515, %p516
    %p518 = scmp.ne.s32.totalorder %s509, %s510
    %p519 = scmp.eq.s32.totalorder %s37, 0
    %p520 = por %p518, %p519
    %p521 = scmp.ne.s32.totalorder %s509, %s510
    %p522 = scmp.eq.s32.totalorder %s38, 1
    %p523 = por %p521, %p522
    %p525 = scmp.ne.s32.totalorder %s510, %s524
    %p526 = scmp.eq.s32.totalorder %s38, 0
    %p527 = por %p525, %p526
    %s529 = sadd.s32 %s528, 1
    %p532 = scmp.eq.s32.totalorder %s32, 1
    %p533 = scmp.ne.s32.totalorder %s528, %s530
    %p534 = scmp.eq.s32.totalorder %s32, 0
    %p535 = por %p533, %p534
    %p536 = scmp.ne.s32.totalorder %s528, %s530
    %p537 = scmp.eq.s32.totalorder %s37, 1
    %p538 = por %p536, %p537
    %p539 = scmp.ne.s32.totalorder %s530, %s531
    %p540 = scmp.eq.s32.totalorder %s37, 0
    %p541 = por %p539, %p540
    %p542 = scmp.ne.s32.totalorder %s530, %s531
    %p543 = scmp.eq.s32.totalorder %s38, 1
    %p544 = por %p542, %p543
    %p546 = scmp.ne.s32.totalorder %s531, %s545
    %p547 = scmp.eq.s32.totalorder %s38, 0
    %p548 = por %p546, %p547
    %s550 = sadd.s32 %s549, 1
    %p553 = scmp.eq.s32.totalorder %s32, 1
    %p554 = scmp.ne.s32.totalorder %s549, %s551
    %p555 = scmp.eq.s32.totalorder %s32, 0
    %p556 = por %p554, %p555
    %p557 = scmp.ne.s32.totalorder %s549, %s551
    %p558 = scmp.eq.s32.totalorder %s37, 1
    %p559 = por %p557, %p558
    %p560 = scmp.ne.s32.totalorder %s551, %s552
    %p561 = scmp.eq.s32.totalorder %s37, 0
    %p562 = por %p560, %p561
    %p563 = scmp.ne.s32.totalorder %s551, %s552
    %p564 = scmp.eq.s32.totalorder %s38, 1
    %p565 = por %p563, %p564
    %p567 = scmp.ne.s32.totalorder %s552, %s566
    %p568 = scmp.eq.s32.totalorder %s38, 0
    %p569 = por %p567, %p568
    %s571 = sadd.s32 %s570, 1
    %p574 = scmp.eq.s32.totalorder %s32, 1
    %p575 = scmp.ne.s32.totalorder %s570, %s572
    %p576 = scmp.eq.s32.totalorder %s32, 0
    %p577 = por %p575, %p576
    %p578 = scmp.ne.s32.totalorder %s570, %s572
    %p579 = scmp.eq.s32.totalorder %s37, 1
    %p580 = por %p578, %p579
    %p581 = scmp.ne.s32.totalorder %s572, %s573
    %p582 = scmp.eq.s32.totalorder %s37, 0
    %p583 = por %p581, %p582
    %p584 = scmp.ne.s32.totalorder %s572, %s573
    %p585 = scmp.eq.s32.totalorder %s38, 1
    %p586 = por %p584, %p585
    %p588 = scmp.ne.s32.totalorder %s573, %s587
    %p589 = scmp.eq.s32.totalorder %s38, 0
    %p590 = por %p588, %p589
    %s591 = ssub.s32 %s32, %s39
    %p592 = scmp.eq.s32.totalorder %s591, 0
    %s594 = sadd.s32 %s593, 1
    %s595 = scalar_select %p592, %s593, %s594
    %p598 = pneg %p592
    %p599 = scmp.eq.s32.totalorder %s32, 1
    %p600 = por %p598, %p599
    %p601 = scmp.ne.s32.totalorder %s593, %s596
    %p602 = scmp.eq.s32.totalorder %s32, 0
    %p603 = por %p601, %p602
    %p604 = scmp.ne.s32.totalorder %s593, %s596
    %p605 = scmp.eq.s32.totalorder %s37, 1
    %p606 = por %p604, %p605
    %p607 = scmp.ne.s32.totalorder %s596, %s597
    %p608 = scmp.eq.s32.totalorder %s37, 0
    %p609 = por %p607, %p608
    %p610 = scmp.ne.s32.totalorder %s596, %s597
    %p611 = scmp.eq.s32.totalorder %s38, 1
    %p612 = por %p610, %p611
    %p614 = scmp.ne.s32.totalorder %s597, %s613
    %p615 = scmp.eq.s32.totalorder %s38, 0
    %p616 = por %p614, %p615
    %p617 = scmp.le.s32.totalorder 1, %s32
    %p618 = scmp.lt.s32.totalorder %s32, 3
    %p619 = pnand %p617, %p618
    %p620 = pneg %p619
    // Predicated region
    $region9: #{lux_net_forward.1} parent=5 // pred_check
      _
    $region10: #{lux_net_forward.1} parent=5 // pred_check_branch
      %622 = sbr.rel (%p619) target = $region12
    $region11: #{lux_net_forward.1} parent=5 // pred_region
      %s623 = ssub.s32 %s32, 1
      // Predicated region
      $region13: #{lux_net_forward.1} parent=11 // pred_check
        %p624 = pneg %p79
      $region14: #{lux_net_forward.1} parent=11 // pred_check_branch
        %626 = sbr.rel (%p624) target = $region16
      $region15: #{lux_net_forward.1} parent=11 // pred_region
        _
      $region16: #{lux_net_forward.1} parent=11 // pred_fallthru
        _
      // Predicated region
      $region17: #{lux_net_forward.1} parent=11 // pred_check
        %p627 = pneg %p100
      $region18: #{lux_net_forward.1} parent=11 // pred_check_branch
        %629 = sbr.rel (%p627) target = $region20
      $region19: #{lux_net_forward.1} parent=11 // pred_region
        _
      $region20: #{lux_net_forward.1} parent=11 // pred_fallthru
        _
      // Predicated region
      $region21: #{lux_net_forward.1} parent=11 // pred_check
        %p630 = pneg %p121
      $region22: #{lux_net_forward.1} parent=11 // pred_check_branch
        %632 = sbr.rel (%p630) target = $region24
      $region23: #{lux_net_forward.1} parent=11 // pred_region
        _
      $region24: #{lux_net_forward.1} parent=11 // pred_fallthru
        _
      // Predicated region
      $region25: #{lux_net_forward.1} parent=11 // pred_check
        %p633 = pneg %p142
      $region26: #{lux_net_forward.1} parent=11 // pred_check_branch
        %635 = sbr.rel (%p633) target = $region28
      $region27: #{lux_net_forward.1} parent=11 // pred_region
        _
      $region28: #{lux_net_forward.1} parent=11 // pred_fallthru
        _
      // Predicated region
      $region29: #{lux_net_forward.1} parent=11 // pred_check
        %p636 = pneg %p163
      $region30: #{lux_net_forward.1} parent=11 // pred_check_branch
        %638 = sbr.rel (%p636) target = $region32
      $region31: #{lux_net_forward.1} parent=11 // pred_region
        _
      $region32: #{lux_net_forward.1} parent=11 // pred_fallthru
        _
      // Predicated region
      $region33: #{lux_net_forward.1} parent=11 // pred_check
        %p639 = pneg %p184
      $region34: #{lux_net_forward.1} parent=11 // pred_check_branch
        %641 = sbr.rel (%p639) target = $region36
      $region35: #{lux_net_forward.1} parent=11 // pred_region
        _
      $region36: #{lux_net_forward.1} parent=11 // pred_fallthru
        _
      // Predicated region
      $region37: #{lux_net_forward.1} parent=11 // pred_check
        %p642 = pneg %p205
      $region38: #{lux_net_forward.1} parent=11 // pred_check_branch
        %644 = sbr.rel (%p642) target = $region40
      $region39: #{lux_net_forward.1} parent=11 // pred_region
        _
      $region40: #{lux_net_forward.1} parent=11 // pred_fallthru
        _
      // Predicated region
      $region41: #{lux_net_forward.1} parent=11 // pred_check
        %p645 = pneg %p226
      $region42: #{lux_net_forward.1} parent=11 // pred_check_branch
        %647 = sbr.rel (%p645) target = $region44
      $region43: #{lux_net_forward.1} parent=11 // pred_region
        _
      $region44: #{lux_net_forward.1} parent=11 // pred_fallthru
        _
      // Predicated region
      $region45: #{lux_net_forward.1} parent=11 // pred_check
        %p648 = pneg %p247
      $region46: #{lux_net_forward.1} parent=11 // pred_check_branch
        %650 = sbr.rel (%p648) target = $region48
      $region47: #{lux_net_forward.1} parent=11 // pred_region
        _
      $region48: #{lux_net_forward.1} parent=11 // pred_fallthru
        _
      // Predicated region
      $region49: #{lux_net_forward.1} parent=11 // pred_check
        %p651 = pneg %p268
      $region50: #{lux_net_forward.1} parent=11 // pred_check_branch
        %653 = sbr.rel (%p651) target = $region52
      $region51: #{lux_net_forward.1} parent=11 // pred_region
        _
      $region52: #{lux_net_forward.1} parent=11 // pred_fallthru
        _
      // Predicated region
      $region53: #{lux_net_forward.1} parent=11 // pred_check
        %p654 = pneg %p289
      $region54: #{lux_net_forward.1} parent=11 // pred_check_branch
        %656 = sbr.rel (%p654) target = $region56
      $region55: #{lux_net_forward.1} parent=11 // pred_region
        _
      $region56: #{lux_net_forward.1} parent=11 // pred_fallthru
        _
      // Predicated region
      $region57: #{lux_net_forward.1} parent=11 // pred_check
        %p657 = pneg %p310
      $region58: #{lux_net_forward.1} parent=11 // pred_check_branch
        %659 = sbr.rel (%p657) target = $region60
      $region59: #{lux_net_forward.1} parent=11 // pred_region
        _
      $region60: #{lux_net_forward.1} parent=11 // pred_fallthru
        _
      // Predicated region
      $region61: #{lux_net_forward.1} parent=11 // pred_check
        %p660 = pneg %p331
      $region62: #{lux_net_forward.1} parent=11 // pred_check_branch
        %662 = sbr.rel (%p660) target = $region64
      $region63: #{lux_net_forward.1} parent=11 // pred_region
        _
      $region64: #{lux_net_forward.1} parent=11 // pred_fallthru
        _
      // Predicated region
      $region65: #{lux_net_forward.1} parent=11 // pred_check
        %p663 = pneg %p352
      $region66: #{lux_net_forward.1} parent=11 // pred_check_branch
        %665 = sbr.rel (%p663) target = $region68
      $region67: #{lux_net_forward.1} parent=11 // pred_region
        _
      $region68: #{lux_net_forward.1} parent=11 // pred_fallthru
        _
      // Predicated region
      $region69: #{lux_net_forward.1} parent=11 // pred_check
        %p666 = pneg %p373
      $region70: #{lux_net_forward.1} parent=11 // pred_check_branch
        %668 = sbr.rel (%p666) target = $region72
      $region71: #{lux_net_forward.1} parent=11 // pred_region
        _
      $region72: #{lux_net_forward.1} parent=11 // pred_fallthru
        _
      // Predicated region
      $region73: #{lux_net_forward.1} parent=11 // pred_check
        %p669 = pneg %p394
      $region74: #{lux_net_forward.1} parent=11 // pred_check_branch
        %671 = sbr.rel (%p669) target = $region76
      $region75: #{lux_net_forward.1} parent=11 // pred_region
        _
      $region76: #{lux_net_forward.1} parent=11 // pred_fallthru
        _
      // Predicated region
      $region77: #{lux_net_forward.1} parent=11 // pred_check
        %p672 = pneg %p415
      $region78: #{lux_net_forward.1} parent=11 // pred_check_branch
        %674 = sbr.rel (%p672) target = $region80
      $region79: #{lux_net_forward.1} parent=11 // pred_region
        _
      $region80: #{lux_net_forward.1} parent=11 // pred_fallthru
        _
      // Predicated region
      $region81: #{lux_net_forward.1} parent=11 // pred_check
        %p675 = pneg %p436
      $region82: #{lux_net_forward.1} parent=11 // pred_check_branch
        %677 = sbr.rel (%p675) target = $region84
      $region83: #{lux_net_forward.1} parent=11 // pred_region
        _
      $region84: #{lux_net_forward.1} parent=11 // pred_fallthru
        _
      // Predicated region
      $region85: #{lux_net_forward.1} parent=11 // pred_check
        %p678 = pneg %p457
      $region86: #{lux_net_forward.1} parent=11 // pred_check_branch
        %680 = sbr.rel (%p678) target = $region88
      $region87: #{lux_net_forward.1} parent=11 // pred_region
        _
      $region88: #{lux_net_forward.1} parent=11 // pred_fallthru
        _
      // Predicated region
      $region89: #{lux_net_forward.1} parent=11 // pred_check
        %p681 = pneg %p478
      $region90: #{lux_net_forward.1} parent=11 // pred_check_branch
        %683 = sbr.rel (%p681) target = $region92
      $region91: #{lux_net_forward.1} parent=11 // pred_region
        _
      $region92: #{lux_net_forward.1} parent=11 // pred_fallthru
        _
      // Predicated region
      $region93: #{lux_net_forward.1} parent=11 // pred_check
        %p684 = pneg %p499
      $region94: #{lux_net_forward.1} parent=11 // pred_check_branch
        %686 = sbr.rel (%p684) target = $region96
      $region95: #{lux_net_forward.1} parent=11 // pred_region
        _
      $region96: #{lux_net_forward.1} parent=11 // pred_fallthru
        _
      // Predicated region
      $region97: #{lux_net_forward.1} parent=11 // pred_check
        %p687 = pneg %p520
      $region98: #{lux_net_forward.1} parent=11 // pred_check_branch
        %689 = sbr.rel (%p687) target = $region100
      $region99: #{lux_net_forward.1} parent=11 // pred_region
        _
      $region100: #{lux_net_forward.1} parent=11 // pred_fallthru
        _
      // Predicated region
      $region101: #{lux_net_forward.1} parent=11 // pred_check
        %p690 = pneg %p541
      $region102: #{lux_net_forward.1} parent=11 // pred_check_branch
        %692 = sbr.rel (%p690) target = $region104
      $region103: #{lux_net_forward.1} parent=11 // pred_region
        _
      $region104: #{lux_net_forward.1} parent=11 // pred_fallthru
        _
      // Predicated region
      $region105: #{lux_net_forward.1} parent=11 // pred_check
        %p693 = pneg %p562
      $region106: #{lux_net_forward.1} parent=11 // pred_check_branch
        %695 = sbr.rel (%p693) target = $region108
      $region107: #{lux_net_forward.1} parent=11 // pred_region
        _
      $region108: #{lux_net_forward.1} parent=11 // pred_fallthru
        _
      // Predicated region
      $region109: #{lux_net_forward.1} parent=11 // pred_check
        %p696 = pneg %p583
      $region110: #{lux_net_forward.1} parent=11 // pred_check_branch
        %698 = sbr.rel (%p696) target = $region112
      $region111: #{lux_net_forward.1} parent=11 // pred_region
        _
      $region112: #{lux_net_forward.1} parent=11 // pred_fallthru
        _
    $region12: #{lux_net_forward.1} parent=5 // pred_fallthru
      _
    %p699 = scmp.lt.s32.totalorder %s32, 2
    // Predicated region
    $region113: #{lux_net_forward.1} parent=5 // pred_check
      %p700 = pneg %p699
    $region114: #{lux_net_forward.1} parent=5 // pred_check_branch
      %702 = sbr.rel (%p700) target = $region116
    $region115: #{lux_net_forward.1} parent=5 // pred_region
      // Predicated region
      $region117: #{lux_net_forward.1} parent=115 // pred_check
        %p703 = pneg %p52
      $region118: #{lux_net_forward.1} parent=115 // pred_check_branch
        %705 = sbr.rel (%p703) target = $region120
      $region119: #{lux_net_forward.1} parent=115 // pred_region
        %p706 = scmp.lt.s32.totalorder %s32, 1
        %s707 = scalar_select %p706, %s32, 1
        %s708 = smul.addr %s707, 8
        %s709 = smul.addr %s708, 8
        %s710 = scalar_lea.vmem %s0, %s709
      $region120: #{lux_net_forward.1} parent=115 // pred_fallthru
        _
    $region116: #{lux_net_forward.1} parent=5 // pred_fallthru
      _
    %p711 = scmp.le.s32.totalorder 1, %s32
    %p712 = scmp.lt.s32.totalorder %s32, 3
    %p713 = pnand %p711, %p712
    %p714 = pneg %p713
    // Predicated region
    $region121: #{lux_net_forward.1} parent=5 // pred_check
      _
    $region122: #{lux_net_forward.1} parent=5 // pred_check_branch
      %716 = sbr.rel (%p713) target = $region124
    $region123: #{lux_net_forward.1} parent=5 // pred_region
      %s717 = ssub.s32 %s32, 1
      %p718 = scmp.lt.s32.totalorder %s37, 1
      %s719 = scalar_select %p718, %s37, 1
      %s720 = smul.addr %s719, 8
      %s721 = smul.addr %s720, 8
      %s722 = scalar_lea.vmem %s0, %s721
      %p723 = pneg %p58
      %p724 = pneg %p55
      %p725 = pneg %p79
      %p726 = pneg %p76
      %p727 = pneg %p100
      %p728 = pneg %p97
      %p729 = pneg %p121
      %p730 = pneg %p118
      %p731 = pneg %p142
      %p732 = pneg %p139
      %p733 = pneg %p163
      %p734 = pneg %p160
      %p735 = pneg %p184
      %p736 = pneg %p181
      %p737 = pneg %p205
      %p738 = pneg %p202
      %p739 = pneg %p226
      %p740 = pneg %p223
      %p741 = pneg %p247
      %p742 = pneg %p244
      %p743 = pneg %p268
      %p744 = pneg %p265
      %p745 = pneg %p289
      %p746 = pneg %p286
      %p747 = pneg %p310
      %p748 = pneg %p307
      %p749 = pneg %p331
      %p750 = pneg %p328
      %p751 = pneg %p352
      %p752 = pneg %p349
      %p753 = pneg %p373
      %p754 = pneg %p370
      %p755 = pneg %p394
      %p756 = pneg %p391
      %p757 = pneg %p415
      %p758 = pneg %p412
      %p759 = pneg %p436
      %p760 = pneg %p433
      %p761 = pneg %p457
      %p762 = pneg %p454
      %p763 = pneg %p478
      %p764 = pneg %p475
      %p765 = pneg %p499
      %p766 = pneg %p496
      %p767 = pneg %p520
      %p768 = pneg %p517
      %p769 = pneg %p541
      %p770 = pneg %p538
      %p771 = pneg %p562
      %p772 = pneg %p559
      %p773 = pneg %p583
      %p774 = pneg %p580
      %p775 = pneg %p609
      %p776 = pneg %p606
      %p777 = scmp.lt.s32.totalorder %s37, 1
      %s778 = scalar_select %p777, %s37, 1
      %s779 = smul.addr %s778, 8
      %s780 = scalar_lea.vmem %s26, %s779
      %p781 = scmp.lt.s32.totalorder %s37, 1
      %s782 = scalar_select %p781, %s37, 1
      %s783 = smul.addr %s782, 8
      %s784 = smul.addr %s783, 8
      %s785 = scalar_lea.vmem %s0, %s784
      %p786 = scmp.lt.s32.totalorder %s37, 1
      %s787 = scalar_select %p786, %s37, 1
      %s788 = smul.addr %s787, 8
      %s789 = scalar_lea.vmem %s26, %s788
      %791 = vst [vmem:[#allocation2] sm:$0xf] 0
      %792 = vst [vmem:[#allocation2 + $0x10] sm:$0xf] 0
      %793 = vst [vmem:[#allocation2 + $0x20] sm:$0xf] 0
      %794 = vst [vmem:[#allocation2 + $0x30] sm:$0xf] 0
      %795 = vst [vmem:[#allocation2 + $0xc] sm:$0xf] 0
      %796 = vst [vmem:[#allocation2 + $0x1c] sm:$0xf] 0
      %797 = vst [vmem:[#allocation2 + $0x2c] sm:$0xf] 0
      %798 = vst [vmem:[#allocation2 + $0x3c] sm:$0xf] 0
      %v799 = vld [vmem:[%s785] sm:$0xff]
      %v800 = vld [vmem:[%s785 + $0x8] sm:$0xff]
      %v801 = vld [vmem:[%s785 + $0x10] sm:$0xff]
      %v802 = vld [vmem:[%s785 + $0x18] sm:$0xff]
      %v803 = vld [vmem:[%s785 + $0x20] sm:$0xff]
      %v804 = vld [vmem:[%s785 + $0x28] sm:$0xff]
      %v805 = vld [vmem:[%s785 + $0x30] sm:$0xff]
      %v806 = vld [vmem:[%s785 + $0x38] sm:$0xff]
      %v807 = vpack.c.bf16 %v800, %v799
      %v808 = vpack.c.bf16 %v802, %v801
      %v809 = vpack.c.bf16 %v804, %v803
      %v810 = vpack.c.bf16 %v806, %v805
      %811 = vst [vmem:[#allocation2 + $0x4] sm:$0xff] %v807
      %812 = vst [vmem:[#allocation2 + $0x14] sm:$0xff] %v808
      %813 = vst [vmem:[#allocation2 + $0x24] sm:$0xff] %v809
      %814 = vst [vmem:[#allocation2 + $0x34] sm:$0xff] %v810
      %v815 = vld [vmem:[#allocation2] sm:$0xff]
      %v816 = vld [vmem:[#allocation2 + $0x8] sm:$0xff]
      %v817 = vld [vmem:[#allocation2 + $0x10] sm:$0xff]
      %v818 = vld [vmem:[#allocation2 + $0x18] sm:$0xff]
      %v819 = vld [vmem:[#allocation2 + $0x20] sm:$0xff]
      %v820 = vld [vmem:[#allocation2 + $0x28] sm:$0xff]
      %v821 = vld [vmem:[#allocation2 + $0x30] sm:$0xff]
      %v822 = vld [vmem:[#allocation2 + $0x38] sm:$0xff]
      %v823 = vld [vmem:[%s1] sm:$0x11]
      %v825 = vunpack.c.l.b16 %v823
      %v826 = vunpack.c.h.b16 %v823
      %v827 = vpack.c.b16 %v825, %v825
      %v828 = vpack.c.b16 %v826, %v826
      %v830 = vshrl.u32 %v827, 16
      %v831 = vpack.i.b16 %v830, %v830
      %v833 = vperm.slane %v831, 0
      %v835 = vshrl.u32 %v828, 16
      %v836 = vpack.i.b16 %v835, %v835
      %v838 = vperm.slane %v836, 0
      %v839 = vunpack.c.l.bf16 %v815
      %v840 = vunpack.c.h.bf16 %v815
      %v841 = vunpack.c.l.bf16 %v816
      %v842 = vunpack.c.l.bf16 %v817
      %v843 = vunpack.c.h.bf16 %v817
      %v844 = vunpack.c.l.bf16 %v818
      %v845 = vunpack.c.l.bf16 %v819
      %v846 = vunpack.c.h.bf16 %v819
      %v847 = vunpack.c.l.bf16 %v820
      %v848 = vunpack.c.l.bf16 %v821
      %v849 = vunpack.c.h.bf16 %v821
      %v850 = vunpack.c.l.bf16 %v822
      %v851 = vunpack.c.l.bf16 %v833
      %v852 = vunpack.c.l.bf16 %v838
      %855 = vrot.lane.b32.xlu0 %v851, 111
      %v856 = vpop.permute.xlu0 %855
      %857 = vrot.lane.b32.xlu0 %v852, 111
      %v858 = vpop.permute.xlu0 %857
      %vm859 = vcmask 908288
      %v860 = vsel %vm859, %v856, %v858
      %v864 = vmul.f32 %v839, %v856
      %v865 = vmul.f32 %v840, %v860
      %v866 = vmul.f32 %v841, %v858
      %v867 = vmul.f32 %v842, %v856
      %v868 = vmul.f32 %v843, %v860
      %v869 = vmul.f32 %v844, %v858
      %v870 = vmul.f32 %v845, %v856
      %v871 = vmul.f32 %v846, %v860
      %v872 = vmul.f32 %v847, %v858
      %v873 = vmul.f32 %v848, %v856
      %v874 = vmul.f32 %v849, %v860
      %v875 = vmul.f32 %v850, %v858
      %v876 = vpack.c.bf16 %v865, %v864
      %v877 = vpack.c.bf16 %v866, %v866
      %v878 = vpack.c.bf16 %v868, %v867
      %v879 = vpack.c.bf16 %v869, %v869
      %v880 = vpack.c.bf16 %v871, %v870
      %v881 = vpack.c.bf16 %v872, %v872
      %v882 = vpack.c.bf16 %v874, %v873
      %v883 = vpack.c.bf16 %v875, %v875
      %892 = vrot.lane.b32.xlu0 %v876, 17
      %v893 = vpop.permute.xlu0 %892
      %894 = vrot.lane.b32.xlu0 %v877, 17
      %v895 = vpop.permute.xlu0 %894
      %896 = vrot.lane.b32.xlu0 %v878, 17
      %v897 = vpop.permute.xlu0 %896
      %898 = vrot.lane.b32.xlu0 %v879, 17
      %v899 = vpop.permute.xlu0 %898
      %900 = vrot.lane.b32.xlu0 %v880, 17
      %v901 = vpop.permute.xlu0 %900
      %902 = vrot.lane.b32.xlu0 %v881, 17
      %v903 = vpop.permute.xlu0 %902
      %904 = vrot.lane.b32.xlu0 %v882, 17
      %v905 = vpop.permute.xlu0 %904
      %906 = vrot.lane.b32.xlu0 %v883, 17
      %v907 = vpop.permute.xlu0 %906
      %v908 = vrot.slane %v893, 4
      %v909 = vrot.slane %v895, 4
      %v910 = vrot.slane %v897, 4
      %v911 = vrot.slane %v899, 4
      %v912 = vrot.slane %v901, 4
      %v913 = vrot.slane %v903, 4
      %v914 = vrot.slane %v905, 4
      %v915 = vrot.slane %v907, 4
      %vm916 = vcmask 1043456
      %v917 = vsel %vm916, %v908, %v909
      %vm918 = vcmask 138240
      %v919 = vsel %vm918, %v893, %v917
      %v920 = vsel %vm916, %v910, %v911
      %v921 = vsel %vm918, %v897, %v920
      %v922 = vsel %vm916, %v912, %v913
      %v923 = vsel %vm918, %v901, %v922
      %v924 = vsel %vm916, %v914, %v915
      %v925 = vsel %vm918, %v905, %v924
      %930 = vst [vmem:[#allocation3] sm:$0xff] %v919
      %931 = vst [vmem:[#allocation3 + $0x8] sm:$0xff] %v921
      %932 = vst [vmem:[#allocation3 + $0x10] sm:$0xff] %v923
      %933 = vst [vmem:[#allocation3 + $0x18] sm:$0xff] %v925
      %942 = vrot.lane.b32.xlu0 %v815, 16
      %v943 = vpop.permute.xlu0 %942
      %944 = vrot.lane.b32.xlu0 %v816, 16
      %v945 = vpop.permute.xlu0 %944
      %946 = vrot.lane.b32.xlu0 %v817, 16
      %v947 = vpop.permute.xlu0 %946
      %948 = vrot.lane.b32.xlu0 %v818, 16
      %v949 = vpop.permute.xlu0 %948
      %950 = vrot.lane.b32.xlu0 %v819, 16
      %v951 = vpop.permute.xlu0 %950
      %952 = vrot.lane.b32.xlu0 %v820, 16
      %v953 = vpop.permute.xlu0 %952
      %954 = vrot.lane.b32.xlu0 %v821, 16
      %v955 = vpop.permute.xlu0 %954
      %956 = vrot.lane.b32.xlu0 %v822, 16
      %v957 = vpop.permute.xlu0 %956
      %v958 = vrot.slane %v943, 4
      %v959 = vrot.slane %v945, 4
      %v960 = vrot.slane %v947, 4
      %v961 = vrot.slane %v949, 4
      %v962 = vrot.slane %v951, 4
      %v963 = vrot.slane %v953, 4
      %v964 = vrot.slane %v955, 4
      %v965 = vrot.slane %v957, 4
      %v966 = vsel %vm916, %v958, %v959
      %vm967 = vcmask 130048
      %v968 = vsel %vm967, %v943, %v966
      %v969 = vsel %vm916, %v960, %v961
      %v970 = vsel %vm967, %v947, %v969
      %v971 = vsel %vm916, %v962, %v963
      %v972 = vsel %vm967, %v951, %v971
      %v973 = vsel %vm916, %v964, %v965
      %v974 = vsel %vm967, %v955, %v973
      %979 = vst [vmem:[#allocation3 + $0x20] sm:$0xff] %v968
      %980 = vst [vmem:[#allocation3 + $0x28] sm:$0xff] %v970
      %981 = vst [vmem:[#allocation3 + $0x30] sm:$0xff] %v972
      %982 = vst [vmem:[#allocation3 + $0x38] sm:$0xff] %v974
      %v983 = vld [vmem:[%s1] sm:$0x22]
      %v985 = vunpack.c.l.b16 %v983
      %v986 = vunpack.c.h.b16 %v983
      %v987 = vpack.c.b16 %v985, %v985
      %v988 = vpack.c.b16 %v986, %v986
      %v990 = vshrl.u32 %v987, 16
      %v991 = vpack.i.b16 %v990, %v990
      %v993 = vperm.slane %v991, 1
      %v995 = vshrl.u32 %v988, 16
      %v996 = vpack.i.b16 %v995, %v995
      %v998 = vperm.slane %v996, 1
      %v999 = vunpack.c.l.bf16 %v993
      %v1000 = vunpack.c.l.bf16 %v998
      %1003 = vrot.lane.b32.xlu0 %v999, 113
      %v1004 = vpop.permute.xlu0 %1003
      %1005 = vrot.lane.b32.xlu0 %v1000, 113
      %v1006 = vpop.permute.xlu0 %1005
      %vm1007 = vcmask 924672
      %v1008 = vsel %vm1007, %v1004, %v1006
      %v1012 = vmul.f32 %v839, %v1004
      %v1013 = vmul.f32 %v840, %v1008
      %v1014 = vmul.f32 %v841, %v1006
      %v1015 = vmul.f32 %v842, %v1004
      %v1016 = vmul.f32 %v843, %v1008
      %v1017 = vmul.f32 %v844, %v1006
      %v1018 = vmul.f32 %v845, %v1004
      %v1019 = vmul.f32 %v846, %v1008
      %v1020 = vmul.f32 %v847, %v1006
      %v1021 = vmul.f32 %v848, %v1004
      %v1022 = vmul.f32 %v849, %v1008
      %v1023 = vmul.f32 %v850, %v1006
      %v1024 = vpack.c.bf16 %v1013, %v1012
      %v1025 = vpack.c.bf16 %v1014, %v1014
      %v1026 = vpack.c.bf16 %v1016, %v1015
      %v1027 = vpack.c.bf16 %v1017, %v1017
      %v1028 = vpack.c.bf16 %v1019, %v1018
      %v1029 = vpack.c.bf16 %v1020, %v1020
      %v1030 = vpack.c.bf16 %v1022, %v1021
      %v1031 = vpack.c.bf16 %v1023, %v1023
      %1040 = vrot.lane.b32.xlu0 %v1024, 15
      %v1041 = vpop.permute.xlu0 %1040
      %1042 = vrot.lane.b32.xlu0 %v1025, 15
      %v1043 = vpop.permute.xlu0 %1042
      %1044 = vrot.lane.b32.xlu0 %v1026, 15
      %v1045 = vpop.permute.xlu0 %1044
      %1046 = vrot.lane.b32.xlu0 %v1027, 15
      %v1047 = vpop.permute.xlu0 %1046
      %1048 = vrot.lane.b32.xlu0 %v1028, 15
      %v1049 = vpop.permute.xlu0 %1048
      %1050 = vrot.lane.b32.xlu0 %v1029, 15
      %v1051 = vpop.permute.xlu0 %1050
      %1052 = vrot.lane.b32.xlu0 %v1030, 15
      %v1053 = vpop.permute.xlu0 %1052
      %1054 = vrot.lane.b32.xlu0 %v1031, 15
      %v1055 = vpop.permute.xlu0 %1054
      %v1056 = vrot.slane %v1041, 4
      %v1057 = vrot.slane %v1043, 4
      %v1058 = vrot.slane %v1045, 4
      %v1059 = vrot.slane %v1047, 4
      %v1060 = vrot.slane %v1049, 4
      %v1061 = vrot.slane %v1051, 4
      %v1062 = vrot.slane %v1053, 4
      %v1063 = vrot.slane %v1055, 4
      %v1064 = vsel %vm916, %v1056, %v1057
      %vm1065 = vcmask 121856
      %v1066 = vsel %vm1065, %v1041, %v1064
      %v1067 = vsel %vm916, %v1058, %v1059
      %v1068 = vsel %vm1065, %v1045, %v1067
      %v1069 = vsel %vm916, %v1060, %v1061
      %v1070 = vsel %vm1065, %v1049, %v1069
      %v1071 = vsel %vm916, %v1062, %v1063
      %v1072 = vsel %vm1065, %v1053, %v1071
      %1077 = vst [vmem:[#allocation3 + $0x40] sm:$0xff] %v1066
      %1078 = vst [vmem:[#allocation3 + $0x48] sm:$0xff] %v1068
      %1079 = vst [vmem:[#allocation3 + $0x50] sm:$0xff] %v1070
      %1080 = vst [vmem:[#allocation3 + $0x58] sm:$0xff] %v1072
      %v1081 = vld [vmem:[%s1] sm:$0x11]
      %v1083 = vunpack.c.l.b16 %v1081
      %v1084 = vunpack.c.h.b16 %v1081
      %v1085 = vpack.c.b16 %v1083, %v1083
      %v1086 = vpack.c.b16 %v1084, %v1084
      %v1088 = vshrl.u32 %v1085, 16
      %v1089 = vpack.i.b16 %v1088, %v1088
      %v1091 = vperm.slane %v1089, 0
      %v1093 = vshrl.u32 %v1086, 16
      %v1094 = vpack.i.b16 %v1093, %v1093
      %v1096 = vperm.slane %v1094, 0
      %v1097 = vunpack.c.l.bf16 %v1091
      %v1098 = vunpack.c.l.bf16 %v1096
      %1101 = vrot.lane.b32.xlu0 %v1097, 127
      %v1102 = vpop.permute.xlu0 %1101
      %1103 = vrot.lane.b32.xlu0 %v1098, 127
      %v1104 = vpop.permute.xlu0 %1103
      %vm1105 = vcmask 1039360
      %v1106 = vsel %vm1105, %v1102, %v1104
      %v1110 = vmul.f32 %v839, %v1102
      %v1111 = vmul.f32 %v840, %v1106
      %v1112 = vmul.f32 %v841, %v1104
      %v1113 = vmul.f32 %v842, %v1102
      %v1114 = vmul.f32 %v843, %v1106
      %v1115 = vmul.f32 %v844, %v1104
      %v1116 = vmul.f32 %v845, %v1102
      %v1117 = vmul.f32 %v846, %v1106
      %v1118 = vmul.f32 %v847, %v1104
      %v1119 = vmul.f32 %v848, %v1102
      %v1120 = vmul.f32 %v849, %v1106
      %v1121 = vmul.f32 %v850, %v1104
      %v1122 = vpack.c.bf16 %v1111, %v1110
      %v1123 = vpack.c.bf16 %v1112, %v1112
      %v1124 = vpack.c.bf16 %v1114, %v1113
      %v1125 = vpack.c.bf16 %v1115, %v1115
      %v1126 = vpack.c.bf16 %v1117, %v1116
      %v1127 = vpack.c.bf16 %v1118, %v1118
      %v1128 = vpack.c.bf16 %v1120, %v1119
      %v1129 = vpack.c.bf16 %v1121, %v1121
      %1138 = vrot.lane.b32.xlu0 %v1122, 1
      %v1139 = vpop.permute.xlu0 %1138
      %1140 = vrot.lane.b32.xlu0 %v1123, 1
      %v1141 = vpop.permute.xlu0 %1140
      %1142 = vrot.lane.b32.xlu0 %v1124, 1
      %v1143 = vpop.permute.xlu0 %1142
      %1144 = vrot.lane.b32.xlu0 %v1125, 1
      %v1145 = vpop.permute.xlu0 %1144
      %1146 = vrot.lane.b32.xlu0 %v1126, 1
      %v1147 = vpop.permute.xlu0 %1146
      %1148 = vrot.lane.b32.xlu0 %v1127, 1
      %v1149 = vpop.permute.xlu0 %1148
      %1150 = vrot.lane.b32.xlu0 %v1128, 1
      %v1151 = vpop.permute.xlu0 %1150
      %1152 = vrot.lane.b32.xlu0 %v1129, 1
      %v1153 = vpop.permute.xlu0 %1152
      %v1154 = vrot.slane %v1139, 4
      %v1155 = vrot.slane %v1141, 4
      %v1156 = vrot.slane %v1143, 4
      %v1157 = vrot.slane %v1145, 4
      %v1158 = vrot.slane %v1147, 4
      %v1159 = vrot.slane %v1149, 4
      %v1160 = vrot.slane %v1151, 4
      %v1161 = vrot.slane %v1153, 4
      %v1162 = vsel %vm916, %v1154, %v1155
      %vm1163 = vcmask 7168
      %v1164 = vsel %vm1163, %v1139, %v1162
      %v1165 = vsel %vm916, %v1156, %v1157
      %v1166 = vsel %vm1163, %v1143, %v1165
      %v1167 = vsel %vm916, %v1158, %v1159
      %v1168 = vsel %vm1163, %v1147, %v1167
      %v1169 = vsel %vm916, %v1160, %v1161
      %v1170 = vsel %vm1163, %v1151, %v1169
      %1175 = vst [vmem:[#allocation3 + $0x60] sm:$0xff] %v1164
      %1176 = vst [vmem:[#allocation3 + $0x68] sm:$0xff] %v1166
      %1177 = vst [vmem:[#allocation3 + $0x70] sm:$0xff] %v1168
      %1178 = vst [vmem:[#allocation3 + $0x78] sm:$0xff] %v1170
      %v1179 = vrot.slane %v815, 4
      %v1180 = vrot.slane %v816, 4
      %v1181 = vrot.slane %v817, 4
      %v1182 = vrot.slane %v818, 4
      %v1183 = vrot.slane %v819, 4
      %v1184 = vrot.slane %v820, 4
      %v1185 = vrot.slane %v821, 4
      %v1186 = vrot.slane %v822, 4
      %v1187 = vsel %vm916, %v1179, %v1180
      %v1188 = vsel %vm916, %v1181, %v1182
      %v1189 = vsel %vm916, %v1183, %v1184
      %v1190 = vsel %vm916, %v1185, %v1186
      %1195 = vst [vmem:[#allocation3 + $0x80] sm:$0xff] %v1187
      %1196 = vst [vmem:[#allocation3 + $0x88] sm:$0xff] %v1188
      %1197 = vst [vmem:[#allocation3 + $0x90] sm:$0xff] %v1189
      %1198 = vst [vmem:[#allocation3 + $0x98] sm:$0xff] %v1190
      %v1199 = vld [vmem:[%s1] sm:$0x22]
      %v1201 = vunpack.c.l.b16 %v1199
      %v1202 = vunpack.c.h.b16 %v1199
      %v1203 = vpack.c.b16 %v1201, %v1201
      %v1204 = vpack.c.b16 %v1202, %v1202
      %v1206 = vshrl.u32 %v1203, 16
      %v1207 = vpack.i.b16 %v1206, %v1206
      %v1209 = vperm.slane %v1207, 1
      %v1211 = vshrl.u32 %v1204, 16
      %v1212 = vpack.i.b16 %v1211, %v1211
      %v1214 = vperm.slane %v1212, 1
      %1215 = vrot.lane.b32.xlu0 %v815, 127
      %v1216 = vpop.permute.xlu0 %1215
      %1217 = vrot.lane.b32.xlu0 %v816, 127
      %v1218 = vpop.permute.xlu0 %1217
      %1219 = vrot.lane.b32.xlu0 %v817, 127
      %v1220 = vpop.permute.xlu0 %1219
      %1221 = vrot.lane.b32.xlu0 %v818, 127
      %v1222 = vpop.permute.xlu0 %1221
      %1223 = vrot.lane.b32.xlu0 %v819, 127
      %v1224 = vpop.permute.xlu0 %1223
      %1225 = vrot.lane.b32.xlu0 %v820, 127
      %v1226 = vpop.permute.xlu0 %1225
      %1227 = vrot.lane.b32.xlu0 %v821, 127
      %v1228 = vpop.permute.xlu0 %1227
      %1229 = vrot.lane.b32.xlu0 %v822, 127
      %v1230 = vpop.permute.xlu0 %1229
      %v1231 = vrot.slane %v1216, 4
      %v1232 = vrot.slane %v1218, 4
      %v1233 = vrot.slane %v1220, 4
      %v1234 = vrot.slane %v1222, 4
      %v1235 = vrot.slane %v1224, 4
      %v1236 = vrot.slane %v1226, 4
      %v1237 = vrot.slane %v1228, 4
      %v1238 = vrot.slane %v1230, 4
      %v1239 = vsel %vm916, %v1231, %v1232
      %vm1240 = vcmask 1039360
      %v1241 = vsel %vm1240, %v1239, %v1218
      %v1242 = vsel %vm916, %v1233, %v1234
      %v1243 = vsel %vm1240, %v1242, %v1222
      %v1244 = vsel %vm916, %v1235, %v1236
      %v1245 = vsel %vm1240, %v1244, %v1226
      %v1246 = vsel %vm916, %v1237, %v1238
      %v1247 = vsel %vm1240, %v1246, %v1230
      %v1252 = vunpack.c.l.bf16 %v1241
      %v1253 = vunpack.c.h.bf16 %v1241
      %v1254 = vunpack.c.l.bf16 %v1243
      %v1255 = vunpack.c.h.bf16 %v1243
      %v1256 = vunpack.c.l.bf16 %v1245
      %v1257 = vunpack.c.h.bf16 %v1245
      %v1258 = vunpack.c.l.bf16 %v1247
      %v1259 = vunpack.c.h.bf16 %v1247
      %v1260 = vunpack.c.l.bf16 %v1209
      %v1261 = vunpack.c.l.bf16 %v1214
      %v1262 = vmul.f32 %v1252, %v1260
      %v1263 = vmul.f32 %v1253, %v1261
      %v1264 = vmul.f32 %v1254, %v1260
      %v1265 = vmul.f32 %v1255, %v1261
      %v1266 = vmul.f32 %v1256, %v1260
      %v1267 = vmul.f32 %v1257, %v1261
      %v1268 = vmul.f32 %v1258, %v1260
      %v1269 = vmul.f32 %v1259, %v1261
      %v1270 = vpack.c.bf16 %v1263, %v1262
      %v1271 = vpack.c.bf16 %v1265, %v1264
      %v1272 = vpack.c.bf16 %v1267, %v1266
      %v1273 = vpack.c.bf16 %v1269, %v1268
      %1274 = vst [vmem:[#allocation3 + $0xa0] sm:$0xff] %v1270
      %1275 = vst [vmem:[#allocation3 + $0xa8] sm:$0xff] %v1271
      %1276 = vst [vmem:[#allocation3 + $0xb0] sm:$0xff] %v1272
      %1277 = vst [vmem:[#allocation3 + $0xb8] sm:$0xff] %v1273
      %v1278 = vld [vmem:[%s1] sm:$0x11]
      %v1280 = vunpack.c.l.b16 %v1278
      %v1281 = vunpack.c.h.b16 %v1278
      %v1282 = vpack.c.b16 %v1280, %v1280
      %v1283 = vpack.c.b16 %v1281, %v1281
      %v1285 = vshrl.u32 %v1282, 16
      %v1286 = vpack.i.b16 %v1285, %v1285
      %v1288 = vperm.slane %v1286, 0
      %v1290 = vshrl.u32 %v1283, 16
      %v1291 = vpack.i.b16 %v1290, %v1290
      %v1293 = vperm.slane %v1291, 0
      %1294 = vrot.lane.b32.xlu0 %v815, 113
      %v1295 = vpop.permute.xlu0 %1294
      %1296 = vrot.lane.b32.xlu0 %v816, 113
      %v1297 = vpop.permute.xlu0 %1296
      %1298 = vrot.lane.b32.xlu0 %v817, 113
      %v1299 = vpop.permute.xlu0 %1298
      %1300 = vrot.lane.b32.xlu0 %v818, 113
      %v1301 = vpop.permute.xlu0 %1300
      %1302 = vrot.lane.b32.xlu0 %v819, 113
      %v1303 = vpop.permute.xlu0 %1302
      %1304 = vrot.lane.b32.xlu0 %v820, 113
      %v1305 = vpop.permute.xlu0 %1304
      %1306 = vrot.lane.b32.xlu0 %v821, 113
      %v1307 = vpop.permute.xlu0 %1306
      %1308 = vrot.lane.b32.xlu0 %v822, 113
      %v1309 = vpop.permute.xlu0 %1308
      %v1310 = vrot.slane %v1295, 4
      %v1311 = vrot.slane %v1297, 4
      %v1312 = vrot.slane %v1299, 4
      %v1313 = vrot.slane %v1301, 4
      %v1314 = vrot.slane %v1303, 4
      %v1315 = vrot.slane %v1305, 4
      %v1316 = vrot.slane %v1307, 4
      %v1317 = vrot.slane %v1309, 4
      %v1318 = vsel %vm916, %v1310, %v1311
      %vm1319 = vcmask 924672
      %v1320 = vsel %vm1319, %v1318, %v1297
      %v1321 = vsel %vm916, %v1312, %v1313
      %v1322 = vsel %vm1319, %v1321, %v1301
      %v1323 = vsel %vm916, %v1314, %v1315
      %v1324 = vsel %vm1319, %v1323, %v1305
      %v1325 = vsel %vm916, %v1316, %v1317
      %v1326 = vsel %vm1319, %v1325, %v1309
      %v1331 = vunpack.c.l.bf16 %v1320
      %v1332 = vunpack.c.h.bf16 %v1320
      %v1333 = vunpack.c.l.bf16 %v1322
      %v1334 = vunpack.c.h.bf16 %v1322
      %v1335 = vunpack.c.l.bf16 %v1324
      %v1336 = vunpack.c.h.bf16 %v1324
      %v1337 = vunpack.c.l.bf16 %v1326
      %v1338 = vunpack.c.h.bf16 %v1326
      %v1339 = vunpack.c.l.bf16 %v1288
      %v1340 = vunpack.c.l.bf16 %v1293
      %v1341 = vmul.f32 %v1331, %v1339
      %v1342 = vmul.f32 %v1332, %v1340
      %v1343 = vmul.f32 %v1333, %v1339
      %v1344 = vmul.f32 %v1334, %v1340
      %v1345 = vmul.f32 %v1335, %v1339
      %v1346 = vmul.f32 %v1336, %v1340
      %v1347 = vmul.f32 %v1337, %v1339
      %v1348 = vmul.f32 %v1338, %v1340
      %v1349 = vpack.c.bf16 %v1342, %v1341
      %v1350 = vpack.c.bf16 %v1344, %v1343
      %v1351 = vpack.c.bf16 %v1346, %v1345
      %v1352 = vpack.c.bf16 %v1348, %v1347
      %1353 = vst [vmem:[#allocation3 + $0xc0] sm:$0xff] %v1349
      %1354 = vst [vmem:[#allocation3 + $0xc8] sm:$0xff] %v1350
      %1355 = vst [vmem:[#allocation3 + $0xd0] sm:$0xff] %v1351
      %1356 = vst [vmem:[#allocation3 + $0xd8] sm:$0xff] %v1352
      %1357 = vrot.lane.b32.xlu0 %v815, 112
      %v1358 = vpop.permute.xlu0 %1357
      %1359 = vrot.lane.b32.xlu0 %v816, 112
      %v1360 = vpop.permute.xlu0 %1359
      %1361 = vrot.lane.b32.xlu0 %v817, 112
      %v1362 = vpop.permute.xlu0 %1361
      %1363 = vrot.lane.b32.xlu0 %v818, 112
      %v1364 = vpop.permute.xlu0 %1363
      %1365 = vrot.lane.b32.xlu0 %v819, 112
      %v1366 = vpop.permute.xlu0 %1365
      %1367 = vrot.lane.b32.xlu0 %v820, 112
      %v1368 = vpop.permute.xlu0 %1367
      %1369 = vrot.lane.b32.xlu0 %v821, 112
      %v1370 = vpop.permute.xlu0 %1369
      %1371 = vrot.lane.b32.xlu0 %v822, 112
      %v1372 = vpop.permute.xlu0 %1371
      %v1373 = vrot.slane %v1358, 4
      %v1374 = vrot.slane %v1360, 4
      %v1375 = vrot.slane %v1362, 4
      %v1376 = vrot.slane %v1364, 4
      %v1377 = vrot.slane %v1366, 4
      %v1378 = vrot.slane %v1368, 4
      %v1379 = vrot.slane %v1370, 4
      %v1380 = vrot.slane %v1372, 4
      %v1381 = vsel %vm916, %v1373, %v1374
      %vm1382 = vcmask 916480
      %v1383 = vsel %vm1382, %v1381, %v1360
      %v1384 = vsel %vm916, %v1375, %v1376
      %v1385 = vsel %vm1382, %v1384, %v1364
      %v1386 = vsel %vm916, %v1377, %v1378
      %v1387 = vsel %vm1382, %v1386, %v1368
      %v1388 = vsel %vm916, %v1379, %v1380
      %v1389 = vsel %vm1382, %v1388, %v1372
      %1394 = vst [vmem:[#allocation3 + $0xe0] sm:$0xff] %v1383
      %1395 = vst [vmem:[#allocation3 + $0xe8] sm:$0xff] %v1385
      %1396 = vst [vmem:[#allocation3 + $0xf0] sm:$0xff] %v1387
      %1397 = vst [vmem:[#allocation3 + $0xf8] sm:$0xff] %v1389
      %v1398 = vld [vmem:[%s1] sm:$0x22]
      %v1400 = vunpack.c.l.b16 %v1398
      %v1401 = vunpack.c.h.b16 %v1398
      %v1402 = vpack.c.b16 %v1400, %v1400
      %v1403 = vpack.c.b16 %v1401, %v1401
      %v1405 = vshrl.u32 %v1402, 16
      %v1406 = vpack.i.b16 %v1405, %v1405
      %v1408 = vperm.slane %v1406, 1
      %v1410 = vshrl.u32 %v1403, 16
      %v1411 = vpack.i.b16 %v1410, %v1410
      %v1413 = vperm.slane %v1411, 1
      %1414 = vrot.lane.b32.xlu0 %v815, 111
      %v1415 = vpop.permute.xlu0 %1414
      %1416 = vrot.lane.b32.xlu0 %v816, 111
      %v1417 = vpop.permute.xlu0 %1416
      %1418 = vrot.lane.b32.xlu0 %v817, 111
      %v1419 = vpop.permute.xlu0 %1418
      %1420 = vrot.lane.b32.xlu0 %v818, 111
      %v1421 = vpop.permute.xlu0 %1420
      %1422 = vrot.lane.b32.xlu0 %v819, 111
      %v1423 = vpop.permute.xlu0 %1422
      %1424 = vrot.lane.b32.xlu0 %v820, 111
      %v1425 = vpop.permute.xlu0 %1424
      %1426 = vrot.lane.b32.xlu0 %v821, 111
      %v1427 = vpop.permute.xlu0 %1426
      %1428 = vrot.lane.b32.xlu0 %v822, 111
      %v1429 = vpop.permute.xlu0 %1428
      %v1430 = vrot.slane %v1415, 4
      %v1431 = vrot.slane %v1417, 4
      %v1432 = vrot.slane %v1419, 4
      %v1433 = vrot.slane %v1421, 4
      %v1434 = vrot.slane %v1423, 4
      %v1435 = vrot.slane %v1425, 4
      %v1436 = vrot.slane %v1427, 4
      %v1437 = vrot.slane %v1429, 4
      %v1438 = vsel %vm916, %v1430, %v1431
      %vm1439 = vcmask 908288
      %v1440 = vsel %vm1439, %v1438, %v1417
      %v1441 = vsel %vm916, %v1432, %v1433
      %v1442 = vsel %vm1439, %v1441, %v1421
      %v1443 = vsel %vm916, %v1434, %v1435
      %v1444 = vsel %vm1439, %v1443, %v1425
      %v1445 = vsel %vm916, %v1436, %v1437
      %v1446 = vsel %vm1439, %v1445, %v1429
      %v1451 = vunpack.c.l.bf16 %v1440
      %v1452 = vunpack.c.h.bf16 %v1440
      %v1453 = vunpack.c.l.bf16 %v1442
      %v1454 = vunpack.c.h.bf16 %v1442
      %v1455 = vunpack.c.l.bf16 %v1444
      %v1456 = vunpack.c.h.bf16 %v1444
      %v1457 = vunpack.c.l.bf16 %v1446
      %v1458 = vunpack.c.h.bf16 %v1446
      %v1459 = vunpack.c.l.bf16 %v1408
      %v1460 = vunpack.c.l.bf16 %v1413
      %v1461 = vmul.f32 %v1451, %v1459
      %v1462 = vmul.f32 %v1452, %v1460
      %v1463 = vmul.f32 %v1453, %v1459
      %v1464 = vmul.f32 %v1454, %v1460
      %v1465 = vmul.f32 %v1455, %v1459
      %v1466 = vmul.f32 %v1456, %v1460
      %v1467 = vmul.f32 %v1457, %v1459
      %v1468 = vmul.f32 %v1458, %v1460
      %v1469 = vpack.c.bf16 %v1462, %v1461
      %v1470 = vpack.c.bf16 %v1464, %v1463
      %v1471 = vpack.c.bf16 %v1466, %v1465
      %v1472 = vpack.c.bf16 %v1468, %v1467
      %1473 = vst [vmem:[#allocation3 + $0x100] sm:$0xff] %v1469
      %1474 = vst [vmem:[#allocation3 + $0x108] sm:$0xff] %v1470
      %1475 = vst [vmem:[#allocation3 + $0x110] sm:$0xff] %v1471
      %1476 = vst [vmem:[#allocation3 + $0x118] sm:$0xff] %v1472
      %v1477 = vld [vmem:[%s2] sm:$0xff]
      %v1478 = vld [vmem:[%s2 + $0x8] sm:$0xf]
      %v1479 = vld [vmem:[%s2 + $0xc] sm:$0xff]
      %v1480 = vld [vmem:[%s2 + $0x14] sm:$0xf]
      %v1481 = vld [vmem:[%s2 + $0x18] sm:$0xff]
      %v1482 = vld [vmem:[%s2 + $0x20] sm:$0xf]
      %v1483 = vld [vmem:[%s2 + $0x24] sm:$0xff]
      %v1484 = vld [vmem:[%s2 + $0x2c] sm:$0xf]
      %v1485 = vld [vmem:[#allocation3] sm:$0xff]
      %v1486 = vld [vmem:[#allocation3 + $0x8] sm:$0xff]
      %v1487 = vld [vmem:[#allocation3 + $0x10] sm:$0xff]
      %v1488 = vld [vmem:[#allocation3 + $0x18] sm:$0xff]
      %v1489 = vld [vmem:[#allocation3 + $0x20] sm:$0xff]
      %v1490 = vld [vmem:[#allocation3 + $0x28] sm:$0xff]
      %v1491 = vld [vmem:[#allocation3 + $0x30] sm:$0xff]
      %v1492 = vld [vmem:[#allocation3 + $0x38] sm:$0xff]
      %v1493 = vld [vmem:[#allocation3 + $0x40] sm:$0xff]
      %v1494 = vld [vmem:[#allocation3 + $0x48] sm:$0xff]
      %v1495 = vld [vmem:[#allocation3 + $0x50] sm:$0xff]
      %v1496 = vld [vmem:[#allocation3 + $0x58] sm:$0xff]
      %v1497 = vld [vmem:[#allocation3 + $0x60] sm:$0xff]
      %v1498 = vld [vmem:[#allocation3 + $0x68] sm:$0xff]
      %v1499 = vld [vmem:[#allocation3 + $0x70] sm:$0xff]
      %v1500 = vld [vmem:[#allocation3 + $0x78] sm:$0xff]
      %v1501 = vld [vmem:[#allocation3 + $0x80] sm:$0xff]
      %v1502 = vld [vmem:[#allocation3 + $0x88] sm:$0xff]
      %v1503 = vld [vmem:[#allocation3 + $0x90] sm:$0xff]
      %v1504 = vld [vmem:[#allocation3 + $0x98] sm:$0xff]
      %v1505 = vld [vmem:[#allocation3 + $0xa0] sm:$0xff]
      %v1506 = vld [vmem:[#allocation3 + $0xa8] sm:$0xff]
      %v1507 = vld [vmem:[#allocation3 + $0xb0] sm:$0xff]
      %v1508 = vld [vmem:[#allocation3 + $0xb8] sm:$0xff]
      %v1509 = vld [vmem:[#allocation3 + $0xc0] sm:$0xff]
      %v1510 = vld [vmem:[#allocation3 + $0xc8] sm:$0xff]
      %v1511 = vld [vmem:[#allocation3 + $0xd0] sm:$0xff]
      %v1512 = vld [vmem:[#allocation3 + $0xd8] sm:$0xff]
      %v1513 = vld [vmem:[#allocation3 + $0xe0] sm:$0xff]
      %v1514 = vld [vmem:[#allocation3 + $0xe8] sm:$0xff]
      %v1515 = vld [vmem:[#allocation3 + $0xf0] sm:$0xff]
      %v1516 = vld [vmem:[#allocation3 + $0xf8] sm:$0xff]
      %v1517 = vld [vmem:[#allocation3 + $0x100] sm:$0xff]
      %v1518 = vld [vmem:[#allocation3 + $0x108] sm:$0xff]
      %v1519 = vld [vmem:[#allocation3 + $0x110] sm:$0xff]
      %v1520 = vld [vmem:[#allocation3 + $0x118] sm:$0xff]
      %v1529 = vunpack.c.l.b16 %v1477
      %v1530 = vunpack.c.h.b16 %v1477
      %v1531 = vunpack.c.l.b16 %v1478
      %v1532 = vunpack.c.l.b16 %v1479
      %v1533 = vunpack.c.h.b16 %v1479
      %v1534 = vunpack.c.l.b16 %v1480
      %v1535 = vunpack.c.l.b16 %v1481
      %v1536 = vunpack.c.h.b16 %v1481
      %v1537 = vunpack.c.l.b16 %v1482
      %v1538 = vunpack.c.l.b16 %v1483
      %v1539 = vunpack.c.h.b16 %v1483
      %v1540 = vunpack.c.l.b16 %v1484
      %v1541 = vpack.c.b16 %v1532, %v1529
      %v1542 = vpack.c.b16 %v1533, %v1530
      %v1543 = vpack.c.b16 %v1534, %v1531
      %v1544 = vpack.c.b16 %v1538, %v1535
      %v1545 = vpack.c.b16 %v1539, %v1536
      %v1546 = vpack.c.b16 %v1540, %v1537
      %v1587 = vunpack.c.l.b16 %v1485
      %v1588 = vunpack.c.h.b16 %v1485
      %v1589 = vunpack.c.l.b16 %v1486
      %v1590 = vunpack.c.h.b16 %v1486
      %v1591 = vunpack.c.l.b16 %v1487
      %v1592 = vunpack.c.h.b16 %v1487
      %v1593 = vunpack.c.l.b16 %v1488
      %v1594 = vunpack.c.h.b16 %v1488
      %v1595 = vunpack.c.l.b16 %v1489
      %v1596 = vunpack.c.h.b16 %v1489
      %v1597 = vunpack.c.l.b16 %v1490
      %v1598 = vunpack.c.h.b16 %v1490
      %v1599 = vunpack.c.l.b16 %v1491
      %v1600 = vunpack.c.h.b16 %v1491
      %v1601 = vunpack.c.l.b16 %v1492
      %v1602 = vunpack.c.h.b16 %v1492
      %v1603 = vunpack.c.l.b16 %v1493
      %v1604 = vunpack.c.h.b16 %v1493
      %v1605 = vunpack.c.l.b16 %v1494
      %v1606 = vunpack.c.h.b16 %v1494
      %v1607 = vunpack.c.l.b16 %v1495
      %v1608 = vunpack.c.h.b16 %v1495
      %v1609 = vunpack.c.l.b16 %v1496
      %v1610 = vunpack.c.h.b16 %v1496
      %v1611 = vunpack.c.l.b16 %v1497
      %v1612 = vunpack.c.h.b16 %v1497
      %v1613 = vunpack.c.l.b16 %v1498
      %v1614 = vunpack.c.h.b16 %v1498
      %v1615 = vunpack.c.l.b16 %v1499
      %v1616 = vunpack.c.h.b16 %v1499
      %v1617 = vunpack.c.l.b16 %v1500
      %v1618 = vunpack.c.h.b16 %v1500
      %v1619 = vunpack.c.l.b16 %v1501
      %v1620 = vunpack.c.h.b16 %v1501
      %v1621 = vunpack.c.l.b16 %v1502
      %v1622 = vunpack.c.h.b16 %v1502
      %v1623 = vunpack.c.l.b16 %v1503
      %v1624 = vunpack.c.h.b16 %v1503
      %v1625 = vunpack.c.l.b16 %v1504
      %v1626 = vunpack.c.h.b16 %v1504
      %v1627 = vunpack.c.l.b16 %v1505
      %v1628 = vunpack.c.h.b16 %v1505
      %v1629 = vunpack.c.l.b16 %v1506
      %v1630 = vunpack.c.h.b16 %v1506
      %v1631 = vunpack.c.l.b16 %v1507
      %v1632 = vunpack.c.h.b16 %v1507
      %v1633 = vunpack.c.l.b16 %v1508
      %v1634 = vunpack.c.h.b16 %v1508
      %v1635 = vunpack.c.l.b16 %v1509
      %v1636 = vunpack.c.h.b16 %v1509
      %v1637 = vunpack.c.l.b16 %v1510
      %v1638 = vunpack.c.h.b16 %v1510
      %v1639 = vunpack.c.l.b16 %v1511
      %v1640 = vunpack.c.h.b16 %v1511
      %v1641 = vunpack.c.l.b16 %v1512
      %v1642 = vunpack.c.h.b16 %v1512
      %v1643 = vunpack.c.l.b16 %v1513
      %v1644 = vunpack.c.h.b16 %v1513
      %v1645 = vunpack.c.l.b16 %v1514
      %v1646 = vunpack.c.h.b16 %v1514
      %v1647 = vunpack.c.l.b16 %v1515
      %v1648 = vunpack.c.h.b16 %v1515
      %v1649 = vunpack.c.l.b16 %v1516
      %v1650 = vunpack.c.h.b16 %v1516
      %v1651 = vunpack.c.l.b16 %v1517
      %v1652 = vunpack.c.h.b16 %v1517
      %v1653 = vunpack.c.l.b16 %v1518
      %v1654 = vunpack.c.h.b16 %v1518
      %v1655 = vunpack.c.l.b16 %v1519
      %v1656 = vunpack.c.h.b16 %v1519
      %v1657 = vunpack.c.l.b16 %v1520
      %v1658 = vunpack.c.h.b16 %v1520
      %v1659 = vpack.c.b16 %v1589, %v1587
      %v1660 = vpack.c.b16 %v1590, %v1588
      %v1661 = vpack.c.b16 %v1593, %v1591
      %v1662 = vpack.c.b16 %v1594, %v1592
      %v1663 = vpack.c.b16 %v1597, %v1595
      %v1664 = vpack.c.b16 %v1598, %v1596
      %v1665 = vpack.c.b16 %v1601, %v1599
      %v1666 = vpack.c.b16 %v1602, %v1600
      %v1667 = vpack.c.b16 %v1605, %v1603
      %v1668 = vpack.c.b16 %v1606, %v1604
      %v1669 = vpack.c.b16 %v1609, %v1607
      %v1670 = vpack.c.b16 %v1610, %v1608
      %v1671 = vpack.c.b16 %v1613, %v1611
      %v1672 = vpack.c.b16 %v1614, %v1612
      %v1673 = vpack.c.b16 %v1617, %v1615
      %v1674 = vpack.c.b16 %v1618, %v1616
      %v1675 = vpack.c.b16 %v1621, %v1619
      %v1676 = vpack.c.b16 %v1622, %v1620
      %v1677 = vpack.c.b16 %v1625, %v1623
      %v1678 = vpack.c.b16 %v1626, %v1624
      %v1679 = vpack.c.b16 %v1629, %v1627
      %v1680 = vpack.c.b16 %v1630, %v1628
      %v1681 = vpack.c.b16 %v1633, %v1631
      %v1682 = vpack.c.b16 %v1634, %v1632
      %v1683 = vpack.c.b16 %v1637, %v1635
      %v1684 = vpack.c.b16 %v1638, %v1636
      %v1685 = vpack.c.b16 %v1641, %v1639
      %v1686 = vpack.c.b16 %v1642, %v1640
      %v1687 = vpack.c.b16 %v1645, %v1643
      %v1688 = vpack.c.b16 %v1646, %v1644
      %v1689 = vpack.c.b16 %v1649, %v1647
      %v1690 = vpack.c.b16 %v1650, %v1648
      %v1691 = vpack.c.b16 %v1653, %v1651
      %v1692 = vpack.c.b16 %v1654, %v1652
      %v1693 = vpack.c.b16 %v1657, %v1655
      %v1694 = vpack.c.b16 %v1658, %v1656
      %vm1731 = vcmask 261120
      %v1733 = vsel %vm1731, %v1543, 0
      %v1736 = vsel %vm1731, %v1546, 0
      %1738 = vmatpush.bf16.msra.mxu0 %v1673
      %1739 = vmatpush.bf16.msra.mxu0 %v1671
      %1740 = vmatpush.bf16.msra.mxu0 %v1669
      %1741 = vmatpush.bf16.msra.mxu0 %v1667
      %1742 = vmatpush.bf16.msra.mxu0 %v1665
      %1743 = vmatpush.bf16.msra.mxu0 %v1663
      %1744 = vmatpush.bf16.msra.mxu0 %v1661
      %1745 = vmatpush.bf16.msra.mxu0 %v1659
      %1746 = vmatmul.bf16.gmra.mxu0 %v1541
      %v1747 = vpop.f32.mrf.mxu0
      %v1748 = vadd.f32 0.0, %v1747
      %v1749 = vpop.f32.mrf.mxu0
      %v1750 = vadd.f32 0.0, %v1749
      %1751 = vmatmul.bf16.gmra.mxu0 %v1544
      %v1752 = vpop.f32.mrf.mxu0
      %v1753 = vadd.f32 0.0, %v1752
      %v1754 = vpop.f32.mrf.mxu0
      %v1755 = vadd.f32 0.0, %v1754
      %1756 = vdwg.mxu0
      %1757 = vmatpush.bf16.msra.mxu0 %v1689
      %1758 = vmatpush.bf16.msra.mxu0 %v1687
      %1759 = vmatpush.bf16.msra.mxu0 %v1685
      %1760 = vmatpush.bf16.msra.mxu0 %v1683
      %1761 = vmatpush.bf16.msra.mxu0 %v1681
      %1762 = vmatpush.bf16.msra.mxu0 %v1679
      %1763 = vmatpush.bf16.msra.mxu0 %v1677
      %1764 = vmatpush.bf16.msra.mxu0 %v1675
      %1765 = vmatmul.bf16.gmra.mxu0 %v1542
      %v1766 = vpop.f32.mrf.mxu0
      %v1767 = vadd.f32 %v1748, %v1766
      %v1768 = vpop.f32.mrf.mxu0
      %v1769 = vadd.f32 %v1750, %v1768
      %1770 = vmatmul.bf16.gmra.mxu0 %v1545
      %v1771 = vpop.f32.mrf.mxu0
      %v1772 = vadd.f32 %v1753, %v1771
      %v1773 = vpop.f32.mrf.mxu0
      %v1774 = vadd.f32 %v1755, %v1773
      %1775 = vdwg.mxu0
      %1776 = vmatpush.bf16.msra.mxu0 0
      %1777 = vmatpush.bf16.msra.mxu0 0
      %1778 = vmatpush.bf16.msra.mxu0 0
      %1779 = vmatpush.bf16.msra.mxu0 0
      %1780 = vmatpush.bf16.msra.mxu0 0
      %1781 = vmatpush.bf16.msra.mxu0 0
      %1782 = vmatpush.bf16.msra.mxu0 %v1693
      %1783 = vmatpush.bf16.msra.mxu0 %v1691
      %1784 = vmatmul.bf16.gmra.mxu0 %v1733
      %v1785 = vpop.f32.mrf.mxu0
      %v1786 = vadd.f32 %v1767, %v1785
      %v1787 = vpop.f32.mrf.mxu0
      %v1788 = vadd.f32 %v1769, %v1787
      %1789 = vmatmul.bf16.gmra.mxu0 %v1736
      %v1790 = vpop.f32.mrf.mxu0
      %v1791 = vadd.f32 %v1772, %v1790
      %v1792 = vpop.f32.mrf.mxu0
      %v1793 = vadd.f32 %v1774, %v1792
      %1794 = vdwg.mxu0
      %1795 = vmatpush.bf16.msra.mxu0 %v1674
      %1796 = vmatpush.bf16.msra.mxu0 %v1672
      %1797 = vmatpush.bf16.msra.mxu0 %v1670
      %1798 = vmatpush.bf16.msra.mxu0 %v1668
      %1799 = vmatpush.bf16.msra.mxu0 %v1666
      %1800 = vmatpush.bf16.msra.mxu0 %v1664
      %1801 = vmatpush.bf16.msra.mxu0 %v1662
      %1802 = vmatpush.bf16.msra.mxu0 %v1660
      %1803 = vmatmul.bf16.gmra.mxu0 %v1541
      %v1804 = vpop.f32.mrf.mxu0
      %v1805 = vadd.f32 0.0, %v1804
      %v1806 = vpop.f32.mrf.mxu0
      %v1807 = vadd.f32 0.0, %v1806
      %1808 = vmatmul.bf16.gmra.mxu0 %v1544
      %v1809 = vpop.f32.mrf.mxu0
      %v1810 = vadd.f32 0.0, %v1809
      %v1811 = vpop.f32.mrf.mxu0
      %v1812 = vadd.f32 0.0, %v1811
      %1813 = vdwg.mxu0
      %1814 = vmatpush.bf16.msra.mxu0 %v1690
      %1815 = vmatpush.bf16.msra.mxu0 %v1688
      %1816 = vmatpush.bf16.msra.mxu0 %v1686
      %1817 = vmatpush.bf16.msra.mxu0 %v1684
      %1818 = vmatpush.bf16.msra.mxu0 %v1682
      %1819 = vmatpush.bf16.msra.mxu0 %v1680
      %1820 = vmatpush.bf16.msra.mxu0 %v1678
      %1821 = vmatpush.bf16.msra.mxu0 %v1676
      %1822 = vmatmul.bf16.gmra.mxu0 %v1542
      %v1823 = vpop.f32.mrf.mxu0
      %v1824 = vadd.f32 %v1805, %v1823
      %v1825 = vpop.f32.mrf.mxu0
      %v1826 = vadd.f32 %v1807, %v1825
      %1827 = vmatmul.bf16.gmra.mxu0 %v1545
      %v1828 = vpop.f32.mrf.mxu0
      %v1829 = vadd.f32 %v1810, %v1828
      %v1830 = vpop.f32.mrf.mxu0
      %v1831 = vadd.f32 %v1812, %v1830
      %1832 = vdwg.mxu0
      %1833 = vmatpush.bf16.msra.mxu0 0
      %1834 = vmatpush.bf16.msra.mxu0 0
      %1835 = vmatpush.bf16.msra.mxu0 0
      %1836 = vmatpush.bf16.msra.mxu0 0
      %1837 = vmatpush.bf16.msra.mxu0 0
      %1838 = vmatpush.bf16.msra.mxu0 0
      %1839 = vmatpush.bf16.msra.mxu0 %v1694
      %1840 = vmatpush.bf16.msra.mxu0 %v1692
      %1841 = vmatmul.bf16.gmra.mxu0 %v1733
      %v1842 = vpop.f32.mrf.mxu0
      %v1843 = vadd.f32 %v1824, %v1842
      %v1844 = vpop.f32.mrf.mxu0
      %v1845 = vadd.f32 %v1826, %v1844
      %1846 = vmatmul.bf16.gmra.mxu0 %v1736
      %v1847 = vpop.f32.mrf.mxu0
      %v1848 = vadd.f32 %v1829, %v1847
      %v1849 = vpop.f32.mrf.mxu0
      %v1850 = vadd.f32 %v1831, %v1849
      %1851 = vdwg.mxu0
      %v1852 = vld [vmem:[%s3] sm:$0xff]
      %v1853 = vld [vmem:[%s3 + $0x8] sm:$0xff]
      %v1854 = vld [vmem:[%s3 + $0x10] sm:$0xff]
      %v1855 = vld [vmem:[%s3 + $0x18] sm:$0xff]
      %1857 = vset.pattern.permute.xlu0 0
      %1858 = vperm.xlu0 %1857, %v1852
      %v1859 = vpop.permute.xlu0 %1858
      %1862 = vset.pattern.permute.xlu0 0
      %1863 = vperm.xlu0 %1862, %v1853
      %v1864 = vpop.permute.xlu0 %1863
      %1867 = vset.pattern.permute.xlu0 0
      %1868 = vperm.xlu0 %1867, %v1854
      %v1869 = vpop.permute.xlu0 %1868
      %1872 = vset.pattern.permute.xlu0 0
      %1873 = vperm.xlu0 %1872, %v1855
      %v1874 = vpop.permute.xlu0 %1873
      %v1876 = vmul.f32 %v1786, %v1859
      %v1877 = vmul.f32 %v1843, %v1859
      %v1878 = vmul.f32 %v1788, %v1864
      %v1879 = vmul.f32 %v1845, %v1864
      %v1880 = vmul.f32 %v1791, %v1869
      %v1881 = vmul.f32 %v1848, %v1869
      %v1882 = vmul.f32 %v1793, %v1874
      %v1883 = vmul.f32 %v1850, %v1874
      %v1884 = vld [vmem:[%s4] sm:$0xff]
      %v1885 = vld [vmem:[%s4 + $0x8] sm:$0xff]
      %v1886 = vld [vmem:[%s4 + $0x10] sm:$0xff]
      %v1887 = vld [vmem:[%s4 + $0x18] sm:$0xff]
      %1889 = vset.pattern.permute.xlu0 0
      %1890 = vperm.xlu0 %1889, %v1884
      %v1891 = vpop.permute.xlu0 %1890
      %1894 = vset.pattern.permute.xlu0 0
      %1895 = vperm.xlu0 %1894, %v1885
      %v1896 = vpop.permute.xlu0 %1895
      %1899 = vset.pattern.permute.xlu0 0
      %1900 = vperm.xlu0 %1899, %v1886
      %v1901 = vpop.permute.xlu0 %1900
      %1904 = vset.pattern.permute.xlu0 0
      %1905 = vperm.xlu0 %1904, %v1887
      %v1906 = vpop.permute.xlu0 %1905
      %v1908 = vadd.f32 %v1876, %v1891
      %v1909 = vadd.f32 %v1877, %v1891
      %v1910 = vadd.f32 %v1878, %v1896
      %v1911 = vadd.f32 %v1879, %v1896
      %v1912 = vadd.f32 %v1880, %v1901
      %v1913 = vadd.f32 %v1881, %v1901
      %v1914 = vadd.f32 %v1882, %v1906
      %v1915 = vadd.f32 %v1883, %v1906
      %vm1916 = vcmp.gt.f32.partialorder %v1908, 0.0
      %vm1917 = vcmp.gt.f32.partialorder %v1909, 0.0
      %vm1918 = vcmp.gt.f32.partialorder %v1910, 0.0
      %vm1919 = vcmp.gt.f32.partialorder %v1911, 0.0
      %vm1920 = vcmp.gt.f32.partialorder %v1912, 0.0
      %vm1921 = vcmp.gt.f32.partialorder %v1913, 0.0
      %vm1922 = vcmp.gt.f32.partialorder %v1914, 0.0
      %vm1923 = vcmp.gt.f32.partialorder %v1915, 0.0
      %v1924 = vmul.f32 %v1908, 0.01
      %v1925 = vmul.f32 %v1909, 0.01
      %v1926 = vmul.f32 %v1910, 0.01
      %v1927 = vmul.f32 %v1911, 0.01
      %v1928 = vmul.f32 %v1912, 0.01
      %v1929 = vmul.f32 %v1913, 0.01
      %v1930 = vmul.f32 %v1914, 0.01
      %v1931 = vmul.f32 %v1915, 0.01
      %v1932 = vsel %vm1916, %v1908, %v1924
      %v1933 = vsel %vm1917, %v1909, %v1925
      %v1934 = vsel %vm1918, %v1910, %v1926
      %v1935 = vsel %vm1919, %v1911, %v1927
      %v1936 = vsel %vm1920, %v1912, %v1928
      %v1937 = vsel %vm1921, %v1913, %v1929
      %v1938 = vsel %vm1922, %v1914, %v1930
      %v1939 = vsel %vm1923, %v1915, %v1931
      %v1940 = vpack.c.bf16 %v1933, %v1932
      %v1941 = vpack.c.bf16 %v1935, %v1934
      %v1942 = vpack.c.bf16 %v1937, %v1936
      %v1943 = vpack.c.bf16 %v1939, %v1938
      %1944 = vst [vmem:[#allocation2 + $0x4] sm:$0xff] %v1940
      %1945 = vst [vmem:[#allocation2 + $0x14] sm:$0xff] %v1941
      %1946 = vst [vmem:[#allocation2 + $0x24] sm:$0xff] %v1942
      %1947 = vst [vmem:[#allocation2 + $0x34] sm:$0xff] %v1943
      %v1948 = vld [vmem:[#allocation2] sm:$0xff]
      %v1949 = vld [vmem:[#allocation2 + $0x8] sm:$0xff]
      %v1950 = vld [vmem:[#allocation2 + $0x10] sm:$0xff]
      %v1951 = vld [vmem:[#allocation2 + $0x18] sm:$0xff]
      %v1952 = vld [vmem:[#allocation2 + $0x20] sm:$0xff]
      %v1953 = vld [vmem:[#allocation2 + $0x28] sm:$0xff]
      %v1954 = vld [vmem:[#allocation2 + $0x30] sm:$0xff]
      %v1955 = vld [vmem:[#allocation2 + $0x38] sm:$0xff]
      %v1956 = vld [vmem:[%s1] sm:$0x11]
      %v1958 = vunpack.c.l.b16 %v1956
      %v1959 = vunpack.c.h.b16 %v1956
      %v1960 = vpack.c.b16 %v1958, %v1958
      %v1961 = vpack.c.b16 %v1959, %v1959
      %v1963 = vshrl.u32 %v1960, 16
      %v1964 = vpack.i.b16 %v1963, %v1963
      %v1966 = vperm.slane %v1964, 0
      %v1968 = vshrl.u32 %v1961, 16
      %v1969 = vpack.i.b16 %v1968, %v1968
      %v1971 = vperm.slane %v1969, 0
      %v1972 = vunpack.c.l.bf16 %v1948
      %v1973 = vunpack.c.h.bf16 %v1948
      %v1974 = vunpack.c.l.bf16 %v1949
      %v1975 = vunpack.c.l.bf16 %v1950
      %v1976 = vunpack.c.h.bf16 %v1950
      %v1977 = vunpack.c.l.bf16 %v1951
      %v1978 = vunpack.c.l.bf16 %v1952
      %v1979 = vunpack.c.h.bf16 %v1952
      %v1980 = vunpack.c.l.bf16 %v1953
      %v1981 = vunpack.c.l.bf16 %v1954
      %v1982 = vunpack.c.h.bf16 %v1954
      %v1983 = vunpack.c.l.bf16 %v1955
      %v1984 = vunpack.c.l.bf16 %v1966
      %v1985 = vunpack.c.l.bf16 %v1971
      %1988 = vrot.lane.b32.xlu0 %v1984, 111
      %v1989 = vpop.permute.xlu0 %1988
      %1990 = vrot.lane.b32.xlu0 %v1985, 111
      %v1991 = vpop.permute.xlu0 %1990
      %v1992 = vsel %vm859, %v1989, %v1991
      %v1996 = vmul.f32 %v1972, %v1989
      %v1997 = vmul.f32 %v1973, %v1992
      %v1998 = vmul.f32 %v1974, %v1991
      %v1999 = vmul.f32 %v1975, %v1989
      %v2000 = vmul.f32 %v1976, %v1992
      %v2001 = vmul.f32 %v1977, %v1991
      %v2002 = vmul.f32 %v1978, %v1989
      %v2003 = vmul.f32 %v1979, %v1992
      %v2004 = vmul.f32 %v1980, %v1991
      %v2005 = vmul.f32 %v1981, %v1989
      %v2006 = vmul.f32 %v1982, %v1992
      %v2007 = vmul.f32 %v1983, %v1991
      %v2008 = vpack.c.bf16 %v1997, %v1996
      %v2009 = vpack.c.bf16 %v1998, %v1998
      %v2010 = vpack.c.bf16 %v2000, %v1999
      %v2011 = vpack.c.bf16 %v2001, %v2001
      %v2012 = vpack.c.bf16 %v2003, %v2002
      %v2013 = vpack.c.bf16 %v2004, %v2004
      %v2014 = vpack.c.bf16 %v2006, %v2005
      %v2015 = vpack.c.bf16 %v2007, %v2007
      %2024 = vrot.lane.b32.xlu0 %v2008, 17
      %v2025 = vpop.permute.xlu0 %2024
      %2026 = vrot.lane.b32.xlu0 %v2009, 17
      %v2027 = vpop.permute.xlu0 %2026
      %2028 = vrot.lane.b32.xlu0 %v2010, 17
      %v2029 = vpop.permute.xlu0 %2028
      %2030 = vrot.lane.b32.xlu0 %v2011, 17
      %v2031 = vpop.permute.xlu0 %2030
      %2032 = vrot.lane.b32.xlu0 %v2012, 17
      %v2033 = vpop.permute.xlu0 %2032
      %2034 = vrot.lane.b32.xlu0 %v2013, 17
      %v2035 = vpop.permute.xlu0 %2034
      %2036 = vrot.lane.b32.xlu0 %v2014, 17
      %v2037 = vpop.permute.xlu0 %2036
      %2038 = vrot.lane.b32.xlu0 %v2015, 17
      %v2039 = vpop.permute.xlu0 %2038
      %v2040 = vrot.slane %v2025, 4
      %v2041 = vrot.slane %v2027, 4
      %v2042 = vrot.slane %v2029, 4
      %v2043 = vrot.slane %v2031, 4
      %v2044 = vrot.slane %v2033, 4
      %v2045 = vrot.slane %v2035, 4
      %v2046 = vrot.slane %v2037, 4
      %v2047 = vrot.slane %v2039, 4
      %v2048 = vsel %vm916, %v2040, %v2041
      %v2049 = vsel %vm918, %v2025, %v2048
      %v2050 = vsel %vm916, %v2042, %v2043
      %v2051 = vsel %vm918, %v2029, %v2050
      %v2052 = vsel %vm916, %v2044, %v2045
      %v2053 = vsel %vm918, %v2033, %v2052
      %v2054 = vsel %vm916, %v2046, %v2047
      %v2055 = vsel %vm918, %v2037, %v2054
      %2060 = vst [vmem:[#allocation3] sm:$0xff] %v2049
      %2061 = vst [vmem:[#allocation3 + $0x8] sm:$0xff] %v2051
      %2062 = vst [vmem:[#allocation3 + $0x10] sm:$0xff] %v2053
      %2063 = vst [vmem:[#allocation3 + $0x18] sm:$0xff] %v2055
      %2072 = vrot.lane.b32.xlu0 %v1948, 16
      %v2073 = vpop.permute.xlu0 %2072
      %2074 = vrot.lane.b32.xlu0 %v1949, 16
      %v2075 = vpop.permute.xlu0 %2074
      %2076 = vrot.lane.b32.xlu0 %v1950, 16
      %v2077 = vpop.permute.xlu0 %2076
      %2078 = vrot.lane.b32.xlu0 %v1951, 16
      %v2079 = vpop.permute.xlu0 %2078
      %2080 = vrot.lane.b32.xlu0 %v1952, 16
      %v2081 = vpop.permute.xlu0 %2080
      %2082 = vrot.lane.b32.xlu0 %v1953, 16
      %v2083 = vpop.permute.xlu0 %2082
      %2084 = vrot.lane.b32.xlu0 %v1954, 16
      %v2085 = vpop.permute.xlu0 %2084
      %2086 = vrot.lane.b32.xlu0 %v1955, 16
      %v2087 = vpop.permute.xlu0 %2086
      %v2088 = vrot.slane %v2073, 4
      %v2089 = vrot.slane %v2075, 4
      %v2090 = vrot.slane %v2077, 4
      %v2091 = vrot.slane %v2079, 4
      %v2092 = vrot.slane %v2081, 4
      %v2093 = vrot.slane %v2083, 4
      %v2094 = vrot.slane %v2085, 4
      %v2095 = vrot.slane %v2087, 4
      %v2096 = vsel %vm916, %v2088, %v2089
      %v2097 = vsel %vm967, %v2073, %v2096
      %v2098 = vsel %vm916, %v2090, %v2091
      %v2099 = vsel %vm967, %v2077, %v2098
      %v2100 = vsel %vm916, %v2092, %v2093
      %v2101 = vsel %vm967, %v2081, %v2100
      %v2102 = vsel %vm916, %v2094, %v2095
      %v2103 = vsel %vm967, %v2085, %v2102
      %2108 = vst [vmem:[#allocation3 + $0x20] sm:$0xff] %v2097
      %2109 = vst [vmem:[#allocation3 + $0x28] sm:$0xff] %v2099
      %2110 = vst [vmem:[#allocation3 + $0x30] sm:$0xff] %v2101
      %2111 = vst [vmem:[#allocation3 + $0x38] sm:$0xff] %v2103
      %v2112 = vld [vmem:[%s1] sm:$0x22]
      %v2114 = vunpack.c.l.b16 %v2112
      %v2115 = vunpack.c.h.b16 %v2112
      %v2116 = vpack.c.b16 %v2114, %v2114
      %v2117 = vpack.c.b16 %v2115, %v2115
      %v2119 = vshrl.u32 %v2116, 16
      %v2120 = vpack.i.b16 %v2119, %v2119
      %v2122 = vperm.slane %v2120, 1
      %v2124 = vshrl.u32 %v2117, 16
      %v2125 = vpack.i.b16 %v2124, %v2124
      %v2127 = vperm.slane %v2125, 1
      %v2128 = vunpack.c.l.bf16 %v2122
      %v2129 = vunpack.c.l.bf16 %v2127
      %2132 = vrot.lane.b32.xlu0 %v2128, 113
      %v2133 = vpop.permute.xlu0 %2132
      %2134 = vrot.lane.b32.xlu0 %v2129, 113
      %v2135 = vpop.permute.xlu0 %2134
      %v2136 = vsel %vm1007, %v2133, %v2135
      %v2140 = vmul.f32 %v1972, %v2133
      %v2141 = vmul.f32 %v1973, %v2136
      %v2142 = vmul.f32 %v1974, %v2135
      %v2143 = vmul.f32 %v1975, %v2133
      %v2144 = vmul.f32 %v1976, %v2136
      %v2145 = vmul.f32 %v1977, %v2135
      %v2146 = vmul.f32 %v1978, %v2133
      %v2147 = vmul.f32 %v1979, %v2136
      %v2148 = vmul.f32 %v1980, %v2135
      %v2149 = vmul.f32 %v1981, %v2133
      %v2150 = vmul.f32 %v1982, %v2136
      %v2151 = vmul.f32 %v1983, %v2135
      %v2152 = vpack.c.bf16 %v2141, %v2140
      %v2153 = vpack.c.bf16 %v2142, %v2142
      %v2154 = vpack.c.bf16 %v2144, %v2143
      %v2155 = vpack.c.bf16 %v2145, %v2145
      %v2156 = vpack.c.bf16 %v2147, %v2146
      %v2157 = vpack.c.bf16 %v2148, %v2148
      %v2158 = vpack.c.bf16 %v2150, %v2149
      %v2159 = vpack.c.bf16 %v2151, %v2151
      %2168 = vrot.lane.b32.xlu0 %v2152, 15
      %v2169 = vpop.permute.xlu0 %2168
      %2170 = vrot.lane.b32.xlu0 %v2153, 15
      %v2171 = vpop.permute.xlu0 %2170
      %2172 = vrot.lane.b32.xlu0 %v2154, 15
      %v2173 = vpop.permute.xlu0 %2172
      %2174 = vrot.lane.b32.xlu0 %v2155, 15
      %v2175 = vpop.permute.xlu0 %2174
      %2176 = vrot.lane.b32.xlu0 %v2156, 15
      %v2177 = vpop.permute.xlu0 %2176
      %2178 = vrot.lane.b32.xlu0 %v2157, 15
      %v2179 = vpop.permute.xlu0 %2178
      %2180 = vrot.lane.b32.xlu0 %v2158, 15
      %v2181 = vpop.permute.xlu0 %2180
      %2182 = vrot.lane.b32.xlu0 %v2159, 15
      %v2183 = vpop.permute.xlu0 %2182
      %v2184 = vrot.slane %v2169, 4
      %v2185 = vrot.slane %v2171, 4
      %v2186 = vrot.slane %v2173, 4
      %v2187 = vrot.slane %v2175, 4
      %v2188 = vrot.slane %v2177, 4
      %v2189 = vrot.slane %v2179, 4
      %v2190 = vrot.slane %v2181, 4
      %v2191 = vrot.slane %v2183, 4
      %v2192 = vsel %vm916, %v2184, %v2185
      %v2193 = vsel %vm1065, %v2169, %v2192
      %v2194 = vsel %vm916, %v2186, %v2187
      %v2195 = vsel %vm1065, %v2173, %v2194
      %v2196 = vsel %vm916, %v2188, %v2189
      %v2197 = vsel %vm1065, %v2177, %v2196
      %v2198 = vsel %vm916, %v2190, %v2191
      %v2199 = vsel %vm1065, %v2181, %v2198
      %2204 = vst [vmem:[#allocation3 + $0x40] sm:$0xff] %v2193
      %2205 = vst [vmem:[#allocation3 + $0x48] sm:$0xff] %v2195
      %2206 = vst [vmem:[#allocation3 + $0x50] sm:$0xff] %v2197
      %2207 = vst [vmem:[#allocation3 + $0x58] sm:$0xff] %v2199
      %v2208 = vld [vmem:[%s1] sm:$0x11]
      %v2210 = vunpack.c.l.b16 %v2208
      %v2211 = vunpack.c.h.b16 %v2208
      %v2212 = vpack.c.b16 %v2210, %v2210
      %v2213 = vpack.c.b16 %v2211, %v2211
      %v2215 = vshrl.u32 %v2212, 16
      %v2216 = vpack.i.b16 %v2215, %v2215
      %v2218 = vperm.slane %v2216, 0
      %v2220 = vshrl.u32 %v2213, 16
      %v2221 = vpack.i.b16 %v2220, %v2220
      %v2223 = vperm.slane %v2221, 0
      %v2224 = vunpack.c.l.bf16 %v2218
      %v2225 = vunpack.c.l.bf16 %v2223
      %2228 = vrot.lane.b32.xlu0 %v2224, 127
      %v2229 = vpop.permute.xlu0 %2228
      %2230 = vrot.lane.b32.xlu0 %v2225, 127
      %v2231 = vpop.permute.xlu0 %2230
      %v2232 = vsel %vm1105, %v2229, %v2231
      %v2236 = vmul.f32 %v1972, %v2229
      %v2237 = vmul.f32 %v1973, %v2232
      %v2238 = vmul.f32 %v1974, %v2231
      %v2239 = vmul.f32 %v1975, %v2229
      %v2240 = vmul.f32 %v1976, %v2232
      %v2241 = vmul.f32 %v1977, %v2231
      %v2242 = vmul.f32 %v1978, %v2229
      %v2243 = vmul.f32 %v1979, %v2232
      %v2244 = vmul.f32 %v1980, %v2231
      %v2245 = vmul.f32 %v1981, %v2229
      %v2246 = vmul.f32 %v1982, %v2232
      %v2247 = vmul.f32 %v1983, %v2231
      %v2248 = vpack.c.bf16 %v2237, %v2236
      %v2249 = vpack.c.bf16 %v2238, %v2238
      %v2250 = vpack.c.bf16 %v2240, %v2239
      %v2251 = vpack.c.bf16 %v2241, %v2241
      %v2252 = vpack.c.bf16 %v2243, %v2242
      %v2253 = vpack.c.bf16 %v2244, %v2244
      %v2254 = vpack.c.bf16 %v2246, %v2245
      %v2255 = vpack.c.bf16 %v2247, %v2247
      %2264 = vrot.lane.b32.xlu0 %v2248, 1
      %v2265 = vpop.permute.xlu0 %2264
      %2266 = vrot.lane.b32.xlu0 %v2249, 1
      %v2267 = vpop.permute.xlu0 %2266
      %2268 = vrot.lane.b32.xlu0 %v2250, 1
      %v2269 = vpop.permute.xlu0 %2268
      %2270 = vrot.lane.b32.xlu0 %v2251, 1
      %v2271 = vpop.permute.xlu0 %2270
      %2272 = vrot.lane.b32.xlu0 %v2252, 1
      %v2273 = vpop.permute.xlu0 %2272
      %2274 = vrot.lane.b32.xlu0 %v2253, 1
      %v2275 = vpop.permute.xlu0 %2274
      %2276 = vrot.lane.b32.xlu0 %v2254, 1
      %v2277 = vpop.permute.xlu0 %2276
      %2278 = vrot.lane.b32.xlu0 %v2255, 1
      %v2279 = vpop.permute.xlu0 %2278
      %v2280 = vrot.slane %v2265, 4
      %v2281 = vrot.slane %v2267, 4
      %v2282 = vrot.slane %v2269, 4
      %v2283 = vrot.slane %v2271, 4
      %v2284 = vrot.slane %v2273, 4
      %v2285 = vrot.slane %v2275, 4
      %v2286 = vrot.slane %v2277, 4
      %v2287 = vrot.slane %v2279, 4
      %v2288 = vsel %vm916, %v2280, %v2281
      %v2289 = vsel %vm1163, %v2265, %v2288
      %v2290 = vsel %vm916, %v2282, %v2283
      %v2291 = vsel %vm1163, %v2269, %v2290
      %v2292 = vsel %vm916, %v2284, %v2285
      %v2293 = vsel %vm1163, %v2273, %v2292
      %v2294 = vsel %vm916, %v2286, %v2287
      %v2295 = vsel %vm1163, %v2277, %v2294
      %2300 = vst [vmem:[#allocation3 + $0x60] sm:$0xff] %v2289
      %2301 = vst [vmem:[#allocation3 + $0x68] sm:$0xff] %v2291
      %2302 = vst [vmem:[#allocation3 + $0x70] sm:$0xff] %v2293
      %2303 = vst [vmem:[#allocation3 + $0x78] sm:$0xff] %v2295
      %v2304 = vrot.slane %v1948, 4
      %v2305 = vrot.slane %v1949, 4
      %v2306 = vrot.slane %v1950, 4
      %v2307 = vrot.slane %v1951, 4
      %v2308 = vrot.slane %v1952, 4
      %v2309 = vrot.slane %v1953, 4
      %v2310 = vrot.slane %v1954, 4
      %v2311 = vrot.slane %v1955, 4
      %v2312 = vsel %vm916, %v2304, %v2305
      %v2313 = vsel %vm916, %v2306, %v2307
      %v2314 = vsel %vm916, %v2308, %v2309
      %v2315 = vsel %vm916, %v2310, %v2311
      %2320 = vst [vmem:[#allocation3 + $0x80] sm:$0xff] %v2312
      %2321 = vst [vmem:[#allocation3 + $0x88] sm:$0xff] %v2313
      %2322 = vst [vmem:[#allocation3 + $0x90] sm:$0xff] %v2314
      %2323 = vst [vmem:[#allocation3 + $0x98] sm:$0xff] %v2315
      %v2324 = vld [vmem:[%s1] sm:$0x22]
      %v2326 = vunpack.c.l.b16 %v2324
      %v2327 = vunpack.c.h.b16 %v2324
      %v2328 = vpack.c.b16 %v2326, %v2326
      %v2329 = vpack.c.b16 %v2327, %v2327
      %v2331 = vshrl.u32 %v2328, 16
      %v2332 = vpack.i.b16 %v2331, %v2331
      %v2334 = vperm.slane %v2332, 1
      %v2336 = vshrl.u32 %v2329, 16
      %v2337 = vpack.i.b16 %v2336, %v2336
      %v2339 = vperm.slane %v2337, 1
      %2340 = vrot.lane.b32.xlu0 %v1948, 127
      %v2341 = vpop.permute.xlu0 %2340
      %2342 = vrot.lane.b32.xlu0 %v1949, 127
      %v2343 = vpop.permute.xlu0 %2342
      %2344 = vrot.lane.b32.xlu0 %v1950, 127
      %v2345 = vpop.permute.xlu0 %2344
      %2346 = vrot.lane.b32.xlu0 %v1951, 127
      %v2347 = vpop.permute.xlu0 %2346
      %2348 = vrot.lane.b32.xlu0 %v1952, 127
      %v2349 = vpop.permute.xlu0 %2348
      %2350 = vrot.lane.b32.xlu0 %v1953, 127
      %v2351 = vpop.permute.xlu0 %2350
      %2352 = vrot.lane.b32.xlu0 %v1954, 127
      %v2353 = vpop.permute.xlu0 %2352
      %2354 = vrot.lane.b32.xlu0 %v1955, 127
      %v2355 = vpop.permute.xlu0 %2354
      %v2356 = vrot.slane %v2341, 4
      %v2357 = vrot.slane %v2343, 4
      %v2358 = vrot.slane %v2345, 4
      %v2359 = vrot.slane %v2347, 4
      %v2360 = vrot.slane %v2349, 4
      %v2361 = vrot.slane %v2351, 4
      %v2362 = vrot.slane %v2353, 4
      %v2363 = vrot.slane %v2355, 4
      %v2364 = vsel %vm916, %v2356, %v2357
      %v2365 = vsel %vm1240, %v2364, %v2343
      %v2366 = vsel %vm916, %v2358, %v2359
      %v2367 = vsel %vm1240, %v2366, %v2347
      %v2368 = vsel %vm916, %v2360, %v2361
      %v2369 = vsel %vm1240, %v2368, %v2351
      %v2370 = vsel %vm916, %v2362, %v2363
      %v2371 = vsel %vm1240, %v2370, %v2355
      %v2376 = vunpack.c.l.bf16 %v2365
      %v2377 = vunpack.c.h.bf16 %v2365
      %v2378 = vunpack.c.l.bf16 %v2367
      %v2379 = vunpack.c.h.bf16 %v2367
      %v2380 = vunpack.c.l.bf16 %v2369
      %v2381 = vunpack.c.h.bf16 %v2369
      %v2382 = vunpack.c.l.bf16 %v2371
      %v2383 = vunpack.c.h.bf16 %v2371
      %v2384 = vunpack.c.l.bf16 %v2334
      %v2385 = vunpack.c.l.bf16 %v2339
      %v2386 = vmul.f32 %v2376, %v2384
      %v2387 = vmul.f32 %v2377, %v2385
      %v2388 = vmul.f32 %v2378, %v2384
      %v2389 = vmul.f32 %v2379, %v2385
      %v2390 = vmul.f32 %v2380, %v2384
      %v2391 = vmul.f32 %v2381, %v2385
      %v2392 = vmul.f32 %v2382, %v2384
      %v2393 = vmul.f32 %v2383, %v2385
      %v2394 = vpack.c.bf16 %v2387, %v2386
      %v2395 = vpack.c.bf16 %v2389, %v2388
      %v2396 = vpack.c.bf16 %v2391, %v2390
      %v2397 = vpack.c.bf16 %v2393, %v2392
      %2398 = vst [vmem:[#allocation3 + $0xa0] sm:$0xff] %v2394
      %2399 = vst [vmem:[#allocation3 + $0xa8] sm:$0xff] %v2395
      %2400 = vst [vmem:[#allocation3 + $0xb0] sm:$0xff] %v2396
      %2401 = vst [vmem:[#allocation3 + $0xb8] sm:$0xff] %v2397
      %v2402 = vld [vmem:[%s1] sm:$0x11]
      %v2404 = vunpack.c.l.b16 %v2402
      %v2405 = vunpack.c.h.b16 %v2402
      %v2406 = vpack.c.b16 %v2404, %v2404
      %v2407 = vpack.c.b16 %v2405, %v2405
      %v2409 = vshrl.u32 %v2406, 16
      %v2410 = vpack.i.b16 %v2409, %v2409
      %v2412 = vperm.slane %v2410, 0
      %v2414 = vshrl.u32 %v2407, 16
      %v2415 = vpack.i.b16 %v2414, %v2414
      %v2417 = vperm.slane %v2415, 0
      %2418 = vrot.lane.b32.xlu0 %v1948, 113
      %v2419 = vpop.permute.xlu0 %2418
      %2420 = vrot.lane.b32.xlu0 %v1949, 113
      %v2421 = vpop.permute.xlu0 %2420
      %2422 = vrot.lane.b32.xlu0 %v1950, 113
      %v2423 = vpop.permute.xlu0 %2422
      %2424 = vrot.lane.b32.xlu0 %v1951, 113
      %v2425 = vpop.permute.xlu0 %2424
      %2426 = vrot.lane.b32.xlu0 %v1952, 113
      %v2427 = vpop.permute.xlu0 %2426
      %2428 = vrot.lane.b32.xlu0 %v1953, 113
      %v2429 = vpop.permute.xlu0 %2428
      %2430 = vrot.lane.b32.xlu0 %v1954, 113
      %v2431 = vpop.permute.xlu0 %2430
      %2432 = vrot.lane.b32.xlu0 %v1955, 113
      %v2433 = vpop.permute.xlu0 %2432
      %v2434 = vrot.slane %v2419, 4
      %v2435 = vrot.slane %v2421, 4
      %v2436 = vrot.slane %v2423, 4
      %v2437 = vrot.slane %v2425, 4
      %v2438 = vrot.slane %v2427, 4
      %v2439 = vrot.slane %v2429, 4
      %v2440 = vrot.slane %v2431, 4
      %v2441 = vrot.slane %v2433, 4
      %v2442 = vsel %vm916, %v2434, %v2435
      %v2443 = vsel %vm1319, %v2442, %v2421
      %v2444 = vsel %vm916, %v2436, %v2437
      %v2445 = vsel %vm1319, %v2444, %v2425
      %v2446 = vsel %vm916, %v2438, %v2439
      %v2447 = vsel %vm1319, %v2446, %v2429
      %v2448 = vsel %vm916, %v2440, %v2441
      %v2449 = vsel %vm1319, %v2448, %v2433
      %v2454 = vunpack.c.l.bf16 %v2443
      %v2455 = vunpack.c.h.bf16 %v2443
      %v2456 = vunpack.c.l.bf16 %v2445
      %v2457 = vunpack.c.h.bf16 %v2445
      %v2458 = vunpack.c.l.bf16 %v2447
      %v2459 = vunpack.c.h.bf16 %v2447
      %v2460 = vunpack.c.l.bf16 %v2449
      %v2461 = vunpack.c.h.bf16 %v2449
      %v2462 = vunpack.c.l.bf16 %v2412
      %v2463 = vunpack.c.l.bf16 %v2417
      %v2464 = vmul.f32 %v2454, %v2462
      %v2465 = vmul.f32 %v2455, %v2463
      %v2466 = vmul.f32 %v2456, %v2462
      %v2467 = vmul.f32 %v2457, %v2463
      %v2468 = vmul.f32 %v2458, %v2462
      %v2469 = vmul.f32 %v2459, %v2463
      %v2470 = vmul.f32 %v2460, %v2462
      %v2471 = vmul.f32 %v2461, %v2463
      %v2472 = vpack.c.bf16 %v2465, %v2464
      %v2473 = vpack.c.bf16 %v2467, %v2466
      %v2474 = vpack.c.bf16 %v2469, %v2468
      %v2475 = vpack.c.bf16 %v2471, %v2470
      %2476 = vst [vmem:[#allocation3 + $0xc0] sm:$0xff] %v2472
      %2477 = vst [vmem:[#allocation3 + $0xc8] sm:$0xff] %v2473
      %2478 = vst [vmem:[#allocation3 + $0xd0] sm:$0xff] %v2474
      %2479 = vst [vmem:[#allocation3 + $0xd8] sm:$0xff] %v2475
      %2480 = vrot.lane.b32.xlu0 %v1948, 112
      %v2481 = vpop.permute.xlu0 %2480
      %2482 = vrot.lane.b32.xlu0 %v1949, 112
      %v2483 = vpop.permute.xlu0 %2482
      %2484 = vrot.lane.b32.xlu0 %v1950, 112
      %v2485 = vpop.permute.xlu0 %2484
      %2486 = vrot.lane.b32.xlu0 %v1951, 112
      %v2487 = vpop.permute.xlu0 %2486
      %2488 = vrot.lane.b32.xlu0 %v1952, 112
      %v2489 = vpop.permute.xlu0 %2488
      %2490 = vrot.lane.b32.xlu0 %v1953, 112
      %v2491 = vpop.permute.xlu0 %2490
      %2492 = vrot.lane.b32.xlu0 %v1954, 112
      %v2493 = vpop.permute.xlu0 %2492
      %2494 = vrot.lane.b32.xlu0 %v1955, 112
      %v2495 = vpop.permute.xlu0 %2494
      %v2496 = vrot.slane %v2481, 4
      %v2497 = vrot.slane %v2483, 4
      %v2498 = vrot.slane %v2485, 4
      %v2499 = vrot.slane %v2487, 4
      %v2500 = vrot.slane %v2489, 4
      %v2501 = vrot.slane %v2491, 4
      %v2502 = vrot.slane %v2493, 4
      %v2503 = vrot.slane %v2495, 4
      %v2504 = vsel %vm916, %v2496, %v2497
      %v2505 = vsel %vm1382, %v2504, %v2483
      %v2506 = vsel %vm916, %v2498, %v2499
      %v2507 = vsel %vm1382, %v2506, %v2487
      %v2508 = vsel %vm916, %v2500, %v2501
      %v2509 = vsel %vm1382, %v2508, %v2491
      %v2510 = vsel %vm916, %v2502, %v2503
      %v2511 = vsel %vm1382, %v2510, %v2495
      %2516 = vst [vmem:[#allocation3 + $0xe0] sm:$0xff] %v2505
      %2517 = vst [vmem:[#allocation3 + $0xe8] sm:$0xff] %v2507
      %2518 = vst [vmem:[#allocation3 + $0xf0] sm:$0xff] %v2509
      %2519 = vst [vmem:[#allocation3 + $0xf8] sm:$0xff] %v2511
      %v2520 = vld [vmem:[%s1] sm:$0x22]
      %v2522 = vunpack.c.l.b16 %v2520
      %v2523 = vunpack.c.h.b16 %v2520
      %v2524 = vpack.c.b16 %v2522, %v2522
      %v2525 = vpack.c.b16 %v2523, %v2523
      %v2527 = vshrl.u32 %v2524, 16
      %v2528 = vpack.i.b16 %v2527, %v2527
      %v2530 = vperm.slane %v2528, 1
      %v2532 = vshrl.u32 %v2525, 16
      %v2533 = vpack.i.b16 %v2532, %v2532
      %v2535 = vperm.slane %v2533, 1
      %2536 = vrot.lane.b32.xlu0 %v1948, 111
      %v2537 = vpop.permute.xlu0 %2536
      %2538 = vrot.lane.b32.xlu0 %v1949, 111
      %v2539 = vpop.permute.xlu0 %2538
      %2540 = vrot.lane.b32.xlu0 %v1950, 111
      %v2541 = vpop.permute.xlu0 %2540
      %2542 = vrot.lane.b32.xlu0 %v1951, 111
      %v2543 = vpop.permute.xlu0 %2542
      %2544 = vrot.lane.b32.xlu0 %v1952, 111
      %v2545 = vpop.permute.xlu0 %2544
      %2546 = vrot.lane.b32.xlu0 %v1953, 111
      %v2547 = vpop.permute.xlu0 %2546
      %2548 = vrot.lane.b32.xlu0 %v1954, 111
      %v2549 = vpop.permute.xlu0 %2548
      %2550 = vrot.lane.b32.xlu0 %v1955, 111
      %v2551 = vpop.permute.xlu0 %2550
      %v2552 = vrot.slane %v2537, 4
      %v2553 = vrot.slane %v2539, 4
      %v2554 = vrot.slane %v2541, 4
      %v2555 = vrot.slane %v2543, 4
      %v2556 = vrot.slane %v2545, 4
      %v2557 = vrot.slane %v2547, 4
      %v2558 = vrot.slane %v2549, 4
      %v2559 = vrot.slane %v2551, 4
      %v2560 = vsel %vm916, %v2552, %v2553
      %v2561 = vsel %vm1439, %v2560, %v2539
      %v2562 = vsel %vm916, %v2554, %v2555
      %v2563 = vsel %vm1439, %v2562, %v2543
      %v2564 = vsel %vm916, %v2556, %v2557
      %v2565 = vsel %vm1439, %v2564, %v2547
      %v2566 = vsel %vm916, %v2558, %v2559
      %v2567 = vsel %vm1439, %v2566, %v2551
      %v2572 = vunpack.c.l.bf16 %v2561
      %v2573 = vunpack.c.h.bf16 %v2561
      %v2574 = vunpack.c.l.bf16 %v2563
      %v2575 = vunpack.c.h.bf16 %v2563
      %v2576 = vunpack.c.l.bf16 %v2565
      %v2577 = vunpack.c.h.bf16 %v2565
      %v2578 = vunpack.c.l.bf16 %v2567
      %v2579 = vunpack.c.h.bf16 %v2567
      %v2580 = vunpack.c.l.bf16 %v2530
      %v2581 = vunpack.c.l.bf16 %v2535
      %v2582 = vmul.f32 %v2572, %v2580
      %v2583 = vmul.f32 %v2573, %v2581
      %v2584 = vmul.f32 %v2574, %v2580
      %v2585 = vmul.f32 %v2575, %v2581
      %v2586 = vmul.f32 %v2576, %v2580
      %v2587 = vmul.f32 %v2577, %v2581
      %v2588 = vmul.f32 %v2578, %v2580
      %v2589 = vmul.f32 %v2579, %v2581
      %v2590 = vpack.c.bf16 %v2583, %v2582
      %v2591 = vpack.c.bf16 %v2585, %v2584
      %v2592 = vpack.c.bf16 %v2587, %v2586
      %v2593 = vpack.c.bf16 %v2589, %v2588
      %2594 = vst [vmem:[#allocation3 + $0x100] sm:$0xff] %v2590
      %2595 = vst [vmem:[#allocation3 + $0x108] sm:$0xff] %v2591
      %2596 = vst [vmem:[#allocation3 + $0x110] sm:$0xff] %v2592
      %2597 = vst [vmem:[#allocation3 + $0x118] sm:$0xff] %v2593
      %v2598 = vld [vmem:[%s5] sm:$0xff]
      %v2599 = vld [vmem:[%s5 + $0x8] sm:$0xf]
      %v2600 = vld [vmem:[%s5 + $0xc] sm:$0xff]
      %v2601 = vld [vmem:[%s5 + $0x14] sm:$0xf]
      %v2602 = vld [vmem:[%s5 + $0x18] sm:$0xff]
      %v2603 = vld [vmem:[%s5 + $0x20] sm:$0xf]
      %v2604 = vld [vmem:[%s5 + $0x24] sm:$0xff]
      %v2605 = vld [vmem:[%s5 + $0x2c] sm:$0xf]
      %v2606 = vld [vmem:[#allocation3] sm:$0xff]
      %v2607 = vld [vmem:[#allocation3 + $0x8] sm:$0xff]
      %v2608 = vld [vmem:[#allocation3 + $0x10] sm:$0xff]
      %v2609 = vld [vmem:[#allocation3 + $0x18] sm:$0xff]
      %v2610 = vld [vmem:[#allocation3 + $0x20] sm:$0xff]
      %v2611 = vld [vmem:[#allocation3 + $0x28] sm:$0xff]
      %v2612 = vld [vmem:[#allocation3 + $0x30] sm:$0xff]
      %v2613 = vld [vmem:[#allocation3 + $0x38] sm:$0xff]
      %v2614 = vld [vmem:[#allocation3 + $0x40] sm:$0xff]
      %v2615 = vld [vmem:[#allocation3 + $0x48] sm:$0xff]
      %v2616 = vld [vmem:[#allocation3 + $0x50] sm:$0xff]
      %v2617 = vld [vmem:[#allocation3 + $0x58] sm:$0xff]
      %v2618 = vld [vmem:[#allocation3 + $0x60] sm:$0xff]
      %v2619 = vld [vmem:[#allocation3 + $0x68] sm:$0xff]
      %v2620 = vld [vmem:[#allocation3 + $0x70] sm:$0xff]
      %v2621 = vld [vmem:[#allocation3 + $0x78] sm:$0xff]
      %v2622 = vld [vmem:[#allocation3 + $0x80] sm:$0xff]
      %v2623 = vld [vmem:[#allocation3 + $0x88] sm:$0xff]
      %v2624 = vld [vmem:[#allocation3 + $0x90] sm:$0xff]
      %v2625 = vld [vmem:[#allocation3 + $0x98] sm:$0xff]
      %v2626 = vld [vmem:[#allocation3 + $0xa0] sm:$0xff]
      %v2627 = vld [vmem:[#allocation3 + $0xa8] sm:$0xff]
      %v2628 = vld [vmem:[#allocation3 + $0xb0] sm:$0xff]
      %v2629 = vld [vmem:[#allocation3 + $0xb8] sm:$0xff]
      %v2630 = vld [vmem:[#allocation3 + $0xc0] sm:$0xff]
      %v2631 = vld [vmem:[#allocation3 + $0xc8] sm:$0xff]
      %v2632 = vld [vmem:[#allocation3 + $0xd0] sm:$0xff]
      %v2633 = vld [vmem:[#allocation3 + $0xd8] sm:$0xff]
      %v2634 = vld [vmem:[#allocation3 + $0xe0] sm:$0xff]
      %v2635 = vld [vmem:[#allocation3 + $0xe8] sm:$0xff]
      %v2636 = vld [vmem:[#allocation3 + $0xf0] sm:$0xff]
      %v2637 = vld [vmem:[#allocation3 + $0xf8] sm:$0xff]
      %v2638 = vld [vmem:[#allocation3 + $0x100] sm:$0xff]
      %v2639 = vld [vmem:[#allocation3 + $0x108] sm:$0xff]
      %v2640 = vld [vmem:[#allocation3 + $0x110] sm:$0xff]
      %v2641 = vld [vmem:[#allocation3 + $0x118] sm:$0xff]
      %v2650 = vunpack.c.l.b16 %v2598
      %v2651 = vunpack.c.h.b16 %v2598
      %v2652 = vunpack.c.l.b16 %v2599
      %v2653 = vunpack.c.l.b16 %v2600
      %v2654 = vunpack.c.h.b16 %v2600
      %v2655 = vunpack.c.l.b16 %v2601
      %v2656 = vunpack.c.l.b16 %v2602
      %v2657 = vunpack.c.h.b16 %v2602
      %v2658 = vunpack.c.l.b16 %v2603
      %v2659 = vunpack.c.l.b16 %v2604
      %v2660 = vunpack.c.h.b16 %v2604
      %v2661 = vunpack.c.l.b16 %v2605
      %v2662 = vpack.c.b16 %v2653, %v2650
      %v2663 = vpack.c.b16 %v2654, %v2651
      %v2664 = vpack.c.b16 %v2655, %v2652
      %v2665 = vpack.c.b16 %v2659, %v2656
      %v2666 = vpack.c.b16 %v2660, %v2657
      %v2667 = vpack.c.b16 %v2661, %v2658
      %v2708 = vunpack.c.l.b16 %v2606
      %v2709 = vunpack.c.h.b16 %v2606
      %v2710 = vunpack.c.l.b16 %v2607
      %v2711 = vunpack.c.h.b16 %v2607
      %v2712 = vunpack.c.l.b16 %v2608
      %v2713 = vunpack.c.h.b16 %v2608
      %v2714 = vunpack.c.l.b16 %v2609
      %v2715 = vunpack.c.h.b16 %v2609
      %v2716 = vunpack.c.l.b16 %v2610
      %v2717 = vunpack.c.h.b16 %v2610
      %v2718 = vunpack.c.l.b16 %v2611
      %v2719 = vunpack.c.h.b16 %v2611
      %v2720 = vunpack.c.l.b16 %v2612
      %v2721 = vunpack.c.h.b16 %v2612
      %v2722 = vunpack.c.l.b16 %v2613
      %v2723 = vunpack.c.h.b16 %v2613
      %v2724 = vunpack.c.l.b16 %v2614
      %v2725 = vunpack.c.h.b16 %v2614
      %v2726 = vunpack.c.l.b16 %v2615
      %v2727 = vunpack.c.h.b16 %v2615
      %v2728 = vunpack.c.l.b16 %v2616
      %v2729 = vunpack.c.h.b16 %v2616
      %v2730 = vunpack.c.l.b16 %v2617
      %v2731 = vunpack.c.h.b16 %v2617
      %v2732 = vunpack.c.l.b16 %v2618
      %v2733 = vunpack.c.h.b16 %v2618
      %v2734 = vunpack.c.l.b16 %v2619
      %v2735 = vunpack.c.h.b16 %v2619
      %v2736 = vunpack.c.l.b16 %v2620
      %v2737 = vunpack.c.h.b16 %v2620
      %v2738 = vunpack.c.l.b16 %v2621
      %v2739 = vunpack.c.h.b16 %v2621
      %v2740 = vunpack.c.l.b16 %v2622
      %v2741 = vunpack.c.h.b16 %v2622
      %v2742 = vunpack.c.l.b16 %v2623
      %v2743 = vunpack.c.h.b16 %v2623
      %v2744 = vunpack.c.l.b16 %v2624
      %v2745 = vunpack.c.h.b16 %v2624
      %v2746 = vunpack.c.l.b16 %v2625
      %v2747 = vunpack.c.h.b16 %v2625
      %v2748 = vunpack.c.l.b16 %v2626
      %v2749 = vunpack.c.h.b16 %v2626
      %v2750 = vunpack.c.l.b16 %v2627
      %v2751 = vunpack.c.h.b16 %v2627
      %v2752 = vunpack.c.l.b16 %v2628
      %v2753 = vunpack.c.h.b16 %v2628
      %v2754 = vunpack.c.l.b16 %v2629
      %v2755 = vunpack.c.h.b16 %v2629
      %v2756 = vunpack.c.l.b16 %v2630
      %v2757 = vunpack.c.h.b16 %v2630
      %v2758 = vunpack.c.l.b16 %v2631
      %v2759 = vunpack.c.h.b16 %v2631
      %v2760 = vunpack.c.l.b16 %v2632
      %v2761 = vunpack.c.h.b16 %v2632
      %v2762 = vunpack.c.l.b16 %v2633
      %v2763 = vunpack.c.h.b16 %v2633
      %v2764 = vunpack.c.l.b16 %v2634
      %v2765 = vunpack.c.h.b16 %v2634
      %v2766 = vunpack.c.l.b16 %v2635
      %v2767 = vunpack.c.h.b16 %v2635
      %v2768 = vunpack.c.l.b16 %v2636
      %v2769 = vunpack.c.h.b16 %v2636
      %v2770 = vunpack.c.l.b16 %v2637
      %v2771 = vunpack.c.h.b16 %v2637
      %v2772 = vunpack.c.l.b16 %v2638
      %v2773 = vunpack.c.h.b16 %v2638
      %v2774 = vunpack.c.l.b16 %v2639
      %v2775 = vunpack.c.h.b16 %v2639
      %v2776 = vunpack.c.l.b16 %v2640
      %v2777 = vunpack.c.h.b16 %v2640
      %v2778 = vunpack.c.l.b16 %v2641
      %v2779 = vunpack.c.h.b16 %v2641
      %v2780 = vpack.c.b16 %v2710, %v2708
      %v2781 = vpack.c.b16 %v2711, %v2709
      %v2782 = vpack.c.b16 %v2714, %v2712
      %v2783 = vpack.c.b16 %v2715, %v2713
      %v2784 = vpack.c.b16 %v2718, %v2716
      %v2785 = vpack.c.b16 %v2719, %v2717
      %v2786 = vpack.c.b16 %v2722, %v2720
      %v2787 = vpack.c.b16 %v2723, %v2721
      %v2788 = vpack.c.b16 %v2726, %v2724
      %v2789 = vpack.c.b16 %v2727, %v2725
      %v2790 = vpack.c.b16 %v2730, %v2728
      %v2791 = vpack.c.b16 %v2731, %v2729
      %v2792 = vpack.c.b16 %v2734, %v2732
      %v2793 = vpack.c.b16 %v2735, %v2733
      %v2794 = vpack.c.b16 %v2738, %v2736
      %v2795 = vpack.c.b16 %v2739, %v2737
      %v2796 = vpack.c.b16 %v2742, %v2740
      %v2797 = vpack.c.b16 %v2743, %v2741
      %v2798 = vpack.c.b16 %v2746, %v2744
      %v2799 = vpack.c.b16 %v2747, %v2745
      %v2800 = vpack.c.b16 %v2750, %v2748
      %v2801 = vpack.c.b16 %v2751, %v2749
      %v2802 = vpack.c.b16 %v2754, %v2752
      %v2803 = vpack.c.b16 %v2755, %v2753
      %v2804 = vpack.c.b16 %v2758, %v2756
      %v2805 = vpack.c.b16 %v2759, %v2757
      %v2806 = vpack.c.b16 %v2762, %v2760
      %v2807 = vpack.c.b16 %v2763, %v2761
      %v2808 = vpack.c.b16 %v2766, %v2764
      %v2809 = vpack.c.b16 %v2767, %v2765
      %v2810 = vpack.c.b16 %v2770, %v2768
      %v2811 = vpack.c.b16 %v2771, %v2769
      %v2812 = vpack.c.b16 %v2774, %v2772
      %v2813 = vpack.c.b16 %v2775, %v2773
      %v2814 = vpack.c.b16 %v2778, %v2776
      %v2815 = vpack.c.b16 %v2779, %v2777
      %v2853 = vsel %vm1731, %v2664, 0
      %v2856 = vsel %vm1731, %v2667, 0
      %2858 = vmatpush.bf16.msra.mxu0 %v2794
      %2859 = vmatpush.bf16.msra.mxu0 %v2792
      %2860 = vmatpush.bf16.msra.mxu0 %v2790
      %2861 = vmatpush.bf16.msra.mxu0 %v2788
      %2862 = vmatpush.bf16.msra.mxu0 %v2786
      %2863 = vmatpush.bf16.msra.mxu0 %v2784
      %2864 = vmatpush.bf16.msra.mxu0 %v2782
      %2865 = vmatpush.bf16.msra.mxu0 %v2780
      %2866 = vmatmul.bf16.gmra.mxu0 %v2662
      %v2867 = vpop.f32.mrf.mxu0
      %v2868 = vadd.f32 0.0, %v2867
      %v2869 = vpop.f32.mrf.mxu0
      %v2870 = vadd.f32 0.0, %v2869
      %2871 = vmatmul.bf16.gmra.mxu0 %v2665
      %v2872 = vpop.f32.mrf.mxu0
      %v2873 = vadd.f32 0.0, %v2872
      %v2874 = vpop.f32.mrf.mxu0
      %v2875 = vadd.f32 0.0, %v2874
      %2876 = vdwg.mxu0
      %2877 = vmatpush.bf16.msra.mxu0 %v2810
      %2878 = vmatpush.bf16.msra.mxu0 %v2808
      %2879 = vmatpush.bf16.msra.mxu0 %v2806
      %2880 = vmatpush.bf16.msra.mxu0 %v2804
      %2881 = vmatpush.bf16.msra.mxu0 %v2802
      %2882 = vmatpush.bf16.msra.mxu0 %v2800
      %2883 = vmatpush.bf16.msra.mxu0 %v2798
      %2884 = vmatpush.bf16.msra.mxu0 %v2796
      %2885 = vmatmul.bf16.gmra.mxu0 %v2663
      %v2886 = vpop.f32.mrf.mxu0
      %v2887 = vadd.f32 %v2868, %v2886
      %v2888 = vpop.f32.mrf.mxu0
      %v2889 = vadd.f32 %v2870, %v2888
      %2890 = vmatmul.bf16.gmra.mxu0 %v2666
      %v2891 = vpop.f32.mrf.mxu0
      %v2892 = vadd.f32 %v2873, %v2891
      %v2893 = vpop.f32.mrf.mxu0
      %v2894 = vadd.f32 %v2875, %v2893
      %2895 = vdwg.mxu0
      %2896 = vmatpush.bf16.msra.mxu0 0
      %2897 = vmatpush.bf16.msra.mxu0 0
      %2898 = vmatpush.bf16.msra.mxu0 0
      %2899 = vmatpush.bf16.msra.mxu0 0
      %2900 = vmatpush.bf16.msra.mxu0 0
      %2901 = vmatpush.bf16.msra.mxu0 0
      %2902 = vmatpush.bf16.msra.mxu0 %v2814
      %2903 = vmatpush.bf16.msra.mxu0 %v2812
      %2904 = vmatmul.bf16.gmra.mxu0 %v2853
      %v2905 = vpop.f32.mrf.mxu0
      %v2906 = vadd.f32 %v2887, %v2905
      %v2907 = vpop.f32.mrf.mxu0
      %v2908 = vadd.f32 %v2889, %v2907
      %2909 = vmatmul.bf16.gmra.mxu0 %v2856
      %v2910 = vpop.f32.mrf.mxu0
      %v2911 = vadd.f32 %v2892, %v2910
      %v2912 = vpop.f32.mrf.mxu0
      %v2913 = vadd.f32 %v2894, %v2912
      %2914 = vdwg.mxu0
      %2915 = vmatpush.bf16.msra.mxu0 %v2795
      %2916 = vmatpush.bf16.msra.mxu0 %v2793
      %2917 = vmatpush.bf16.msra.mxu0 %v2791
      %2918 = vmatpush.bf16.msra.mxu0 %v2789
      %2919 = vmatpush.bf16.msra.mxu0 %v2787
      %2920 = vmatpush.bf16.msra.mxu0 %v2785
      %2921 = vmatpush.bf16.msra.mxu0 %v2783
      %2922 = vmatpush.bf16.msra.mxu0 %v2781
      %2923 = vmatmul.bf16.gmra.mxu0 %v2662
      %v2924 = vpop.f32.mrf.mxu0
      %v2925 = vadd.f32 0.0, %v2924
      %v2926 = vpop.f32.mrf.mxu0
      %v2927 = vadd.f32 0.0, %v2926
      %2928 = vmatmul.bf16.gmra.mxu0 %v2665
      %v2929 = vpop.f32.mrf.mxu0
      %v2930 = vadd.f32 0.0, %v2929
      %v2931 = vpop.f32.mrf.mxu0
      %v2932 = vadd.f32 0.0, %v2931
      %2933 = vdwg.mxu0
      %2934 = vmatpush.bf16.msra.mxu0 %v2811
      %2935 = vmatpush.bf16.msra.mxu0 %v2809
      %2936 = vmatpush.bf16.msra.mxu0 %v2807
      %2937 = vmatpush.bf16.msra.mxu0 %v2805
      %2938 = vmatpush.bf16.msra.mxu0 %v2803
      %2939 = vmatpush.bf16.msra.mxu0 %v2801
      %2940 = vmatpush.bf16.msra.mxu0 %v2799
      %2941 = vmatpush.bf16.msra.mxu0 %v2797
      %2942 = vmatmul.bf16.gmra.mxu0 %v2663
      %v2943 = vpop.f32.mrf.mxu0
      %v2944 = vadd.f32 %v2925, %v2943
      %v2945 = vpop.f32.mrf.mxu0
      %v2946 = vadd.f32 %v2927, %v2945
      %2947 = vmatmul.bf16.gmra.mxu0 %v2666
      %v2948 = vpop.f32.mrf.mxu0
      %v2949 = vadd.f32 %v2930, %v2948
      %v2950 = vpop.f32.mrf.mxu0
      %v2951 = vadd.f32 %v2932, %v2950
      %2952 = vdwg.mxu0
      %2953 = vmatpush.bf16.msra.mxu0 0
      %2954 = vmatpush.bf16.msra.mxu0 0
      %2955 = vmatpush.bf16.msra.mxu0 0
      %2956 = vmatpush.bf16.msra.mxu0 0
      %2957 = vmatpush.bf16.msra.mxu0 0
      %2958 = vmatpush.bf16.msra.mxu0 0
      %2959 = vmatpush.bf16.msra.mxu0 %v2815
      %2960 = vmatpush.bf16.msra.mxu0 %v2813
      %2961 = vmatmul.bf16.gmra.mxu0 %v2853
      %v2962 = vpop.f32.mrf.mxu0
      %v2963 = vadd.f32 %v2944, %v2962
      %v2964 = vpop.f32.mrf.mxu0
      %v2965 = vadd.f32 %v2946, %v2964
      %2966 = vmatmul.bf16.gmra.mxu0 %v2856
      %v2967 = vpop.f32.mrf.mxu0
      %v2968 = vadd.f32 %v2949, %v2967
      %v2969 = vpop.f32.mrf.mxu0
      %v2970 = vadd.f32 %v2951, %v2969
      %2971 = vdwg.mxu0
      %v2972 = vld [vmem:[%s6] sm:$0xff]
      %v2973 = vld [vmem:[%s6 + $0x8] sm:$0xff]
      %v2974 = vld [vmem:[%s6 + $0x10] sm:$0xff]
      %v2975 = vld [vmem:[%s6 + $0x18] sm:$0xff]
      %2977 = vset.pattern.permute.xlu0 0
      %2978 = vperm.xlu0 %2977, %v2972
      %v2979 = vpop.permute.xlu0 %2978
      %2982 = vset.pattern.permute.xlu0 0
      %2983 = vperm.xlu0 %2982, %v2973
      %v2984 = vpop.permute.xlu0 %2983
      %2987 = vset.pattern.permute.xlu0 0
      %2988 = vperm.xlu0 %2987, %v2974
      %v2989 = vpop.permute.xlu0 %2988
      %2992 = vset.pattern.permute.xlu0 0
      %2993 = vperm.xlu0 %2992, %v2975
      %v2994 = vpop.permute.xlu0 %2993
      %v2996 = vmul.f32 %v2906, %v2979
      %v2997 = vmul.f32 %v2963, %v2979
      %v2998 = vmul.f32 %v2908, %v2984
      %v2999 = vmul.f32 %v2965, %v2984
      %v3000 = vmul.f32 %v2911, %v2989
      %v3001 = vmul.f32 %v2968, %v2989
      %v3002 = vmul.f32 %v2913, %v2994
      %v3003 = vmul.f32 %v2970, %v2994
      %v3004 = vld [vmem:[%s7] sm:$0xff]
      %v3005 = vld [vmem:[%s7 + $0x8] sm:$0xff]
      %v3006 = vld [vmem:[%s7 + $0x10] sm:$0xff]
      %v3007 = vld [vmem:[%s7 + $0x18] sm:$0xff]
      %3009 = vset.pattern.permute.xlu0 0
      %3010 = vperm.xlu0 %3009, %v3004
      %v3011 = vpop.permute.xlu0 %3010
      %3014 = vset.pattern.permute.xlu0 0
      %3015 = vperm.xlu0 %3014, %v3005
      %v3016 = vpop.permute.xlu0 %3015
      %3019 = vset.pattern.permute.xlu0 0
      %3020 = vperm.xlu0 %3019, %v3006
      %v3021 = vpop.permute.xlu0 %3020
      %3024 = vset.pattern.permute.xlu0 0
      %3025 = vperm.xlu0 %3024, %v3007
      %v3026 = vpop.permute.xlu0 %3025
      %v3028 = vadd.f32 %v2996, %v3011
      %v3029 = vadd.f32 %v2997, %v3011
      %v3030 = vadd.f32 %v2998, %v3016
      %v3031 = vadd.f32 %v2999, %v3016
      %v3032 = vadd.f32 %v3000, %v3021
      %v3033 = vadd.f32 %v3001, %v3021
      %v3034 = vadd.f32 %v3002, %v3026
      %v3035 = vadd.f32 %v3003, %v3026
      %v3036 = vadd.f32 %v3028, %v1932
      %v3037 = vadd.f32 %v3029, %v1933
      %v3038 = vadd.f32 %v3030, %v1934
      %v3039 = vadd.f32 %v3031, %v1935
      %v3040 = vadd.f32 %v3032, %v1936
      %v3041 = vadd.f32 %v3033, %v1937
      %v3042 = vadd.f32 %v3034, %v1938
      %v3043 = vadd.f32 %v3035, %v1939
      %vm3044 = vcmp.gt.f32.partialorder %v3036, 0.0
      %vm3045 = vcmp.gt.f32.partialorder %v3037, 0.0
      %vm3046 = vcmp.gt.f32.partialorder %v3038, 0.0
      %vm3047 = vcmp.gt.f32.partialorder %v3039, 0.0
      %vm3048 = vcmp.gt.f32.partialorder %v3040, 0.0
      %vm3049 = vcmp.gt.f32.partialorder %v3041, 0.0
      %vm3050 = vcmp.gt.f32.partialorder %v3042, 0.0
      %vm3051 = vcmp.gt.f32.partialorder %v3043, 0.0
      %v3052 = vmul.f32 %v3036, 0.01
      %v3053 = vmul.f32 %v3037, 0.01
      %v3054 = vmul.f32 %v3038, 0.01
      %v3055 = vmul.f32 %v3039, 0.01
      %v3056 = vmul.f32 %v3040, 0.01
      %v3057 = vmul.f32 %v3041, 0.01
      %v3058 = vmul.f32 %v3042, 0.01
      %v3059 = vmul.f32 %v3043, 0.01
      %v3060 = vsel %vm3044, %v3036, %v3052
      %v3061 = vsel %vm3045, %v3037, %v3053
      %v3062 = vsel %vm3046, %v3038, %v3054
      %v3063 = vsel %vm3047, %v3039, %v3055
      %v3064 = vsel %vm3048, %v3040, %v3056
      %v3065 = vsel %vm3049, %v3041, %v3057
      %v3066 = vsel %vm3050, %v3042, %v3058
      %v3067 = vsel %vm3051, %v3043, %v3059
      %v3068 = vpack.c.bf16 %v3061, %v3060
      %v3069 = vpack.c.bf16 %v3063, %v3062
      %v3070 = vpack.c.bf16 %v3065, %v3064
      %v3071 = vpack.c.bf16 %v3067, %v3066
      %3072 = vst [vmem:[#allocation2 + $0x4] sm:$0xff] %v3068
      %3073 = vst [vmem:[#allocation2 + $0x14] sm:$0xff] %v3069
      %3074 = vst [vmem:[#allocation2 + $0x24] sm:$0xff] %v3070
      %3075 = vst [vmem:[#allocation2 + $0x34] sm:$0xff] %v3071
      %v3076 = vld [vmem:[#allocation2] sm:$0xff]
      %v3077 = vld [vmem:[#allocation2 + $0x8] sm:$0xff]
      %v3078 = vld [vmem:[#allocation2 + $0x10] sm:$0xff]
      %v3079 = vld [vmem:[#allocation2 + $0x18] sm:$0xff]
      %v3080 = vld [vmem:[#allocation2 + $0x20] sm:$0xff]
      %v3081 = vld [vmem:[#allocation2 + $0x28] sm:$0xff]
      %v3082 = vld [vmem:[#allocation2 + $0x30] sm:$0xff]
      %v3083 = vld [vmem:[#allocation2 + $0x38] sm:$0xff]
      %v3084 = vld [vmem:[%s1] sm:$0x11]
      %v3086 = vunpack.c.l.b16 %v3084
      %v3087 = vunpack.c.h.b16 %v3084
      %v3088 = vpack.c.b16 %v3086, %v3086
      %v3089 = vpack.c.b16 %v3087, %v3087
      %v3091 = vshrl.u32 %v3088, 16
      %v3092 = vpack.i.b16 %v3091, %v3091
      %v3094 = vperm.slane %v3092, 0
      %v3096 = vshrl.u32 %v3089, 16
      %v3097 = vpack.i.b16 %v3096, %v3096
      %v3099 = vperm.slane %v3097, 0
      %v3100 = vunpack.c.l.bf16 %v3076
      %v3101 = vunpack.c.h.bf16 %v3076
      %v3102 = vunpack.c.l.bf16 %v3077
      %v3103 = vunpack.c.l.bf16 %v3078
      %v3104 = vunpack.c.h.bf16 %v3078
      %v3105 = vunpack.c.l.bf16 %v3079
      %v3106 = vunpack.c.l.bf16 %v3080
      %v3107 = vunpack.c.h.bf16 %v3080
      %v3108 = vunpack.c.l.bf16 %v3081
      %v3109 = vunpack.c.l.bf16 %v3082
      %v3110 = vunpack.c.h.bf16 %v3082
      %v3111 = vunpack.c.l.bf16 %v3083
      %v3112 = vunpack.c.l.bf16 %v3094
      %v3113 = vunpack.c.l.bf16 %v3099
      %3116 = vrot.lane.b32.xlu0 %v3112, 111
      %v3117 = vpop.permute.xlu0 %3116
      %3118 = vrot.lane.b32.xlu0 %v3113, 111
      %v3119 = vpop.permute.xlu0 %3118
      %v3120 = vsel %vm859, %v3117, %v3119
      %v3124 = vmul.f32 %v3100, %v3117
      %v3125 = vmul.f32 %v3101, %v3120
      %v3126 = vmul.f32 %v3102, %v3119
      %v3127 = vmul.f32 %v3103, %v3117
      %v3128 = vmul.f32 %v3104, %v3120
      %v3129 = vmul.f32 %v3105, %v3119
      %v3130 = vmul.f32 %v3106, %v3117
      %v3131 = vmul.f32 %v3107, %v3120
      %v3132 = vmul.f32 %v3108, %v3119
      %v3133 = vmul.f32 %v3109, %v3117
      %v3134 = vmul.f32 %v3110, %v3120
      %v3135 = vmul.f32 %v3111, %v3119
      %v3136 = vpack.c.bf16 %v3125, %v3124
      %v3137 = vpack.c.bf16 %v3126, %v3126
      %v3138 = vpack.c.bf16 %v3128, %v3127
      %v3139 = vpack.c.bf16 %v3129, %v3129
      %v3140 = vpack.c.bf16 %v3131, %v3130
      %v3141 = vpack.c.bf16 %v3132, %v3132
      %v3142 = vpack.c.bf16 %v3134, %v3133
      %v3143 = vpack.c.bf16 %v3135, %v3135
      %3152 = vrot.lane.b32.xlu0 %v3136, 17
      %v3153 = vpop.permute.xlu0 %3152
      %3154 = vrot.lane.b32.xlu0 %v3137, 17
      %v3155 = vpop.permute.xlu0 %3154
      %3156 = vrot.lane.b32.xlu0 %v3138, 17
      %v3157 = vpop.permute.xlu0 %3156
      %3158 = vrot.lane.b32.xlu0 %v3139, 17
      %v3159 = vpop.permute.xlu0 %3158
      %3160 = vrot.lane.b32.xlu0 %v3140, 17
      %v3161 = vpop.permute.xlu0 %3160
      %3162 = vrot.lane.b32.xlu0 %v3141, 17
      %v3163 = vpop.permute.xlu0 %3162
      %3164 = vrot.lane.b32.xlu0 %v3142, 17
      %v3165 = vpop.permute.xlu0 %3164
      %3166 = vrot.lane.b32.xlu0 %v3143, 17
      %v3167 = vpop.permute.xlu0 %3166
      %v3168 = vrot.slane %v3153, 4
      %v3169 = vrot.slane %v3155, 4
      %v3170 = vrot.slane %v3157, 4
      %v3171 = vrot.slane %v3159, 4
      %v3172 = vrot.slane %v3161, 4
      %v3173 = vrot.slane %v3163, 4
      %v3174 = vrot.slane %v3165, 4
      %v3175 = vrot.slane %v3167, 4
      %v3176 = vsel %vm916, %v3168, %v3169
      %v3177 = vsel %vm918, %v3153, %v3176
      %v3178 = vsel %vm916, %v3170, %v3171
      %v3179 = vsel %vm918, %v3157, %v3178
      %v3180 = vsel %vm916, %v3172, %v3173
      %v3181 = vsel %vm918, %v3161, %v3180
      %v3182 = vsel %vm916, %v3174, %v3175
      %v3183 = vsel %vm918, %v3165, %v3182
      %3188 = vst [vmem:[#allocation3] sm:$0xff] %v3177
      %3189 = vst [vmem:[#allocation3 + $0x8] sm:$0xff] %v3179
      %3190 = vst [vmem:[#allocation3 + $0x10] sm:$0xff] %v3181
      %3191 = vst [vmem:[#allocation3 + $0x18] sm:$0xff] %v3183
      %3200 = vrot.lane.b32.xlu0 %v3076, 16
      %v3201 = vpop.permute.xlu0 %3200
      %3202 = vrot.lane.b32.xlu0 %v3077, 16
      %v3203 = vpop.permute.xlu0 %3202
      %3204 = vrot.lane.b32.xlu0 %v3078, 16
      %v3205 = vpop.permute.xlu0 %3204
      %3206 = vrot.lane.b32.xlu0 %v3079, 16
      %v3207 = vpop.permute.xlu0 %3206
      %3208 = vrot.lane.b32.xlu0 %v3080, 16
      %v3209 = vpop.permute.xlu0 %3208
      %3210 = vrot.lane.b32.xlu0 %v3081, 16
      %v3211 = vpop.permute.xlu0 %3210
      %3212 = vrot.lane.b32.xlu0 %v3082, 16
      %v3213 = vpop.permute.xlu0 %3212
      %3214 = vrot.lane.b32.xlu0 %v3083, 16
      %v3215 = vpop.permute.xlu0 %3214
      %v3216 = vrot.slane %v3201, 4
      %v3217 = vrot.slane %v3203, 4
      %v3218 = vrot.slane %v3205, 4
      %v3219 = vrot.slane %v3207, 4
      %v3220 = vrot.slane %v3209, 4
      %v3221 = vrot.slane %v3211, 4
      %v3222 = vrot.slane %v3213, 4
      %v3223 = vrot.slane %v3215, 4
      %v3224 = vsel %vm916, %v3216, %v3217
      %v3225 = vsel %vm967, %v3201, %v3224
      %v3226 = vsel %vm916, %v3218, %v3219
      %v3227 = vsel %vm967, %v3205, %v3226
      %v3228 = vsel %vm916, %v3220, %v3221
      %v3229 = vsel %vm967, %v3209, %v3228
      %v3230 = vsel %vm916, %v3222, %v3223
      %v3231 = vsel %vm967, %v3213, %v3230
      %3236 = vst [vmem:[#allocation3 + $0x20] sm:$0xff] %v3225
      %3237 = vst [vmem:[#allocation3 + $0x28] sm:$0xff] %v3227
      %3238 = vst [vmem:[#allocation3 + $0x30] sm:$0xff] %v3229
      %3239 = vst [vmem:[#allocation3 + $0x38] sm:$0xff] %v3231
      %v3240 = vld [vmem:[%s1] sm:$0x22]
      %v3242 = vunpack.c.l.b16 %v3240
      %v3243 = vunpack.c.h.b16 %v3240
      %v3244 = vpack.c.b16 %v3242, %v3242
      %v3245 = vpack.c.b16 %v3243, %v3243
      %v3247 = vshrl.u32 %v3244, 16
      %v3248 = vpack.i.b16 %v3247, %v3247
      %v3250 = vperm.slane %v3248, 1
      %v3252 = vshrl.u32 %v3245, 16
      %v3253 = vpack.i.b16 %v3252, %v3252
      %v3255 = vperm.slane %v3253, 1
      %v3256 = vunpack.c.l.bf16 %v3250
      %v3257 = vunpack.c.l.bf16 %v3255
      %3260 = vrot.lane.b32.xlu0 %v3256, 113
      %v3261 = vpop.permute.xlu0 %3260
      %3262 = vrot.lane.b32.xlu0 %v3257, 113
      %v3263 = vpop.permute.xlu0 %3262
      %v3264 = vsel %vm1007, %v3261, %v3263
      %v3268 = vmul.f32 %v3100, %v3261
      %v3269 = vmul.f32 %v3101, %v3264
      %v3270 = vmul.f32 %v3102, %v3263
      %v3271 = vmul.f32 %v3103, %v3261
      %v3272 = vmul.f32 %v3104, %v3264
      %v3273 = vmul.f32 %v3105, %v3263
      %v3274 = vmul.f32 %v3106, %v3261
      %v3275 = vmul.f32 %v3107, %v3264
      %v3276 = vmul.f32 %v3108, %v3263
      %v3277 = vmul.f32 %v3109, %v3261
      %v3278 = vmul.f32 %v3110, %v3264
      %v3279 = vmul.f32 %v3111, %v3263
      %v3280 = vpack.c.bf16 %v3269, %v3268
      %v3281 = vpack.c.bf16 %v3270, %v3270
      %v3282 = vpack.c.bf16 %v3272, %v3271
      %v3283 = vpack.c.bf16 %v3273, %v3273
      %v3284 = vpack.c.bf16 %v3275, %v3274
      %v3285 = vpack.c.bf16 %v3276, %v3276
      %v3286 = vpack.c.bf16 %v3278, %v3277
      %v3287 = vpack.c.bf16 %v3279, %v3279
      %3296 = vrot.lane.b32.xlu0 %v3280, 15
      %v3297 = vpop.permute.xlu0 %3296
      %3298 = vrot.lane.b32.xlu0 %v3281, 15
      %v3299 = vpop.permute.xlu0 %3298
      %3300 = vrot.lane.b32.xlu0 %v3282, 15
      %v3301 = vpop.permute.xlu0 %3300
      %3302 = vrot.lane.b32.xlu0 %v3283, 15
      %v3303 = vpop.permute.xlu0 %3302
      %3304 = vrot.lane.b32.xlu0 %v3284, 15
      %v3305 = vpop.permute.xlu0 %3304
      %3306 = vrot.lane.b32.xlu0 %v3285, 15
      %v3307 = vpop.permute.xlu0 %3306
      %3308 = vrot.lane.b32.xlu0 %v3286, 15
      %v3309 = vpop.permute.xlu0 %3308
      %3310 = vrot.lane.b32.xlu0 %v3287, 15
      %v3311 = vpop.permute.xlu0 %3310
      %v3312 = vrot.slane %v3297, 4
      %v3313 = vrot.slane %v3299, 4
      %v3314 = vrot.slane %v3301, 4
      %v3315 = vrot.slane %v3303, 4
      %v3316 = vrot.slane %v3305, 4
      %v3317 = vrot.slane %v3307, 4
      %v3318 = vrot.slane %v3309, 4
      %v3319 = vrot.slane %v3311, 4
      %v3320 = vsel %vm916, %v3312, %v3313
      %v3321 = vsel %vm1065, %v3297, %v3320
      %v3322 = vsel %vm916, %v3314, %v3315
      %v3323 = vsel %vm1065, %v3301, %v3322
      %v3324 = vsel %vm916, %v3316, %v3317
      %v3325 = vsel %vm1065, %v3305, %v3324
      %v3326 = vsel %vm916, %v3318, %v3319
      %v3327 = vsel %vm1065, %v3309, %v3326
      %3332 = vst [vmem:[#allocation3 + $0x40] sm:$0xff] %v3321
      %3333 = vst [vmem:[#allocation3 + $0x48] sm:$0xff] %v3323
      %3334 = vst [vmem:[#allocation3 + $0x50] sm:$0xff] %v3325
      %3335 = vst [vmem:[#allocation3 + $0x58] sm:$0xff] %v3327
      %v3336 = vld [vmem:[%s1] sm:$0x11]
      %v3338 = vunpack.c.l.b16 %v3336
      %v3339 = vunpack.c.h.b16 %v3336
      %v3340 = vpack.c.b16 %v3338, %v3338
      %v3341 = vpack.c.b16 %v3339, %v3339
      %v3343 = vshrl.u32 %v3340, 16
      %v3344 = vpack.i.b16 %v3343, %v3343
      %v3346 = vperm.slane %v3344, 0
      %v3348 = vshrl.u32 %v3341, 16
      %v3349 = vpack.i.b16 %v3348, %v3348
      %v3351 = vperm.slane %v3349, 0
      %v3352 = vunpack.c.l.bf16 %v3346
      %v3353 = vunpack.c.l.bf16 %v3351
      %3356 = vrot.lane.b32.xlu0 %v3352, 127
      %v3357 = vpop.permute.xlu0 %3356
      %3358 = vrot.lane.b32.xlu0 %v3353, 127
      %v3359 = vpop.permute.xlu0 %3358
      %v3360 = vsel %vm1105, %v3357, %v3359
      %v3364 = vmul.f32 %v3100, %v3357
      %v3365 = vmul.f32 %v3101, %v3360
      %v3366 = vmul.f32 %v3102, %v3359
      %v3367 = vmul.f32 %v3103, %v3357
      %v3368 = vmul.f32 %v3104, %v3360
      %v3369 = vmul.f32 %v3105, %v3359
      %v3370 = vmul.f32 %v3106, %v3357
      %v3371 = vmul.f32 %v3107, %v3360
      %v3372 = vmul.f32 %v3108, %v3359
      %v3373 = vmul.f32 %v3109, %v3357
      %v3374 = vmul.f32 %v3110, %v3360
      %v3375 = vmul.f32 %v3111, %v3359
      %v3376 = vpack.c.bf16 %v3365, %v3364
      %v3377 = vpack.c.bf16 %v3366, %v3366
      %v3378 = vpack.c.bf16 %v3368, %v3367
      %v3379 = vpack.c.bf16 %v3369, %v3369
      %v3380 = vpack.c.bf16 %v3371, %v3370
      %v3381 = vpack.c.bf16 %v3372, %v3372
      %v3382 = vpack.c.bf16 %v3374, %v3373
      %v3383 = vpack.c.bf16 %v3375, %v3375
      %3392 = vrot.lane.b32.xlu0 %v3376, 1
      %v3393 = vpop.permute.xlu0 %3392
      %3394 = vrot.lane.b32.xlu0 %v3377, 1
      %v3395 = vpop.permute.xlu0 %3394
      %3396 = vrot.lane.b32.xlu0 %v3378, 1
      %v3397 = vpop.permute.xlu0 %3396
      %3398 = vrot.lane.b32.xlu0 %v3379, 1
      %v3399 = vpop.permute.xlu0 %3398
      %3400 = vrot.lane.b32.xlu0 %v3380, 1
      %v3401 = vpop.permute.xlu0 %3400
      %3402 = vrot.lane.b32.xlu0 %v3381, 1
      %v3403 = vpop.permute.xlu0 %3402
      %3404 = vrot.lane.b32.xlu0 %v3382, 1
      %v3405 = vpop.permute.xlu0 %3404
      %3406 = vrot.lane.b32.xlu0 %v3383, 1
      %v3407 = vpop.permute.xlu0 %3406
      %v3408 = vrot.slane %v3393, 4
      %v3409 = vrot.slane %v3395, 4
      %v3410 = vrot.slane %v3397, 4
      %v3411 = vrot.slane %v3399, 4
      %v3412 = vrot.slane %v3401, 4
      %v3413 = vrot.slane %v3403, 4
      %v3414 = vrot.slane %v3405, 4
      %v3415 = vrot.slane %v3407, 4
      %v3416 = vsel %vm916, %v3408, %v3409
      %v3417 = vsel %vm1163, %v3393, %v3416
      %v3418 = vsel %vm916, %v3410, %v3411
      %v3419 = vsel %vm1163, %v3397, %v3418
      %v3420 = vsel %vm916, %v3412, %v3413
      %v3421 = vsel %vm1163, %v3401, %v3420
      %v3422 = vsel %vm916, %v3414, %v3415
      %v3423 = vsel %vm1163, %v3405, %v3422
      %3428 = vst [vmem:[#allocation3 + $0x60] sm:$0xff] %v3417
      %3429 = vst [vmem:[#allocation3 + $0x68] sm:$0xff] %v3419
      %3430 = vst [vmem:[#allocation3 + $0x70] sm:$0xff] %v3421
      %3431 = vst [vmem:[#allocation3 + $0x78] sm:$0xff] %v3423
      %v3432 = vrot.slane %v3076, 4
      %v3433 = vrot.slane %v3077, 4
      %v3434 = vrot.slane %v3078, 4
      %v3435 = vrot.slane %v3079, 4
      %v3436 = vrot.slane %v3080, 4
      %v3437 = vrot.slane %v3081, 4
      %v3438 = vrot.slane %v3082, 4
      %v3439 = vrot.slane %v3083, 4
      %v3440 = vsel %vm916, %v3432, %v3433
      %v3441 = vsel %vm916, %v3434, %v3435
      %v3442 = vsel %vm916, %v3436, %v3437
      %v3443 = vsel %vm916, %v3438, %v3439
      %3448 = vst [vmem:[#allocation3 + $0x80] sm:$0xff] %v3440
      %3449 = vst [vmem:[#allocation3 + $0x88] sm:$0xff] %v3441
      %3450 = vst [vmem:[#allocation3 + $0x90] sm:$0xff] %v3442
      %3451 = vst [vmem:[#allocation3 + $0x98] sm:$0xff] %v3443
      %v3452 = vld [vmem:[%s1] sm:$0x22]
      %v3454 = vunpack.c.l.b16 %v3452
      %v3455 = vunpack.c.h.b16 %v3452
      %v3456 = vpack.c.b16 %v3454, %v3454
      %v3457 = vpack.c.b16 %v3455, %v3455
      %v3459 = vshrl.u32 %v3456, 16
      %v3460 = vpack.i.b16 %v3459, %v3459
      %v3462 = vperm.slane %v3460, 1
      %v3464 = vshrl.u32 %v3457, 16
      %v3465 = vpack.i.b16 %v3464, %v3464
      %v3467 = vperm.slane %v3465, 1
      %3468 = vrot.lane.b32.xlu0 %v3076, 127
      %v3469 = vpop.permute.xlu0 %3468
      %3470 = vrot.lane.b32.xlu0 %v3077, 127
      %v3471 = vpop.permute.xlu0 %3470
      %3472 = vrot.lane.b32.xlu0 %v3078, 127
      %v3473 = vpop.permute.xlu0 %3472
      %3474 = vrot.lane.b32.xlu0 %v3079, 127
      %v3475 = vpop.permute.xlu0 %3474
      %3476 = vrot.lane.b32.xlu0 %v3080, 127
      %v3477 = vpop.permute.xlu0 %3476
      %3478 = vrot.lane.b32.xlu0 %v3081, 127
      %v3479 = vpop.permute.xlu0 %3478
      %3480 = vrot.lane.b32.xlu0 %v3082, 127
      %v3481 = vpop.permute.xlu0 %3480
      %3482 = vrot.lane.b32.xlu0 %v3083, 127
      %v3483 = vpop.permute.xlu0 %3482
      %v3484 = vrot.slane %v3469, 4
      %v3485 = vrot.slane %v3471, 4
      %v3486 = vrot.slane %v3473, 4
      %v3487 = vrot.slane %v3475, 4
      %v3488 = vrot.slane %v3477, 4
      %v3489 = vrot.slane %v3479, 4
      %v3490 = vrot.slane %v3481, 4
      %v3491 = vrot.slane %v3483, 4
      %v3492 = vsel %vm916, %v3484, %v3485
      %v3493 = vsel %vm1240, %v3492, %v3471
      %v3494 = vsel %vm916, %v3486, %v3487
      %v3495 = vsel %vm1240, %v3494, %v3475
      %v3496 = vsel %vm916, %v3488, %v3489
      %v3497 = vsel %vm1240, %v3496, %v3479
      %v3498 = vsel %vm916, %v3490, %v3491
      %v3499 = vsel %vm1240, %v3498, %v3483
      %v3504 = vunpack.c.l.bf16 %v3493
      %v3505 = vunpack.c.h.bf16 %v3493
      %v3506 = vunpack.c.l.bf16 %v3495
      %v3507 = vunpack.c.h.bf16 %v3495
      %v3508 = vunpack.c.l.bf16 %v3497
      %v3509 = vunpack.c.h.bf16 %v3497
      %v3510 = vunpack.c.l.bf16 %v3499
      %v3511 = vunpack.c.h.bf16 %v3499
      %v3512 = vunpack.c.l.bf16 %v3462
      %v3513 = vunpack.c.l.bf16 %v3467
      %v3514 = vmul.f32 %v3504, %v3512
      %v3515 = vmul.f32 %v3505, %v3513
      %v3516 = vmul.f32 %v3506, %v3512
      %v3517 = vmul.f32 %v3507, %v3513
      %v3518 = vmul.f32 %v3508, %v3512
      %v3519 = vmul.f32 %v3509, %v3513
      %v3520 = vmul.f32 %v3510, %v3512
      %v3521 = vmul.f32 %v3511, %v3513
      %v3522 = vpack.c.bf16 %v3515, %v3514
      %v3523 = vpack.c.bf16 %v3517, %v3516
      %v3524 = vpack.c.bf16 %v3519, %v3518
      %v3525 = vpack.c.bf16 %v3521, %v3520
      %3526 = vst [vmem:[#allocation3 + $0xa0] sm:$0xff] %v3522
      %3527 = vst [vmem:[#allocation3 + $0xa8] sm:$0xff] %v3523
      %3528 = vst [vmem:[#allocation3 + $0xb0] sm:$0xff] %v3524
      %3529 = vst [vmem:[#allocation3 + $0xb8] sm:$0xff] %v3525
      %v3530 = vld [vmem:[%s1] sm:$0x11]
      %v3532 = vunpack.c.l.b16 %v3530
      %v3533 = vunpack.c.h.b16 %v3530
      %v3534 = vpack.c.b16 %v3532, %v3532
      %v3535 = vpack.c.b16 %v3533, %v3533
      %v3537 = vshrl.u32 %v3534, 16
      %v3538 = vpack.i.b16 %v3537, %v3537
      %v3540 = vperm.slane %v3538, 0
      %v3542 = vshrl.u32 %v3535, 16
      %v3543 = vpack.i.b16 %v3542, %v3542
      %v3545 = vperm.slane %v3543, 0
      %3546 = vrot.lane.b32.xlu0 %v3076, 113
      %v3547 = vpop.permute.xlu0 %3546
      %3548 = vrot.lane.b32.xlu0 %v3077, 113
      %v3549 = vpop.permute.xlu0 %3548
      %3550 = vrot.lane.b32.xlu0 %v3078, 113
      %v3551 = vpop.permute.xlu0 %3550
      %3552 = vrot.lane.b32.xlu0 %v3079, 113
      %v3553 = vpop.permute.xlu0 %3552
      %3554 = vrot.lane.b32.xlu0 %v3080, 113
      %v3555 = vpop.permute.xlu0 %3554
      %3556 = vrot.lane.b32.xlu0 %v3081, 113
      %v3557 = vpop.permute.xlu0 %3556
      %3558 = vrot.lane.b32.xlu0 %v3082, 113
      %v3559 = vpop.permute.xlu0 %3558
      %3560 = vrot.lane.b32.xlu0 %v3083, 113
      %v3561 = vpop.permute.xlu0 %3560
      %v3562 = vrot.slane %v3547, 4
      %v3563 = vrot.slane %v3549, 4
      %v3564 = vrot.slane %v3551, 4
      %v3565 = vrot.slane %v3553, 4
      %v3566 = vrot.slane %v3555, 4
      %v3567 = vrot.slane %v3557, 4
      %v3568 = vrot.slane %v3559, 4
      %v3569 = vrot.slane %v3561, 4
      %v3570 = vsel %vm916, %v3562, %v3563
      %v3571 = vsel %vm1319, %v3570, %v3549
      %v3572 = vsel %vm916, %v3564, %v3565
      %v3573 = vsel %vm1319, %v3572, %v3553
      %v3574 = vsel %vm916, %v3566, %v3567
      %v3575 = vsel %vm1319, %v3574, %v3557
      %v3576 = vsel %vm916, %v3568, %v3569
      %v3577 = vsel %vm1319, %v3576, %v3561
      %v3582 = vunpack.c.l.bf16 %v3571
      %v3583 = vunpack.c.h.bf16 %v3571
      %v3584 = vunpack.c.l.bf16 %v3573
      %v3585 = vunpack.c.h.bf16 %v3573
      %v3586 = vunpack.c.l.bf16 %v3575
      %v3587 = vunpack.c.h.bf16 %v3575
      %v3588 = vunpack.c.l.bf16 %v3577
      %v3589 = vunpack.c.h.bf16 %v3577
      %v3590 = vunpack.c.l.bf16 %v3540
      %v3591 = vunpack.c.l.bf16 %v3545
      %v3592 = vmul.f32 %v3582, %v3590
      %v3593 = vmul.f32 %v3583, %v3591
      %v3594 = vmul.f32 %v3584, %v3590
      %v3595 = vmul.f32 %v3585, %v3591
      %v3596 = vmul.f32 %v3586, %v3590
      %v3597 = vmul.f32 %v3587, %v3591
      %v3598 = vmul.f32 %v3588, %v3590
      %v3599 = vmul.f32 %v3589, %v3591
      %v3600 = vpack.c.bf16 %v3593, %v3592
      %v3601 = vpack.c.bf16 %v3595, %v3594
      %v3602 = vpack.c.bf16 %v3597, %v3596
      %v3603 = vpack.c.bf16 %v3599, %v3598
      %3604 = vst [vmem:[#allocation3 + $0xc0] sm:$0xff] %v3600
      %3605 = vst [vmem:[#allocation3 + $0xc8] sm:$0xff] %v3601
      %3606 = vst [vmem:[#allocation3 + $0xd0] sm:$0xff] %v3602
      %3607 = vst [vmem:[#allocation3 + $0xd8] sm:$0xff] %v3603
      %3608 = vrot.lane.b32.xlu0 %v3076, 112
      %v3609 = vpop.permute.xlu0 %3608
      %3610 = vrot.lane.b32.xlu0 %v3077, 112
      %v3611 = vpop.permute.xlu0 %3610
      %3612 = vrot.lane.b32.xlu0 %v3078, 112
      %v3613 = vpop.permute.xlu0 %3612
      %3614 = vrot.lane.b32.xlu0 %v3079, 112
      %v3615 = vpop.permute.xlu0 %3614
      %3616 = vrot.lane.b32.xlu0 %v3080, 112
      %v3617 = vpop.permute.xlu0 %3616
      %3618 = vrot.lane.b32.xlu0 %v3081, 112
      %v3619 = vpop.permute.xlu0 %3618
      %3620 = vrot.lane.b32.xlu0 %v3082, 112
      %v3621 = vpop.permute.xlu0 %3620
      %3622 = vrot.lane.b32.xlu0 %v3083, 112
      %v3623 = vpop.permute.xlu0 %3622
      %v3624 = vrot.slane %v3609, 4
      %v3625 = vrot.slane %v3611, 4
      %v3626 = vrot.slane %v3613, 4
      %v3627 = vrot.slane %v3615, 4
      %v3628 = vrot.slane %v3617, 4
      %v3629 = vrot.slane %v3619, 4
      %v3630 = vrot.slane %v3621, 4
      %v3631 = vrot.slane %v3623, 4
      %v3632 = vsel %vm916, %v3624, %v3625
      %v3633 = vsel %vm1382, %v3632, %v3611
      %v3634 = vsel %vm916, %v3626, %v3627
      %v3635 = vsel %vm1382, %v3634, %v3615
      %v3636 = vsel %vm916, %v3628, %v3629
      %v3637 = vsel %vm1382, %v3636, %v3619
      %v3638 = vsel %vm916, %v3630, %v3631
      %v3639 = vsel %vm1382, %v3638, %v3623
      %3644 = vst [vmem:[#allocation3 + $0xe0] sm:$0xff] %v3633
      %3645 = vst [vmem:[#allocation3 + $0xe8] sm:$0xff] %v3635
      %3646 = vst [vmem:[#allocation3 + $0xf0] sm:$0xff] %v3637
      %3647 = vst [vmem:[#allocation3 + $0xf8] sm:$0xff] %v3639
      %v3648 = vld [vmem:[%s1] sm:$0x22]
      %v3650 = vunpack.c.l.b16 %v3648
      %v3651 = vunpack.c.h.b16 %v3648
      %v3652 = vpack.c.b16 %v3650, %v3650
      %v3653 = vpack.c.b16 %v3651, %v3651
      %v3655 = vshrl.u32 %v3652, 16
      %v3656 = vpack.i.b16 %v3655, %v3655
      %v3658 = vperm.slane %v3656, 1
      %v3660 = vshrl.u32 %v3653, 16
      %v3661 = vpack.i.b16 %v3660, %v3660
      %v3663 = vperm.slane %v3661, 1
      %3664 = vrot.lane.b32.xlu0 %v3076, 111
      %v3665 = vpop.permute.xlu0 %3664
      %3666 = vrot.lane.b32.xlu0 %v3077, 111
      %v3667 = vpop.permute.xlu0 %3666
      %3668 = vrot.lane.b32.xlu0 %v3078, 111
      %v3669 = vpop.permute.xlu0 %3668
      %3670 = vrot.lane.b32.xlu0 %v3079, 111
      %v3671 = vpop.permute.xlu0 %3670
      %3672 = vrot.lane.b32.xlu0 %v3080, 111
      %v3673 = vpop.permute.xlu0 %3672
      %3674 = vrot.lane.b32.xlu0 %v3081, 111
      %v3675 = vpop.permute.xlu0 %3674
      %3676 = vrot.lane.b32.xlu0 %v3082, 111
      %v3677 = vpop.permute.xlu0 %3676
      %3678 = vrot.lane.b32.xlu0 %v3083, 111
      %v3679 = vpop.permute.xlu0 %3678
      %v3680 = vrot.slane %v3665, 4
      %v3681 = vrot.slane %v3667, 4
      %v3682 = vrot.slane %v3669, 4
      %v3683 = vrot.slane %v3671, 4
      %v3684 = vrot.slane %v3673, 4
      %v3685 = vrot.slane %v3675, 4
      %v3686 = vrot.slane %v3677, 4
      %v3687 = vrot.slane %v3679, 4
      %v3688 = vsel %vm916, %v3680, %v3681
      %v3689 = vsel %vm1439, %v3688, %v3667
      %v3690 = vsel %vm916, %v3682, %v3683
      %v3691 = vsel %vm1439, %v3690, %v3671
      %v3692 = vsel %vm916, %v3684, %v3685
      %v3693 = vsel %vm1439, %v3692, %v3675
      %v3694 = vsel %vm916, %v3686, %v3687
      %v3695 = vsel %vm1439, %v3694, %v3679
      %v3700 = vunpack.c.l.bf16 %v3689
      %v3701 = vunpack.c.h.bf16 %v3689
      %v3702 = vunpack.c.l.bf16 %v3691
      %v3703 = vunpack.c.h.bf16 %v3691
      %v3704 = vunpack.c.l.bf16 %v3693
      %v3705 = vunpack.c.h.bf16 %v3693
      %v3706 = vunpack.c.l.bf16 %v3695
      %v3707 = vunpack.c.h.bf16 %v3695
      %v3708 = vunpack.c.l.bf16 %v3658
      %v3709 = vunpack.c.l.bf16 %v3663
      %v3710 = vmul.f32 %v3700, %v3708
      %v3711 = vmul.f32 %v3701, %v3709
      %v3712 = vmul.f32 %v3702, %v3708
      %v3713 = vmul.f32 %v3703, %v3709
      %v3714 = vmul.f32 %v3704, %v3708
      %v3715 = vmul.f32 %v3705, %v3709
      %v3716 = vmul.f32 %v3706, %v3708
      %v3717 = vmul.f32 %v3707, %v3709
      %v3718 = vpack.c.bf16 %v3711, %v3710
      %v3719 = vpack.c.bf16 %v3713, %v3712
      %v3720 = vpack.c.bf16 %v3715, %v3714
      %v3721 = vpack.c.bf16 %v3717, %v3716
      %3722 = vst [vmem:[#allocation3 + $0x100] sm:$0xff] %v3718
      %3723 = vst [vmem:[#allocation3 + $0x108] sm:$0xff] %v3719
      %3724 = vst [vmem:[#allocation3 + $0x110] sm:$0xff] %v3720
      %3725 = vst [vmem:[#allocation3 + $0x118] sm:$0xff] %v3721
      %v3726 = vld [vmem:[%s8] sm:$0xff]
      %v3727 = vld [vmem:[%s8 + $0x8] sm:$0xf]
      %v3728 = vld [vmem:[%s8 + $0xc] sm:$0xff]
      %v3729 = vld [vmem:[%s8 + $0x14] sm:$0xf]
      %v3730 = vld [vmem:[%s8 + $0x18] sm:$0xff]
      %v3731 = vld [vmem:[%s8 + $0x20] sm:$0xf]
      %v3732 = vld [vmem:[%s8 + $0x24] sm:$0xff]
      %v3733 = vld [vmem:[%s8 + $0x2c] sm:$0xf]
      %v3734 = vld [vmem:[#allocation3] sm:$0xff]
      %v3735 = vld [vmem:[#allocation3 + $0x8] sm:$0xff]
      %v3736 = vld [vmem:[#allocation3 + $0x10] sm:$0xff]
      %v3737 = vld [vmem:[#allocation3 + $0x18] sm:$0xff]
      %v3738 = vld [vmem:[#allocation3 + $0x20] sm:$0xff]
      %v3739 = vld [vmem:[#allocation3 + $0x28] sm:$0xff]
      %v3740 = vld [vmem:[#allocation3 + $0x30] sm:$0xff]
      %v3741 = vld [vmem:[#allocation3 + $0x38] sm:$0xff]
      %v3742 = vld [vmem:[#allocation3 + $0x40] sm:$0xff]
      %v3743 = vld [vmem:[#allocation3 + $0x48] sm:$0xff]
      %v3744 = vld [vmem:[#allocation3 + $0x50] sm:$0xff]
      %v3745 = vld [vmem:[#allocation3 + $0x58] sm:$0xff]
      %v3746 = vld [vmem:[#allocation3 + $0x60] sm:$0xff]
      %v3747 = vld [vmem:[#allocation3 + $0x68] sm:$0xff]
      %v3748 = vld [vmem:[#allocation3 + $0x70] sm:$0xff]
      %v3749 = vld [vmem:[#allocation3 + $0x78] sm:$0xff]
      %v3750 = vld [vmem:[#allocation3 + $0x80] sm:$0xff]
      %v3751 = vld [vmem:[#allocation3 + $0x88] sm:$0xff]
      %v3752 = vld [vmem:[#allocation3 + $0x90] sm:$0xff]
      %v3753 = vld [vmem:[#allocation3 + $0x98] sm:$0xff]
      %v3754 = vld [vmem:[#allocation3 + $0xa0] sm:$0xff]
      %v3755 = vld [vmem:[#allocation3 + $0xa8] sm:$0xff]
      %v3756 = vld [vmem:[#allocation3 + $0xb0] sm:$0xff]
      %v3757 = vld [vmem:[#allocation3 + $0xb8] sm:$0xff]
      %v3758 = vld [vmem:[#allocation3 + $0xc0] sm:$0xff]
      %v3759 = vld [vmem:[#allocation3 + $0xc8] sm:$0xff]
      %v3760 = vld [vmem:[#allocation3 + $0xd0] sm:$0xff]
      %v3761 = vld [vmem:[#allocation3 + $0xd8] sm:$0xff]
      %v3762 = vld [vmem:[#allocation3 + $0xe0] sm:$0xff]
      %v3763 = vld [vmem:[#allocation3 + $0xe8] sm:$0xff]
      %v3764 = vld [vmem:[#allocation3 + $0xf0] sm:$0xff]
      %v3765 = vld [vmem:[#allocation3 + $0xf8] sm:$0xff]
      %v3766 = vld [vmem:[#allocation3 + $0x100] sm:$0xff]
      %v3767 = vld [vmem:[#allocation3 + $0x108] sm:$0xff]
      %v3768 = vld [vmem:[#allocation3 + $0x110] sm:$0xff]
      %v3769 = vld [vmem:[#allocation3 + $0x118] sm:$0xff]
      %v3778 = vunpack.c.l.b16 %v3726
      %v3779 = vunpack.c.h.b16 %v3726
      %v3780 = vunpack.c.l.b16 %v3727
      %v3781 = vunpack.c.l.b16 %v3728
      %v3782 = vunpack.c.h.b16 %v3728
      %v3783 = vunpack.c.l.b16 %v3729
      %v3784 = vunpack.c.l.b16 %v3730
      %v3785 = vunpack.c.h.b16 %v3730
      %v3786 = vunpack.c.l.b16 %v3731
      %v3787 = vunpack.c.l.b16 %v3732
      %v3788 = vunpack.c.h.b16 %v3732
      %v3789 = vunpack.c.l.b16 %v3733
      %v3790 = vpack.c.b16 %v3781, %v3778
      %v3791 = vpack.c.b16 %v3782, %v3779
      %v3792 = vpack.c.b16 %v3783, %v3780
      %v3793 = vpack.c.b16 %v3787, %v3784
      %v3794 = vpack.c.b16 %v3788, %v3785
      %v3795 = vpack.c.b16 %v3789, %v3786
      %v3836 = vunpack.c.l.b16 %v3734
      %v3837 = vunpack.c.h.b16 %v3734
      %v3838 = vunpack.c.l.b16 %v3735
      %v3839 = vunpack.c.h.b16 %v3735
      %v3840 = vunpack.c.l.b16 %v3736
      %v3841 = vunpack.c.h.b16 %v3736
      %v3842 = vunpack.c.l.b16 %v3737
      %v3843 = vunpack.c.h.b16 %v3737
      %v3844 = vunpack.c.l.b16 %v3738
      %v3845 = vunpack.c.h.b16 %v3738
      %v3846 = vunpack.c.l.b16 %v3739
      %v3847 = vunpack.c.h.b16 %v3739
      %v3848 = vunpack.c.l.b16 %v3740
      %v3849 = vunpack.c.h.b16 %v3740
      %v3850 = vunpack.c.l.b16 %v3741
      %v3851 = vunpack.c.h.b16 %v3741
      %v3852 = vunpack.c.l.b16 %v3742
      %v3853 = vunpack.c.h.b16 %v3742
      %v3854 = vunpack.c.l.b16 %v3743
      %v3855 = vunpack.c.h.b16 %v3743
      %v3856 = vunpack.c.l.b16 %v3744
      %v3857 = vunpack.c.h.b16 %v3744
      %v3858 = vunpack.c.l.b16 %v3745
      %v3859 = vunpack.c.h.b16 %v3745
      %v3860 = vunpack.c.l.b16 %v3746
      %v3861 = vunpack.c.h.b16 %v3746
      %v3862 = vunpack.c.l.b16 %v3747
      %v3863 = vunpack.c.h.b16 %v3747
      %v3864 = vunpack.c.l.b16 %v3748
      %v3865 = vunpack.c.h.b16 %v3748
      %v3866 = vunpack.c.l.b16 %v3749
      %v3867 = vunpack.c.h.b16 %v3749
      %v3868 = vunpack.c.l.b16 %v3750
      %v3869 = vunpack.c.h.b16 %v3750
      %v3870 = vunpack.c.l.b16 %v3751
      %v3871 = vunpack.c.h.b16 %v3751
      %v3872 = vunpack.c.l.b16 %v3752
      %v3873 = vunpack.c.h.b16 %v3752
      %v3874 = vunpack.c.l.b16 %v3753
      %v3875 = vunpack.c.h.b16 %v3753
      %v3876 = vunpack.c.l.b16 %v3754
      %v3877 = vunpack.c.h.b16 %v3754
      %v3878 = vunpack.c.l.b16 %v3755
      %v3879 = vunpack.c.h.b16 %v3755
      %v3880 = vunpack.c.l.b16 %v3756
      %v3881 = vunpack.c.h.b16 %v3756
      %v3882 = vunpack.c.l.b16 %v3757
      %v3883 = vunpack.c.h.b16 %v3757
      %v3884 = vunpack.c.l.b16 %v3758
      %v3885 = vunpack.c.h.b16 %v3758
      %v3886 = vunpack.c.l.b16 %v3759
      %v3887 = vunpack.c.h.b16 %v3759
      %v3888 = vunpack.c.l.b16 %v3760
      %v3889 = vunpack.c.h.b16 %v3760
      %v3890 = vunpack.c.l.b16 %v3761
      %v3891 = vunpack.c.h.b16 %v3761
      %v3892 = vunpack.c.l.b16 %v3762
      %v3893 = vunpack.c.h.b16 %v3762
      %v3894 = vunpack.c.l.b16 %v3763
      %v3895 = vunpack.c.h.b16 %v3763
      %v3896 = vunpack.c.l.b16 %v3764
      %v3897 = vunpack.c.h.b16 %v3764
      %v3898 = vunpack.c.l.b16 %v3765
      %v3899 = vunpack.c.h.b16 %v3765
      %v3900 = vunpack.c.l.b16 %v3766
      %v3901 = vunpack.c.h.b16 %v3766
      %v3902 = vunpack.c.l.b16 %v3767
      %v3903 = vunpack.c.h.b16 %v3767
      %v3904 = vunpack.c.l.b16 %v3768
      %v3905 = vunpack.c.h.b16 %v3768
      %v3906 = vunpack.c.l.b16 %v3769
      %v3907 = vunpack.c.h.b16 %v3769
      %v3908 = vpack.c.b16 %v3838, %v3836
      %v3909 = vpack.c.b16 %v3839, %v3837
      %v3910 = vpack.c.b16 %v3842, %v3840
      %v3911 = vpack.c.b16 %v3843, %v3841
      %v3912 = vpack.c.b16 %v3846, %v3844
      %v3913 = vpack.c.b16 %v3847, %v3845
      %v3914 = vpack.c.b16 %v3850, %v3848
      %v3915 = vpack.c.b16 %v3851, %v3849
      %v3916 = vpack.c.b16 %v3854, %v3852
      %v3917 = vpack.c.b16 %v3855, %v3853
      %v3918 = vpack.c.b16 %v3858, %v3856
      %v3919 = vpack.c.b16 %v3859, %v3857
      %v3920 = vpack.c.b16 %v3862, %v3860
      %v3921 = vpack.c.b16 %v3863, %v3861
      %v3922 = vpack.c.b16 %v3866, %v3864
      %v3923 = vpack.c.b16 %v3867, %v3865
      %v3924 = vpack.c.b16 %v3870, %v3868
      %v3925 = vpack.c.b16 %v3871, %v3869
      %v3926 = vpack.c.b16 %v3874, %v3872
      %v3927 = vpack.c.b16 %v3875, %v3873
      %v3928 = vpack.c.b16 %v3878, %v3876
      %v3929 = vpack.c.b16 %v3879, %v3877
      %v3930 = vpack.c.b16 %v3882, %v3880
      %v3931 = vpack.c.b16 %v3883, %v3881
      %v3932 = vpack.c.b16 %v3886, %v3884
      %v3933 = vpack.c.b16 %v3887, %v3885
      %v3934 = vpack.c.b16 %v3890, %v3888
      %v3935 = vpack.c.b16 %v3891, %v3889
      %v3936 = vpack.c.b16 %v3894, %v3892
      %v3937 = vpack.c.b16 %v3895, %v3893
      %v3938 = vpack.c.b16 %v3898, %v3896
      %v3939 = vpack.c.b16 %v3899, %v3897
      %v3940 = vpack.c.b16 %v3902, %v3900
      %v3941 = vpack.c.b16 %v3903, %v3901
      %v3942 = vpack.c.b16 %v3906, %v3904
      %v3943 = vpack.c.b16 %v3907, %v3905
      %v3981 = vsel %vm1731, %v3792, 0
      %v3984 = vsel %vm1731, %v3795, 0
      %3986 = vmatpush.bf16.msra.mxu0 %v3922
      %3987 = vmatpush.bf16.msra.mxu0 %v3920
      %3988 = vmatpush.bf16.msra.mxu0 %v3918
      %3989 = vmatpush.bf16.msra.mxu0 %v3916
      %3990 = vmatpush.bf16.msra.mxu0 %v3914
      %3991 = vmatpush.bf16.msra.mxu0 %v3912
      %3992 = vmatpush.bf16.msra.mxu0 %v3910
      %3993 = vmatpush.bf16.msra.mxu0 %v3908
      %3994 = vmatmul.bf16.gmra.mxu0 %v3790
      %v3995 = vpop.f32.mrf.mxu0
      %v3996 = vadd.f32 0.0, %v3995
      %v3997 = vpop.f32.mrf.mxu0
      %v3998 = vadd.f32 0.0, %v3997
      %3999 = vmatmul.bf16.gmra.mxu0 %v3793
      %v4000 = vpop.f32.mrf.mxu0
      %v4001 = vadd.f32 0.0, %v4000
      %v4002 = vpop.f32.mrf.mxu0
      %v4003 = vadd.f32 0.0, %v4002
      %4004 = vdwg.mxu0
      %4005 = vmatpush.bf16.msra.mxu0 %v3938
      %4006 = vmatpush.bf16.msra.mxu0 %v3936
      %4007 = vmatpush.bf16.msra.mxu0 %v3934
      %4008 = vmatpush.bf16.msra.mxu0 %v3932
      %4009 = vmatpush.bf16.msra.mxu0 %v3930
      %4010 = vmatpush.bf16.msra.mxu0 %v3928
      %4011 = vmatpush.bf16.msra.mxu0 %v3926
      %4012 = vmatpush.bf16.msra.mxu0 %v3924
      %4013 = vmatmul.bf16.gmra.mxu0 %v3791
      %v4014 = vpop.f32.mrf.mxu0
      %v4015 = vadd.f32 %v3996, %v4014
      %v4016 = vpop.f32.mrf.mxu0
      %v4017 = vadd.f32 %v3998, %v4016
      %4018 = vmatmul.bf16.gmra.mxu0 %v3794
      %v4019 = vpop.f32.mrf.mxu0
      %v4020 = vadd.f32 %v4001, %v4019
      %v4021 = vpop.f32.mrf.mxu0
      %v4022 = vadd.f32 %v4003, %v4021
      %4023 = vdwg.mxu0
      %4024 = vmatpush.bf16.msra.mxu0 0
      %4025 = vmatpush.bf16.msra.mxu0 0
      %4026 = vmatpush.bf16.msra.mxu0 0
      %4027 = vmatpush.bf16.msra.mxu0 0
      %4028 = vmatpush.bf16.msra.mxu0 0
      %4029 = vmatpush.bf16.msra.mxu0 0
      %4030 = vmatpush.bf16.msra.mxu0 %v3942
      %4031 = vmatpush.bf16.msra.mxu0 %v3940
      %4032 = vmatmul.bf16.gmra.mxu0 %v3981
      %v4033 = vpop.f32.mrf.mxu0
      %v4034 = vadd.f32 %v4015, %v4033
      %v4035 = vpop.f32.mrf.mxu0
      %v4036 = vadd.f32 %v4017, %v4035
      %4037 = vmatmul.bf16.gmra.mxu0 %v3984
      %v4038 = vpop.f32.mrf.mxu0
      %v4039 = vadd.f32 %v4020, %v4038
      %v4040 = vpop.f32.mrf.mxu0
      %v4041 = vadd.f32 %v4022, %v4040
      %4042 = vdwg.mxu0
      %4043 = vmatpush.bf16.msra.mxu0 %v3923
      %4044 = vmatpush.bf16.msra.mxu0 %v3921
      %4045 = vmatpush.bf16.msra.mxu0 %v3919
      %4046 = vmatpush.bf16.msra.mxu0 %v3917
      %4047 = vmatpush.bf16.msra.mxu0 %v3915
      %4048 = vmatpush.bf16.msra.mxu0 %v3913
      %4049 = vmatpush.bf16.msra.mxu0 %v3911
      %4050 = vmatpush.bf16.msra.mxu0 %v3909
      %4051 = vmatmul.bf16.gmra.mxu0 %v3790
      %v4052 = vpop.f32.mrf.mxu0
      %v4053 = vadd.f32 0.0, %v4052
      %v4054 = vpop.f32.mrf.mxu0
      %v4055 = vadd.f32 0.0, %v4054
      %4056 = vmatmul.bf16.gmra.mxu0 %v3793
      %v4057 = vpop.f32.mrf.mxu0
      %v4058 = vadd.f32 0.0, %v4057
      %v4059 = vpop.f32.mrf.mxu0
      %v4060 = vadd.f32 0.0, %v4059
      %4061 = vdwg.mxu0
      %4062 = vmatpush.bf16.msra.mxu0 %v3939
      %4063 = vmatpush.bf16.msra.mxu0 %v3937
      %4064 = vmatpush.bf16.msra.mxu0 %v3935
      %4065 = vmatpush.bf16.msra.mxu0 %v3933
      %4066 = vmatpush.bf16.msra.mxu0 %v3931
      %4067 = vmatpush.bf16.msra.mxu0 %v3929
      %4068 = vmatpush.bf16.msra.mxu0 %v3927
      %4069 = vmatpush.bf16.msra.mxu0 %v3925
      %4070 = vmatmul.bf16.gmra.mxu0 %v3791
      %v4071 = vpop.f32.mrf.mxu0
      %v4072 = vadd.f32 %v4053, %v4071
      %v4073 = vpop.f32.mrf.mxu0
      %v4074 = vadd.f32 %v4055, %v4073
      %4075 = vmatmul.bf16.gmra.mxu0 %v3794
      %v4076 = vpop.f32.mrf.mxu0
      %v4077 = vadd.f32 %v4058, %v4076
      %v4078 = vpop.f32.mrf.mxu0
      %v4079 = vadd.f32 %v4060, %v4078
      %4080 = vdwg.mxu0
      %4081 = vmatpush.bf16.msra.mxu0 0
      %4082 = vmatpush.bf16.msra.mxu0 0
      %4083 = vmatpush.bf16.msra.mxu0 0
      %4084 = vmatpush.bf16.msra.mxu0 0
      %4085 = vmatpush.bf16.msra.mxu0 0
      %4086 = vmatpush.bf16.msra.mxu0 0
      %4087 = vmatpush.bf16.msra.mxu0 %v3943
      %4088 = vmatpush.bf16.msra.mxu0 %v3941
      %4089 = vmatmul.bf16.gmra.mxu0 %v3981
      %v4090 = vpop.f32.mrf.mxu0
      %v4091 = vadd.f32 %v4072, %v4090
      %v4092 = vpop.f32.mrf.mxu0
      %v4093 = vadd.f32 %v4074, %v4092
      %4094 = vmatmul.bf16.gmra.mxu0 %v3984
      %v4095 = vpop.f32.mrf.mxu0
      %v4096 = vadd.f32 %v4077, %v4095
      %v4097 = vpop.f32.mrf.mxu0
      %v4098 = vadd.f32 %v4079, %v4097
      %4099 = vdwg.mxu0
      %v4100 = vld [vmem:[%s9] sm:$0xff]
      %v4101 = vld [vmem:[%s9 + $0x8] sm:$0xff]
      %v4102 = vld [vmem:[%s9 + $0x10] sm:$0xff]
      %v4103 = vld [vmem:[%s9 + $0x18] sm:$0xff]
      %4105 = vset.pattern.permute.xlu0 0
      %4106 = vperm.xlu0 %4105, %v4100
      %v4107 = vpop.permute.xlu0 %4106
      %4110 = vset.pattern.permute.xlu0 0
      %4111 = vperm.xlu0 %4110, %v4101
      %v4112 = vpop.permute.xlu0 %4111
      %4115 = vset.pattern.permute.xlu0 0
      %4116 = vperm.xlu0 %4115, %v4102
      %v4117 = vpop.permute.xlu0 %4116
      %4120 = vset.pattern.permute.xlu0 0
      %4121 = vperm.xlu0 %4120, %v4103
      %v4122 = vpop.permute.xlu0 %4121
      %v4124 = vmul.f32 %v4034, %v4107
      %v4125 = vmul.f32 %v4091, %v4107
      %v4126 = vmul.f32 %v4036, %v4112
      %v4127 = vmul.f32 %v4093, %v4112
      %v4128 = vmul.f32 %v4039, %v4117
      %v4129 = vmul.f32 %v4096, %v4117
      %v4130 = vmul.f32 %v4041, %v4122
      %v4131 = vmul.f32 %v4098, %v4122
      %v4132 = vld [vmem:[%s10] sm:$0xff]
      %v4133 = vld [vmem:[%s10 + $0x8] sm:$0xff]
      %v4134 = vld [vmem:[%s10 + $0x10] sm:$0xff]
      %v4135 = vld [vmem:[%s10 + $0x18] sm:$0xff]
      %4137 = vset.pattern.permute.xlu0 0
      %4138 = vperm.xlu0 %4137, %v4132
      %v4139 = vpop.permute.xlu0 %4138
      %4142 = vset.pattern.permute.xlu0 0
      %4143 = vperm.xlu0 %4142, %v4133
      %v4144 = vpop.permute.xlu0 %4143
      %4147 = vset.pattern.permute.xlu0 0
      %4148 = vperm.xlu0 %4147, %v4134
      %v4149 = vpop.permute.xlu0 %4148
      %4152 = vset.pattern.permute.xlu0 0
      %4153 = vperm.xlu0 %4152, %v4135
      %v4154 = vpop.permute.xlu0 %4153
      %v4156 = vadd.f32 %v4124, %v4139
      %v4157 = vadd.f32 %v4125, %v4139
      %v4158 = vadd.f32 %v4126, %v4144
      %v4159 = vadd.f32 %v4127, %v4144
      %v4160 = vadd.f32 %v4128, %v4149
      %v4161 = vadd.f32 %v4129, %v4149
      %v4162 = vadd.f32 %v4130, %v4154
      %v4163 = vadd.f32 %v4131, %v4154
      %v4164 = vadd.f32 %v4156, %v3060
      %v4165 = vadd.f32 %v4157, %v3061
      %v4166 = vadd.f32 %v4158, %v3062
      %v4167 = vadd.f32 %v4159, %v3063
      %v4168 = vadd.f32 %v4160, %v3064
      %v4169 = vadd.f32 %v4161, %v3065
      %v4170 = vadd.f32 %v4162, %v3066
      %v4171 = vadd.f32 %v4163, %v3067
      %vm4172 = vcmp.gt.f32.partialorder %v4164, 0.0
      %vm4173 = vcmp.gt.f32.partialorder %v4165, 0.0
      %vm4174 = vcmp.gt.f32.partialorder %v4166, 0.0
      %vm4175 = vcmp.gt.f32.partialorder %v4167, 0.0
      %vm4176 = vcmp.gt.f32.partialorder %v4168, 0.0
      %vm4177 = vcmp.gt.f32.partialorder %v4169, 0.0
      %vm4178 = vcmp.gt.f32.partialorder %v4170, 0.0
      %vm4179 = vcmp.gt.f32.partialorder %v4171, 0.0
      %v4180 = vmul.f32 %v4164, 0.01
      %v4181 = vmul.f32 %v4165, 0.01
      %v4182 = vmul.f32 %v4166, 0.01
      %v4183 = vmul.f32 %v4167, 0.01
      %v4184 = vmul.f32 %v4168, 0.01
      %v4185 = vmul.f32 %v4169, 0.01
      %v4186 = vmul.f32 %v4170, 0.01
      %v4187 = vmul.f32 %v4171, 0.01
      %v4188 = vsel %vm4172, %v4164, %v4180
      %v4189 = vsel %vm4173, %v4165, %v4181
      %v4190 = vsel %vm4174, %v4166, %v4182
      %v4191 = vsel %vm4175, %v4167, %v4183
      %v4192 = vsel %vm4176, %v4168, %v4184
      %v4193 = vsel %vm4177, %v4169, %v4185
      %v4194 = vsel %vm4178, %v4170, %v4186
      %v4195 = vsel %vm4179, %v4171, %v4187
      %v4196 = vperm.slane %v799, 0
      %v4197 = vperm.slane %v800, 0
      %v4198 = vmul.f32 %v4188, %v4196
      %v4199 = vmul.f32 %v4189, %v4197
      %v4200 = vmul.f32 %v4190, %v4196
      %v4201 = vmul.f32 %v4191, %v4197
      %v4202 = vmul.f32 %v4192, %v4196
      %v4203 = vmul.f32 %v4193, %v4197
      %v4204 = vmul.f32 %v4194, %v4196
      %v4205 = vmul.f32 %v4195, %v4197
      %v4206 = vadd.f32 %v4198, %v4199
      %4207 = vadd.xlane.f32.xlu0 %v4206
      %v4208 = vpop.xlane.xlu0 %4207
      %v4209 = vadd.f32 %v4200, %v4201
      %4210 = vadd.xlane.f32.xlu0 %v4209
      %v4211 = vpop.xlane.xlu0 %4210
      %v4212 = vadd.f32 %v4202, %v4203
      %4213 = vadd.xlane.f32.xlu0 %v4212
      %v4214 = vpop.xlane.xlu0 %4213
      %v4215 = vadd.f32 %v4204, %v4205
      %4216 = vadd.xlane.f32.xlu0 %v4215
      %v4217 = vpop.xlane.xlu0 %4216
      %v4218 = vpack.c.bf16 %v4189, %v4188
      %v4219 = vpack.c.bf16 %v4191, %v4190
      %v4220 = vpack.c.bf16 %v4193, %v4192
      %v4221 = vpack.c.bf16 %v4195, %v4194
      %4222 = vst [vmem:[#allocation2 + $0x4] sm:$0xff] %v4218
      %4223 = vst [vmem:[#allocation2 + $0x14] sm:$0xff] %v4219
      %4224 = vst [vmem:[#allocation2 + $0x24] sm:$0xff] %v4220
      %4225 = vst [vmem:[#allocation2 + $0x34] sm:$0xff] %v4221
      %v4226 = vld [vmem:[#allocation2] sm:$0xff]
      %v4227 = vld [vmem:[#allocation2 + $0x8] sm:$0xff]
      %v4228 = vld [vmem:[#allocation2 + $0x10] sm:$0xff]
      %v4229 = vld [vmem:[#allocation2 + $0x18] sm:$0xff]
      %v4230 = vld [vmem:[#allocation2 + $0x20] sm:$0xff]
      %v4231 = vld [vmem:[#allocation2 + $0x28] sm:$0xff]
      %v4232 = vld [vmem:[#allocation2 + $0x30] sm:$0xff]
      %v4233 = vld [vmem:[#allocation2 + $0x38] sm:$0xff]
      %v4234 = vld [vmem:[%s1] sm:$0x11]
      %v4236 = vunpack.c.l.b16 %v4234
      %v4237 = vunpack.c.h.b16 %v4234
      %v4238 = vpack.c.b16 %v4236, %v4236
      %v4239 = vpack.c.b16 %v4237, %v4237
      %v4241 = vpack.i.b16 %v4238, %v4238
      %v4243 = vperm.slane %v4241, 0
      %v4245 = vpack.i.b16 %v4239, %v4239
      %v4247 = vperm.slane %v4245, 0
      %v4248 = vunpack.c.l.bf16 %v4226
      %v4249 = vunpack.c.h.bf16 %v4226
      %v4250 = vunpack.c.l.bf16 %v4227
      %v4251 = vunpack.c.l.bf16 %v4228
      %v4252 = vunpack.c.h.bf16 %v4228
      %v4253 = vunpack.c.l.bf16 %v4229
      %v4254 = vunpack.c.l.bf16 %v4230
      %v4255 = vunpack.c.h.bf16 %v4230
      %v4256 = vunpack.c.l.bf16 %v4231
      %v4257 = vunpack.c.l.bf16 %v4232
      %v4258 = vunpack.c.h.bf16 %v4232
      %v4259 = vunpack.c.l.bf16 %v4233
      %v4260 = vunpack.c.l.bf16 %v4243
      %v4261 = vunpack.c.l.bf16 %v4247
      %4264 = vrot.lane.b32.xlu0 %v4260, 94
      %v4265 = vpop.permute.xlu0 %4264
      %4266 = vrot.lane.b32.xlu0 %v4261, 94
      %v4267 = vpop.permute.xlu0 %4266
      %vm4268 = vcmask 769024
      %v4269 = vsel %vm4268, %v4265, %v4267
      %v4273 = vmul.f32 %v4248, %v4265
      %v4274 = vmul.f32 %v4249, %v4269
      %v4275 = vmul.f32 %v4250, %v4267
      %v4276 = vmul.f32 %v4251, %v4265
      %v4277 = vmul.f32 %v4252, %v4269
      %v4278 = vmul.f32 %v4253, %v4267
      %v4279 = vmul.f32 %v4254, %v4265
      %v4280 = vmul.f32 %v4255, %v4269
      %v4281 = vmul.f32 %v4256, %v4267
      %v4282 = vmul.f32 %v4257, %v4265
      %v4283 = vmul.f32 %v4258, %v4269
      %v4284 = vmul.f32 %v4259, %v4267
      %v4285 = vpack.c.bf16 %v4274, %v4273
      %v4286 = vpack.c.bf16 %v4275, %v4275
      %v4287 = vpack.c.bf16 %v4277, %v4276
      %v4288 = vpack.c.bf16 %v4278, %v4278
      %v4289 = vpack.c.bf16 %v4280, %v4279
      %v4290 = vpack.c.bf16 %v4281, %v4281
      %v4291 = vpack.c.bf16 %v4283, %v4282
      %v4292 = vpack.c.bf16 %v4284, %v4284
      %4301 = vrot.lane.b32.xlu0 %v4285, 34
      %v4302 = vpop.permute.xlu0 %4301
      %4303 = vrot.lane.b32.xlu0 %v4286, 34
      %v4304 = vpop.permute.xlu0 %4303
      %4305 = vrot.lane.b32.xlu0 %v4287, 34
      %v4306 = vpop.permute.xlu0 %4305
      %4307 = vrot.lane.b32.xlu0 %v4288, 34
      %v4308 = vpop.permute.xlu0 %4307
      %4309 = vrot.lane.b32.xlu0 %v4289, 34
      %v4310 = vpop.permute.xlu0 %4309
      %4311 = vrot.lane.b32.xlu0 %v4290, 34
      %v4312 = vpop.permute.xlu0 %4311
      %4313 = vrot.lane.b32.xlu0 %v4291, 34
      %v4314 = vpop.permute.xlu0 %4313
      %4315 = vrot.lane.b32.xlu0 %v4292, 34
      %v4316 = vpop.permute.xlu0 %4315
      %v4317 = vrot.slane %v4302, 4
      %v4318 = vrot.slane %v4304, 4
      %v4319 = vrot.slane %v4306, 4
      %v4320 = vrot.slane %v4308, 4
      %v4321 = vrot.slane %v4310, 4
      %v4322 = vrot.slane %v4312, 4
      %v4323 = vrot.slane %v4314, 4
      %v4324 = vrot.slane %v4316, 4
      %v4325 = vsel %vm916, %v4317, %v4318
      %vm4326 = vcmask 277504
      %v4327 = vsel %vm4326, %v4302, %v4325
      %v4328 = vsel %vm916, %v4319, %v4320
      %v4329 = vsel %vm4326, %v4306, %v4328
      %v4330 = vsel %vm916, %v4321, %v4322
      %v4331 = vsel %vm4326, %v4310, %v4330
      %v4332 = vsel %vm916, %v4323, %v4324
      %v4333 = vsel %vm4326, %v4314, %v4332
      %4338 = vst [vmem:[#allocation3] sm:$0xff] %v4327
      %4339 = vst [vmem:[#allocation3 + $0x8] sm:$0xff] %v4329
      %4340 = vst [vmem:[#allocation3 + $0x10] sm:$0xff] %v4331
      %4341 = vst [vmem:[#allocation3 + $0x18] sm:$0xff] %v4333
      %v4342 = vld [vmem:[%s1] sm:$0x11]
      %v4344 = vunpack.c.l.b16 %v4342
      %v4345 = vunpack.c.h.b16 %v4342
      %v4346 = vpack.c.b16 %v4344, %v4344
      %v4347 = vpack.c.b16 %v4345, %v4345
      %v4349 = vshrl.u32 %v4346, 16
      %v4350 = vpack.i.b16 %v4349, %v4349
      %v4352 = vperm.slane %v4350, 0
      %v4354 = vshrl.u32 %v4347, 16
      %v4355 = vpack.i.b16 %v4354, %v4354
      %v4357 = vperm.slane %v4355, 0
      %v4358 = vunpack.c.l.bf16 %v4352
      %v4359 = vunpack.c.l.bf16 %v4357
      %4362 = vrot.lane.b32.xlu0 %v4358, 95
      %v4363 = vpop.permute.xlu0 %4362
      %4364 = vrot.lane.b32.xlu0 %v4359, 95
      %v4365 = vpop.permute.xlu0 %4364
      %vm4366 = vcmask 777216
      %v4367 = vsel %vm4366, %v4363, %v4365
      %v4371 = vmul.f32 %v4248, %v4363
      %v4372 = vmul.f32 %v4249, %v4367
      %v4373 = vmul.f32 %v4250, %v4365
      %v4374 = vmul.f32 %v4251, %v4363
      %v4375 = vmul.f32 %v4252, %v4367
      %v4376 = vmul.f32 %v4253, %v4365
      %v4377 = vmul.f32 %v4254, %v4363
      %v4378 = vmul.f32 %v4255, %v4367
      %v4379 = vmul.f32 %v4256, %v4365
      %v4380 = vmul.f32 %v4257, %v4363
      %v4381 = vmul.f32 %v4258, %v4367
      %v4382 = vmul.f32 %v4259, %v4365
      %v4383 = vpack.c.bf16 %v4372, %v4371
      %v4384 = vpack.c.bf16 %v4373, %v4373
      %v4385 = vpack.c.bf16 %v4375, %v4374
      %v4386 = vpack.c.bf16 %v4376, %v4376
      %v4387 = vpack.c.bf16 %v4378, %v4377
      %v4388 = vpack.c.bf16 %v4379, %v4379
      %v4389 = vpack.c.bf16 %v4381, %v4380
      %v4390 = vpack.c.bf16 %v4382, %v4382
      %4399 = vrot.lane.b32.xlu0 %v4383, 33
      %v4400 = vpop.permute.xlu0 %4399
      %4401 = vrot.lane.b32.xlu0 %v4384, 33
      %v4402 = vpop.permute.xlu0 %4401
      %4403 = vrot.lane.b32.xlu0 %v4385, 33
      %v4404 = vpop.permute.xlu0 %4403
      %4405 = vrot.lane.b32.xlu0 %v4386, 33
      %v4406 = vpop.permute.xlu0 %4405
      %4407 = vrot.lane.b32.xlu0 %v4387, 33
      %v4408 = vpop.permute.xlu0 %4407
      %4409 = vrot.lane.b32.xlu0 %v4388, 33
      %v4410 = vpop.permute.xlu0 %4409
      %4411 = vrot.lane.b32.xlu0 %v4389, 33
      %v4412 = vpop.permute.xlu0 %4411
      %4413 = vrot.lane.b32.xlu0 %v4390, 33
      %v4414 = vpop.permute.xlu0 %4413
      %v4415 = vrot.slane %v4400, 4
      %v4416 = vrot.slane %v4402, 4
      %v4417 = vrot.slane %v4404, 4
      %v4418 = vrot.slane %v4406, 4
      %v4419 = vrot.slane %v4408, 4
      %v4420 = vrot.slane %v4410, 4
      %v4421 = vrot.slane %v4412, 4
      %v4422 = vrot.slane %v4414, 4
      %v4423 = vsel %vm916, %v4415, %v4416
      %vm4424 = vcmask 269312
      %v4425 = vsel %vm4424, %v4400, %v4423
      %v4426 = vsel %vm916, %v4417, %v4418
      %v4427 = vsel %vm4424, %v4404, %v4426
      %v4428 = vsel %vm916, %v4419, %v4420
      %v4429 = vsel %vm4424, %v4408, %v4428
      %v4430 = vsel %vm916, %v4421, %v4422
      %v4431 = vsel %vm4424, %v4412, %v4430
      %4436 = vst [vmem:[#allocation3 + $0x20] sm:$0xff] %v4425
      %4437 = vst [vmem:[#allocation3 + $0x28] sm:$0xff] %v4427
      %4438 = vst [vmem:[#allocation3 + $0x30] sm:$0xff] %v4429
      %4439 = vst [vmem:[#allocation3 + $0x38] sm:$0xff] %v4431
      %4448 = vrot.lane.b32.xlu0 %v4226, 32
      %v4449 = vpop.permute.xlu0 %4448
      %4450 = vrot.lane.b32.xlu0 %v4227, 32
      %v4451 = vpop.permute.xlu0 %4450
      %4452 = vrot.lane.b32.xlu0 %v4228, 32
      %v4453 = vpop.permute.xlu0 %4452
      %4454 = vrot.lane.b32.xlu0 %v4229, 32
      %v4455 = vpop.permute.xlu0 %4454
      %4456 = vrot.lane.b32.xlu0 %v4230, 32
      %v4457 = vpop.permute.xlu0 %4456
      %4458 = vrot.lane.b32.xlu0 %v4231, 32
      %v4459 = vpop.permute.xlu0 %4458
      %4460 = vrot.lane.b32.xlu0 %v4232, 32
      %v4461 = vpop.permute.xlu0 %4460
      %4462 = vrot.lane.b32.xlu0 %v4233, 32
      %v4463 = vpop.permute.xlu0 %4462
      %v4464 = vrot.slane %v4449, 4
      %v4465 = vrot.slane %v4451, 4
      %v4466 = vrot.slane %v4453, 4
      %v4467 = vrot.slane %v4455, 4
      %v4468 = vrot.slane %v4457, 4
      %v4469 = vrot.slane %v4459, 4
      %v4470 = vrot.slane %v4461, 4
      %v4471 = vrot.slane %v4463, 4
      %v4472 = vsel %vm916, %v4464, %v4465
      %vm4473 = vcmask 261120
      %v4474 = vsel %vm4473, %v4449, %v4472
      %v4475 = vsel %vm916, %v4466, %v4467
      %v4476 = vsel %vm4473, %v4453, %v4475
      %v4477 = vsel %vm916, %v4468, %v4469
      %v4478 = vsel %vm4473, %v4457, %v4477
      %v4479 = vsel %vm916, %v4470, %v4471
      %v4480 = vsel %vm4473, %v4461, %v4479
      %4485 = vst [vmem:[#allocation3 + $0x40] sm:$0xff] %v4474
      %4486 = vst [vmem:[#allocation3 + $0x48] sm:$0xff] %v4476
      %4487 = vst [vmem:[#allocation3 + $0x50] sm:$0xff] %v4478
      %4488 = vst [vmem:[#allocation3 + $0x58] sm:$0xff] %v4480
      %v4489 = vld [vmem:[%s1] sm:$0x22]
      %v4491 = vunpack.c.l.b16 %v4489
      %v4492 = vunpack.c.h.b16 %v4489
      %v4493 = vpack.c.b16 %v4491, %v4491
      %v4494 = vpack.c.b16 %v4492, %v4492
      %v4496 = vshrl.u32 %v4493, 16
      %v4497 = vpack.i.b16 %v4496, %v4496
      %v4499 = vperm.slane %v4497, 1
      %v4501 = vshrl.u32 %v4494, 16
      %v4502 = vpack.i.b16 %v4501, %v4501
      %v4504 = vperm.slane %v4502, 1
      %v4505 = vunpack.c.l.bf16 %v4499
      %v4506 = vunpack.c.l.bf16 %v4504
      %4509 = vrot.lane.b32.xlu0 %v4505, 97
      %v4510 = vpop.permute.xlu0 %4509
      %4511 = vrot.lane.b32.xlu0 %v4506, 97
      %v4512 = vpop.permute.xlu0 %4511
      %vm4513 = vcmask 793600
      %v4514 = vsel %vm4513, %v4510, %v4512
      %v4518 = vmul.f32 %v4248, %v4510
      %v4519 = vmul.f32 %v4249, %v4514
      %v4520 = vmul.f32 %v4250, %v4512
      %v4521 = vmul.f32 %v4251, %v4510
      %v4522 = vmul.f32 %v4252, %v4514
      %v4523 = vmul.f32 %v4253, %v4512
      %v4524 = vmul.f32 %v4254, %v4510
      %v4525 = vmul.f32 %v4255, %v4514
      %v4526 = vmul.f32 %v4256, %v4512
      %v4527 = vmul.f32 %v4257, %v4510
      %v4528 = vmul.f32 %v4258, %v4514
      %v4529 = vmul.f32 %v4259, %v4512
      %v4530 = vpack.c.bf16 %v4519, %v4518
      %v4531 = vpack.c.bf16 %v4520, %v4520
      %v4532 = vpack.c.bf16 %v4522, %v4521
      %v4533 = vpack.c.bf16 %v4523, %v4523
      %v4534 = vpack.c.bf16 %v4525, %v4524
      %v4535 = vpack.c.bf16 %v4526, %v4526
      %v4536 = vpack.c.bf16 %v4528, %v4527
      %v4537 = vpack.c.bf16 %v4529, %v4529
      %4546 = vrot.lane.b32.xlu0 %v4530, 31
      %v4547 = vpop.permute.xlu0 %4546
      %4548 = vrot.lane.b32.xlu0 %v4531, 31
      %v4549 = vpop.permute.xlu0 %4548
      %4550 = vrot.lane.b32.xlu0 %v4532, 31
      %v4551 = vpop.permute.xlu0 %4550
      %4552 = vrot.lane.b32.xlu0 %v4533, 31
      %v4553 = vpop.permute.xlu0 %4552
      %4554 = vrot.lane.b32.xlu0 %v4534, 31
      %v4555 = vpop.permute.xlu0 %4554
      %4556 = vrot.lane.b32.xlu0 %v4535, 31
      %v4557 = vpop.permute.xlu0 %4556
      %4558 = vrot.lane.b32.xlu0 %v4536, 31
      %v4559 = vpop.permute.xlu0 %4558
      %4560 = vrot.lane.b32.xlu0 %v4537, 31
      %v4561 = vpop.permute.xlu0 %4560
      %v4562 = vrot.slane %v4547, 4
      %v4563 = vrot.slane %v4549, 4
      %v4564 = vrot.slane %v4551, 4
      %v4565 = vrot.slane %v4553, 4
      %v4566 = vrot.slane %v4555, 4
      %v4567 = vrot.slane %v4557, 4
      %v4568 = vrot.slane %v4559, 4
      %v4569 = vrot.slane %v4561, 4
      %v4570 = vsel %vm916, %v4562, %v4563
      %vm4571 = vcmask 252928
      %v4572 = vsel %vm4571, %v4547, %v4570
      %v4573 = vsel %vm916, %v4564, %v4565
      %v4574 = vsel %vm4571, %v4551, %v4573
      %v4575 = vsel %vm916, %v4566, %v4567
      %v4576 = vsel %vm4571, %v4555, %v4575
      %v4577 = vsel %vm916, %v4568, %v4569
      %v4578 = vsel %vm4571, %v4559, %v4577
      %4583 = vst [vmem:[#allocation3 + $0x60] sm:$0xff] %v4572
      %4584 = vst [vmem:[#allocation3 + $0x68] sm:$0xff] %v4574
      %4585 = vst [vmem:[#allocation3 + $0x70] sm:$0xff] %v4576
      %4586 = vst [vmem:[#allocation3 + $0x78] sm:$0xff] %v4578
      %v4587 = vld [vmem:[%s1] sm:$0x44]
      %v4589 = vunpack.c.l.b16 %v4587
      %v4590 = vunpack.c.h.b16 %v4587
      %v4591 = vpack.c.b16 %v4589, %v4589
      %v4592 = vpack.c.b16 %v4590, %v4590
      %v4594 = vpack.i.b16 %v4591, %v4591
      %v4596 = vperm.slane %v4594, 2
      %v4598 = vpack.i.b16 %v4592, %v4592
      %v4600 = vperm.slane %v4598, 2
      %v4601 = vunpack.c.l.bf16 %v4596
      %v4602 = vunpack.c.l.bf16 %v4600
      %4605 = vrot.lane.b32.xlu0 %v4601, 98
      %v4606 = vpop.permute.xlu0 %4605
      %4607 = vrot.lane.b32.xlu0 %v4602, 98
      %v4608 = vpop.permute.xlu0 %4607
      %vm4609 = vcmask 801792
      %v4610 = vsel %vm4609, %v4606, %v4608
      %v4614 = vmul.f32 %v4248, %v4606
      %v4615 = vmul.f32 %v4249, %v4610
      %v4616 = vmul.f32 %v4250, %v4608
      %v4617 = vmul.f32 %v4251, %v4606
      %v4618 = vmul.f32 %v4252, %v4610
      %v4619 = vmul.f32 %v4253, %v4608
      %v4620 = vmul.f32 %v4254, %v4606
      %v4621 = vmul.f32 %v4255, %v4610
      %v4622 = vmul.f32 %v4256, %v4608
      %v4623 = vmul.f32 %v4257, %v4606
      %v4624 = vmul.f32 %v4258, %v4610
      %v4625 = vmul.f32 %v4259, %v4608
      %v4626 = vpack.c.bf16 %v4615, %v4614
      %v4627 = vpack.c.bf16 %v4616, %v4616
      %v4628 = vpack.c.bf16 %v4618, %v4617
      %v4629 = vpack.c.bf16 %v4619, %v4619
      %v4630 = vpack.c.bf16 %v4621, %v4620
      %v4631 = vpack.c.bf16 %v4622, %v4622
      %v4632 = vpack.c.bf16 %v4624, %v4623
      %v4633 = vpack.c.bf16 %v4625, %v4625
      %4642 = vrot.lane.b32.xlu0 %v4626, 30
      %v4643 = vpop.permute.xlu0 %4642
      %4644 = vrot.lane.b32.xlu0 %v4627, 30
      %v4645 = vpop.permute.xlu0 %4644
      %4646 = vrot.lane.b32.xlu0 %v4628, 30
      %v4647 = vpop.permute.xlu0 %4646
      %4648 = vrot.lane.b32.xlu0 %v4629, 30
      %v4649 = vpop.permute.xlu0 %4648
      %4650 = vrot.lane.b32.xlu0 %v4630, 30
      %v4651 = vpop.permute.xlu0 %4650
      %4652 = vrot.lane.b32.xlu0 %v4631, 30
      %v4653 = vpop.permute.xlu0 %4652
      %4654 = vrot.lane.b32.xlu0 %v4632, 30
      %v4655 = vpop.permute.xlu0 %4654
      %4656 = vrot.lane.b32.xlu0 %v4633, 30
      %v4657 = vpop.permute.xlu0 %4656
      %v4658 = vrot.slane %v4643, 4
      %v4659 = vrot.slane %v4645, 4
      %v4660 = vrot.slane %v4647, 4
      %v4661 = vrot.slane %v4649, 4
      %v4662 = vrot.slane %v4651, 4
      %v4663 = vrot.slane %v4653, 4
      %v4664 = vrot.slane %v4655, 4
      %v4665 = vrot.slane %v4657, 4
      %v4666 = vsel %vm916, %v4658, %v4659
      %vm4667 = vcmask 244736
      %v4668 = vsel %vm4667, %v4643, %v4666
      %v4669 = vsel %vm916, %v4660, %v4661
      %v4670 = vsel %vm4667, %v4647, %v4669
      %v4671 = vsel %vm916, %v4662, %v4663
      %v4672 = vsel %vm4667, %v4651, %v4671
      %v4673 = vsel %vm916, %v4664, %v4665
      %v4674 = vsel %vm4667, %v4655, %v4673
      %4679 = vst [vmem:[#allocation3 + $0x80] sm:$0xff] %v4668
      %4680 = vst [vmem:[#allocation3 + $0x88] sm:$0xff] %v4670
      %4681 = vst [vmem:[#allocation3 + $0x90] sm:$0xff] %v4672
      %4682 = vst [vmem:[#allocation3 + $0x98] sm:$0xff] %v4674
      %v4683 = vld [vmem:[%s1] sm:$0x11]
      %v4685 = vunpack.c.l.b16 %v4683
      %v4686 = vunpack.c.h.b16 %v4683
      %v4687 = vpack.c.b16 %v4685, %v4685
      %v4688 = vpack.c.b16 %v4686, %v4686
      %v4690 = vpack.i.b16 %v4687, %v4687
      %v4692 = vperm.slane %v4690, 0
      %v4694 = vpack.i.b16 %v4688, %v4688
      %v4696 = vperm.slane %v4694, 0
      %v4697 = vunpack.c.l.bf16 %v4692
      %v4698 = vunpack.c.l.bf16 %v4696
      %4701 = vrot.lane.b32.xlu0 %v4697, 110
      %v4702 = vpop.permute.xlu0 %4701
      %4703 = vrot.lane.b32.xlu0 %v4698, 110
      %v4704 = vpop.permute.xlu0 %4703
      %vm4705 = vcmask 900096
      %v4706 = vsel %vm4705, %v4702, %v4704
      %v4710 = vmul.f32 %v4248, %v4702
      %v4711 = vmul.f32 %v4249, %v4706
      %v4712 = vmul.f32 %v4250, %v4704
      %v4713 = vmul.f32 %v4251, %v4702
      %v4714 = vmul.f32 %v4252, %v4706
      %v4715 = vmul.f32 %v4253, %v4704
      %v4716 = vmul.f32 %v4254, %v4702
      %v4717 = vmul.f32 %v4255, %v4706
      %v4718 = vmul.f32 %v4256, %v4704
      %v4719 = vmul.f32 %v4257, %v4702
      %v4720 = vmul.f32 %v4258, %v4706
      %v4721 = vmul.f32 %v4259, %v4704
      %v4722 = vpack.c.bf16 %v4711, %v4710
      %v4723 = vpack.c.bf16 %v4712, %v4712
      %v4724 = vpack.c.bf16 %v4714, %v4713
      %v4725 = vpack.c.bf16 %v4715, %v4715
      %v4726 = vpack.c.bf16 %v4717, %v4716
      %v4727 = vpack.c.bf16 %v4718, %v4718
      %v4728 = vpack.c.bf16 %v4720, %v4719
      %v4729 = vpack.c.bf16 %v4721, %v4721
      %4738 = vrot.lane.b32.xlu0 %v4722, 18
      %v4739 = vpop.permute.xlu0 %4738
      %4740 = vrot.lane.b32.xlu0 %v4723, 18
      %v4741 = vpop.permute.xlu0 %4740
      %4742 = vrot.lane.b32.xlu0 %v4724, 18
      %v4743 = vpop.permute.xlu0 %4742
      %4744 = vrot.lane.b32.xlu0 %v4725, 18
      %v4745 = vpop.permute.xlu0 %4744
      %4746 = vrot.lane.b32.xlu0 %v4726, 18
      %v4747 = vpop.permute.xlu0 %4746
      %4748 = vrot.lane.b32.xlu0 %v4727, 18
      %v4749 = vpop.permute.xlu0 %4748
      %4750 = vrot.lane.b32.xlu0 %v4728, 18
      %v4751 = vpop.permute.xlu0 %4750
      %4752 = vrot.lane.b32.xlu0 %v4729, 18
      %v4753 = vpop.permute.xlu0 %4752
      %v4754 = vrot.slane %v4739, 4
      %v4755 = vrot.slane %v4741, 4
      %v4756 = vrot.slane %v4743, 4
      %v4757 = vrot.slane %v4745, 4
      %v4758 = vrot.slane %v4747, 4
      %v4759 = vrot.slane %v4749, 4
      %v4760 = vrot.slane %v4751, 4
      %v4761 = vrot.slane %v4753, 4
      %v4762 = vsel %vm916, %v4754, %v4755
      %vm4763 = vcmask 146432
      %v4764 = vsel %vm4763, %v4739, %v4762
      %v4765 = vsel %vm916, %v4756, %v4757
      %v4766 = vsel %vm4763, %v4743, %v4765
      %v4767 = vsel %vm916, %v4758, %v4759
      %v4768 = vsel %vm4763, %v4747, %v4767
      %v4769 = vsel %vm916, %v4760, %v4761
      %v4770 = vsel %vm4763, %v4751, %v4769
      %4775 = vst [vmem:[#allocation3 + $0xa0] sm:$0xff] %v4764
      %4776 = vst [vmem:[#allocation3 + $0xa8] sm:$0xff] %v4766
      %4777 = vst [vmem:[#allocation3 + $0xb0] sm:$0xff] %v4768
      %4778 = vst [vmem:[#allocation3 + $0xb8] sm:$0xff] %v4770
      %v4779 = vld [vmem:[%s1] sm:$0x11]
      %v4781 = vunpack.c.l.b16 %v4779
      %v4782 = vunpack.c.h.b16 %v4779
      %v4783 = vpack.c.b16 %v4781, %v4781
      %v4784 = vpack.c.b16 %v4782, %v4782
      %v4786 = vshrl.u32 %v4783, 16
      %v4787 = vpack.i.b16 %v4786, %v4786
      %v4789 = vperm.slane %v4787, 0
      %v4791 = vshrl.u32 %v4784, 16
      %v4792 = vpack.i.b16 %v4791, %v4791
      %v4794 = vperm.slane %v4792, 0
      %v4795 = vunpack.c.l.bf16 %v4789
      %v4796 = vunpack.c.l.bf16 %v4794
      %4799 = vrot.lane.b32.xlu0 %v4795, 111
      %v4800 = vpop.permute.xlu0 %4799
      %4801 = vrot.lane.b32.xlu0 %v4796, 111
      %v4802 = vpop.permute.xlu0 %4801
      %v4803 = vsel %vm859, %v4800, %v4802
      %v4807 = vmul.f32 %v4248, %v4800
      %v4808 = vmul.f32 %v4249, %v4803
      %v4809 = vmul.f32 %v4250, %v4802
      %v4810 = vmul.f32 %v4251, %v4800
      %v4811 = vmul.f32 %v4252, %v4803
      %v4812 = vmul.f32 %v4253, %v4802
      %v4813 = vmul.f32 %v4254, %v4800
      %v4814 = vmul.f32 %v4255, %v4803
      %v4815 = vmul.f32 %v4256, %v4802
      %v4816 = vmul.f32 %v4257, %v4800
      %v4817 = vmul.f32 %v4258, %v4803
      %v4818 = vmul.f32 %v4259, %v4802
      %v4819 = vpack.c.bf16 %v4808, %v4807
      %v4820 = vpack.c.bf16 %v4809, %v4809
      %v4821 = vpack.c.bf16 %v4811, %v4810
      %v4822 = vpack.c.bf16 %v4812, %v4812
      %v4823 = vpack.c.bf16 %v4814, %v4813
      %v4824 = vpack.c.bf16 %v4815, %v4815
      %v4825 = vpack.c.bf16 %v4817, %v4816
      %v4826 = vpack.c.bf16 %v4818, %v4818
      %4835 = vrot.lane.b32.xlu0 %v4819, 17
      %v4836 = vpop.permute.xlu0 %4835
      %4837 = vrot.lane.b32.xlu0 %v4820, 17
      %v4838 = vpop.permute.xlu0 %4837
      %4839 = vrot.lane.b32.xlu0 %v4821, 17
      %v4840 = vpop.permute.xlu0 %4839
      %4841 = vrot.lane.b32.xlu0 %v4822, 17
      %v4842 = vpop.permute.xlu0 %4841
      %4843 = vrot.lane.b32.xlu0 %v4823, 17
      %v4844 = vpop.permute.xlu0 %4843
      %4845 = vrot.lane.b32.xlu0 %v4824, 17
      %v4846 = vpop.permute.xlu0 %4845
      %4847 = vrot.lane.b32.xlu0 %v4825, 17
      %v4848 = vpop.permute.xlu0 %4847
      %4849 = vrot.lane.b32.xlu0 %v4826, 17
      %v4850 = vpop.permute.xlu0 %4849
      %v4851 = vrot.slane %v4836, 4
      %v4852 = vrot.slane %v4838, 4
      %v4853 = vrot.slane %v4840, 4
      %v4854 = vrot.slane %v4842, 4
      %v4855 = vrot.slane %v4844, 4
      %v4856 = vrot.slane %v4846, 4
      %v4857 = vrot.slane %v4848, 4
      %v4858 = vrot.slane %v4850, 4
      %v4859 = vsel %vm916, %v4851, %v4852
      %v4860 = vsel %vm918, %v4836, %v4859
      %v4861 = vsel %vm916, %v4853, %v4854
      %v4862 = vsel %vm918, %v4840, %v4861
      %v4863 = vsel %vm916, %v4855, %v4856
      %v4864 = vsel %vm918, %v4844, %v4863
      %v4865 = vsel %vm916, %v4857, %v4858
      %v4866 = vsel %vm918, %v4848, %v4865
      %4871 = vst [vmem:[#allocation3 + $0xc0] sm:$0xff] %v4860
      %4872 = vst [vmem:[#allocation3 + $0xc8] sm:$0xff] %v4862
      %4873 = vst [vmem:[#allocation3 + $0xd0] sm:$0xff] %v4864
      %4874 = vst [vmem:[#allocation3 + $0xd8] sm:$0xff] %v4866
      %4875 = vrot.lane.b32.xlu0 %v4226, 16
      %v4876 = vpop.permute.xlu0 %4875
      %4877 = vrot.lane.b32.xlu0 %v4227, 16
      %v4878 = vpop.permute.xlu0 %4877
      %4879 = vrot.lane.b32.xlu0 %v4228, 16
      %v4880 = vpop.permute.xlu0 %4879
      %4881 = vrot.lane.b32.xlu0 %v4229, 16
      %v4882 = vpop.permute.xlu0 %4881
      %4883 = vrot.lane.b32.xlu0 %v4230, 16
      %v4884 = vpop.permute.xlu0 %4883
      %4885 = vrot.lane.b32.xlu0 %v4231, 16
      %v4886 = vpop.permute.xlu0 %4885
      %4887 = vrot.lane.b32.xlu0 %v4232, 16
      %v4888 = vpop.permute.xlu0 %4887
      %4889 = vrot.lane.b32.xlu0 %v4233, 16
      %v4890 = vpop.permute.xlu0 %4889
      %v4891 = vrot.slane %v4876, 4
      %v4892 = vrot.slane %v4878, 4
      %v4893 = vrot.slane %v4880, 4
      %v4894 = vrot.slane %v4882, 4
      %v4895 = vrot.slane %v4884, 4
      %v4896 = vrot.slane %v4886, 4
      %v4897 = vrot.slane %v4888, 4
      %v4898 = vrot.slane %v4890, 4
      %v4899 = vsel %vm916, %v4891, %v4892
      %v4900 = vsel %vm967, %v4876, %v4899
      %v4901 = vsel %vm916, %v4893, %v4894
      %v4902 = vsel %vm967, %v4880, %v4901
      %v4903 = vsel %vm916, %v4895, %v4896
      %v4904 = vsel %vm967, %v4884, %v4903
      %v4905 = vsel %vm916, %v4897, %v4898
      %v4906 = vsel %vm967, %v4888, %v4905
      %4911 = vst [vmem:[#allocation3 + $0xe0] sm:$0xff] %v4900
      %4912 = vst [vmem:[#allocation3 + $0xe8] sm:$0xff] %v4902
      %4913 = vst [vmem:[#allocation3 + $0xf0] sm:$0xff] %v4904
      %4914 = vst [vmem:[#allocation3 + $0xf8] sm:$0xff] %v4906
      %v4915 = vld [vmem:[%s1] sm:$0x22]
      %v4917 = vunpack.c.l.b16 %v4915
      %v4918 = vunpack.c.h.b16 %v4915
      %v4919 = vpack.c.b16 %v4917, %v4917
      %v4920 = vpack.c.b16 %v4918, %v4918
      %v4922 = vshrl.u32 %v4919, 16
      %v4923 = vpack.i.b16 %v4922, %v4922
      %v4925 = vperm.slane %v4923, 1
      %v4927 = vshrl.u32 %v4920, 16
      %v4928 = vpack.i.b16 %v4927, %v4927
      %v4930 = vperm.slane %v4928, 1
      %v4931 = vunpack.c.l.bf16 %v4925
      %v4932 = vunpack.c.l.bf16 %v4930
      %4935 = vrot.lane.b32.xlu0 %v4931, 113
      %v4936 = vpop.permute.xlu0 %4935
      %4937 = vrot.lane.b32.xlu0 %v4932, 113
      %v4938 = vpop.permute.xlu0 %4937
      %v4939 = vsel %vm1007, %v4936, %v4938
      %v4943 = vmul.f32 %v4248, %v4936
      %v4944 = vmul.f32 %v4249, %v4939
      %v4945 = vmul.f32 %v4250, %v4938
      %v4946 = vmul.f32 %v4251, %v4936
      %v4947 = vmul.f32 %v4252, %v4939
      %v4948 = vmul.f32 %v4253, %v4938
      %v4949 = vmul.f32 %v4254, %v4936
      %v4950 = vmul.f32 %v4255, %v4939
      %v4951 = vmul.f32 %v4256, %v4938
      %v4952 = vmul.f32 %v4257, %v4936
      %v4953 = vmul.f32 %v4258, %v4939
      %v4954 = vmul.f32 %v4259, %v4938
      %v4955 = vpack.c.bf16 %v4944, %v4943
      %v4956 = vpack.c.bf16 %v4945, %v4945
      %v4957 = vpack.c.bf16 %v4947, %v4946
      %v4958 = vpack.c.bf16 %v4948, %v4948
      %v4959 = vpack.c.bf16 %v4950, %v4949
      %v4960 = vpack.c.bf16 %v4951, %v4951
      %v4961 = vpack.c.bf16 %v4953, %v4952
      %v4962 = vpack.c.bf16 %v4954, %v4954
      %4971 = vrot.lane.b32.xlu0 %v4955, 15
      %v4972 = vpop.permute.xlu0 %4971
      %4973 = vrot.lane.b32.xlu0 %v4956, 15
      %v4974 = vpop.permute.xlu0 %4973
      %4975 = vrot.lane.b32.xlu0 %v4957, 15
      %v4976 = vpop.permute.xlu0 %4975
      %4977 = vrot.lane.b32.xlu0 %v4958, 15
      %v4978 = vpop.permute.xlu0 %4977
      %4979 = vrot.lane.b32.xlu0 %v4959, 15
      %v4980 = vpop.permute.xlu0 %4979
      %4981 = vrot.lane.b32.xlu0 %v4960, 15
      %v4982 = vpop.permute.xlu0 %4981
      %4983 = vrot.lane.b32.xlu0 %v4961, 15
      %v4984 = vpop.permute.xlu0 %4983
      %4985 = vrot.lane.b32.xlu0 %v4962, 15
      %v4986 = vpop.permute.xlu0 %4985
      %v4987 = vrot.slane %v4972, 4
      %v4988 = vrot.slane %v4974, 4
      %v4989 = vrot.slane %v4976, 4
      %v4990 = vrot.slane %v4978, 4
      %v4991 = vrot.slane %v4980, 4
      %v4992 = vrot.slane %v4982, 4
      %v4993 = vrot.slane %v4984, 4
      %v4994 = vrot.slane %v4986, 4
      %v4995 = vsel %vm916, %v4987, %v4988
      %v4996 = vsel %vm1065, %v4972, %v4995
      %v4997 = vsel %vm916, %v4989, %v4990
      %v4998 = vsel %vm1065, %v4976, %v4997
      %v4999 = vsel %vm916, %v4991, %v4992
      %v5000 = vsel %vm1065, %v4980, %v4999
      %v5001 = vsel %vm916, %v4993, %v4994
      %v5002 = vsel %vm1065, %v4984, %v5001
      %5007 = vst [vmem:[#allocation3 + $0x100] sm:$0xff] %v4996
      %5008 = vst [vmem:[#allocation3 + $0x108] sm:$0xff] %v4998
      %5009 = vst [vmem:[#allocation3 + $0x110] sm:$0xff] %v5000
      %5010 = vst [vmem:[#allocation3 + $0x118] sm:$0xff] %v5002
      %v5011 = vld [vmem:[%s1] sm:$0x44]
      %v5013 = vunpack.c.l.b16 %v5011
      %v5014 = vunpack.c.h.b16 %v5011
      %v5015 = vpack.c.b16 %v5013, %v5013
      %v5016 = vpack.c.b16 %v5014, %v5014
      %v5018 = vpack.i.b16 %v5015, %v5015
      %v5020 = vperm.slane %v5018, 2
      %v5022 = vpack.i.b16 %v5016, %v5016
      %v5024 = vperm.slane %v5022, 2
      %v5025 = vunpack.c.l.bf16 %v5020
      %v5026 = vunpack.c.l.bf16 %v5024
      %5029 = vrot.lane.b32.xlu0 %v5025, 114
      %v5030 = vpop.permute.xlu0 %5029
      %5031 = vrot.lane.b32.xlu0 %v5026, 114
      %v5032 = vpop.permute.xlu0 %5031
      %vm5033 = vcmask 932864
      %v5034 = vsel %vm5033, %v5030, %v5032
      %v5038 = vmul.f32 %v4248, %v5030
      %v5039 = vmul.f32 %v4249, %v5034
      %v5040 = vmul.f32 %v4250, %v5032
      %v5041 = vmul.f32 %v4251, %v5030
      %v5042 = vmul.f32 %v4252, %v5034
      %v5043 = vmul.f32 %v4253, %v5032
      %v5044 = vmul.f32 %v4254, %v5030
      %v5045 = vmul.f32 %v4255, %v5034
      %v5046 = vmul.f32 %v4256, %v5032
      %v5047 = vmul.f32 %v4257, %v5030
      %v5048 = vmul.f32 %v4258, %v5034
      %v5049 = vmul.f32 %v4259, %v5032
      %v5050 = vpack.c.bf16 %v5039, %v5038
      %v5051 = vpack.c.bf16 %v5040, %v5040
      %v5052 = vpack.c.bf16 %v5042, %v5041
      %v5053 = vpack.c.bf16 %v5043, %v5043
      %v5054 = vpack.c.bf16 %v5045, %v5044
      %v5055 = vpack.c.bf16 %v5046, %v5046
      %v5056 = vpack.c.bf16 %v5048, %v5047
      %v5057 = vpack.c.bf16 %v5049, %v5049
      %5066 = vrot.lane.b32.xlu0 %v5050, 14
      %v5067 = vpop.permute.xlu0 %5066
      %5068 = vrot.lane.b32.xlu0 %v5051, 14
      %v5069 = vpop.permute.xlu0 %5068
      %5070 = vrot.lane.b32.xlu0 %v5052, 14
      %v5071 = vpop.permute.xlu0 %5070
      %5072 = vrot.lane.b32.xlu0 %v5053, 14
      %v5073 = vpop.permute.xlu0 %5072
      %5074 = vrot.lane.b32.xlu0 %v5054, 14
      %v5075 = vpop.permute.xlu0 %5074
      %5076 = vrot.lane.b32.xlu0 %v5055, 14
      %v5077 = vpop.permute.xlu0 %5076
      %5078 = vrot.lane.b32.xlu0 %v5056, 14
      %v5079 = vpop.permute.xlu0 %5078
      %5080 = vrot.lane.b32.xlu0 %v5057, 14
      %v5081 = vpop.permute.xlu0 %5080
      %v5082 = vrot.slane %v5067, 4
      %v5083 = vrot.slane %v5069, 4
      %v5084 = vrot.slane %v5071, 4
      %v5085 = vrot.slane %v5073, 4
      %v5086 = vrot.slane %v5075, 4
      %v5087 = vrot.slane %v5077, 4
      %v5088 = vrot.slane %v5079, 4
      %v5089 = vrot.slane %v5081, 4
      %v5090 = vsel %vm916, %v5082, %v5083
      %vm5091 = vcmask 113664
      %v5092 = vsel %vm5091, %v5067, %v5090
      %v5093 = vsel %vm916, %v5084, %v5085
      %v5094 = vsel %vm5091, %v5071, %v5093
      %v5095 = vsel %vm916, %v5086, %v5087
      %v5096 = vsel %vm5091, %v5075, %v5095
      %v5097 = vsel %vm916, %v5088, %v5089
      %v5098 = vsel %vm5091, %v5079, %v5097
      %5103 = vst [vmem:[#allocation3 + $0x120] sm:$0xff] %v5092
      %5104 = vst [vmem:[#allocation3 + $0x128] sm:$0xff] %v5094
      %5105 = vst [vmem:[#allocation3 + $0x130] sm:$0xff] %v5096
      %5106 = vst [vmem:[#allocation3 + $0x138] sm:$0xff] %v5098
      %v5107 = vld [vmem:[%s1] sm:$0x11]
      %v5109 = vunpack.c.l.b16 %v5107
      %v5110 = vunpack.c.h.b16 %v5107
      %v5111 = vpack.c.b16 %v5109, %v5109
      %v5112 = vpack.c.b16 %v5110, %v5110
      %v5114 = vpack.i.b16 %v5111, %v5111
      %v5116 = vperm.slane %v5114, 0
      %v5118 = vpack.i.b16 %v5112, %v5112
      %v5120 = vperm.slane %v5118, 0
      %v5121 = vunpack.c.l.bf16 %v5116
      %v5122 = vunpack.c.l.bf16 %v5120
      %5125 = vrot.lane.b32.xlu0 %v5121, 126
      %v5126 = vpop.permute.xlu0 %5125
      %5127 = vrot.lane.b32.xlu0 %v5122, 126
      %v5128 = vpop.permute.xlu0 %5127
      %vm5129 = vcmask 1031168
      %v5130 = vsel %vm5129, %v5126, %v5128
      %v5134 = vmul.f32 %v4248, %v5126
      %v5135 = vmul.f32 %v4249, %v5130
      %v5136 = vmul.f32 %v4250, %v5128
      %v5137 = vmul.f32 %v4251, %v5126
      %v5138 = vmul.f32 %v4252, %v5130
      %v5139 = vmul.f32 %v4253, %v5128
      %v5140 = vmul.f32 %v4254, %v5126
      %v5141 = vmul.f32 %v4255, %v5130
      %v5142 = vmul.f32 %v4256, %v5128
      %v5143 = vmul.f32 %v4257, %v5126
      %v5144 = vmul.f32 %v4258, %v5130
      %v5145 = vmul.f32 %v4259, %v5128
      %v5146 = vpack.c.bf16 %v5135, %v5134
      %v5147 = vpack.c.bf16 %v5136, %v5136
      %v5148 = vpack.c.bf16 %v5138, %v5137
      %v5149 = vpack.c.bf16 %v5139, %v5139
      %v5150 = vpack.c.bf16 %v5141, %v5140
      %v5151 = vpack.c.bf16 %v5142, %v5142
      %v5152 = vpack.c.bf16 %v5144, %v5143
      %v5153 = vpack.c.bf16 %v5145, %v5145
      %5162 = vrot.lane.b32.xlu0 %v5146, 2
      %v5163 = vpop.permute.xlu0 %5162
      %5164 = vrot.lane.b32.xlu0 %v5147, 2
      %v5165 = vpop.permute.xlu0 %5164
      %5166 = vrot.lane.b32.xlu0 %v5148, 2
      %v5167 = vpop.permute.xlu0 %5166
      %5168 = vrot.lane.b32.xlu0 %v5149, 2
      %v5169 = vpop.permute.xlu0 %5168
      %5170 = vrot.lane.b32.xlu0 %v5150, 2
      %v5171 = vpop.permute.xlu0 %5170
      %5172 = vrot.lane.b32.xlu0 %v5151, 2
      %v5173 = vpop.permute.xlu0 %5172
      %5174 = vrot.lane.b32.xlu0 %v5152, 2
      %v5175 = vpop.permute.xlu0 %5174
      %5176 = vrot.lane.b32.xlu0 %v5153, 2
      %v5177 = vpop.permute.xlu0 %5176
      %v5178 = vrot.slane %v5163, 4
      %v5179 = vrot.slane %v5165, 4
      %v5180 = vrot.slane %v5167, 4
      %v5181 = vrot.slane %v5169, 4
      %v5182 = vrot.slane %v5171, 4
      %v5183 = vrot.slane %v5173, 4
      %v5184 = vrot.slane %v5175, 4
      %v5185 = vrot.slane %v5177, 4
      %v5186 = vsel %vm916, %v5178, %v5179
      %vm5187 = vcmask 15360
      %v5188 = vsel %vm5187, %v5163, %v5186
      %v5189 = vsel %vm916, %v5180, %v5181
      %v5190 = vsel %vm5187, %v5167, %v5189
      %v5191 = vsel %vm916, %v5182, %v5183
      %v5192 = vsel %vm5187, %v5171, %v5191
      %v5193 = vsel %vm916, %v5184, %v5185
      %v5194 = vsel %vm5187, %v5175, %v5193
      %5199 = vst [vmem:[#allocation3 + $0x140] sm:$0xff] %v5188
      %5200 = vst [vmem:[#allocation3 + $0x148] sm:$0xff] %v5190
      %5201 = vst [vmem:[#allocation3 + $0x150] sm:$0xff] %v5192
      %5202 = vst [vmem:[#allocation3 + $0x158] sm:$0xff] %v5194
      %v5203 = vld [vmem:[%s1] sm:$0x11]
      %v5205 = vunpack.c.l.b16 %v5203
      %v5206 = vunpack.c.h.b16 %v5203
      %v5207 = vpack.c.b16 %v5205, %v5205
      %v5208 = vpack.c.b16 %v5206, %v5206
      %v5210 = vshrl.u32 %v5207, 16
      %v5211 = vpack.i.b16 %v5210, %v5210
      %v5213 = vperm.slane %v5211, 0
      %v5215 = vshrl.u32 %v5208, 16
      %v5216 = vpack.i.b16 %v5215, %v5215
      %v5218 = vperm.slane %v5216, 0
      %v5219 = vunpack.c.l.bf16 %v5213
      %v5220 = vunpack.c.l.bf16 %v5218
      %5223 = vrot.lane.b32.xlu0 %v5219, 127
      %v5224 = vpop.permute.xlu0 %5223
      %5225 = vrot.lane.b32.xlu0 %v5220, 127
      %v5226 = vpop.permute.xlu0 %5225
      %v5227 = vsel %vm1105, %v5224, %v5226
      %v5231 = vmul.f32 %v4248, %v5224
      %v5232 = vmul.f32 %v4249, %v5227
      %v5233 = vmul.f32 %v4250, %v5226
      %v5234 = vmul.f32 %v4251, %v5224
      %v5235 = vmul.f32 %v4252, %v5227
      %v5236 = vmul.f32 %v4253, %v5226
      %v5237 = vmul.f32 %v4254, %v5224
      %v5238 = vmul.f32 %v4255, %v5227
      %v5239 = vmul.f32 %v4256, %v5226
      %v5240 = vmul.f32 %v4257, %v5224
      %v5241 = vmul.f32 %v4258, %v5227
      %v5242 = vmul.f32 %v4259, %v5226
      %v5243 = vpack.c.bf16 %v5232, %v5231
      %v5244 = vpack.c.bf16 %v5233, %v5233
      %v5245 = vpack.c.bf16 %v5235, %v5234
      %v5246 = vpack.c.bf16 %v5236, %v5236
      %v5247 = vpack.c.bf16 %v5238, %v5237
      %v5248 = vpack.c.bf16 %v5239, %v5239
      %v5249 = vpack.c.bf16 %v5241, %v5240
      %v5250 = vpack.c.bf16 %v5242, %v5242
      %5259 = vrot.lane.b32.xlu0 %v5243, 1
      %v5260 = vpop.permute.xlu0 %5259
      %5261 = vrot.lane.b32.xlu0 %v5244, 1
      %v5262 = vpop.permute.xlu0 %5261
      %5263 = vrot.lane.b32.xlu0 %v5245, 1
      %v5264 = vpop.permute.xlu0 %5263
      %5265 = vrot.lane.b32.xlu0 %v5246, 1
      %v5266 = vpop.permute.xlu0 %5265
      %5267 = vrot.lane.b32.xlu0 %v5247, 1
      %v5268 = vpop.permute.xlu0 %5267
      %5269 = vrot.lane.b32.xlu0 %v5248, 1
      %v5270 = vpop.permute.xlu0 %5269
      %5271 = vrot.lane.b32.xlu0 %v5249, 1
      %v5272 = vpop.permute.xlu0 %5271
      %5273 = vrot.lane.b32.xlu0 %v5250, 1
      %v5274 = vpop.permute.xlu0 %5273
      %v5275 = vrot.slane %v5260, 4
      %v5276 = vrot.slane %v5262, 4
      %v5277 = vrot.slane %v5264, 4
      %v5278 = vrot.slane %v5266, 4
      %v5279 = vrot.slane %v5268, 4
      %v5280 = vrot.slane %v5270, 4
      %v5281 = vrot.slane %v5272, 4
      %v5282 = vrot.slane %v5274, 4
      %v5283 = vsel %vm916, %v5275, %v5276
      %v5284 = vsel %vm1163, %v5260, %v5283
      %v5285 = vsel %vm916, %v5277, %v5278
      %v5286 = vsel %vm1163, %v5264, %v5285
      %v5287 = vsel %vm916, %v5279, %v5280
      %v5288 = vsel %vm1163, %v5268, %v5287
      %v5289 = vsel %vm916, %v5281, %v5282
      %v5290 = vsel %vm1163, %v5272, %v5289
      %5295 = vst [vmem:[#allocation3 + $0x160] sm:$0xff] %v5284
      %5296 = vst [vmem:[#allocation3 + $0x168] sm:$0xff] %v5286
      %5297 = vst [vmem:[#allocation3 + $0x170] sm:$0xff] %v5288
      %5298 = vst [vmem:[#allocation3 + $0x178] sm:$0xff] %v5290
      %v5299 = vrot.slane %v4226, 4
      %v5300 = vrot.slane %v4227, 4
      %v5301 = vrot.slane %v4228, 4
      %v5302 = vrot.slane %v4229, 4
      %v5303 = vrot.slane %v4230, 4
      %v5304 = vrot.slane %v4231, 4
      %v5305 = vrot.slane %v4232, 4
      %v5306 = vrot.slane %v4233, 4
      %v5307 = vsel %vm916, %v5299, %v5300
      %v5308 = vsel %vm916, %v5301, %v5302
      %v5309 = vsel %vm916, %v5303, %v5304
      %v5310 = vsel %vm916, %v5305, %v5306
      %5315 = vst [vmem:[#allocation3 + $0x180] sm:$0xff] %v5307
      %5316 = vst [vmem:[#allocation3 + $0x188] sm:$0xff] %v5308
      %5317 = vst [vmem:[#allocation3 + $0x190] sm:$0xff] %v5309
      %5318 = vst [vmem:[#allocation3 + $0x198] sm:$0xff] %v5310
      %v5319 = vld [vmem:[%s1] sm:$0x22]
      %v5321 = vunpack.c.l.b16 %v5319
      %v5322 = vunpack.c.h.b16 %v5319
      %v5323 = vpack.c.b16 %v5321, %v5321
      %v5324 = vpack.c.b16 %v5322, %v5322
      %v5326 = vshrl.u32 %v5323, 16
      %v5327 = vpack.i.b16 %v5326, %v5326
      %v5329 = vperm.slane %v5327, 1
      %v5331 = vshrl.u32 %v5324, 16
      %v5332 = vpack.i.b16 %v5331, %v5331
      %v5334 = vperm.slane %v5332, 1
      %5335 = vrot.lane.b32.xlu0 %v4226, 127
      %v5336 = vpop.permute.xlu0 %5335
      %5337 = vrot.lane.b32.xlu0 %v4227, 127
      %v5338 = vpop.permute.xlu0 %5337
      %5339 = vrot.lane.b32.xlu0 %v4228, 127
      %v5340 = vpop.permute.xlu0 %5339
      %5341 = vrot.lane.b32.xlu0 %v4229, 127
      %v5342 = vpop.permute.xlu0 %5341
      %5343 = vrot.lane.b32.xlu0 %v4230, 127
      %v5344 = vpop.permute.xlu0 %5343
      %5345 = vrot.lane.b32.xlu0 %v4231, 127
      %v5346 = vpop.permute.xlu0 %5345
      %5347 = vrot.lane.b32.xlu0 %v4232, 127
      %v5348 = vpop.permute.xlu0 %5347
      %5349 = vrot.lane.b32.xlu0 %v4233, 127
      %v5350 = vpop.permute.xlu0 %5349
      %v5351 = vrot.slane %v5336, 4
      %v5352 = vrot.slane %v5338, 4
      %v5353 = vrot.slane %v5340, 4
      %v5354 = vrot.slane %v5342, 4
      %v5355 = vrot.slane %v5344, 4
      %v5356 = vrot.slane %v5346, 4
      %v5357 = vrot.slane %v5348, 4
      %v5358 = vrot.slane %v5350, 4
      %v5359 = vsel %vm916, %v5351, %v5352
      %v5360 = vsel %vm1240, %v5359, %v5338
      %v5361 = vsel %vm916, %v5353, %v5354
      %v5362 = vsel %vm1240, %v5361, %v5342
      %v5363 = vsel %vm916, %v5355, %v5356
      %v5364 = vsel %vm1240, %v5363, %v5346
      %v5365 = vsel %vm916, %v5357, %v5358
      %v5366 = vsel %vm1240, %v5365, %v5350
      %v5371 = vunpack.c.l.bf16 %v5360
      %v5372 = vunpack.c.h.bf16 %v5360
      %v5373 = vunpack.c.l.bf16 %v5362
      %v5374 = vunpack.c.h.bf16 %v5362
      %v5375 = vunpack.c.l.bf16 %v5364
      %v5376 = vunpack.c.h.bf16 %v5364
      %v5377 = vunpack.c.l.bf16 %v5366
      %v5378 = vunpack.c.h.bf16 %v5366
      %v5379 = vunpack.c.l.bf16 %v5329
      %v5380 = vunpack.c.l.bf16 %v5334
      %v5381 = vmul.f32 %v5371, %v5379
      %v5382 = vmul.f32 %v5372, %v5380
      %v5383 = vmul.f32 %v5373, %v5379
      %v5384 = vmul.f32 %v5374, %v5380
      %v5385 = vmul.f32 %v5375, %v5379
      %v5386 = vmul.f32 %v5376, %v5380
      %v5387 = vmul.f32 %v5377, %v5379
      %v5388 = vmul.f32 %v5378, %v5380
      %v5389 = vpack.c.bf16 %v5382, %v5381
      %v5390 = vpack.c.bf16 %v5384, %v5383
      %v5391 = vpack.c.bf16 %v5386, %v5385
      %v5392 = vpack.c.bf16 %v5388, %v5387
      %5393 = vst [vmem:[#allocation3 + $0x1a0] sm:$0xff] %v5389
      %5394 = vst [vmem:[#allocation3 + $0x1a8] sm:$0xff] %v5390
      %5395 = vst [vmem:[#allocation3 + $0x1b0] sm:$0xff] %v5391
      %5396 = vst [vmem:[#allocation3 + $0x1b8] sm:$0xff] %v5392
      %v5397 = vld [vmem:[%s1] sm:$0x44]
      %v5399 = vunpack.c.l.b16 %v5397
      %v5400 = vunpack.c.h.b16 %v5397
      %v5401 = vpack.c.b16 %v5399, %v5399
      %v5402 = vpack.c.b16 %v5400, %v5400
      %v5404 = vpack.i.b16 %v5401, %v5401
      %v5406 = vperm.slane %v5404, 2
      %v5408 = vpack.i.b16 %v5402, %v5402
      %v5410 = vperm.slane %v5408, 2
      %5411 = vrot.lane.b32.xlu0 %v4226, 126
      %v5412 = vpop.permute.xlu0 %5411
      %5413 = vrot.lane.b32.xlu0 %v4227, 126
      %v5414 = vpop.permute.xlu0 %5413
      %5415 = vrot.lane.b32.xlu0 %v4228, 126
      %v5416 = vpop.permute.xlu0 %5415
      %5417 = vrot.lane.b32.xlu0 %v4229, 126
      %v5418 = vpop.permute.xlu0 %5417
      %5419 = vrot.lane.b32.xlu0 %v4230, 126
      %v5420 = vpop.permute.xlu0 %5419
      %5421 = vrot.lane.b32.xlu0 %v4231, 126
      %v5422 = vpop.permute.xlu0 %5421
      %5423 = vrot.lane.b32.xlu0 %v4232, 126
      %v5424 = vpop.permute.xlu0 %5423
      %5425 = vrot.lane.b32.xlu0 %v4233, 126
      %v5426 = vpop.permute.xlu0 %5425
      %v5427 = vrot.slane %v5412, 4
      %v5428 = vrot.slane %v5414, 4
      %v5429 = vrot.slane %v5416, 4
      %v5430 = vrot.slane %v5418, 4
      %v5431 = vrot.slane %v5420, 4
      %v5432 = vrot.slane %v5422, 4
      %v5433 = vrot.slane %v5424, 4
      %v5434 = vrot.slane %v5426, 4
      %v5435 = vsel %vm916, %v5427, %v5428
      %vm5436 = vcmask 1031168
      %v5437 = vsel %vm5436, %v5435, %v5414
      %v5438 = vsel %vm916, %v5429, %v5430
      %v5439 = vsel %vm5436, %v5438, %v5418
      %v5440 = vsel %vm916, %v5431, %v5432
      %v5441 = vsel %vm5436, %v5440, %v5422
      %v5442 = vsel %vm916, %v5433, %v5434
      %v5443 = vsel %vm5436, %v5442, %v5426
      %v5448 = vunpack.c.l.bf16 %v5437
      %v5449 = vunpack.c.h.bf16 %v5437
      %v5450 = vunpack.c.l.bf16 %v5439
      %v5451 = vunpack.c.h.bf16 %v5439
      %v5452 = vunpack.c.l.bf16 %v5441
      %v5453 = vunpack.c.h.bf16 %v5441
      %v5454 = vunpack.c.l.bf16 %v5443
      %v5455 = vunpack.c.h.bf16 %v5443
      %v5456 = vunpack.c.l.bf16 %v5406
      %v5457 = vunpack.c.l.bf16 %v5410
      %v5458 = vmul.f32 %v5448, %v5456
      %v5459 = vmul.f32 %v5449, %v5457
      %v5460 = vmul.f32 %v5450, %v5456
      %v5461 = vmul.f32 %v5451, %v5457
      %v5462 = vmul.f32 %v5452, %v5456
      %v5463 = vmul.f32 %v5453, %v5457
      %v5464 = vmul.f32 %v5454, %v5456
      %v5465 = vmul.f32 %v5455, %v5457
      %v5466 = vpack.c.bf16 %v5459, %v5458
      %v5467 = vpack.c.bf16 %v5461, %v5460
      %v5468 = vpack.c.bf16 %v5463, %v5462
      %v5469 = vpack.c.bf16 %v5465, %v5464
      %5470 = vst [vmem:[#allocation3 + $0x1c0] sm:$0xff] %v5466
      %5471 = vst [vmem:[#allocation3 + $0x1c8] sm:$0xff] %v5467
      %5472 = vst [vmem:[#allocation3 + $0x1d0] sm:$0xff] %v5468
      %5473 = vst [vmem:[#allocation3 + $0x1d8] sm:$0xff] %v5469
      %v5474 = vld [vmem:[%s1] sm:$0x11]
      %v5476 = vunpack.c.l.b16 %v5474
      %v5477 = vunpack.c.h.b16 %v5474
      %v5478 = vpack.c.b16 %v5476, %v5476
      %v5479 = vpack.c.b16 %v5477, %v5477
      %v5481 = vpack.i.b16 %v5478, %v5478
      %v5483 = vperm.slane %v5481, 0
      %v5485 = vpack.i.b16 %v5479, %v5479
      %v5487 = vperm.slane %v5485, 0
      %5488 = vrot.lane.b32.xlu0 %v4226, 114
      %v5489 = vpop.permute.xlu0 %5488
      %5490 = vrot.lane.b32.xlu0 %v4227, 114
      %v5491 = vpop.permute.xlu0 %5490
      %5492 = vrot.lane.b32.xlu0 %v4228, 114
      %v5493 = vpop.permute.xlu0 %5492
      %5494 = vrot.lane.b32.xlu0 %v4229, 114
      %v5495 = vpop.permute.xlu0 %5494
      %5496 = vrot.lane.b32.xlu0 %v4230, 114
      %v5497 = vpop.permute.xlu0 %5496
      %5498 = vrot.lane.b32.xlu0 %v4231, 114
      %v5499 = vpop.permute.xlu0 %5498
      %5500 = vrot.lane.b32.xlu0 %v4232, 114
      %v5501 = vpop.permute.xlu0 %5500
      %5502 = vrot.lane.b32.xlu0 %v4233, 114
      %v5503 = vpop.permute.xlu0 %5502
      %v5504 = vrot.slane %v5489, 4
      %v5505 = vrot.slane %v5491, 4
      %v5506 = vrot.slane %v5493, 4
      %v5507 = vrot.slane %v5495, 4
      %v5508 = vrot.slane %v5497, 4
      %v5509 = vrot.slane %v5499, 4
      %v5510 = vrot.slane %v5501, 4
      %v5511 = vrot.slane %v5503, 4
      %v5512 = vsel %vm916, %v5504, %v5505
      %vm5513 = vcmask 932864
      %v5514 = vsel %vm5513, %v5512, %v5491
      %v5515 = vsel %vm916, %v5506, %v5507
      %v5516 = vsel %vm5513, %v5515, %v5495
      %v5517 = vsel %vm916, %v5508, %v5509
      %v5518 = vsel %vm5513, %v5517, %v5499
      %v5519 = vsel %vm916, %v5510, %v5511
      %v5520 = vsel %vm5513, %v5519, %v5503
      %v5525 = vunpack.c.l.bf16 %v5514
      %v5526 = vunpack.c.h.bf16 %v5514
      %v5527 = vunpack.c.l.bf16 %v5516
      %v5528 = vunpack.c.h.bf16 %v5516
      %v5529 = vunpack.c.l.bf16 %v5518
      %v5530 = vunpack.c.h.bf16 %v5518
      %v5531 = vunpack.c.l.bf16 %v5520
      %v5532 = vunpack.c.h.bf16 %v5520
      %v5533 = vunpack.c.l.bf16 %v5483
      %v5534 = vunpack.c.l.bf16 %v5487
      %v5535 = vmul.f32 %v5525, %v5533
      %v5536 = vmul.f32 %v5526, %v5534
      %v5537 = vmul.f32 %v5527, %v5533
      %v5538 = vmul.f32 %v5528, %v5534
      %v5539 = vmul.f32 %v5529, %v5533
      %v5540 = vmul.f32 %v5530, %v5534
      %v5541 = vmul.f32 %v5531, %v5533
      %v5542 = vmul.f32 %v5532, %v5534
      %v5543 = vpack.c.bf16 %v5536, %v5535
      %v5544 = vpack.c.bf16 %v5538, %v5537
      %v5545 = vpack.c.bf16 %v5540, %v5539
      %v5546 = vpack.c.bf16 %v5542, %v5541
      %5547 = vst [vmem:[#allocation3 + $0x1e0] sm:$0xff] %v5543
      %5548 = vst [vmem:[#allocation3 + $0x1e8] sm:$0xff] %v5544
      %5549 = vst [vmem:[#allocation3 + $0x1f0] sm:$0xff] %v5545
      %5550 = vst [vmem:[#allocation3 + $0x1f8] sm:$0xff] %v5546
      %v5551 = vld [vmem:[%s1] sm:$0x11]
      %v5553 = vunpack.c.l.b16 %v5551
      %v5554 = vunpack.c.h.b16 %v5551
      %v5555 = vpack.c.b16 %v5553, %v5553
      %v5556 = vpack.c.b16 %v5554, %v5554
      %v5558 = vshrl.u32 %v5555, 16
      %v5559 = vpack.i.b16 %v5558, %v5558
      %v5561 = vperm.slane %v5559, 0
      %v5563 = vshrl.u32 %v5556, 16
      %v5564 = vpack.i.b16 %v5563, %v5563
      %v5566 = vperm.slane %v5564, 0
      %5567 = vrot.lane.b32.xlu0 %v4226, 113
      %v5568 = vpop.permute.xlu0 %5567
      %5569 = vrot.lane.b32.xlu0 %v4227, 113
      %v5570 = vpop.permute.xlu0 %5569
      %5571 = vrot.lane.b32.xlu0 %v4228, 113
      %v5572 = vpop.permute.xlu0 %5571
      %5573 = vrot.lane.b32.xlu0 %v4229, 113
      %v5574 = vpop.permute.xlu0 %5573
      %5575 = vrot.lane.b32.xlu0 %v4230, 113
      %v5576 = vpop.permute.xlu0 %5575
      %5577 = vrot.lane.b32.xlu0 %v4231, 113
      %v5578 = vpop.permute.xlu0 %5577
      %5579 = vrot.lane.b32.xlu0 %v4232, 113
      %v5580 = vpop.permute.xlu0 %5579
      %5581 = vrot.lane.b32.xlu0 %v4233, 113
      %v5582 = vpop.permute.xlu0 %5581
      %v5583 = vrot.slane %v5568, 4
      %v5584 = vrot.slane %v5570, 4
      %v5585 = vrot.slane %v5572, 4
      %v5586 = vrot.slane %v5574, 4
      %v5587 = vrot.slane %v5576, 4
      %v5588 = vrot.slane %v5578, 4
      %v5589 = vrot.slane %v5580, 4
      %v5590 = vrot.slane %v5582, 4
      %v5591 = vsel %vm916, %v5583, %v5584
      %v5592 = vsel %vm1319, %v5591, %v5570
      %v5593 = vsel %vm916, %v5585, %v5586
      %v5594 = vsel %vm1319, %v5593, %v5574
      %v5595 = vsel %vm916, %v5587, %v5588
      %v5596 = vsel %vm1319, %v5595, %v5578
      %v5597 = vsel %vm916, %v5589, %v5590
      %v5598 = vsel %vm1319, %v5597, %v5582
      %v5603 = vunpack.c.l.bf16 %v5592
      %v5604 = vunpack.c.h.bf16 %v5592
      %v5605 = vunpack.c.l.bf16 %v5594
      %v5606 = vunpack.c.h.bf16 %v5594
      %v5607 = vunpack.c.l.bf16 %v5596
      %v5608 = vunpack.c.h.bf16 %v5596
      %v5609 = vunpack.c.l.bf16 %v5598
      %v5610 = vunpack.c.h.bf16 %v5598
      %v5611 = vunpack.c.l.bf16 %v5561
      %v5612 = vunpack.c.l.bf16 %v5566
      %v5613 = vmul.f32 %v5603, %v5611
      %v5614 = vmul.f32 %v5604, %v5612
      %v5615 = vmul.f32 %v5605, %v5611
      %v5616 = vmul.f32 %v5606, %v5612
      %v5617 = vmul.f32 %v5607, %v5611
      %v5618 = vmul.f32 %v5608, %v5612
      %v5619 = vmul.f32 %v5609, %v5611
      %v5620 = vmul.f32 %v5610, %v5612
      %v5621 = vpack.c.bf16 %v5614, %v5613
      %v5622 = vpack.c.bf16 %v5616, %v5615
      %v5623 = vpack.c.bf16 %v5618, %v5617
      %v5624 = vpack.c.bf16 %v5620, %v5619
      %5625 = vst [vmem:[#allocation3 + $0x200] sm:$0xff] %v5621
      %5626 = vst [vmem:[#allocation3 + $0x208] sm:$0xff] %v5622
      %5627 = vst [vmem:[#allocation3 + $0x210] sm:$0xff] %v5623
      %5628 = vst [vmem:[#allocation3 + $0x218] sm:$0xff] %v5624
      %5629 = vrot.lane.b32.xlu0 %v4226, 112
      %v5630 = vpop.permute.xlu0 %5629
      %5631 = vrot.lane.b32.xlu0 %v4227, 112
      %v5632 = vpop.permute.xlu0 %5631
      %5633 = vrot.lane.b32.xlu0 %v4228, 112
      %v5634 = vpop.permute.xlu0 %5633
      %5635 = vrot.lane.b32.xlu0 %v4229, 112
      %v5636 = vpop.permute.xlu0 %5635
      %5637 = vrot.lane.b32.xlu0 %v4230, 112
      %v5638 = vpop.permute.xlu0 %5637
      %5639 = vrot.lane.b32.xlu0 %v4231, 112
      %v5640 = vpop.permute.xlu0 %5639
      %5641 = vrot.lane.b32.xlu0 %v4232, 112
      %v5642 = vpop.permute.xlu0 %5641
      %5643 = vrot.lane.b32.xlu0 %v4233, 112
      %v5644 = vpop.permute.xlu0 %5643
      %v5645 = vrot.slane %v5630, 4
      %v5646 = vrot.slane %v5632, 4
      %v5647 = vrot.slane %v5634, 4
      %v5648 = vrot.slane %v5636, 4
      %v5649 = vrot.slane %v5638, 4
      %v5650 = vrot.slane %v5640, 4
      %v5651 = vrot.slane %v5642, 4
      %v5652 = vrot.slane %v5644, 4
      %v5653 = vsel %vm916, %v5645, %v5646
      %v5654 = vsel %vm1382, %v5653, %v5632
      %v5655 = vsel %vm916, %v5647, %v5648
      %v5656 = vsel %vm1382, %v5655, %v5636
      %v5657 = vsel %vm916, %v5649, %v5650
      %v5658 = vsel %vm1382, %v5657, %v5640
      %v5659 = vsel %vm916, %v5651, %v5652
      %v5660 = vsel %vm1382, %v5659, %v5644
      %5665 = vst [vmem:[#allocation3 + $0x220] sm:$0xff] %v5654
      %5666 = vst [vmem:[#allocation3 + $0x228] sm:$0xff] %v5656
      %5667 = vst [vmem:[#allocation3 + $0x230] sm:$0xff] %v5658
      %5668 = vst [vmem:[#allocation3 + $0x238] sm:$0xff] %v5660
      %v5669 = vld [vmem:[%s1] sm:$0x22]
      %v5671 = vunpack.c.l.b16 %v5669
      %v5672 = vunpack.c.h.b16 %v5669
      %v5673 = vpack.c.b16 %v5671, %v5671
      %v5674 = vpack.c.b16 %v5672, %v5672
      %v5676 = vshrl.u32 %v5673, 16
      %v5677 = vpack.i.b16 %v5676, %v5676
      %v5679 = vperm.slane %v5677, 1
      %v5681 = vshrl.u32 %v5674, 16
      %v5682 = vpack.i.b16 %v5681, %v5681
      %v5684 = vperm.slane %v5682, 1
      %5685 = vrot.lane.b32.xlu0 %v4226, 111
      %v5686 = vpop.permute.xlu0 %5685
      %5687 = vrot.lane.b32.xlu0 %v4227, 111
      %v5688 = vpop.permute.xlu0 %5687
      %5689 = vrot.lane.b32.xlu0 %v4228, 111
      %v5690 = vpop.permute.xlu0 %5689
      %5691 = vrot.lane.b32.xlu0 %v4229, 111
      %v5692 = vpop.permute.xlu0 %5691
      %5693 = vrot.lane.b32.xlu0 %v4230, 111
      %v5694 = vpop.permute.xlu0 %5693
      %5695 = vrot.lane.b32.xlu0 %v4231, 111
      %v5696 = vpop.permute.xlu0 %5695
      %5697 = vrot.lane.b32.xlu0 %v4232, 111
      %v5698 = vpop.permute.xlu0 %5697
      %5699 = vrot.lane.b32.xlu0 %v4233, 111
      %v5700 = vpop.permute.xlu0 %5699
      %v5701 = vrot.slane %v5686, 4
      %v5702 = vrot.slane %v5688, 4
      %v5703 = vrot.slane %v5690, 4
      %v5704 = vrot.slane %v5692, 4
      %v5705 = vrot.slane %v5694, 4
      %v5706 = vrot.slane %v5696, 4
      %v5707 = vrot.slane %v5698, 4
      %v5708 = vrot.slane %v5700, 4
      %v5709 = vsel %vm916, %v5701, %v5702
      %v5710 = vsel %vm1439, %v5709, %v5688
      %v5711 = vsel %vm916, %v5703, %v5704
      %v5712 = vsel %vm1439, %v5711, %v5692
      %v5713 = vsel %vm916, %v5705, %v5706
      %v5714 = vsel %vm1439, %v5713, %v5696
      %v5715 = vsel %vm916, %v5707, %v5708
      %v5716 = vsel %vm1439, %v5715, %v5700
      %v5721 = vunpack.c.l.bf16 %v5710
      %v5722 = vunpack.c.h.bf16 %v5710
      %v5723 = vunpack.c.l.bf16 %v5712
      %v5724 = vunpack.c.h.bf16 %v5712
      %v5725 = vunpack.c.l.bf16 %v5714
      %v5726 = vunpack.c.h.bf16 %v5714
      %v5727 = vunpack.c.l.bf16 %v5716
      %v5728 = vunpack.c.h.bf16 %v5716
      %v5729 = vunpack.c.l.bf16 %v5679
      %v5730 = vunpack.c.l.bf16 %v5684
      %v5731 = vmul.f32 %v5721, %v5729
      %v5732 = vmul.f32 %v5722, %v5730
      %v5733 = vmul.f32 %v5723, %v5729
      %v5734 = vmul.f32 %v5724, %v5730
      %v5735 = vmul.f32 %v5725, %v5729
      %v5736 = vmul.f32 %v5726, %v5730
      %v5737 = vmul.f32 %v5727, %v5729
      %v5738 = vmul.f32 %v5728, %v5730
      %v5739 = vpack.c.bf16 %v5732, %v5731
      %v5740 = vpack.c.bf16 %v5734, %v5733
      %v5741 = vpack.c.bf16 %v5736, %v5735
      %v5742 = vpack.c.bf16 %v5738, %v5737
      %5743 = vst [vmem:[#allocation3 + $0x240] sm:$0xff] %v5739
      %5744 = vst [vmem:[#allocation3 + $0x248] sm:$0xff] %v5740
      %5745 = vst [vmem:[#allocation3 + $0x250] sm:$0xff] %v5741
      %5746 = vst [vmem:[#allocation3 + $0x258] sm:$0xff] %v5742
      %v5747 = vld [vmem:[%s1] sm:$0x44]
      %v5749 = vunpack.c.l.b16 %v5747
      %v5750 = vunpack.c.h.b16 %v5747
      %v5751 = vpack.c.b16 %v5749, %v5749
      %v5752 = vpack.c.b16 %v5750, %v5750
      %v5754 = vpack.i.b16 %v5751, %v5751
      %v5756 = vperm.slane %v5754, 2
      %v5758 = vpack.i.b16 %v5752, %v5752
      %v5760 = vperm.slane %v5758, 2
      %5761 = vrot.lane.b32.xlu0 %v4226, 110
      %v5762 = vpop.permute.xlu0 %5761
      %5763 = vrot.lane.b32.xlu0 %v4227, 110
      %v5764 = vpop.permute.xlu0 %5763
      %5765 = vrot.lane.b32.xlu0 %v4228, 110
      %v5766 = vpop.permute.xlu0 %5765
      %5767 = vrot.lane.b32.xlu0 %v4229, 110
      %v5768 = vpop.permute.xlu0 %5767
      %5769 = vrot.lane.b32.xlu0 %v4230, 110
      %v5770 = vpop.permute.xlu0 %5769
      %5771 = vrot.lane.b32.xlu0 %v4231, 110
      %v5772 = vpop.permute.xlu0 %5771
      %5773 = vrot.lane.b32.xlu0 %v4232, 110
      %v5774 = vpop.permute.xlu0 %5773
      %5775 = vrot.lane.b32.xlu0 %v4233, 110
      %v5776 = vpop.permute.xlu0 %5775
      %v5777 = vrot.slane %v5762, 4
      %v5778 = vrot.slane %v5764, 4
      %v5779 = vrot.slane %v5766, 4
      %v5780 = vrot.slane %v5768, 4
      %v5781 = vrot.slane %v5770, 4
      %v5782 = vrot.slane %v5772, 4
      %v5783 = vrot.slane %v5774, 4
      %v5784 = vrot.slane %v5776, 4
      %v5785 = vsel %vm916, %v5777, %v5778
      %vm5786 = vcmask 900096
      %v5787 = vsel %vm5786, %v5785, %v5764
      %v5788 = vsel %vm916, %v5779, %v5780
      %v5789 = vsel %vm5786, %v5788, %v5768
      %v5790 = vsel %vm916, %v5781, %v5782
      %v5791 = vsel %vm5786, %v5790, %v5772
      %v5792 = vsel %vm916, %v5783, %v5784
      %v5793 = vsel %vm5786, %v5792, %v5776
      %v5798 = vunpack.c.l.bf16 %v5787
      %v5799 = vunpack.c.h.bf16 %v5787
      %v5800 = vunpack.c.l.bf16 %v5789
      %v5801 = vunpack.c.h.bf16 %v5789
      %v5802 = vunpack.c.l.bf16 %v5791
      %v5803 = vunpack.c.h.bf16 %v5791
      %v5804 = vunpack.c.l.bf16 %v5793
      %v5805 = vunpack.c.h.bf16 %v5793
      %v5806 = vunpack.c.l.bf16 %v5756
      %v5807 = vunpack.c.l.bf16 %v5760
      %v5808 = vmul.f32 %v5798, %v5806
      %v5809 = vmul.f32 %v5799, %v5807
      %v5810 = vmul.f32 %v5800, %v5806
      %v5811 = vmul.f32 %v5801, %v5807
      %v5812 = vmul.f32 %v5802, %v5806
      %v5813 = vmul.f32 %v5803, %v5807
      %v5814 = vmul.f32 %v5804, %v5806
      %v5815 = vmul.f32 %v5805, %v5807
      %v5816 = vpack.c.bf16 %v5809, %v5808
      %v5817 = vpack.c.bf16 %v5811, %v5810
      %v5818 = vpack.c.bf16 %v5813, %v5812
      %v5819 = vpack.c.bf16 %v5815, %v5814
      %5820 = vst [vmem:[#allocation3 + $0x260] sm:$0xff] %v5816
      %5821 = vst [vmem:[#allocation3 + $0x268] sm:$0xff] %v5817
      %5822 = vst [vmem:[#allocation3 + $0x270] sm:$0xff] %v5818
      %5823 = vst [vmem:[#allocation3 + $0x278] sm:$0xff] %v5819
      %v5824 = vld [vmem:[%s1] sm:$0x11]
      %v5826 = vunpack.c.l.b16 %v5824
      %v5827 = vunpack.c.h.b16 %v5824
      %v5828 = vpack.c.b16 %v5826, %v5826
      %v5829 = vpack.c.b16 %v5827, %v5827
      %v5831 = vpack.i.b16 %v5828, %v5828
      %v5833 = vperm.slane %v5831, 0
      %v5835 = vpack.i.b16 %v5829, %v5829
      %v5837 = vperm.slane %v5835, 0
      %5838 = vrot.lane.b32.xlu0 %v4226, 98
      %v5839 = vpop.permute.xlu0 %5838
      %5840 = vrot.lane.b32.xlu0 %v4227, 98
      %v5841 = vpop.permute.xlu0 %5840
      %5842 = vrot.lane.b32.xlu0 %v4228, 98
      %v5843 = vpop.permute.xlu0 %5842
      %5844 = vrot.lane.b32.xlu0 %v4229, 98
      %v5845 = vpop.permute.xlu0 %5844
      %5846 = vrot.lane.b32.xlu0 %v4230, 98
      %v5847 = vpop.permute.xlu0 %5846
      %5848 = vrot.lane.b32.xlu0 %v4231, 98
      %v5849 = vpop.permute.xlu0 %5848
      %5850 = vrot.lane.b32.xlu0 %v4232, 98
      %v5851 = vpop.permute.xlu0 %5850
      %5852 = vrot.lane.b32.xlu0 %v4233, 98
      %v5853 = vpop.permute.xlu0 %5852
      %v5854 = vrot.slane %v5839, 4
      %v5855 = vrot.slane %v5841, 4
      %v5856 = vrot.slane %v5843, 4
      %v5857 = vrot.slane %v5845, 4
      %v5858 = vrot.slane %v5847, 4
      %v5859 = vrot.slane %v5849, 4
      %v5860 = vrot.slane %v5851, 4
      %v5861 = vrot.slane %v5853, 4
      %v5862 = vsel %vm916, %v5854, %v5855
      %vm5863 = vcmask 801792
      %v5864 = vsel %vm5863, %v5862, %v5841
      %v5865 = vsel %vm916, %v5856, %v5857
      %v5866 = vsel %vm5863, %v5865, %v5845
      %v5867 = vsel %vm916, %v5858, %v5859
      %v5868 = vsel %vm5863, %v5867, %v5849
      %v5869 = vsel %vm916, %v5860, %v5861
      %v5870 = vsel %vm5863, %v5869, %v5853
      %v5875 = vunpack.c.l.bf16 %v5864
      %v5876 = vunpack.c.h.bf16 %v5864
      %v5877 = vunpack.c.l.bf16 %v5866
      %v5878 = vunpack.c.h.bf16 %v5866
      %v5879 = vunpack.c.l.bf16 %v5868
      %v5880 = vunpack.c.h.bf16 %v5868
      %v5881 = vunpack.c.l.bf16 %v5870
      %v5882 = vunpack.c.h.bf16 %v5870
      %v5883 = vunpack.c.l.bf16 %v5833
      %v5884 = vunpack.c.l.bf16 %v5837
      %v5885 = vmul.f32 %v5875, %v5883
      %v5886 = vmul.f32 %v5876, %v5884
      %v5887 = vmul.f32 %v5877, %v5883
      %v5888 = vmul.f32 %v5878, %v5884
      %v5889 = vmul.f32 %v5879, %v5883
      %v5890 = vmul.f32 %v5880, %v5884
      %v5891 = vmul.f32 %v5881, %v5883
      %v5892 = vmul.f32 %v5882, %v5884
      %v5893 = vpack.c.bf16 %v5886, %v5885
      %v5894 = vpack.c.bf16 %v5888, %v5887
      %v5895 = vpack.c.bf16 %v5890, %v5889
      %v5896 = vpack.c.bf16 %v5892, %v5891
      %5897 = vst [vmem:[#allocation3 + $0x280] sm:$0xff] %v5893
      %5898 = vst [vmem:[#allocation3 + $0x288] sm:$0xff] %v5894
      %5899 = vst [vmem:[#allocation3 + $0x290] sm:$0xff] %v5895
      %5900 = vst [vmem:[#allocation3 + $0x298] sm:$0xff] %v5896
      %v5901 = vld [vmem:[%s1] sm:$0x11]
      %v5903 = vunpack.c.l.b16 %v5901
      %v5904 = vunpack.c.h.b16 %v5901
      %v5905 = vpack.c.b16 %v5903, %v5903
      %v5906 = vpack.c.b16 %v5904, %v5904
      %v5908 = vshrl.u32 %v5905, 16
      %v5909 = vpack.i.b16 %v5908, %v5908
      %v5911 = vperm.slane %v5909, 0
      %v5913 = vshrl.u32 %v5906, 16
      %v5914 = vpack.i.b16 %v5913, %v5913
      %v5916 = vperm.slane %v5914, 0
      %5917 = vrot.lane.b32.xlu0 %v4226, 97
      %v5918 = vpop.permute.xlu0 %5917
      %5919 = vrot.lane.b32.xlu0 %v4227, 97
      %v5920 = vpop.permute.xlu0 %5919
      %5921 = vrot.lane.b32.xlu0 %v4228, 97
      %v5922 = vpop.permute.xlu0 %5921
      %5923 = vrot.lane.b32.xlu0 %v4229, 97
      %v5924 = vpop.permute.xlu0 %5923
      %5925 = vrot.lane.b32.xlu0 %v4230, 97
      %v5926 = vpop.permute.xlu0 %5925
      %5927 = vrot.lane.b32.xlu0 %v4231, 97
      %v5928 = vpop.permute.xlu0 %5927
      %5929 = vrot.lane.b32.xlu0 %v4232, 97
      %v5930 = vpop.permute.xlu0 %5929
      %5931 = vrot.lane.b32.xlu0 %v4233, 97
      %v5932 = vpop.permute.xlu0 %5931
      %v5933 = vrot.slane %v5918, 4
      %v5934 = vrot.slane %v5920, 4
      %v5935 = vrot.slane %v5922, 4
      %v5936 = vrot.slane %v5924, 4
      %v5937 = vrot.slane %v5926, 4
      %v5938 = vrot.slane %v5928, 4
      %v5939 = vrot.slane %v5930, 4
      %v5940 = vrot.slane %v5932, 4
      %v5941 = vsel %vm916, %v5933, %v5934
      %vm5942 = vcmask 793600
      %v5943 = vsel %vm5942, %v5941, %v5920
      %v5944 = vsel %vm916, %v5935, %v5936
      %v5945 = vsel %vm5942, %v5944, %v5924
      %v5946 = vsel %vm916, %v5937, %v5938
      %v5947 = vsel %vm5942, %v5946, %v5928
      %v5948 = vsel %vm916, %v5939, %v5940
      %v5949 = vsel %vm5942, %v5948, %v5932
      %v5954 = vunpack.c.l.bf16 %v5943
      %v5955 = vunpack.c.h.bf16 %v5943
      %v5956 = vunpack.c.l.bf16 %v5945
      %v5957 = vunpack.c.h.bf16 %v5945
      %v5958 = vunpack.c.l.bf16 %v5947
      %v5959 = vunpack.c.h.bf16 %v5947
      %v5960 = vunpack.c.l.bf16 %v5949
      %v5961 = vunpack.c.h.bf16 %v5949
      %v5962 = vunpack.c.l.bf16 %v5911
      %v5963 = vunpack.c.l.bf16 %v5916
      %v5964 = vmul.f32 %v5954, %v5962
      %v5965 = vmul.f32 %v5955, %v5963
      %v5966 = vmul.f32 %v5956, %v5962
      %v5967 = vmul.f32 %v5957, %v5963
      %v5968 = vmul.f32 %v5958, %v5962
      %v5969 = vmul.f32 %v5959, %v5963
      %v5970 = vmul.f32 %v5960, %v5962
      %v5971 = vmul.f32 %v5961, %v5963
      %v5972 = vpack.c.bf16 %v5965, %v5964
      %v5973 = vpack.c.bf16 %v5967, %v5966
      %v5974 = vpack.c.bf16 %v5969, %v5968
      %v5975 = vpack.c.bf16 %v5971, %v5970
      %5976 = vst [vmem:[#allocation3 + $0x2a0] sm:$0xff] %v5972
      %5977 = vst [vmem:[#allocation3 + $0x2a8] sm:$0xff] %v5973
      %5978 = vst [vmem:[#allocation3 + $0x2b0] sm:$0xff] %v5974
      %5979 = vst [vmem:[#allocation3 + $0x2b8] sm:$0xff] %v5975
      %5980 = vrot.lane.b32.xlu0 %v4226, 96
      %v5981 = vpop.permute.xlu0 %5980
      %5982 = vrot.lane.b32.xlu0 %v4227, 96
      %v5983 = vpop.permute.xlu0 %5982
      %5984 = vrot.lane.b32.xlu0 %v4228, 96
      %v5985 = vpop.permute.xlu0 %5984
      %5986 = vrot.lane.b32.xlu0 %v4229, 96
      %v5987 = vpop.permute.xlu0 %5986
      %5988 = vrot.lane.b32.xlu0 %v4230, 96
      %v5989 = vpop.permute.xlu0 %5988
      %5990 = vrot.lane.b32.xlu0 %v4231, 96
      %v5991 = vpop.permute.xlu0 %5990
      %5992 = vrot.lane.b32.xlu0 %v4232, 96
      %v5993 = vpop.permute.xlu0 %5992
      %5994 = vrot.lane.b32.xlu0 %v4233, 96
      %v5995 = vpop.permute.xlu0 %5994
      %v5996 = vrot.slane %v5981, 4
      %v5997 = vrot.slane %v5983, 4
      %v5998 = vrot.slane %v5985, 4
      %v5999 = vrot.slane %v5987, 4
      %v6000 = vrot.slane %v5989, 4
      %v6001 = vrot.slane %v5991, 4
      %v6002 = vrot.slane %v5993, 4
      %v6003 = vrot.slane %v5995, 4
      %v6004 = vsel %vm916, %v5996, %v5997
      %vm6005 = vcmask 785408
      %v6006 = vsel %vm6005, %v6004, %v5983
      %v6007 = vsel %vm916, %v5998, %v5999
      %v6008 = vsel %vm6005, %v6007, %v5987
      %v6009 = vsel %vm916, %v6000, %v6001
      %v6010 = vsel %vm6005, %v6009, %v5991
      %v6011 = vsel %vm916, %v6002, %v6003
      %v6012 = vsel %vm6005, %v6011, %v5995
      %6017 = vst [vmem:[#allocation3 + $0x2c0] sm:$0xff] %v6006
      %6018 = vst [vmem:[#allocation3 + $0x2c8] sm:$0xff] %v6008
      %6019 = vst [vmem:[#allocation3 + $0x2d0] sm:$0xff] %v6010
      %6020 = vst [vmem:[#allocation3 + $0x2d8] sm:$0xff] %v6012
      %v6021 = vld [vmem:[%s1] sm:$0x22]
      %v6023 = vunpack.c.l.b16 %v6021
      %v6024 = vunpack.c.h.b16 %v6021
      %v6025 = vpack.c.b16 %v6023, %v6023
      %v6026 = vpack.c.b16 %v6024, %v6024
      %v6028 = vshrl.u32 %v6025, 16
      %v6029 = vpack.i.b16 %v6028, %v6028
      %v6031 = vperm.slane %v6029, 1
      %v6033 = vshrl.u32 %v6026, 16
      %v6034 = vpack.i.b16 %v6033, %v6033
      %v6036 = vperm.slane %v6034, 1
      %6037 = vrot.lane.b32.xlu0 %v4226, 95
      %v6038 = vpop.permute.xlu0 %6037
      %6039 = vrot.lane.b32.xlu0 %v4227, 95
      %v6040 = vpop.permute.xlu0 %6039
      %6041 = vrot.lane.b32.xlu0 %v4228, 95
      %v6042 = vpop.permute.xlu0 %6041
      %6043 = vrot.lane.b32.xlu0 %v4229, 95
      %v6044 = vpop.permute.xlu0 %6043
      %6045 = vrot.lane.b32.xlu0 %v4230, 95
      %v6046 = vpop.permute.xlu0 %6045
      %6047 = vrot.lane.b32.xlu0 %v4231, 95
      %v6048 = vpop.permute.xlu0 %6047
      %6049 = vrot.lane.b32.xlu0 %v4232, 95
      %v6050 = vpop.permute.xlu0 %6049
      %6051 = vrot.lane.b32.xlu0 %v4233, 95
      %v6052 = vpop.permute.xlu0 %6051
      %v6053 = vrot.slane %v6038, 4
      %v6054 = vrot.slane %v6040, 4
      %v6055 = vrot.slane %v6042, 4
      %v6056 = vrot.slane %v6044, 4
      %v6057 = vrot.slane %v6046, 4
      %v6058 = vrot.slane %v6048, 4
      %v6059 = vrot.slane %v6050, 4
      %v6060 = vrot.slane %v6052, 4
      %v6061 = vsel %vm916, %v6053, %v6054
      %vm6062 = vcmask 777216
      %v6063 = vsel %vm6062, %v6061, %v6040
      %v6064 = vsel %vm916, %v6055, %v6056
      %v6065 = vsel %vm6062, %v6064, %v6044
      %v6066 = vsel %vm916, %v6057, %v6058
      %v6067 = vsel %vm6062, %v6066, %v6048
      %v6068 = vsel %vm916, %v6059, %v6060
      %v6069 = vsel %vm6062, %v6068, %v6052
      %v6074 = vunpack.c.l.bf16 %v6063
      %v6075 = vunpack.c.h.bf16 %v6063
      %v6076 = vunpack.c.l.bf16 %v6065
      %v6077 = vunpack.c.h.bf16 %v6065
      %v6078 = vunpack.c.l.bf16 %v6067
      %v6079 = vunpack.c.h.bf16 %v6067
      %v6080 = vunpack.c.l.bf16 %v6069
      %v6081 = vunpack.c.h.bf16 %v6069
      %v6082 = vunpack.c.l.bf16 %v6031
      %v6083 = vunpack.c.l.bf16 %v6036
      %v6084 = vmul.f32 %v6074, %v6082
      %v6085 = vmul.f32 %v6075, %v6083
      %v6086 = vmul.f32 %v6076, %v6082
      %v6087 = vmul.f32 %v6077, %v6083
      %v6088 = vmul.f32 %v6078, %v6082
      %v6089 = vmul.f32 %v6079, %v6083
      %v6090 = vmul.f32 %v6080, %v6082
      %v6091 = vmul.f32 %v6081, %v6083
      %v6092 = vpack.c.bf16 %v6085, %v6084
      %v6093 = vpack.c.bf16 %v6087, %v6086
      %v6094 = vpack.c.bf16 %v6089, %v6088
      %v6095 = vpack.c.bf16 %v6091, %v6090
      %6096 = vst [vmem:[#allocation3 + $0x2e0] sm:$0xff] %v6092
      %6097 = vst [vmem:[#allocation3 + $0x2e8] sm:$0xff] %v6093
      %6098 = vst [vmem:[#allocation3 + $0x2f0] sm:$0xff] %v6094
      %6099 = vst [vmem:[#allocation3 + $0x2f8] sm:$0xff] %v6095
      %v6100 = vld [vmem:[%s1] sm:$0x44]
      %v6102 = vunpack.c.l.b16 %v6100
      %v6103 = vunpack.c.h.b16 %v6100
      %v6104 = vpack.c.b16 %v6102, %v6102
      %v6105 = vpack.c.b16 %v6103, %v6103
      %v6107 = vpack.i.b16 %v6104, %v6104
      %v6109 = vperm.slane %v6107, 2
      %v6111 = vpack.i.b16 %v6105, %v6105
      %v6113 = vperm.slane %v6111, 2
      %6114 = vrot.lane.b32.xlu0 %v4226, 94
      %v6115 = vpop.permute.xlu0 %6114
      %6116 = vrot.lane.b32.xlu0 %v4227, 94
      %v6117 = vpop.permute.xlu0 %6116
      %6118 = vrot.lane.b32.xlu0 %v4228, 94
      %v6119 = vpop.permute.xlu0 %6118
      %6120 = vrot.lane.b32.xlu0 %v4229, 94
      %v6121 = vpop.permute.xlu0 %6120
      %6122 = vrot.lane.b32.xlu0 %v4230, 94
      %v6123 = vpop.permute.xlu0 %6122
      %6124 = vrot.lane.b32.xlu0 %v4231, 94
      %v6125 = vpop.permute.xlu0 %6124
      %6126 = vrot.lane.b32.xlu0 %v4232, 94
      %v6127 = vpop.permute.xlu0 %6126
      %6128 = vrot.lane.b32.xlu0 %v4233, 94
      %v6129 = vpop.permute.xlu0 %6128
      %v6130 = vrot.slane %v6115, 4
      %v6131 = vrot.slane %v6117, 4
      %v6132 = vrot.slane %v6119, 4
      %v6133 = vrot.slane %v6121, 4
      %v6134 = vrot.slane %v6123, 4
      %v6135 = vrot.slane %v6125, 4
      %v6136 = vrot.slane %v6127, 4
      %v6137 = vrot.slane %v6129, 4
      %v6138 = vsel %vm916, %v6130, %v6131
      %vm6139 = vcmask 769024
      %v6140 = vsel %vm6139, %v6138, %v6117
      %v6141 = vsel %vm916, %v6132, %v6133
      %v6142 = vsel %vm6139, %v6141, %v6121
      %v6143 = vsel %vm916, %v6134, %v6135
      %v6144 = vsel %vm6139, %v6143, %v6125
      %v6145 = vsel %vm916, %v6136, %v6137
      %v6146 = vsel %vm6139, %v6145, %v6129
      %v6151 = vunpack.c.l.bf16 %v6140
      %v6152 = vunpack.c.h.bf16 %v6140
      %v6153 = vunpack.c.l.bf16 %v6142
      %v6154 = vunpack.c.h.bf16 %v6142
      %v6155 = vunpack.c.l.bf16 %v6144
      %v6156 = vunpack.c.h.bf16 %v6144
      %v6157 = vunpack.c.l.bf16 %v6146
      %v6158 = vunpack.c.h.bf16 %v6146
      %v6159 = vunpack.c.l.bf16 %v6109
      %v6160 = vunpack.c.l.bf16 %v6113
      %v6161 = vmul.f32 %v6151, %v6159
      %v6162 = vmul.f32 %v6152, %v6160
      %v6163 = vmul.f32 %v6153, %v6159
      %v6164 = vmul.f32 %v6154, %v6160
      %v6165 = vmul.f32 %v6155, %v6159
      %v6166 = vmul.f32 %v6156, %v6160
      %v6167 = vmul.f32 %v6157, %v6159
      %v6168 = vmul.f32 %v6158, %v6160
      %v6169 = vpack.c.bf16 %v6162, %v6161
      %v6170 = vpack.c.bf16 %v6164, %v6163
      %v6171 = vpack.c.bf16 %v6166, %v6165
      %v6172 = vpack.c.bf16 %v6168, %v6167
      %6173 = vst [vmem:[#allocation3 + $0x300] sm:$0xff] %v6169
      %6174 = vst [vmem:[#allocation3 + $0x308] sm:$0xff] %v6170
      %6175 = vst [vmem:[#allocation3 + $0x310] sm:$0xff] %v6171
      %6176 = vst [vmem:[#allocation3 + $0x318] sm:$0xff] %v6172
      %v6177 = vld [vmem:[%s11] sm:$0xff]
      %v6178 = vld [vmem:[%s11 + $0x8] sm:$0xff]
      %v6179 = vld [vmem:[%s11 + $0x10] sm:$0xff]
      %v6180 = vld [vmem:[%s11 + $0x18] sm:$0xf]
      %v6181 = vld [vmem:[%s11 + $0x1c] sm:$0xff]
      %v6182 = vld [vmem:[%s11 + $0x24] sm:$0xff]
      %v6183 = vld [vmem:[%s11 + $0x2c] sm:$0xff]
      %v6184 = vld [vmem:[%s11 + $0x34] sm:$0xf]
      %v6185 = vld [vmem:[#allocation3] sm:$0xff]
      %v6186 = vld [vmem:[#allocation3 + $0x8] sm:$0xff]
      %v6187 = vld [vmem:[#allocation3 + $0x10] sm:$0xff]
      %v6188 = vld [vmem:[#allocation3 + $0x18] sm:$0xff]
      %v6189 = vld [vmem:[#allocation3 + $0x20] sm:$0xff]
      %v6190 = vld [vmem:[#allocation3 + $0x28] sm:$0xff]
      %v6191 = vld [vmem:[#allocation3 + $0x30] sm:$0xff]
      %v6192 = vld [vmem:[#allocation3 + $0x38] sm:$0xff]
      %v6193 = vld [vmem:[#allocation3 + $0x40] sm:$0xff]
      %v6194 = vld [vmem:[#allocation3 + $0x48] sm:$0xff]
      %v6195 = vld [vmem:[#allocation3 + $0x50] sm:$0xff]
      %v6196 = vld [vmem:[#allocation3 + $0x58] sm:$0xff]
      %v6197 = vld [vmem:[#allocation3 + $0x60] sm:$0xff]
      %v6198 = vld [vmem:[#allocation3 + $0x68] sm:$0xff]
      %v6199 = vld [vmem:[#allocation3 + $0x70] sm:$0xff]
      %v6200 = vld [vmem:[#allocation3 + $0x78] sm:$0xff]
      %v6201 = vld [vmem:[#allocation3 + $0x80] sm:$0xff]
      %v6202 = vld [vmem:[#allocation3 + $0x88] sm:$0xff]
      %v6203 = vld [vmem:[#allocation3 + $0x90] sm:$0xff]
      %v6204 = vld [vmem:[#allocation3 + $0x98] sm:$0xff]
      %v6205 = vld [vmem:[#allocation3 + $0xa0] sm:$0xff]
      %v6206 = vld [vmem:[#allocation3 + $0xa8] sm:$0xff]
      %v6207 = vld [vmem:[#allocation3 + $0xb0] sm:$0xff]
      %v6208 = vld [vmem:[#allocation3 + $0xb8] sm:$0xff]
      %v6209 = vld [vmem:[#allocation3 + $0xc0] sm:$0xff]
      %v6210 = vld [vmem:[#allocation3 + $0xc8] sm:$0xff]
      %v6211 = vld [vmem:[#allocation3 + $0xd0] sm:$0xff]
      %v6212 = vld [vmem:[#allocation3 + $0xd8] sm:$0xff]
      %v6213 = vld [vmem:[#allocation3 + $0xe0] sm:$0xff]
      %v6214 = vld [vmem:[#allocation3 + $0xe8] sm:$0xff]
      %v6215 = vld [vmem:[#allocation3 + $0xf0] sm:$0xff]
      %v6216 = vld [vmem:[#allocation3 + $0xf8] sm:$0xff]
      %v6217 = vld [vmem:[#allocation3 + $0x100] sm:$0xff]
      %v6218 = vld [vmem:[#allocation3 + $0x108] sm:$0xff]
      %v6219 = vld [vmem:[#allocation3 + $0x110] sm:$0xff]
      %v6220 = vld [vmem:[#allocation3 + $0x118] sm:$0xff]
      %v6221 = vld [vmem:[#allocation3 + $0x120] sm:$0xff]
      %v6222 = vld [vmem:[#allocation3 + $0x128] sm:$0xff]
      %v6223 = vld [vmem:[#allocation3 + $0x130] sm:$0xff]
      %v6224 = vld [vmem:[#allocation3 + $0x138] sm:$0xff]
      %v6225 = vld [vmem:[#allocation3 + $0x140] sm:$0xff]
      %v6226 = vld [vmem:[#allocation3 + $0x148] sm:$0xff]
      %v6227 = vld [vmem:[#allocation3 + $0x150] sm:$0xff]
      %v6228 = vld [vmem:[#allocation3 + $0x158] sm:$0xff]
      %v6229 = vld [vmem:[#allocation3 + $0x160] sm:$0xff]
      %v6230 = vld [vmem:[#allocation3 + $0x168] sm:$0xff]
      %v6231 = vld [vmem:[#allocation3 + $0x170] sm:$0xff]
      %v6232 = vld [vmem:[#allocation3 + $0x178] sm:$0xff]
      %v6233 = vld [vmem:[#allocation3 + $0x180] sm:$0xff]
      %v6234 = vld [vmem:[#allocation3 + $0x188] sm:$0xff]
      %v6235 = vld [vmem:[#allocation3 + $0x190] sm:$0xff]
      %v6236 = vld [vmem:[#allocation3 + $0x198] sm:$0xff]
      %v6237 = vld [vmem:[#allocation3 + $0x1a0] sm:$0xff]
      %v6238 = vld [vmem:[#allocation3 + $0x1a8] sm:$0xff]
      %v6239 = vld [vmem:[#allocation3 + $0x1b0] sm:$0xff]
      %v6240 = vld [vmem:[#allocation3 + $0x1b8] sm:$0xff]
      %v6241 = vld [vmem:[#allocation3 + $0x1c0] sm:$0xff]
      %v6242 = vld [vmem:[#allocation3 + $0x1c8] sm:$0xff]
      %v6243 = vld [vmem:[#allocation3 + $0x1d0] sm:$0xff]
      %v6244 = vld [vmem:[#allocation3 + $0x1d8] sm:$0xff]
      %v6245 = vld [vmem:[#allocation3 + $0x1e0] sm:$0xff]
      %v6246 = vld [vmem:[#allocation3 + $0x1e8] sm:$0xff]
      %v6247 = vld [vmem:[#allocation3 + $0x1f0] sm:$0xff]
      %v6248 = vld [vmem:[#allocation3 + $0x1f8] sm:$0xff]
      %v6249 = vld [vmem:[#allocation3 + $0x200] sm:$0xff]
      %v6250 = vld [vmem:[#allocation3 + $0x208] sm:$0xff]
      %v6251 = vld [vmem:[#allocation3 + $0x210] sm:$0xff]
      %v6252 = vld [vmem:[#allocation3 + $0x218] sm:$0xff]
      %v6253 = vld [vmem:[#allocation3 + $0x220] sm:$0xff]
      %v6254 = vld [vmem:[#allocation3 + $0x228] sm:$0xff]
      %v6255 = vld [vmem:[#allocation3 + $0x230] sm:$0xff]
      %v6256 = vld [vmem:[#allocation3 + $0x238] sm:$0xff]
      %v6257 = vld [vmem:[#allocation3 + $0x240] sm:$0xff]
      %v6258 = vld [vmem:[#allocation3 + $0x248] sm:$0xff]
      %v6259 = vld [vmem:[#allocation3 + $0x250] sm:$0xff]
      %v6260 = vld [vmem:[#allocation3 + $0x258] sm:$0xff]
      %v6261 = vld [vmem:[#allocation3 + $0x260] sm:$0xff]
      %v6262 = vld [vmem:[#allocation3 + $0x268] sm:$0xff]
      %v6263 = vld [vmem:[#allocation3 + $0x270] sm:$0xff]
      %v6264 = vld [vmem:[#allocation3 + $0x278] sm:$0xff]
      %v6265 = vld [vmem:[#allocation3 + $0x280] sm:$0xff]
      %v6266 = vld [vmem:[#allocation3 + $0x288] sm:$0xff]
      %v6267 = vld [vmem:[#allocation3 + $0x290] sm:$0xff]
      %v6268 = vld [vmem:[#allocation3 + $0x298] sm:$0xff]
      %v6269 = vld [vmem:[#allocation3 + $0x2a0] sm:$0xff]
      %v6270 = vld [vmem:[#allocation3 + $0x2a8] sm:$0xff]
      %v6271 = vld [vmem:[#allocation3 + $0x2b0] sm:$0xff]
      %v6272 = vld [vmem:[#allocation3 + $0x2b8] sm:$0xff]
      %v6273 = vld [vmem:[#allocation3 + $0x2c0] sm:$0xff]
      %v6274 = vld [vmem:[#allocation3 + $0x2c8] sm:$0xff]
      %v6275 = vld [vmem:[#allocation3 + $0x2d0] sm:$0xff]
      %v6276 = vld [vmem:[#allocation3 + $0x2d8] sm:$0xff]
      %v6277 = vld [vmem:[#allocation3 + $0x2e0] sm:$0xff]
      %v6278 = vld [vmem:[#allocation3 + $0x2e8] sm:$0xff]
      %v6279 = vld [vmem:[#allocation3 + $0x2f0] sm:$0xff]
      %v6280 = vld [vmem:[#allocation3 + $0x2f8] sm:$0xff]
      %v6281 = vld [vmem:[#allocation3 + $0x300] sm:$0xff]
      %v6282 = vld [vmem:[#allocation3 + $0x308] sm:$0xff]
      %v6283 = vld [vmem:[#allocation3 + $0x310] sm:$0xff]
      %v6284 = vld [vmem:[#allocation3 + $0x318] sm:$0xff]
      %v6293 = vunpack.c.l.b16 %v6177
      %v6294 = vunpack.c.h.b16 %v6177
      %v6295 = vunpack.c.l.b16 %v6178
      %v6296 = vunpack.c.h.b16 %v6178
      %v6297 = vunpack.c.l.b16 %v6179
      %v6298 = vunpack.c.h.b16 %v6179
      %v6299 = vunpack.c.l.b16 %v6180
      %v6300 = vunpack.c.l.b16 %v6181
      %v6301 = vunpack.c.h.b16 %v6181
      %v6302 = vunpack.c.l.b16 %v6182
      %v6303 = vunpack.c.h.b16 %v6182
      %v6304 = vunpack.c.l.b16 %v6183
      %v6305 = vunpack.c.h.b16 %v6183
      %v6306 = vunpack.c.l.b16 %v6184
      %v6307 = vpack.c.b16 %v6300, %v6293
      %v6308 = vpack.c.b16 %v6301, %v6294
      %v6309 = vpack.c.b16 %v6302, %v6295
      %v6310 = vpack.c.b16 %v6303, %v6296
      %v6311 = vpack.c.b16 %v6304, %v6297
      %v6312 = vpack.c.b16 %v6305, %v6298
      %v6313 = vpack.c.b16 %v6306, %v6299
      %v6420 = vunpack.c.l.b16 %v6185
      %v6421 = vunpack.c.h.b16 %v6185
      %v6422 = vunpack.c.l.b16 %v6186
      %v6423 = vunpack.c.h.b16 %v6186
      %v6424 = vunpack.c.l.b16 %v6187
      %v6425 = vunpack.c.h.b16 %v6187
      %v6426 = vunpack.c.l.b16 %v6188
      %v6427 = vunpack.c.h.b16 %v6188
      %v6428 = vunpack.c.l.b16 %v6189
      %v6429 = vunpack.c.h.b16 %v6189
      %v6430 = vunpack.c.l.b16 %v6190
      %v6431 = vunpack.c.h.b16 %v6190
      %v6432 = vunpack.c.l.b16 %v6191
      %v6433 = vunpack.c.h.b16 %v6191
      %v6434 = vunpack.c.l.b16 %v6192
      %v6435 = vunpack.c.h.b16 %v6192
      %v6436 = vunpack.c.l.b16 %v6193
      %v6437 = vunpack.c.h.b16 %v6193
      %v6438 = vunpack.c.l.b16 %v6194
      %v6439 = vunpack.c.h.b16 %v6194
      %v6440 = vunpack.c.l.b16 %v6195
      %v6441 = vunpack.c.h.b16 %v6195
      %v6442 = vunpack.c.l.b16 %v6196
      %v6443 = vunpack.c.h.b16 %v6196
      %v6444 = vunpack.c.l.b16 %v6197
      %v6445 = vunpack.c.h.b16 %v6197
      %v6446 = vunpack.c.l.b16 %v6198
      %v6447 = vunpack.c.h.b16 %v6198
      %v6448 = vunpack.c.l.b16 %v6199
      %v6449 = vunpack.c.h.b16 %v6199
      %v6450 = vunpack.c.l.b16 %v6200
      %v6451 = vunpack.c.h.b16 %v6200
      %v6452 = vunpack.c.l.b16 %v6201
      %v6453 = vunpack.c.h.b16 %v6201
      %v6454 = vunpack.c.l.b16 %v6202
      %v6455 = vunpack.c.h.b16 %v6202
      %v6456 = vunpack.c.l.b16 %v6203
      %v6457 = vunpack.c.h.b16 %v6203
      %v6458 = vunpack.c.l.b16 %v6204
      %v6459 = vunpack.c.h.b16 %v6204
      %v6460 = vunpack.c.l.b16 %v6205
      %v6461 = vunpack.c.h.b16 %v6205
      %v6462 = vunpack.c.l.b16 %v6206
      %v6463 = vunpack.c.h.b16 %v6206
      %v6464 = vunpack.c.l.b16 %v6207
      %v6465 = vunpack.c.h.b16 %v6207
      %v6466 = vunpack.c.l.b16 %v6208
      %v6467 = vunpack.c.h.b16 %v6208
      %v6468 = vunpack.c.l.b16 %v6209
      %v6469 = vunpack.c.h.b16 %v6209
      %v6470 = vunpack.c.l.b16 %v6210
      %v6471 = vunpack.c.h.b16 %v6210
      %v6472 = vunpack.c.l.b16 %v6211
      %v6473 = vunpack.c.h.b16 %v6211
      %v6474 = vunpack.c.l.b16 %v6212
      %v6475 = vunpack.c.h.b16 %v6212
      %v6476 = vunpack.c.l.b16 %v6213
      %v6477 = vunpack.c.h.b16 %v6213
      %v6478 = vunpack.c.l.b16 %v6214
      %v6479 = vunpack.c.h.b16 %v6214
      %v6480 = vunpack.c.l.b16 %v6215
      %v6481 = vunpack.c.h.b16 %v6215
      %v6482 = vunpack.c.l.b16 %v6216
      %v6483 = vunpack.c.h.b16 %v6216
      %v6484 = vunpack.c.l.b16 %v6217
      %v6485 = vunpack.c.h.b16 %v6217
      %v6486 = vunpack.c.l.b16 %v6218
      %v6487 = vunpack.c.h.b16 %v6218
      %v6488 = vunpack.c.l.b16 %v6219
      %v6489 = vunpack.c.h.b16 %v6219
      %v6490 = vunpack.c.l.b16 %v6220
      %v6491 = vunpack.c.h.b16 %v6220
      %v6492 = vunpack.c.l.b16 %v6221
      %v6493 = vunpack.c.h.b16 %v6221
      %v6494 = vunpack.c.l.b16 %v6222
      %v6495 = vunpack.c.h.b16 %v6222
      %v6496 = vunpack.c.l.b16 %v6223
      %v6497 = vunpack.c.h.b16 %v6223
      %v6498 = vunpack.c.l.b16 %v6224
      %v6499 = vunpack.c.h.b16 %v6224
      %v6500 = vunpack.c.l.b16 %v6225
      %v6501 = vunpack.c.h.b16 %v6225
      %v6502 = vunpack.c.l.b16 %v6226
      %v6503 = vunpack.c.h.b16 %v6226
      %v6504 = vunpack.c.l.b16 %v6227
      %v6505 = vunpack.c.h.b16 %v6227
      %v6506 = vunpack.c.l.b16 %v6228
      %v6507 = vunpack.c.h.b16 %v6228
      %v6508 = vunpack.c.l.b16 %v6229
      %v6509 = vunpack.c.h.b16 %v6229
      %v6510 = vunpack.c.l.b16 %v6230
      %v6511 = vunpack.c.h.b16 %v6230
      %v6512 = vunpack.c.l.b16 %v6231
      %v6513 = vunpack.c.h.b16 %v6231
      %v6514 = vunpack.c.l.b16 %v6232
      %v6515 = vunpack.c.h.b16 %v6232
      %v6516 = vunpack.c.l.b16 %v6233
      %v6517 = vunpack.c.h.b16 %v6233
      %v6518 = vunpack.c.l.b16 %v6234
      %v6519 = vunpack.c.h.b16 %v6234
      %v6520 = vunpack.c.l.b16 %v6235
      %v6521 = vunpack.c.h.b16 %v6235
      %v6522 = vunpack.c.l.b16 %v6236
      %v6523 = vunpack.c.h.b16 %v6236
      %v6524 = vunpack.c.l.b16 %v6237
      %v6525 = vunpack.c.h.b16 %v6237
      %v6526 = vunpack.c.l.b16 %v6238
      %v6527 = vunpack.c.h.b16 %v6238
      %v6528 = vunpack.c.l.b16 %v6239
      %v6529 = vunpack.c.h.b16 %v6239
      %v6530 = vunpack.c.l.b16 %v6240
      %v6531 = vunpack.c.h.b16 %v6240
      %v6532 = vunpack.c.l.b16 %v6241
      %v6533 = vunpack.c.h.b16 %v6241
      %v6534 = vunpack.c.l.b16 %v6242
      %v6535 = vunpack.c.h.b16 %v6242
      %v6536 = vunpack.c.l.b16 %v6243
      %v6537 = vunpack.c.h.b16 %v6243
      %v6538 = vunpack.c.l.b16 %v6244
      %v6539 = vunpack.c.h.b16 %v6244
      %v6540 = vunpack.c.l.b16 %v6245
      %v6541 = vunpack.c.h.b16 %v6245
      %v6542 = vunpack.c.l.b16 %v6246
      %v6543 = vunpack.c.h.b16 %v6246
      %v6544 = vunpack.c.l.b16 %v6247
      %v6545 = vunpack.c.h.b16 %v6247
      %v6546 = vunpack.c.l.b16 %v6248
      %v6547 = vunpack.c.h.b16 %v6248
      %v6548 = vunpack.c.l.b16 %v6249
      %v6549 = vunpack.c.h.b16 %v6249
      %v6550 = vunpack.c.l.b16 %v6250
      %v6551 = vunpack.c.h.b16 %v6250
      %v6552 = vunpack.c.l.b16 %v6251
      %v6553 = vunpack.c.h.b16 %v6251
      %v6554 = vunpack.c.l.b16 %v6252
      %v6555 = vunpack.c.h.b16 %v6252
      %v6556 = vunpack.c.l.b16 %v6253
      %v6557 = vunpack.c.h.b16 %v6253
      %v6558 = vunpack.c.l.b16 %v6254
      %v6559 = vunpack.c.h.b16 %v6254
      %v6560 = vunpack.c.l.b16 %v6255
      %v6561 = vunpack.c.h.b16 %v6255
      %v6562 = vunpack.c.l.b16 %v6256
      %v6563 = vunpack.c.h.b16 %v6256
      %v6564 = vunpack.c.l.b16 %v6257
      %v6565 = vunpack.c.h.b16 %v6257
      %v6566 = vunpack.c.l.b16 %v6258
      %v6567 = vunpack.c.h.b16 %v6258
      %v6568 = vunpack.c.l.b16 %v6259
      %v6569 = vunpack.c.h.b16 %v6259
      %v6570 = vunpack.c.l.b16 %v6260
      %v6571 = vunpack.c.h.b16 %v6260
      %v6572 = vunpack.c.l.b16 %v6261
      %v6573 = vunpack.c.h.b16 %v6261
      %v6574 = vunpack.c.l.b16 %v6262
      %v6575 = vunpack.c.h.b16 %v6262
      %v6576 = vunpack.c.l.b16 %v6263
      %v6577 = vunpack.c.h.b16 %v6263
      %v6578 = vunpack.c.l.b16 %v6264
      %v6579 = vunpack.c.h.b16 %v6264
      %v6580 = vunpack.c.l.b16 %v6265
      %v6581 = vunpack.c.h.b16 %v6265
      %v6582 = vunpack.c.l.b16 %v6266
      %v6583 = vunpack.c.h.b16 %v6266
      %v6584 = vunpack.c.l.b16 %v6267
      %v6585 = vunpack.c.h.b16 %v6267
      %v6586 = vunpack.c.l.b16 %v6268
      %v6587 = vunpack.c.h.b16 %v6268
      %v6588 = vunpack.c.l.b16 %v6269
      %v6589 = vunpack.c.h.b16 %v6269
      %v6590 = vunpack.c.l.b16 %v6270
      %v6591 = vunpack.c.h.b16 %v6270
      %v6592 = vunpack.c.l.b16 %v6271
      %v6593 = vunpack.c.h.b16 %v6271
      %v6594 = vunpack.c.l.b16 %v6272
      %v6595 = vunpack.c.h.b16 %v6272
      %v6596 = vunpack.c.l.b16 %v6273
      %v6597 = vunpack.c.h.b16 %v6273
      %v6598 = vunpack.c.l.b16 %v6274
      %v6599 = vunpack.c.h.b16 %v6274
      %v6600 = vunpack.c.l.b16 %v6275
      %v6601 = vunpack.c.h.b16 %v6275
      %v6602 = vunpack.c.l.b16 %v6276
      %v6603 = vunpack.c.h.b16 %v6276
      %v6604 = vunpack.c.l.b16 %v6277
      %v6605 = vunpack.c.h.b16 %v6277
      %v6606 = vunpack.c.l.b16 %v6278
      %v6607 = vunpack.c.h.b16 %v6278
      %v6608 = vunpack.c.l.b16 %v6279
      %v6609 = vunpack.c.h.b16 %v6279
      %v6610 = vunpack.c.l.b16 %v6280
      %v6611 = vunpack.c.h.b16 %v6280
      %v6612 = vunpack.c.l.b16 %v6281
      %v6613 = vunpack.c.h.b16 %v6281
      %v6614 = vunpack.c.l.b16 %v6282
      %v6615 = vunpack.c.h.b16 %v6282
      %v6616 = vunpack.c.l.b16 %v6283
      %v6617 = vunpack.c.h.b16 %v6283
      %v6618 = vunpack.c.l.b16 %v6284
      %v6619 = vunpack.c.h.b16 %v6284
      %v6620 = vpack.c.b16 %v6422, %v6420
      %v6621 = vpack.c.b16 %v6423, %v6421
      %v6622 = vpack.c.b16 %v6426, %v6424
      %v6623 = vpack.c.b16 %v6427, %v6425
      %v6624 = vpack.c.b16 %v6430, %v6428
      %v6625 = vpack.c.b16 %v6431, %v6429
      %v6626 = vpack.c.b16 %v6434, %v6432
      %v6627 = vpack.c.b16 %v6435, %v6433
      %v6628 = vpack.c.b16 %v6438, %v6436
      %v6629 = vpack.c.b16 %v6439, %v6437
      %v6630 = vpack.c.b16 %v6442, %v6440
      %v6631 = vpack.c.b16 %v6443, %v6441
      %v6632 = vpack.c.b16 %v6446, %v6444
      %v6633 = vpack.c.b16 %v6447, %v6445
      %v6634 = vpack.c.b16 %v6450, %v6448
      %v6635 = vpack.c.b16 %v6451, %v6449
      %v6636 = vpack.c.b16 %v6454, %v6452
      %v6637 = vpack.c.b16 %v6455, %v6453
      %v6638 = vpack.c.b16 %v6458, %v6456
      %v6639 = vpack.c.b16 %v6459, %v6457
      %v6640 = vpack.c.b16 %v6462, %v6460
      %v6641 = vpack.c.b16 %v6463, %v6461
      %v6642 = vpack.c.b16 %v6466, %v6464
      %v6643 = vpack.c.b16 %v6467, %v6465
      %v6644 = vpack.c.b16 %v6470, %v6468
      %v6645 = vpack.c.b16 %v6471, %v6469
      %v6646 = vpack.c.b16 %v6474, %v6472
      %v6647 = vpack.c.b16 %v6475, %v6473
      %v6648 = vpack.c.b16 %v6478, %v6476
      %v6649 = vpack.c.b16 %v6479, %v6477
      %v6650 = vpack.c.b16 %v6482, %v6480
      %v6651 = vpack.c.b16 %v6483, %v6481
      %v6652 = vpack.c.b16 %v6486, %v6484
      %v6653 = vpack.c.b16 %v6487, %v6485
      %v6654 = vpack.c.b16 %v6490, %v6488
      %v6655 = vpack.c.b16 %v6491, %v6489
      %v6656 = vpack.c.b16 %v6494, %v6492
      %v6657 = vpack.c.b16 %v6495, %v6493
      %v6658 = vpack.c.b16 %v6498, %v6496
      %v6659 = vpack.c.b16 %v6499, %v6497
      %v6660 = vpack.c.b16 %v6502, %v6500
      %v6661 = vpack.c.b16 %v6503, %v6501
      %v6662 = vpack.c.b16 %v6506, %v6504
      %v6663 = vpack.c.b16 %v6507, %v6505
      %v6664 = vpack.c.b16 %v6510, %v6508
      %v6665 = vpack.c.b16 %v6511, %v6509
      %v6666 = vpack.c.b16 %v6514, %v6512
      %v6667 = vpack.c.b16 %v6515, %v6513
      %v6668 = vpack.c.b16 %v6518, %v6516
      %v6669 = vpack.c.b16 %v6519, %v6517
      %v6670 = vpack.c.b16 %v6522, %v6520
      %v6671 = vpack.c.b16 %v6523, %v6521
      %v6672 = vpack.c.b16 %v6526, %v6524
      %v6673 = vpack.c.b16 %v6527, %v6525
      %v6674 = vpack.c.b16 %v6530, %v6528
      %v6675 = vpack.c.b16 %v6531, %v6529
      %v6676 = vpack.c.b16 %v6534, %v6532
      %v6677 = vpack.c.b16 %v6535, %v6533
      %v6678 = vpack.c.b16 %v6538, %v6536
      %v6679 = vpack.c.b16 %v6539, %v6537
      %v6680 = vpack.c.b16 %v6542, %v6540
      %v6681 = vpack.c.b16 %v6543, %v6541
      %v6682 = vpack.c.b16 %v6546, %v6544
      %v6683 = vpack.c.b16 %v6547, %v6545
      %v6684 = vpack.c.b16 %v6550, %v6548
      %v6685 = vpack.c.b16 %v6551, %v6549
      %v6686 = vpack.c.b16 %v6554, %v6552
      %v6687 = vpack.c.b16 %v6555, %v6553
      %v6688 = vpack.c.b16 %v6558, %v6556
      %v6689 = vpack.c.b16 %v6559, %v6557
      %v6690 = vpack.c.b16 %v6562, %v6560
      %v6691 = vpack.c.b16 %v6563, %v6561
      %v6692 = vpack.c.b16 %v6566, %v6564
      %v6693 = vpack.c.b16 %v6567, %v6565
      %v6694 = vpack.c.b16 %v6570, %v6568
      %v6695 = vpack.c.b16 %v6571, %v6569
      %v6696 = vpack.c.b16 %v6574, %v6572
      %v6697 = vpack.c.b16 %v6575, %v6573
      %v6698 = vpack.c.b16 %v6578, %v6576
      %v6699 = vpack.c.b16 %v6579, %v6577
      %v6700 = vpack.c.b16 %v6582, %v6580
      %v6701 = vpack.c.b16 %v6583, %v6581
      %v6702 = vpack.c.b16 %v6586, %v6584
      %v6703 = vpack.c.b16 %v6587, %v6585
      %v6704 = vpack.c.b16 %v6590, %v6588
      %v6705 = vpack.c.b16 %v6591, %v6589
      %v6706 = vpack.c.b16 %v6594, %v6592
      %v6707 = vpack.c.b16 %v6595, %v6593
      %v6708 = vpack.c.b16 %v6598, %v6596
      %v6709 = vpack.c.b16 %v6599, %v6597
      %v6710 = vpack.c.b16 %v6602, %v6600
      %v6711 = vpack.c.b16 %v6603, %v6601
      %v6712 = vpack.c.b16 %v6606, %v6604
      %v6713 = vpack.c.b16 %v6607, %v6605
      %v6714 = vpack.c.b16 %v6610, %v6608
      %v6715 = vpack.c.b16 %v6611, %v6609
      %v6716 = vpack.c.b16 %v6614, %v6612
      %v6717 = vpack.c.b16 %v6615, %v6613
      %v6718 = vpack.c.b16 %v6618, %v6616
      %v6719 = vpack.c.b16 %v6619, %v6617
      %v6821 = vsel %vm1731, %v6313, 0
      %6823 = vmatpush.bf16.msra.mxu0 %v6634
      %6824 = vmatpush.bf16.msra.mxu0 %v6632
      %6825 = vmatpush.bf16.msra.mxu0 %v6630
      %6826 = vmatpush.bf16.msra.mxu0 %v6628
      %6827 = vmatpush.bf16.msra.mxu0 %v6626
      %6828 = vmatpush.bf16.msra.mxu0 %v6624
      %6829 = vmatpush.bf16.msra.mxu0 %v6622
      %6830 = vmatpush.bf16.msra.mxu0 %v6620
      %6831 = vmatmul.bf16.gmra.mxu0 %v6307
      %v6832 = vpop.f32.mrf.mxu0
      %v6833 = vadd.f32 0.0, %v6832
      %v6834 = vpop.f32.mrf.mxu0
      %v6835 = vadd.f32 0.0, %v6834
      %6836 = vdwg.mxu0
      %6837 = vmatpush.bf16.msra.mxu0 %v6650
      %6838 = vmatpush.bf16.msra.mxu0 %v6648
      %6839 = vmatpush.bf16.msra.mxu0 %v6646
      %6840 = vmatpush.bf16.msra.mxu0 %v6644
      %6841 = vmatpush.bf16.msra.mxu0 %v6642
      %6842 = vmatpush.bf16.msra.mxu0 %v6640
      %6843 = vmatpush.bf16.msra.mxu0 %v6638
      %6844 = vmatpush.bf16.msra.mxu0 %v6636
      %6845 = vmatmul.bf16.gmra.mxu0 %v6308
      %v6846 = vpop.f32.mrf.mxu0
      %v6847 = vadd.f32 %v6833, %v6846
      %v6848 = vpop.f32.mrf.mxu0
      %v6849 = vadd.f32 %v6835, %v6848
      %6850 = vdwg.mxu0
      %6851 = vmatpush.bf16.msra.mxu0 %v6666
      %6852 = vmatpush.bf16.msra.mxu0 %v6664
      %6853 = vmatpush.bf16.msra.mxu0 %v6662
      %6854 = vmatpush.bf16.msra.mxu0 %v6660
      %6855 = vmatpush.bf16.msra.mxu0 %v6658
      %6856 = vmatpush.bf16.msra.mxu0 %v6656
      %6857 = vmatpush.bf16.msra.mxu0 %v6654
      %6858 = vmatpush.bf16.msra.mxu0 %v6652
      %6859 = vmatmul.bf16.gmra.mxu0 %v6309
      %v6860 = vpop.f32.mrf.mxu0
      %v6861 = vadd.f32 %v6847, %v6860
      %v6862 = vpop.f32.mrf.mxu0
      %v6863 = vadd.f32 %v6849, %v6862
      %6864 = vdwg.mxu0
      %6865 = vmatpush.bf16.msra.mxu0 %v6682
      %6866 = vmatpush.bf16.msra.mxu0 %v6680
      %6867 = vmatpush.bf16.msra.mxu0 %v6678
      %6868 = vmatpush.bf16.msra.mxu0 %v6676
      %6869 = vmatpush.bf16.msra.mxu0 %v6674
      %6870 = vmatpush.bf16.msra.mxu0 %v6672
      %6871 = vmatpush.bf16.msra.mxu0 %v6670
      %6872 = vmatpush.bf16.msra.mxu0 %v6668
      %6873 = vmatmul.bf16.gmra.mxu0 %v6310
      %v6874 = vpop.f32.mrf.mxu0
      %v6875 = vadd.f32 %v6861, %v6874
      %v6876 = vpop.f32.mrf.mxu0
      %v6877 = vadd.f32 %v6863, %v6876
      %6878 = vdwg.mxu0
      %6879 = vmatpush.bf16.msra.mxu0 %v6698
      %6880 = vmatpush.bf16.msra.mxu0 %v6696
      %6881 = vmatpush.bf16.msra.mxu0 %v6694
      %6882 = vmatpush.bf16.msra.mxu0 %v6692
      %6883 = vmatpush.bf16.msra.mxu0 %v6690
      %6884 = vmatpush.bf16.msra.mxu0 %v6688
      %6885 = vmatpush.bf16.msra.mxu0 %v6686
      %6886 = vmatpush.bf16.msra.mxu0 %v6684
      %6887 = vmatmul.bf16.gmra.mxu0 %v6311
      %v6888 = vpop.f32.mrf.mxu0
      %v6889 = vadd.f32 %v6875, %v6888
      %v6890 = vpop.f32.mrf.mxu0
      %v6891 = vadd.f32 %v6877, %v6890
      %6892 = vdwg.mxu0
      %6893 = vmatpush.bf16.msra.mxu0 %v6714
      %6894 = vmatpush.bf16.msra.mxu0 %v6712
      %6895 = vmatpush.bf16.msra.mxu0 %v6710
      %6896 = vmatpush.bf16.msra.mxu0 %v6708
      %6897 = vmatpush.bf16.msra.mxu0 %v6706
      %6898 = vmatpush.bf16.msra.mxu0 %v6704
      %6899 = vmatpush.bf16.msra.mxu0 %v6702
      %6900 = vmatpush.bf16.msra.mxu0 %v6700
      %6901 = vmatmul.bf16.gmra.mxu0 %v6312
      %v6902 = vpop.f32.mrf.mxu0
      %v6903 = vadd.f32 %v6889, %v6902
      %v6904 = vpop.f32.mrf.mxu0
      %v6905 = vadd.f32 %v6891, %v6904
      %6906 = vdwg.mxu0
      %6907 = vmatpush.bf16.msra.mxu0 0
      %6908 = vmatpush.bf16.msra.mxu0 0
      %6909 = vmatpush.bf16.msra.mxu0 0
      %6910 = vmatpush.bf16.msra.mxu0 0
      %6911 = vmatpush.bf16.msra.mxu0 0
      %6912 = vmatpush.bf16.msra.mxu0 0
      %6913 = vmatpush.bf16.msra.mxu0 %v6718
      %6914 = vmatpush.bf16.msra.mxu0 %v6716
      %6915 = vmatmul.bf16.gmra.mxu0 %v6821
      %v6916 = vpop.f32.mrf.mxu0
      %v6917 = vadd.f32 %v6903, %v6916
      %v6918 = vpop.f32.mrf.mxu0
      %v6919 = vadd.f32 %v6905, %v6918
      %6920 = vdwg.mxu0
      %6921 = vmatpush.bf16.msra.mxu0 %v6635
      %6922 = vmatpush.bf16.msra.mxu0 %v6633
      %6923 = vmatpush.bf16.msra.mxu0 %v6631
      %6924 = vmatpush.bf16.msra.mxu0 %v6629
      %6925 = vmatpush.bf16.msra.mxu0 %v6627
      %6926 = vmatpush.bf16.msra.mxu0 %v6625
      %6927 = vmatpush.bf16.msra.mxu0 %v6623
      %6928 = vmatpush.bf16.msra.mxu0 %v6621
      %6929 = vmatmul.bf16.gmra.mxu0 %v6307
      %v6930 = vpop.f32.mrf.mxu0
      %v6931 = vadd.f32 0.0, %v6930
      %v6932 = vpop.f32.mrf.mxu0
      %v6933 = vadd.f32 0.0, %v6932
      %6934 = vdwg.mxu0
      %6935 = vmatpush.bf16.msra.mxu0 %v6651
      %6936 = vmatpush.bf16.msra.mxu0 %v6649
      %6937 = vmatpush.bf16.msra.mxu0 %v6647
      %6938 = vmatpush.bf16.msra.mxu0 %v6645
      %6939 = vmatpush.bf16.msra.mxu0 %v6643
      %6940 = vmatpush.bf16.msra.mxu0 %v6641
      %6941 = vmatpush.bf16.msra.mxu0 %v6639
      %6942 = vmatpush.bf16.msra.mxu0 %v6637
      %6943 = vmatmul.bf16.gmra.mxu0 %v6308
      %v6944 = vpop.f32.mrf.mxu0
      %v6945 = vadd.f32 %v6931, %v6944
      %v6946 = vpop.f32.mrf.mxu0
      %v6947 = vadd.f32 %v6933, %v6946
      %6948 = vdwg.mxu0
      %6949 = vmatpush.bf16.msra.mxu0 %v6667
      %6950 = vmatpush.bf16.msra.mxu0 %v6665
      %6951 = vmatpush.bf16.msra.mxu0 %v6663
      %6952 = vmatpush.bf16.msra.mxu0 %v6661
      %6953 = vmatpush.bf16.msra.mxu0 %v6659
      %6954 = vmatpush.bf16.msra.mxu0 %v6657
      %6955 = vmatpush.bf16.msra.mxu0 %v6655
      %6956 = vmatpush.bf16.msra.mxu0 %v6653
      %6957 = vmatmul.bf16.gmra.mxu0 %v6309
      %v6958 = vpop.f32.mrf.mxu0
      %v6959 = vadd.f32 %v6945, %v6958
      %v6960 = vpop.f32.mrf.mxu0
      %v6961 = vadd.f32 %v6947, %v6960
      %6962 = vdwg.mxu0
      %6963 = vmatpush.bf16.msra.mxu0 %v6683
      %6964 = vmatpush.bf16.msra.mxu0 %v6681
      %6965 = vmatpush.bf16.msra.mxu0 %v6679
      %6966 = vmatpush.bf16.msra.mxu0 %v6677
      %6967 = vmatpush.bf16.msra.mxu0 %v6675
      %6968 = vmatpush.bf16.msra.mxu0 %v6673
      %6969 = vmatpush.bf16.msra.mxu0 %v6671
      %6970 = vmatpush.bf16.msra.mxu0 %v6669
      %6971 = vmatmul.bf16.gmra.mxu0 %v6310
      %v6972 = vpop.f32.mrf.mxu0
      %v6973 = vadd.f32 %v6959, %v6972
      %v6974 = vpop.f32.mrf.mxu0
      %v6975 = vadd.f32 %v6961, %v6974
      %6976 = vdwg.mxu0
      %6977 = vmatpush.bf16.msra.mxu0 %v6699
      %6978 = vmatpush.bf16.msra.mxu0 %v6697
      %6979 = vmatpush.bf16.msra.mxu0 %v6695
      %6980 = vmatpush.bf16.msra.mxu0 %v6693
      %6981 = vmatpush.bf16.msra.mxu0 %v6691
      %6982 = vmatpush.bf16.msra.mxu0 %v6689
      %6983 = vmatpush.bf16.msra.mxu0 %v6687
      %6984 = vmatpush.bf16.msra.mxu0 %v6685
      %6985 = vmatmul.bf16.gmra.mxu0 %v6311
      %v6986 = vpop.f32.mrf.mxu0
      %v6987 = vadd.f32 %v6973, %v6986
      %v6988 = vpop.f32.mrf.mxu0
      %v6989 = vadd.f32 %v6975, %v6988
      %6990 = vdwg.mxu0
      %6991 = vmatpush.bf16.msra.mxu0 %v6715
      %6992 = vmatpush.bf16.msra.mxu0 %v6713
      %6993 = vmatpush.bf16.msra.mxu0 %v6711
      %6994 = vmatpush.bf16.msra.mxu0 %v6709
      %6995 = vmatpush.bf16.msra.mxu0 %v6707
      %6996 = vmatpush.bf16.msra.mxu0 %v6705
      %6997 = vmatpush.bf16.msra.mxu0 %v6703
      %6998 = vmatpush.bf16.msra.mxu0 %v6701
      %6999 = vmatmul.bf16.gmra.mxu0 %v6312
      %v7000 = vpop.f32.mrf.mxu0
      %v7001 = vadd.f32 %v6987, %v7000
      %v7002 = vpop.f32.mrf.mxu0
      %v7003 = vadd.f32 %v6989, %v7002
      %7004 = vdwg.mxu0
      %7005 = vmatpush.bf16.msra.mxu0 0
      %7006 = vmatpush.bf16.msra.mxu0 0
      %7007 = vmatpush.bf16.msra.mxu0 0
      %7008 = vmatpush.bf16.msra.mxu0 0
      %7009 = vmatpush.bf16.msra.mxu0 0
      %7010 = vmatpush.bf16.msra.mxu0 0
      %7011 = vmatpush.bf16.msra.mxu0 %v6719
      %7012 = vmatpush.bf16.msra.mxu0 %v6717
      %7013 = vmatmul.bf16.gmra.mxu0 %v6821
      %v7014 = vpop.f32.mrf.mxu0
      %v7015 = vadd.f32 %v7001, %v7014
      %v7016 = vpop.f32.mrf.mxu0
      %v7017 = vadd.f32 %v7003, %v7016
      %7018 = vdwg.mxu0
      %v7019 = vld [vmem:[%s12] sm:$0xff]
      %v7020 = vld [vmem:[%s12 + $0x8] sm:$0xff]
      %7022 = vset.pattern.permute.xlu0 0
      %7023 = vperm.xlu0 %7022, %v7019
      %v7024 = vpop.permute.xlu0 %7023
      %7027 = vset.pattern.permute.xlu0 0
      %7028 = vperm.xlu0 %7027, %v7020
      %v7029 = vpop.permute.xlu0 %7028
      %v7031 = vmul.f32 %v6917, %v7024
      %v7032 = vmul.f32 %v7015, %v7024
      %v7033 = vmul.f32 %v6919, %v7029
      %v7034 = vmul.f32 %v7017, %v7029
      %v7035 = vld [vmem:[%s13] sm:$0xff]
      %v7036 = vld [vmem:[%s13 + $0x8] sm:$0xff]
      %7038 = vset.pattern.permute.xlu0 0
      %7039 = vperm.xlu0 %7038, %v7035
      %v7040 = vpop.permute.xlu0 %7039
      %7043 = vset.pattern.permute.xlu0 0
      %7044 = vperm.xlu0 %7043, %v7036
      %v7045 = vpop.permute.xlu0 %7044
      %v7047 = vadd.f32 %v7031, %v7040
      %v7048 = vadd.f32 %v7032, %v7040
      %v7049 = vadd.f32 %v7033, %v7045
      %v7050 = vadd.f32 %v7034, %v7045
      %vm7051 = vcmp.gt.f32.partialorder %v7047, 0.0
      %vm7052 = vcmp.gt.f32.partialorder %v7048, 0.0
      %vm7053 = vcmp.gt.f32.partialorder %v7049, 0.0
      %vm7054 = vcmp.gt.f32.partialorder %v7050, 0.0
      %v7055 = vmul.f32 %v7047, 0.01
      %v7056 = vmul.f32 %v7048, 0.01
      %v7057 = vmul.f32 %v7049, 0.01
      %v7058 = vmul.f32 %v7050, 0.01
      %v7059 = vsel %vm7051, %v7047, %v7055
      %v7060 = vsel %vm7052, %v7048, %v7056
      %v7061 = vsel %vm7053, %v7049, %v7057
      %v7062 = vsel %vm7054, %v7050, %v7058
      %v7063 = vpack.c.bf16 %v7060, %v7059
      %v7064 = vpack.c.bf16 %v7062, %v7061
      %7065 = vst [vmem:[#allocation2 + $0x4] sm:$0xff] %v7063
      %7066 = vst [vmem:[#allocation2 + $0x14] sm:$0xff] %v7064
      %v7067 = vld [vmem:[#allocation2] sm:$0xff]
      %v7068 = vld [vmem:[#allocation2 + $0x8] sm:$0xff]
      %v7069 = vld [vmem:[#allocation2 + $0x10] sm:$0xff]
      %v7070 = vld [vmem:[#allocation2 + $0x18] sm:$0xff]
      %v7071 = vld [vmem:[%s1] sm:$0x11]
      %v7073 = vunpack.c.l.b16 %v7071
      %v7074 = vunpack.c.h.b16 %v7071
      %v7075 = vpack.c.b16 %v7073, %v7073
      %v7076 = vpack.c.b16 %v7074, %v7074
      %v7078 = vpack.i.b16 %v7075, %v7075
      %v7080 = vperm.slane %v7078, 0
      %v7082 = vpack.i.b16 %v7076, %v7076
      %v7084 = vperm.slane %v7082, 0
      %v7085 = vunpack.c.l.bf16 %v7067
      %v7086 = vunpack.c.h.bf16 %v7067
      %v7087 = vunpack.c.l.bf16 %v7068
      %v7088 = vunpack.c.l.bf16 %v7069
      %v7089 = vunpack.c.h.bf16 %v7069
      %v7090 = vunpack.c.l.bf16 %v7070
      %v7091 = vunpack.c.l.bf16 %v7080
      %v7092 = vunpack.c.l.bf16 %v7084
      %7095 = vrot.lane.b32.xlu0 %v7091, 94
      %v7096 = vpop.permute.xlu0 %7095
      %7097 = vrot.lane.b32.xlu0 %v7092, 94
      %v7098 = vpop.permute.xlu0 %7097
      %v7099 = vsel %vm4268, %v7096, %v7098
      %v7103 = vmul.f32 %v7085, %v7096
      %v7104 = vmul.f32 %v7086, %v7099
      %v7105 = vmul.f32 %v7087, %v7098
      %v7106 = vmul.f32 %v7088, %v7096
      %v7107 = vmul.f32 %v7089, %v7099
      %v7108 = vmul.f32 %v7090, %v7098
      %v7109 = vpack.c.bf16 %v7104, %v7103
      %v7110 = vpack.c.bf16 %v7105, %v7105
      %v7111 = vpack.c.bf16 %v7107, %v7106
      %v7112 = vpack.c.bf16 %v7108, %v7108
      %7117 = vrot.lane.b32.xlu0 %v7109, 34
      %v7118 = vpop.permute.xlu0 %7117
      %7119 = vrot.lane.b32.xlu0 %v7110, 34
      %v7120 = vpop.permute.xlu0 %7119
      %7121 = vrot.lane.b32.xlu0 %v7111, 34
      %v7122 = vpop.permute.xlu0 %7121
      %7123 = vrot.lane.b32.xlu0 %v7112, 34
      %v7124 = vpop.permute.xlu0 %7123
      %v7125 = vrot.slane %v7118, 4
      %v7126 = vrot.slane %v7120, 4
      %v7127 = vrot.slane %v7122, 4
      %v7128 = vrot.slane %v7124, 4
      %v7129 = vsel %vm916, %v7125, %v7126
      %v7130 = vsel %vm4326, %v7118, %v7129
      %v7131 = vsel %vm916, %v7127, %v7128
      %v7132 = vsel %vm4326, %v7122, %v7131
      %7135 = vst [vmem:[#allocation3] sm:$0xff] %v7130
      %7136 = vst [vmem:[#allocation3 + $0x8] sm:$0xff] %v7132
      %v7137 = vld [vmem:[%s1] sm:$0x11]
      %v7139 = vunpack.c.l.b16 %v7137
      %v7140 = vunpack.c.h.b16 %v7137
      %v7141 = vpack.c.b16 %v7139, %v7139
      %v7142 = vpack.c.b16 %v7140, %v7140
      %v7144 = vshrl.u32 %v7141, 16
      %v7145 = vpack.i.b16 %v7144, %v7144
      %v7147 = vperm.slane %v7145, 0
      %v7149 = vshrl.u32 %v7142, 16
      %v7150 = vpack.i.b16 %v7149, %v7149
      %v7152 = vperm.slane %v7150, 0
      %v7153 = vunpack.c.l.bf16 %v7147
      %v7154 = vunpack.c.l.bf16 %v7152
      %7157 = vrot.lane.b32.xlu0 %v7153, 95
      %v7158 = vpop.permute.xlu0 %7157
      %7159 = vrot.lane.b32.xlu0 %v7154, 95
      %v7160 = vpop.permute.xlu0 %7159
      %v7161 = vsel %vm4366, %v7158, %v7160
      %v7165 = vmul.f32 %v7085, %v7158
      %v7166 = vmul.f32 %v7086, %v7161
      %v7167 = vmul.f32 %v7087, %v7160
      %v7168 = vmul.f32 %v7088, %v7158
      %v7169 = vmul.f32 %v7089, %v7161
      %v7170 = vmul.f32 %v7090, %v7160
      %v7171 = vpack.c.bf16 %v7166, %v7165
      %v7172 = vpack.c.bf16 %v7167, %v7167
      %v7173 = vpack.c.bf16 %v7169, %v7168
      %v7174 = vpack.c.bf16 %v7170, %v7170
      %7179 = vrot.lane.b32.xlu0 %v7171, 33
      %v7180 = vpop.permute.xlu0 %7179
      %7181 = vrot.lane.b32.xlu0 %v7172, 33
      %v7182 = vpop.permute.xlu0 %7181
      %7183 = vrot.lane.b32.xlu0 %v7173, 33
      %v7184 = vpop.permute.xlu0 %7183
      %7185 = vrot.lane.b32.xlu0 %v7174, 33
      %v7186 = vpop.permute.xlu0 %7185
      %v7187 = vrot.slane %v7180, 4
      %v7188 = vrot.slane %v7182, 4
      %v7189 = vrot.slane %v7184, 4
      %v7190 = vrot.slane %v7186, 4
      %v7191 = vsel %vm916, %v7187, %v7188
      %v7192 = vsel %vm4424, %v7180, %v7191
      %v7193 = vsel %vm916, %v7189, %v7190
      %v7194 = vsel %vm4424, %v7184, %v7193
      %7197 = vst [vmem:[#allocation3 + $0x10] sm:$0xff] %v7192
      %7198 = vst [vmem:[#allocation3 + $0x18] sm:$0xff] %v7194
      %7203 = vrot.lane.b32.xlu0 %v7067, 32
      %v7204 = vpop.permute.xlu0 %7203
      %7205 = vrot.lane.b32.xlu0 %v7068, 32
      %v7206 = vpop.permute.xlu0 %7205
      %7207 = vrot.lane.b32.xlu0 %v7069, 32
      %v7208 = vpop.permute.xlu0 %7207
      %7209 = vrot.lane.b32.xlu0 %v7070, 32
      %v7210 = vpop.permute.xlu0 %7209
      %v7211 = vrot.slane %v7204, 4
      %v7212 = vrot.slane %v7206, 4
      %v7213 = vrot.slane %v7208, 4
      %v7214 = vrot.slane %v7210, 4
      %v7215 = vsel %vm916, %v7211, %v7212
      %v7216 = vsel %vm4473, %v7204, %v7215
      %v7217 = vsel %vm916, %v7213, %v7214
      %v7218 = vsel %vm4473, %v7208, %v7217
      %7221 = vst [vmem:[#allocation3 + $0x20] sm:$0xff] %v7216
      %7222 = vst [vmem:[#allocation3 + $0x28] sm:$0xff] %v7218
      %v7223 = vld [vmem:[%s1] sm:$0x22]
      %v7225 = vunpack.c.l.b16 %v7223
      %v7226 = vunpack.c.h.b16 %v7223
      %v7227 = vpack.c.b16 %v7225, %v7225
      %v7228 = vpack.c.b16 %v7226, %v7226
      %v7230 = vshrl.u32 %v7227, 16
      %v7231 = vpack.i.b16 %v7230, %v7230
      %v7233 = vperm.slane %v7231, 1
      %v7235 = vshrl.u32 %v7228, 16
      %v7236 = vpack.i.b16 %v7235, %v7235
      %v7238 = vperm.slane %v7236, 1
      %v7239 = vunpack.c.l.bf16 %v7233
      %v7240 = vunpack.c.l.bf16 %v7238
      %7243 = vrot.lane.b32.xlu0 %v7239, 97
      %v7244 = vpop.permute.xlu0 %7243
      %7245 = vrot.lane.b32.xlu0 %v7240, 97
      %v7246 = vpop.permute.xlu0 %7245
      %v7247 = vsel %vm4513, %v7244, %v7246
      %v7251 = vmul.f32 %v7085, %v7244
      %v7252 = vmul.f32 %v7086, %v7247
      %v7253 = vmul.f32 %v7087, %v7246
      %v7254 = vmul.f32 %v7088, %v7244
      %v7255 = vmul.f32 %v7089, %v7247
      %v7256 = vmul.f32 %v7090, %v7246
      %v7257 = vpack.c.bf16 %v7252, %v7251
      %v7258 = vpack.c.bf16 %v7253, %v7253
      %v7259 = vpack.c.bf16 %v7255, %v7254
      %v7260 = vpack.c.bf16 %v7256, %v7256
      %7265 = vrot.lane.b32.xlu0 %v7257, 31
      %v7266 = vpop.permute.xlu0 %7265
      %7267 = vrot.lane.b32.xlu0 %v7258, 31
      %v7268 = vpop.permute.xlu0 %7267
      %7269 = vrot.lane.b32.xlu0 %v7259, 31
      %v7270 = vpop.permute.xlu0 %7269
      %7271 = vrot.lane.b32.xlu0 %v7260, 31
      %v7272 = vpop.permute.xlu0 %7271
      %v7273 = vrot.slane %v7266, 4
      %v7274 = vrot.slane %v7268, 4
      %v7275 = vrot.slane %v7270, 4
      %v7276 = vrot.slane %v7272, 4
      %v7277 = vsel %vm916, %v7273, %v7274
      %v7278 = vsel %vm4571, %v7266, %v7277
      %v7279 = vsel %vm916, %v7275, %v7276
      %v7280 = vsel %vm4571, %v7270, %v7279
      %7283 = vst [vmem:[#allocation3 + $0x30] sm:$0xff] %v7278
      %7284 = vst [vmem:[#allocation3 + $0x38] sm:$0xff] %v7280
      %v7285 = vld [vmem:[%s1] sm:$0x44]
      %v7287 = vunpack.c.l.b16 %v7285
      %v7288 = vunpack.c.h.b16 %v7285
      %v7289 = vpack.c.b16 %v7287, %v7287
      %v7290 = vpack.c.b16 %v7288, %v7288
      %v7292 = vpack.i.b16 %v7289, %v7289
      %v7294 = vperm.slane %v7292, 2
      %v7296 = vpack.i.b16 %v7290, %v7290
      %v7298 = vperm.slane %v7296, 2
      %v7299 = vunpack.c.l.bf16 %v7294
      %v7300 = vunpack.c.l.bf16 %v7298
      %7303 = vrot.lane.b32.xlu0 %v7299, 98
      %v7304 = vpop.permute.xlu0 %7303
      %7305 = vrot.lane.b32.xlu0 %v7300, 98
      %v7306 = vpop.permute.xlu0 %7305
      %v7307 = vsel %vm4609, %v7304, %v7306
      %v7311 = vmul.f32 %v7085, %v7304
      %v7312 = vmul.f32 %v7086, %v7307
      %v7313 = vmul.f32 %v7087, %v7306
      %v7314 = vmul.f32 %v7088, %v7304
      %v7315 = vmul.f32 %v7089, %v7307
      %v7316 = vmul.f32 %v7090, %v7306
      %v7317 = vpack.c.bf16 %v7312, %v7311
      %v7318 = vpack.c.bf16 %v7313, %v7313
      %v7319 = vpack.c.bf16 %v7315, %v7314
      %v7320 = vpack.c.bf16 %v7316, %v7316
      %7325 = vrot.lane.b32.xlu0 %v7317, 30
      %v7326 = vpop.permute.xlu0 %7325
      %7327 = vrot.lane.b32.xlu0 %v7318, 30
      %v7328 = vpop.permute.xlu0 %7327
      %7329 = vrot.lane.b32.xlu0 %v7319, 30
      %v7330 = vpop.permute.xlu0 %7329
      %7331 = vrot.lane.b32.xlu0 %v7320, 30
      %v7332 = vpop.permute.xlu0 %7331
      %v7333 = vrot.slane %v7326, 4
      %v7334 = vrot.slane %v7328, 4
      %v7335 = vrot.slane %v7330, 4
      %v7336 = vrot.slane %v7332, 4
      %v7337 = vsel %vm916, %v7333, %v7334
      %v7338 = vsel %vm4667, %v7326, %v7337
      %v7339 = vsel %vm916, %v7335, %v7336
      %v7340 = vsel %vm4667, %v7330, %v7339
      %7343 = vst [vmem:[#allocation3 + $0x40] sm:$0xff] %v7338
      %7344 = vst [vmem:[#allocation3 + $0x48] sm:$0xff] %v7340
      %v7345 = vld [vmem:[%s1] sm:$0x11]
      %v7347 = vunpack.c.l.b16 %v7345
      %v7348 = vunpack.c.h.b16 %v7345
      %v7349 = vpack.c.b16 %v7347, %v7347
      %v7350 = vpack.c.b16 %v7348, %v7348
      %v7352 = vpack.i.b16 %v7349, %v7349
      %v7354 = vperm.slane %v7352, 0
      %v7356 = vpack.i.b16 %v7350, %v7350
      %v7358 = vperm.slane %v7356, 0
      %v7359 = vunpack.c.l.bf16 %v7354
      %v7360 = vunpack.c.l.bf16 %v7358
      %7363 = vrot.lane.b32.xlu0 %v7359, 110
      %v7364 = vpop.permute.xlu0 %7363
      %7365 = vrot.lane.b32.xlu0 %v7360, 110
      %v7366 = vpop.permute.xlu0 %7365
      %v7367 = vsel %vm4705, %v7364, %v7366
      %v7371 = vmul.f32 %v7085, %v7364
      %v7372 = vmul.f32 %v7086, %v7367
      %v7373 = vmul.f32 %v7087, %v7366
      %v7374 = vmul.f32 %v7088, %v7364
      %v7375 = vmul.f32 %v7089, %v7367
      %v7376 = vmul.f32 %v7090, %v7366
      %v7377 = vpack.c.bf16 %v7372, %v7371
      %v7378 = vpack.c.bf16 %v7373, %v7373
      %v7379 = vpack.c.bf16 %v7375, %v7374
      %v7380 = vpack.c.bf16 %v7376, %v7376
      %7385 = vrot.lane.b32.xlu0 %v7377, 18
      %v7386 = vpop.permute.xlu0 %7385
      %7387 = vrot.lane.b32.xlu0 %v7378, 18
      %v7388 = vpop.permute.xlu0 %7387
      %7389 = vrot.lane.b32.xlu0 %v7379, 18
      %v7390 = vpop.permute.xlu0 %7389
      %7391 = vrot.lane.b32.xlu0 %v7380, 18
      %v7392 = vpop.permute.xlu0 %7391
      %v7393 = vrot.slane %v7386, 4
      %v7394 = vrot.slane %v7388, 4
      %v7395 = vrot.slane %v7390, 4
      %v7396 = vrot.slane %v7392, 4
      %v7397 = vsel %vm916, %v7393, %v7394
      %v7398 = vsel %vm4763, %v7386, %v7397
      %v7399 = vsel %vm916, %v7395, %v7396
      %v7400 = vsel %vm4763, %v7390, %v7399
      %7403 = vst [vmem:[#allocation3 + $0x50] sm:$0xff] %v7398
      %7404 = vst [vmem:[#allocation3 + $0x58] sm:$0xff] %v7400
      %v7405 = vld [vmem:[%s1] sm:$0x11]
      %v7407 = vunpack.c.l.b16 %v7405
      %v7408 = vunpack.c.h.b16 %v7405
      %v7409 = vpack.c.b16 %v7407, %v7407
      %v7410 = vpack.c.b16 %v7408, %v7408
      %v7412 = vshrl.u32 %v7409, 16
      %v7413 = vpack.i.b16 %v7412, %v7412
      %v7415 = vperm.slane %v7413, 0
      %v7417 = vshrl.u32 %v7410, 16
      %v7418 = vpack.i.b16 %v7417, %v7417
      %v7420 = vperm.slane %v7418, 0
      %v7421 = vunpack.c.l.bf16 %v7415
      %v7422 = vunpack.c.l.bf16 %v7420
      %7425 = vrot.lane.b32.xlu0 %v7421, 111
      %v7426 = vpop.permute.xlu0 %7425
      %7427 = vrot.lane.b32.xlu0 %v7422, 111
      %v7428 = vpop.permute.xlu0 %7427
      %v7429 = vsel %vm859, %v7426, %v7428
      %v7433 = vmul.f32 %v7085, %v7426
      %v7434 = vmul.f32 %v7086, %v7429
      %v7435 = vmul.f32 %v7087, %v7428
      %v7436 = vmul.f32 %v7088, %v7426
      %v7437 = vmul.f32 %v7089, %v7429
      %v7438 = vmul.f32 %v7090, %v7428
      %v7439 = vpack.c.bf16 %v7434, %v7433
      %v7440 = vpack.c.bf16 %v7435, %v7435
      %v7441 = vpack.c.bf16 %v7437, %v7436
      %v7442 = vpack.c.bf16 %v7438, %v7438
      %7447 = vrot.lane.b32.xlu0 %v7439, 17
      %v7448 = vpop.permute.xlu0 %7447
      %7449 = vrot.lane.b32.xlu0 %v7440, 17
      %v7450 = vpop.permute.xlu0 %7449
      %7451 = vrot.lane.b32.xlu0 %v7441, 17
      %v7452 = vpop.permute.xlu0 %7451
      %7453 = vrot.lane.b32.xlu0 %v7442, 17
      %v7454 = vpop.permute.xlu0 %7453
      %v7455 = vrot.slane %v7448, 4
      %v7456 = vrot.slane %v7450, 4
      %v7457 = vrot.slane %v7452, 4
      %v7458 = vrot.slane %v7454, 4
      %v7459 = vsel %vm916, %v7455, %v7456
      %v7460 = vsel %vm918, %v7448, %v7459
      %v7461 = vsel %vm916, %v7457, %v7458
      %v7462 = vsel %vm918, %v7452, %v7461
      %7465 = vst [vmem:[#allocation3 + $0x60] sm:$0xff] %v7460
      %7466 = vst [vmem:[#allocation3 + $0x68] sm:$0xff] %v7462
      %7467 = vrot.lane.b32.xlu0 %v7067, 16
      %v7468 = vpop.permute.xlu0 %7467
      %7469 = vrot.lane.b32.xlu0 %v7068, 16
      %v7470 = vpop.permute.xlu0 %7469
      %7471 = vrot.lane.b32.xlu0 %v7069, 16
      %v7472 = vpop.permute.xlu0 %7471
      %7473 = vrot.lane.b32.xlu0 %v7070, 16
      %v7474 = vpop.permute.xlu0 %7473
      %v7475 = vrot.slane %v7468, 4
      %v7476 = vrot.slane %v7470, 4
      %v7477 = vrot.slane %v7472, 4
      %v7478 = vrot.slane %v7474, 4
      %v7479 = vsel %vm916, %v7475, %v7476
      %v7480 = vsel %vm967, %v7468, %v7479
      %v7481 = vsel %vm916, %v7477, %v7478
      %v7482 = vsel %vm967, %v7472, %v7481
      %7485 = vst [vmem:[#allocation3 + $0x70] sm:$0xff] %v7480
      %7486 = vst [vmem:[#allocation3 + $0x78] sm:$0xff] %v7482
      %v7487 = vld [vmem:[%s1] sm:$0x22]
      %v7489 = vunpack.c.l.b16 %v7487
      %v7490 = vunpack.c.h.b16 %v7487
      %v7491 = vpack.c.b16 %v7489, %v7489
      %v7492 = vpack.c.b16 %v7490, %v7490
      %v7494 = vshrl.u32 %v7491, 16
      %v7495 = vpack.i.b16 %v7494, %v7494
      %v7497 = vperm.slane %v7495, 1
      %v7499 = vshrl.u32 %v7492, 16
      %v7500 = vpack.i.b16 %v7499, %v7499
      %v7502 = vperm.slane %v7500, 1
      %v7503 = vunpack.c.l.bf16 %v7497
      %v7504 = vunpack.c.l.bf16 %v7502
      %7507 = vrot.lane.b32.xlu0 %v7503, 113
      %v7508 = vpop.permute.xlu0 %7507
      %7509 = vrot.lane.b32.xlu0 %v7504, 113
      %v7510 = vpop.permute.xlu0 %7509
      %v7511 = vsel %vm1007, %v7508, %v7510
      %v7515 = vmul.f32 %v7085, %v7508
      %v7516 = vmul.f32 %v7086, %v7511
      %v7517 = vmul.f32 %v7087, %v7510
      %v7518 = vmul.f32 %v7088, %v7508
      %v7519 = vmul.f32 %v7089, %v7511
      %v7520 = vmul.f32 %v7090, %v7510
      %v7521 = vpack.c.bf16 %v7516, %v7515
      %v7522 = vpack.c.bf16 %v7517, %v7517
      %v7523 = vpack.c.bf16 %v7519, %v7518
      %v7524 = vpack.c.bf16 %v7520, %v7520
      %7529 = vrot.lane.b32.xlu0 %v7521, 15
      %v7530 = vpop.permute.xlu0 %7529
      %7531 = vrot.lane.b32.xlu0 %v7522, 15
      %v7532 = vpop.permute.xlu0 %7531
      %7533 = vrot.lane.b32.xlu0 %v7523, 15
      %v7534 = vpop.permute.xlu0 %7533
      %7535 = vrot.lane.b32.xlu0 %v7524, 15
      %v7536 = vpop.permute.xlu0 %7535
      %v7537 = vrot.slane %v7530, 4
      %v7538 = vrot.slane %v7532, 4
      %v7539 = vrot.slane %v7534, 4
      %v7540 = vrot.slane %v7536, 4
      %v7541 = vsel %vm916, %v7537, %v7538
      %v7542 = vsel %vm1065, %v7530, %v7541
      %v7543 = vsel %vm916, %v7539, %v7540
      %v7544 = vsel %vm1065, %v7534, %v7543
      %7547 = vst [vmem:[#allocation3 + $0x80] sm:$0xff] %v7542
      %7548 = vst [vmem:[#allocation3 + $0x88] sm:$0xff] %v7544
      %v7549 = vld [vmem:[%s1] sm:$0x44]
      %v7551 = vunpack.c.l.b16 %v7549
      %v7552 = vunpack.c.h.b16 %v7549
      %v7553 = vpack.c.b16 %v7551, %v7551
      %v7554 = vpack.c.b16 %v7552, %v7552
      %v7556 = vpack.i.b16 %v7553, %v7553
      %v7558 = vperm.slane %v7556, 2
      %v7560 = vpack.i.b16 %v7554, %v7554
      %v7562 = vperm.slane %v7560, 2
      %v7563 = vunpack.c.l.bf16 %v7558
      %v7564 = vunpack.c.l.bf16 %v7562
      %7567 = vrot.lane.b32.xlu0 %v7563, 114
      %v7568 = vpop.permute.xlu0 %7567
      %7569 = vrot.lane.b32.xlu0 %v7564, 114
      %v7570 = vpop.permute.xlu0 %7569
      %v7571 = vsel %vm5033, %v7568, %v7570
      %v7575 = vmul.f32 %v7085, %v7568
      %v7576 = vmul.f32 %v7086, %v7571
      %v7577 = vmul.f32 %v7087, %v7570
      %v7578 = vmul.f32 %v7088, %v7568
      %v7579 = vmul.f32 %v7089, %v7571
      %v7580 = vmul.f32 %v7090, %v7570
      %v7581 = vpack.c.bf16 %v7576, %v7575
      %v7582 = vpack.c.bf16 %v7577, %v7577
      %v7583 = vpack.c.bf16 %v7579, %v7578
      %v7584 = vpack.c.bf16 %v7580, %v7580
      %7589 = vrot.lane.b32.xlu0 %v7581, 14
      %v7590 = vpop.permute.xlu0 %7589
      %7591 = vrot.lane.b32.xlu0 %v7582, 14
      %v7592 = vpop.permute.xlu0 %7591
      %7593 = vrot.lane.b32.xlu0 %v7583, 14
      %v7594 = vpop.permute.xlu0 %7593
      %7595 = vrot.lane.b32.xlu0 %v7584, 14
      %v7596 = vpop.permute.xlu0 %7595
      %v7597 = vrot.slane %v7590, 4
      %v7598 = vrot.slane %v7592, 4
      %v7599 = vrot.slane %v7594, 4
      %v7600 = vrot.slane %v7596, 4
      %v7601 = vsel %vm916, %v7597, %v7598
      %v7602 = vsel %vm5091, %v7590, %v7601
      %v7603 = vsel %vm916, %v7599, %v7600
      %v7604 = vsel %vm5091, %v7594, %v7603
      %7607 = vst [vmem:[#allocation3 + $0x90] sm:$0xff] %v7602
      %7608 = vst [vmem:[#allocation3 + $0x98] sm:$0xff] %v7604
      %v7609 = vld [vmem:[%s1] sm:$0x11]
      %v7611 = vunpack.c.l.b16 %v7609
      %v7612 = vunpack.c.h.b16 %v7609
      %v7613 = vpack.c.b16 %v7611, %v7611
      %v7614 = vpack.c.b16 %v7612, %v7612
      %v7616 = vpack.i.b16 %v7613, %v7613
      %v7618 = vperm.slane %v7616, 0
      %v7620 = vpack.i.b16 %v7614, %v7614
      %v7622 = vperm.slane %v7620, 0
      %v7623 = vunpack.c.l.bf16 %v7618
      %v7624 = vunpack.c.l.bf16 %v7622
      %7627 = vrot.lane.b32.xlu0 %v7623, 126
      %v7628 = vpop.permute.xlu0 %7627
      %7629 = vrot.lane.b32.xlu0 %v7624, 126
      %v7630 = vpop.permute.xlu0 %7629
      %v7631 = vsel %vm5129, %v7628, %v7630
      %v7635 = vmul.f32 %v7085, %v7628
      %v7636 = vmul.f32 %v7086, %v7631
      %v7637 = vmul.f32 %v7087, %v7630
      %v7638 = vmul.f32 %v7088, %v7628
      %v7639 = vmul.f32 %v7089, %v7631
      %v7640 = vmul.f32 %v7090, %v7630
      %v7641 = vpack.c.bf16 %v7636, %v7635
      %v7642 = vpack.c.bf16 %v7637, %v7637
      %v7643 = vpack.c.bf16 %v7639, %v7638
      %v7644 = vpack.c.bf16 %v7640, %v7640
      %7649 = vrot.lane.b32.xlu0 %v7641, 2
      %v7650 = vpop.permute.xlu0 %7649
      %7651 = vrot.lane.b32.xlu0 %v7642, 2
      %v7652 = vpop.permute.xlu0 %7651
      %7653 = vrot.lane.b32.xlu0 %v7643, 2
      %v7654 = vpop.permute.xlu0 %7653
      %7655 = vrot.lane.b32.xlu0 %v7644, 2
      %v7656 = vpop.permute.xlu0 %7655
      %v7657 = vrot.slane %v7650, 4
      %v7658 = vrot.slane %v7652, 4
      %v7659 = vrot.slane %v7654, 4
      %v7660 = vrot.slane %v7656, 4
      %v7661 = vsel %vm916, %v7657, %v7658
      %v7662 = vsel %vm5187, %v7650, %v7661
      %v7663 = vsel %vm916, %v7659, %v7660
      %v7664 = vsel %vm5187, %v7654, %v7663
      %7667 = vst [vmem:[#allocation3 + $0xa0] sm:$0xff] %v7662
      %7668 = vst [vmem:[#allocation3 + $0xa8] sm:$0xff] %v7664
      %v7669 = vld [vmem:[%s1] sm:$0x11]
      %v7671 = vunpack.c.l.b16 %v7669
      %v7672 = vunpack.c.h.b16 %v7669
      %v7673 = vpack.c.b16 %v7671, %v7671
      %v7674 = vpack.c.b16 %v7672, %v7672
      %v7676 = vshrl.u32 %v7673, 16
      %v7677 = vpack.i.b16 %v7676, %v7676
      %v7679 = vperm.slane %v7677, 0
      %v7681 = vshrl.u32 %v7674, 16
      %v7682 = vpack.i.b16 %v7681, %v7681
      %v7684 = vperm.slane %v7682, 0
      %v7685 = vunpack.c.l.bf16 %v7679
      %v7686 = vunpack.c.l.bf16 %v7684
      %7689 = vrot.lane.b32.xlu0 %v7685, 127
      %v7690 = vpop.permute.xlu0 %7689
      %7691 = vrot.lane.b32.xlu0 %v7686, 127
      %v7692 = vpop.permute.xlu0 %7691
      %v7693 = vsel %vm1105, %v7690, %v7692
      %v7697 = vmul.f32 %v7085, %v7690
      %v7698 = vmul.f32 %v7086, %v7693
      %v7699 = vmul.f32 %v7087, %v7692
      %v7700 = vmul.f32 %v7088, %v7690
      %v7701 = vmul.f32 %v7089, %v7693
      %v7702 = vmul.f32 %v7090, %v7692
      %v7703 = vpack.c.bf16 %v7698, %v7697
      %v7704 = vpack.c.bf16 %v7699, %v7699
      %v7705 = vpack.c.bf16 %v7701, %v7700
      %v7706 = vpack.c.bf16 %v7702, %v7702
      %7711 = vrot.lane.b32.xlu0 %v7703, 1
      %v7712 = vpop.permute.xlu0 %7711
      %7713 = vrot.lane.b32.xlu0 %v7704, 1
      %v7714 = vpop.permute.xlu0 %7713
      %7715 = vrot.lane.b32.xlu0 %v7705, 1
      %v7716 = vpop.permute.xlu0 %7715
      %7717 = vrot.lane.b32.xlu0 %v7706, 1
      %v7718 = vpop.permute.xlu0 %7717
      %v7719 = vrot.slane %v7712, 4
      %v7720 = vrot.slane %v7714, 4
      %v7721 = vrot.slane %v7716, 4
      %v7722 = vrot.slane %v7718, 4
      %v7723 = vsel %vm916, %v7719, %v7720
      %v7724 = vsel %vm1163, %v7712, %v7723
      %v7725 = vsel %vm916, %v7721, %v7722
      %v7726 = vsel %vm1163, %v7716, %v7725
      %7729 = vst [vmem:[#allocation3 + $0xb0] sm:$0xff] %v7724
      %7730 = vst [vmem:[#allocation3 + $0xb8] sm:$0xff] %v7726
      %v7731 = vrot.slane %v7067, 4
      %v7732 = vrot.slane %v7068, 4
      %v7733 = vrot.slane %v7069, 4
      %v7734 = vrot.slane %v7070, 4
      %v7735 = vsel %vm916, %v7731, %v7732
      %v7736 = vsel %vm916, %v7733, %v7734
      %7739 = vst [vmem:[#allocation3 + $0xc0] sm:$0xff] %v7735
      %7740 = vst [vmem:[#allocation3 + $0xc8] sm:$0xff] %v7736
      %v7741 = vld [vmem:[%s1] sm:$0x22]
      %v7743 = vunpack.c.l.b16 %v7741
      %v7744 = vunpack.c.h.b16 %v7741
      %v7745 = vpack.c.b16 %v7743, %v7743
      %v7746 = vpack.c.b16 %v7744, %v7744
      %v7748 = vshrl.u32 %v7745, 16
      %v7749 = vpack.i.b16 %v7748, %v7748
      %v7751 = vperm.slane %v7749, 1
      %v7753 = vshrl.u32 %v7746, 16
      %v7754 = vpack.i.b16 %v7753, %v7753
      %v7756 = vperm.slane %v7754, 1
      %7757 = vrot.lane.b32.xlu0 %v7067, 127
      %v7758 = vpop.permute.xlu0 %7757
      %7759 = vrot.lane.b32.xlu0 %v7068, 127
      %v7760 = vpop.permute.xlu0 %7759
      %7761 = vrot.lane.b32.xlu0 %v7069, 127
      %v7762 = vpop.permute.xlu0 %7761
      %7763 = vrot.lane.b32.xlu0 %v7070, 127
      %v7764 = vpop.permute.xlu0 %7763
      %v7765 = vrot.slane %v7758, 4
      %v7766 = vrot.slane %v7760, 4
      %v7767 = vrot.slane %v7762, 4
      %v7768 = vrot.slane %v7764, 4
      %v7769 = vsel %vm916, %v7765, %v7766
      %v7770 = vsel %vm1240, %v7769, %v7760
      %v7771 = vsel %vm916, %v7767, %v7768
      %v7772 = vsel %vm1240, %v7771, %v7764
      %v7775 = vunpack.c.l.bf16 %v7770
      %v7776 = vunpack.c.h.bf16 %v7770
      %v7777 = vunpack.c.l.bf16 %v7772
      %v7778 = vunpack.c.h.bf16 %v7772
      %v7779 = vunpack.c.l.bf16 %v7751
      %v7780 = vunpack.c.l.bf16 %v7756
      %v7781 = vmul.f32 %v7775, %v7779
      %v7782 = vmul.f32 %v7776, %v7780
      %v7783 = vmul.f32 %v7777, %v7779
      %v7784 = vmul.f32 %v7778, %v7780
      %v7785 = vpack.c.bf16 %v7782, %v7781
      %v7786 = vpack.c.bf16 %v7784, %v7783
      %7787 = vst [vmem:[#allocation3 + $0xd0] sm:$0xff] %v7785
      %7788 = vst [vmem:[#allocation3 + $0xd8] sm:$0xff] %v7786
      %v7789 = vld [vmem:[%s1] sm:$0x44]
      %v7791 = vunpack.c.l.b16 %v7789
      %v7792 = vunpack.c.h.b16 %v7789
      %v7793 = vpack.c.b16 %v7791, %v7791
      %v7794 = vpack.c.b16 %v7792, %v7792
      %v7796 = vpack.i.b16 %v7793, %v7793
      %v7798 = vperm.slane %v7796, 2
      %v7800 = vpack.i.b16 %v7794, %v7794
      %v7802 = vperm.slane %v7800, 2
      %7803 = vrot.lane.b32.xlu0 %v7067, 126
      %v7804 = vpop.permute.xlu0 %7803
      %7805 = vrot.lane.b32.xlu0 %v7068, 126
      %v7806 = vpop.permute.xlu0 %7805
      %7807 = vrot.lane.b32.xlu0 %v7069, 126
      %v7808 = vpop.permute.xlu0 %7807
      %7809 = vrot.lane.b32.xlu0 %v7070, 126
      %v7810 = vpop.permute.xlu0 %7809
      %v7811 = vrot.slane %v7804, 4
      %v7812 = vrot.slane %v7806, 4
      %v7813 = vrot.slane %v7808, 4
      %v7814 = vrot.slane %v7810, 4
      %v7815 = vsel %vm916, %v7811, %v7812
      %v7816 = vsel %vm5436, %v7815, %v7806
      %v7817 = vsel %vm916, %v7813, %v7814
      %v7818 = vsel %vm5436, %v7817, %v7810
      %v7821 = vunpack.c.l.bf16 %v7816
      %v7822 = vunpack.c.h.bf16 %v7816
      %v7823 = vunpack.c.l.bf16 %v7818
      %v7824 = vunpack.c.h.bf16 %v7818
      %v7825 = vunpack.c.l.bf16 %v7798
      %v7826 = vunpack.c.l.bf16 %v7802
      %v7827 = vmul.f32 %v7821, %v7825
      %v7828 = vmul.f32 %v7822, %v7826
      %v7829 = vmul.f32 %v7823, %v7825
      %v7830 = vmul.f32 %v7824, %v7826
      %v7831 = vpack.c.bf16 %v7828, %v7827
      %v7832 = vpack.c.bf16 %v7830, %v7829
      %7833 = vst [vmem:[#allocation3 + $0xe0] sm:$0xff] %v7831
      %7834 = vst [vmem:[#allocation3 + $0xe8] sm:$0xff] %v7832
      %v7835 = vld [vmem:[%s1] sm:$0x11]
      %v7837 = vunpack.c.l.b16 %v7835
      %v7838 = vunpack.c.h.b16 %v7835
      %v7839 = vpack.c.b16 %v7837, %v7837
      %v7840 = vpack.c.b16 %v7838, %v7838
      %v7842 = vpack.i.b16 %v7839, %v7839
      %v7844 = vperm.slane %v7842, 0
      %v7846 = vpack.i.b16 %v7840, %v7840
      %v7848 = vperm.slane %v7846, 0
      %7849 = vrot.lane.b32.xlu0 %v7067, 114
      %v7850 = vpop.permute.xlu0 %7849
      %7851 = vrot.lane.b32.xlu0 %v7068, 114
      %v7852 = vpop.permute.xlu0 %7851
      %7853 = vrot.lane.b32.xlu0 %v7069, 114
      %v7854 = vpop.permute.xlu0 %7853
      %7855 = vrot.lane.b32.xlu0 %v7070, 114
      %v7856 = vpop.permute.xlu0 %7855
      %v7857 = vrot.slane %v7850, 4
      %v7858 = vrot.slane %v7852, 4
      %v7859 = vrot.slane %v7854, 4
      %v7860 = vrot.slane %v7856, 4
      %v7861 = vsel %vm916, %v7857, %v7858
      %v7862 = vsel %vm5513, %v7861, %v7852
      %v7863 = vsel %vm916, %v7859, %v7860
      %v7864 = vsel %vm5513, %v7863, %v7856
      %v7867 = vunpack.c.l.bf16 %v7862
      %v7868 = vunpack.c.h.bf16 %v7862
      %v7869 = vunpack.c.l.bf16 %v7864
      %v7870 = vunpack.c.h.bf16 %v7864
      %v7871 = vunpack.c.l.bf16 %v7844
      %v7872 = vunpack.c.l.bf16 %v7848
      %v7873 = vmul.f32 %v7867, %v7871
      %v7874 = vmul.f32 %v7868, %v7872
      %v7875 = vmul.f32 %v7869, %v7871
      %v7876 = vmul.f32 %v7870, %v7872
      %v7877 = vpack.c.bf16 %v7874, %v7873
      %v7878 = vpack.c.bf16 %v7876, %v7875
      %7879 = vst [vmem:[#allocation3 + $0xf0] sm:$0xff] %v7877
      %7880 = vst [vmem:[#allocation3 + $0xf8] sm:$0xff] %v7878
      %v7881 = vld [vmem:[%s1] sm:$0x11]
      %v7883 = vunpack.c.l.b16 %v7881
      %v7884 = vunpack.c.h.b16 %v7881
      %v7885 = vpack.c.b16 %v7883, %v7883
      %v7886 = vpack.c.b16 %v7884, %v7884
      %v7888 = vshrl.u32 %v7885, 16
      %v7889 = vpack.i.b16 %v7888, %v7888
      %v7891 = vperm.slane %v7889, 0
      %v7893 = vshrl.u32 %v7886, 16
      %v7894 = vpack.i.b16 %v7893, %v7893
      %v7896 = vperm.slane %v7894, 0
      %7897 = vrot.lane.b32.xlu0 %v7067, 113
      %v7898 = vpop.permute.xlu0 %7897
      %7899 = vrot.lane.b32.xlu0 %v7068, 113
      %v7900 = vpop.permute.xlu0 %7899
      %7901 = vrot.lane.b32.xlu0 %v7069, 113
      %v7902 = vpop.permute.xlu0 %7901
      %7903 = vrot.lane.b32.xlu0 %v7070, 113
      %v7904 = vpop.permute.xlu0 %7903
      %v7905 = vrot.slane %v7898, 4
      %v7906 = vrot.slane %v7900, 4
      %v7907 = vrot.slane %v7902, 4
      %v7908 = vrot.slane %v7904, 4
      %v7909 = vsel %vm916, %v7905, %v7906
      %v7910 = vsel %vm1319, %v7909, %v7900
      %v7911 = vsel %vm916, %v7907, %v7908
      %v7912 = vsel %vm1319, %v7911, %v7904
      %v7915 = vunpack.c.l.bf16 %v7910
      %v7916 = vunpack.c.h.bf16 %v7910
      %v7917 = vunpack.c.l.bf16 %v7912
      %v7918 = vunpack.c.h.bf16 %v7912
      %v7919 = vunpack.c.l.bf16 %v7891
      %v7920 = vunpack.c.l.bf16 %v7896
      %v7921 = vmul.f32 %v7915, %v7919
      %v7922 = vmul.f32 %v7916, %v7920
      %v7923 = vmul.f32 %v7917, %v7919
      %v7924 = vmul.f32 %v7918, %v7920
      %v7925 = vpack.c.bf16 %v7922, %v7921
      %v7926 = vpack.c.bf16 %v7924, %v7923
      %7927 = vst [vmem:[#allocation3 + $0x100] sm:$0xff] %v7925
      %7928 = vst [vmem:[#allocation3 + $0x108] sm:$0xff] %v7926
      %7929 = vrot.lane.b32.xlu0 %v7067, 112
      %v7930 = vpop.permute.xlu0 %7929
      %7931 = vrot.lane.b32.xlu0 %v7068, 112
      %v7932 = vpop.permute.xlu0 %7931
      %7933 = vrot.lane.b32.xlu0 %v7069, 112
      %v7934 = vpop.permute.xlu0 %7933
      %7935 = vrot.lane.b32.xlu0 %v7070, 112
      %v7936 = vpop.permute.xlu0 %7935
      %v7937 = vrot.slane %v7930, 4
      %v7938 = vrot.slane %v7932, 4
      %v7939 = vrot.slane %v7934, 4
      %v7940 = vrot.slane %v7936, 4
      %v7941 = vsel %vm916, %v7937, %v7938
      %v7942 = vsel %vm1382, %v7941, %v7932
      %v7943 = vsel %vm916, %v7939, %v7940
      %v7944 = vsel %vm1382, %v7943, %v7936
      %7947 = vst [vmem:[#allocation3 + $0x110] sm:$0xff] %v7942
      %7948 = vst [vmem:[#allocation3 + $0x118] sm:$0xff] %v7944
      %v7949 = vld [vmem:[%s1] sm:$0x22]
      %v7951 = vunpack.c.l.b16 %v7949
      %v7952 = vunpack.c.h.b16 %v7949
      %v7953 = vpack.c.b16 %v7951, %v7951
      %v7954 = vpack.c.b16 %v7952, %v7952
      %v7956 = vshrl.u32 %v7953, 16
      %v7957 = vpack.i.b16 %v7956, %v7956
      %v7959 = vperm.slane %v7957, 1
      %v7961 = vshrl.u32 %v7954, 16
      %v7962 = vpack.i.b16 %v7961, %v7961
      %v7964 = vperm.slane %v7962, 1
      %7965 = vrot.lane.b32.xlu0 %v7067, 111
      %v7966 = vpop.permute.xlu0 %7965
      %7967 = vrot.lane.b32.xlu0 %v7068, 111
      %v7968 = vpop.permute.xlu0 %7967
      %7969 = vrot.lane.b32.xlu0 %v7069, 111
      %v7970 = vpop.permute.xlu0 %7969
      %7971 = vrot.lane.b32.xlu0 %v7070, 111
      %v7972 = vpop.permute.xlu0 %7971
      %v7973 = vrot.slane %v7966, 4
      %v7974 = vrot.slane %v7968, 4
      %v7975 = vrot.slane %v7970, 4
      %v7976 = vrot.slane %v7972, 4
      %v7977 = vsel %vm916, %v7973, %v7974
      %v7978 = vsel %vm1439, %v7977, %v7968
      %v7979 = vsel %vm916, %v7975, %v7976
      %v7980 = vsel %vm1439, %v7979, %v7972
      %v7983 = vunpack.c.l.bf16 %v7978
      %v7984 = vunpack.c.h.bf16 %v7978
      %v7985 = vunpack.c.l.bf16 %v7980
      %v7986 = vunpack.c.h.bf16 %v7980
      %v7987 = vunpack.c.l.bf16 %v7959
      %v7988 = vunpack.c.l.bf16 %v7964
      %v7989 = vmul.f32 %v7983, %v7987
      %v7990 = vmul.f32 %v7984, %v7988
      %v7991 = vmul.f32 %v7985, %v7987
      %v7992 = vmul.f32 %v7986, %v7988
      %v7993 = vpack.c.bf16 %v7990, %v7989
      %v7994 = vpack.c.bf16 %v7992, %v7991
      %7995 = vst [vmem:[#allocation3 + $0x120] sm:$0xff] %v7993
      %7996 = vst [vmem:[#allocation3 + $0x128] sm:$0xff] %v7994
      %v7997 = vld [vmem:[%s1] sm:$0x44]
      %v7999 = vunpack.c.l.b16 %v7997
      %v8000 = vunpack.c.h.b16 %v7997
      %v8001 = vpack.c.b16 %v7999, %v7999
      %v8002 = vpack.c.b16 %v8000, %v8000
      %v8004 = vpack.i.b16 %v8001, %v8001
      %v8006 = vperm.slane %v8004, 2
      %v8008 = vpack.i.b16 %v8002, %v8002
      %v8010 = vperm.slane %v8008, 2
      %8011 = vrot.lane.b32.xlu0 %v7067, 110
      %v8012 = vpop.permute.xlu0 %8011
      %8013 = vrot.lane.b32.xlu0 %v7068, 110
      %v8014 = vpop.permute.xlu0 %8013
      %8015 = vrot.lane.b32.xlu0 %v7069, 110
      %v8016 = vpop.permute.xlu0 %8015
      %8017 = vrot.lane.b32.xlu0 %v7070, 110
      %v8018 = vpop.permute.xlu0 %8017
      %v8019 = vrot.slane %v8012, 4
      %v8020 = vrot.slane %v8014, 4
      %v8021 = vrot.slane %v8016, 4
      %v8022 = vrot.slane %v8018, 4
      %v8023 = vsel %vm916, %v8019, %v8020
      %v8024 = vsel %vm5786, %v8023, %v8014
      %v8025 = vsel %vm916, %v8021, %v8022
      %v8026 = vsel %vm5786, %v8025, %v8018
      %v8029 = vunpack.c.l.bf16 %v8024
      %v8030 = vunpack.c.h.bf16 %v8024
      %v8031 = vunpack.c.l.bf16 %v8026
      %v8032 = vunpack.c.h.bf16 %v8026
      %v8033 = vunpack.c.l.bf16 %v8006
      %v8034 = vunpack.c.l.bf16 %v8010
      %v8035 = vmul.f32 %v8029, %v8033
      %v8036 = vmul.f32 %v8030, %v8034
      %v8037 = vmul.f32 %v8031, %v8033
      %v8038 = vmul.f32 %v8032, %v8034
      %v8039 = vpack.c.bf16 %v8036, %v8035
      %v8040 = vpack.c.bf16 %v8038, %v8037
      %8041 = vst [vmem:[#allocation3 + $0x130] sm:$0xff] %v8039
      %8042 = vst [vmem:[#allocation3 + $0x138] sm:$0xff] %v8040
      %v8043 = vld [vmem:[%s1] sm:$0x11]
      %v8045 = vunpack.c.l.b16 %v8043
      %v8046 = vunpack.c.h.b16 %v8043
      %v8047 = vpack.c.b16 %v8045, %v8045
      %v8048 = vpack.c.b16 %v8046, %v8046
      %v8050 = vpack.i.b16 %v8047, %v8047
      %v8052 = vperm.slane %v8050, 0
      %v8054 = vpack.i.b16 %v8048, %v8048
      %v8056 = vperm.slane %v8054, 0
      %8057 = vrot.lane.b32.xlu0 %v7067, 98
      %v8058 = vpop.permute.xlu0 %8057
      %8059 = vrot.lane.b32.xlu0 %v7068, 98
      %v8060 = vpop.permute.xlu0 %8059
      %8061 = vrot.lane.b32.xlu0 %v7069, 98
      %v8062 = vpop.permute.xlu0 %8061
      %8063 = vrot.lane.b32.xlu0 %v7070, 98
      %v8064 = vpop.permute.xlu0 %8063
      %v8065 = vrot.slane %v8058, 4
      %v8066 = vrot.slane %v8060, 4
      %v8067 = vrot.slane %v8062, 4
      %v8068 = vrot.slane %v8064, 4
      %v8069 = vsel %vm916, %v8065, %v8066
      %v8070 = vsel %vm5863, %v8069, %v8060
      %v8071 = vsel %vm916, %v8067, %v8068
      %v8072 = vsel %vm5863, %v8071, %v8064
      %v8075 = vunpack.c.l.bf16 %v8070
      %v8076 = vunpack.c.h.bf16 %v8070
      %v8077 = vunpack.c.l.bf16 %v8072
      %v8078 = vunpack.c.h.bf16 %v8072
      %v8079 = vunpack.c.l.bf16 %v8052
      %v8080 = vunpack.c.l.bf16 %v8056
      %v8081 = vmul.f32 %v8075, %v8079
      %v8082 = vmul.f32 %v8076, %v8080
      %v8083 = vmul.f32 %v8077, %v8079
      %v8084 = vmul.f32 %v8078, %v8080
      %v8085 = vpack.c.bf16 %v8082, %v8081
      %v8086 = vpack.c.bf16 %v8084, %v8083
      %8087 = vst [vmem:[#allocation3 + $0x140] sm:$0xff] %v8085
      %8088 = vst [vmem:[#allocation3 + $0x148] sm:$0xff] %v8086
      %v8089 = vld [vmem:[%s1] sm:$0x11]
      %v8091 = vunpack.c.l.b16 %v8089
      %v8092 = vunpack.c.h.b16 %v8089
      %v8093 = vpack.c.b16 %v8091, %v8091
      %v8094 = vpack.c.b16 %v8092, %v8092
      %v8096 = vshrl.u32 %v8093, 16
      %v8097 = vpack.i.b16 %v8096, %v8096
      %v8099 = vperm.slane %v8097, 0
      %v8101 = vshrl.u32 %v8094, 16
      %v8102 = vpack.i.b16 %v8101, %v8101
      %v8104 = vperm.slane %v8102, 0
      %8105 = vrot.lane.b32.xlu0 %v7067, 97
      %v8106 = vpop.permute.xlu0 %8105
      %8107 = vrot.lane.b32.xlu0 %v7068, 97
      %v8108 = vpop.permute.xlu0 %8107
      %8109 = vrot.lane.b32.xlu0 %v7069, 97
      %v8110 = vpop.permute.xlu0 %8109
      %8111 = vrot.lane.b32.xlu0 %v7070, 97
      %v8112 = vpop.permute.xlu0 %8111
      %v8113 = vrot.slane %v8106, 4
      %v8114 = vrot.slane %v8108, 4
      %v8115 = vrot.slane %v8110, 4
      %v8116 = vrot.slane %v8112, 4
      %v8117 = vsel %vm916, %v8113, %v8114
      %v8118 = vsel %vm5942, %v8117, %v8108
      %v8119 = vsel %vm916, %v8115, %v8116
      %v8120 = vsel %vm5942, %v8119, %v8112
      %v8123 = vunpack.c.l.bf16 %v8118
      %v8124 = vunpack.c.h.bf16 %v8118
      %v8125 = vunpack.c.l.bf16 %v8120
      %v8126 = vunpack.c.h.bf16 %v8120
      %v8127 = vunpack.c.l.bf16 %v8099
      %v8128 = vunpack.c.l.bf16 %v8104
      %v8129 = vmul.f32 %v8123, %v8127
      %v8130 = vmul.f32 %v8124, %v8128
      %v8131 = vmul.f32 %v8125, %v8127
      %v8132 = vmul.f32 %v8126, %v8128
      %v8133 = vpack.c.bf16 %v8130, %v8129
      %v8134 = vpack.c.bf16 %v8132, %v8131
      %8135 = vst [vmem:[#allocation3 + $0x150] sm:$0xff] %v8133
      %8136 = vst [vmem:[#allocation3 + $0x158] sm:$0xff] %v8134
      %8137 = vrot.lane.b32.xlu0 %v7067, 96
      %v8138 = vpop.permute.xlu0 %8137
      %8139 = vrot.lane.b32.xlu0 %v7068, 96
      %v8140 = vpop.permute.xlu0 %8139
      %8141 = vrot.lane.b32.xlu0 %v7069, 96
      %v8142 = vpop.permute.xlu0 %8141
      %8143 = vrot.lane.b32.xlu0 %v7070, 96
      %v8144 = vpop.permute.xlu0 %8143
      %v8145 = vrot.slane %v8138, 4
      %v8146 = vrot.slane %v8140, 4
      %v8147 = vrot.slane %v8142, 4
      %v8148 = vrot.slane %v8144, 4
      %v8149 = vsel %vm916, %v8145, %v8146
      %v8150 = vsel %vm6005, %v8149, %v8140
      %v8151 = vsel %vm916, %v8147, %v8148
      %v8152 = vsel %vm6005, %v8151, %v8144
      %8155 = vst [vmem:[#allocation3 + $0x160] sm:$0xff] %v8150
      %8156 = vst [vmem:[#allocation3 + $0x168] sm:$0xff] %v8152
      %v8157 = vld [vmem:[%s1] sm:$0x22]
      %v8159 = vunpack.c.l.b16 %v8157
      %v8160 = vunpack.c.h.b16 %v8157
      %v8161 = vpack.c.b16 %v8159, %v8159
      %v8162 = vpack.c.b16 %v8160, %v8160
      %v8164 = vshrl.u32 %v8161, 16
      %v8165 = vpack.i.b16 %v8164, %v8164
      %v8167 = vperm.slane %v8165, 1
      %v8169 = vshrl.u32 %v8162, 16
      %v8170 = vpack.i.b16 %v8169, %v8169
      %v8172 = vperm.slane %v8170, 1
      %8173 = vrot.lane.b32.xlu0 %v7067, 95
      %v8174 = vpop.permute.xlu0 %8173
      %8175 = vrot.lane.b32.xlu0 %v7068, 95
      %v8176 = vpop.permute.xlu0 %8175
      %8177 = vrot.lane.b32.xlu0 %v7069, 95
      %v8178 = vpop.permute.xlu0 %8177
      %8179 = vrot.lane.b32.xlu0 %v7070, 95
      %v8180 = vpop.permute.xlu0 %8179
      %v8181 = vrot.slane %v8174, 4
      %v8182 = vrot.slane %v8176, 4
      %v8183 = vrot.slane %v8178, 4
      %v8184 = vrot.slane %v8180, 4
      %v8185 = vsel %vm916, %v8181, %v8182
      %v8186 = vsel %vm6062, %v8185, %v8176
      %v8187 = vsel %vm916, %v8183, %v8184
      %v8188 = vsel %vm6062, %v8187, %v8180
      %v8191 = vunpack.c.l.bf16 %v8186
      %v8192 = vunpack.c.h.bf16 %v8186
      %v8193 = vunpack.c.l.bf16 %v8188
      %v8194 = vunpack.c.h.bf16 %v8188
      %v8195 = vunpack.c.l.bf16 %v8167
      %v8196 = vunpack.c.l.bf16 %v8172
      %v8197 = vmul.f32 %v8191, %v8195
      %v8198 = vmul.f32 %v8192, %v8196
      %v8199 = vmul.f32 %v8193, %v8195
      %v8200 = vmul.f32 %v8194, %v8196
      %v8201 = vpack.c.bf16 %v8198, %v8197
      %v8202 = vpack.c.bf16 %v8200, %v8199
      %8203 = vst [vmem:[#allocation3 + $0x170] sm:$0xff] %v8201
      %8204 = vst [vmem:[#allocation3 + $0x178] sm:$0xff] %v8202
      %v8205 = vld [vmem:[%s1] sm:$0x44]
      %v8207 = vunpack.c.l.b16 %v8205
      %v8208 = vunpack.c.h.b16 %v8205
      %v8209 = vpack.c.b16 %v8207, %v8207
      %v8210 = vpack.c.b16 %v8208, %v8208
      %v8212 = vpack.i.b16 %v8209, %v8209
      %v8214 = vperm.slane %v8212, 2
      %v8216 = vpack.i.b16 %v8210, %v8210
      %v8218 = vperm.slane %v8216, 2
      %8219 = vrot.lane.b32.xlu0 %v7067, 94
      %v8220 = vpop.permute.xlu0 %8219
      %8221 = vrot.lane.b32.xlu0 %v7068, 94
      %v8222 = vpop.permute.xlu0 %8221
      %8223 = vrot.lane.b32.xlu0 %v7069, 94
      %v8224 = vpop.permute.xlu0 %8223
      %8225 = vrot.lane.b32.xlu0 %v7070, 94
      %v8226 = vpop.permute.xlu0 %8225
      %v8227 = vrot.slane %v8220, 4
      %v8228 = vrot.slane %v8222, 4
      %v8229 = vrot.slane %v8224, 4
      %v8230 = vrot.slane %v8226, 4
      %v8231 = vsel %vm916, %v8227, %v8228
      %v8232 = vsel %vm6139, %v8231, %v8222
      %v8233 = vsel %vm916, %v8229, %v8230
      %v8234 = vsel %vm6139, %v8233, %v8226
      %v8237 = vunpack.c.l.bf16 %v8232
      %v8238 = vunpack.c.h.bf16 %v8232
      %v8239 = vunpack.c.l.bf16 %v8234
      %v8240 = vunpack.c.h.bf16 %v8234
      %v8241 = vunpack.c.l.bf16 %v8214
      %v8242 = vunpack.c.l.bf16 %v8218
      %v8243 = vmul.f32 %v8237, %v8241
      %v8244 = vmul.f32 %v8238, %v8242
      %v8245 = vmul.f32 %v8239, %v8241
      %v8246 = vmul.f32 %v8240, %v8242
      %v8247 = vpack.c.bf16 %v8244, %v8243
      %v8248 = vpack.c.bf16 %v8246, %v8245
      %8249 = vst [vmem:[#allocation3 + $0x180] sm:$0xff] %v8247
      %8250 = vst [vmem:[#allocation3 + $0x188] sm:$0xff] %v8248
      %v8251 = vld [vmem:[%s14] sm:$0xff]
      %v8252 = vld [vmem:[%s14 + $0x8] sm:$0xff]
      %v8253 = vld [vmem:[#allocation3] sm:$0xff]
      %v8254 = vld [vmem:[#allocation3 + $0x8] sm:$0xff]
      %v8255 = vld [vmem:[#allocation3 + $0x10] sm:$0xff]
      %v8256 = vld [vmem:[#allocation3 + $0x18] sm:$0xff]
      %v8257 = vld [vmem:[#allocation3 + $0x20] sm:$0xff]
      %v8258 = vld [vmem:[#allocation3 + $0x28] sm:$0xff]
      %v8259 = vld [vmem:[#allocation3 + $0x30] sm:$0xff]
      %v8260 = vld [vmem:[#allocation3 + $0x38] sm:$0xff]
      %v8261 = vld [vmem:[#allocation3 + $0x40] sm:$0xff]
      %v8262 = vld [vmem:[#allocation3 + $0x48] sm:$0xff]
      %v8263 = vld [vmem:[#allocation3 + $0x50] sm:$0xff]
      %v8264 = vld [vmem:[#allocation3 + $0x58] sm:$0xff]
      %v8265 = vld [vmem:[#allocation3 + $0x60] sm:$0xff]
      %v8266 = vld [vmem:[#allocation3 + $0x68] sm:$0xff]
      %v8267 = vld [vmem:[#allocation3 + $0x70] sm:$0xff]
      %v8268 = vld [vmem:[#allocation3 + $0x78] sm:$0xff]
      %v8269 = vld [vmem:[#allocation3 + $0x80] sm:$0xff]
      %v8270 = vld [vmem:[#allocation3 + $0x88] sm:$0xff]
      %v8271 = vld [vmem:[#allocation3 + $0x90] sm:$0xff]
      %v8272 = vld [vmem:[#allocation3 + $0x98] sm:$0xff]
      %v8273 = vld [vmem:[#allocation3 + $0xa0] sm:$0xff]
      %v8274 = vld [vmem:[#allocation3 + $0xa8] sm:$0xff]
      %v8275 = vld [vmem:[#allocation3 + $0xb0] sm:$0xff]
      %v8276 = vld [vmem:[#allocation3 + $0xb8] sm:$0xff]
      %v8277 = vld [vmem:[#allocation3 + $0xc0] sm:$0xff]
      %v8278 = vld [vmem:[#allocation3 + $0xc8] sm:$0xff]
      %v8279 = vld [vmem:[#allocation3 + $0xd0] sm:$0xff]
      %v8280 = vld [vmem:[#allocation3 + $0xd8] sm:$0xff]
      %v8281 = vld [vmem:[#allocation3 + $0xe0] sm:$0xff]
      %v8282 = vld [vmem:[#allocation3 + $0xe8] sm:$0xff]
      %v8283 = vld [vmem:[#allocation3 + $0xf0] sm:$0xff]
      %v8284 = vld [vmem:[#allocation3 + $0xf8] sm:$0xff]
      %v8285 = vld [vmem:[#allocation3 + $0x100] sm:$0xff]
      %v8286 = vld [vmem:[#allocation3 + $0x108] sm:$0xff]
      %v8287 = vld [vmem:[#allocation3 + $0x110] sm:$0xff]
      %v8288 = vld [vmem:[#allocation3 + $0x118] sm:$0xff]
      %v8289 = vld [vmem:[#allocation3 + $0x120] sm:$0xff]
      %v8290 = vld [vmem:[#allocation3 + $0x128] sm:$0xff]
      %v8291 = vld [vmem:[#allocation3 + $0x130] sm:$0xff]
      %v8292 = vld [vmem:[#allocation3 + $0x138] sm:$0xff]
      %v8293 = vld [vmem:[#allocation3 + $0x140] sm:$0xff]
      %v8294 = vld [vmem:[#allocation3 + $0x148] sm:$0xff]
      %v8295 = vld [vmem:[#allocation3 + $0x150] sm:$0xff]
      %v8296 = vld [vmem:[#allocation3 + $0x158] sm:$0xff]
      %v8297 = vld [vmem:[#allocation3 + $0x160] sm:$0xff]
      %v8298 = vld [vmem:[#allocation3 + $0x168] sm:$0xff]
      %v8299 = vld [vmem:[#allocation3 + $0x170] sm:$0xff]
      %v8300 = vld [vmem:[#allocation3 + $0x178] sm:$0xff]
      %v8301 = vld [vmem:[#allocation3 + $0x180] sm:$0xff]
      %v8302 = vld [vmem:[#allocation3 + $0x188] sm:$0xff]
      %v8305 = vunpack.c.l.b16 %v8251
      %v8306 = vunpack.c.h.b16 %v8251
      %v8307 = vunpack.c.l.b16 %v8252
      %v8308 = vunpack.c.h.b16 %v8252
      %v8309 = vpack.c.b16 %v8305, %v8305
      %v8310 = vpack.c.b16 %v8306, %v8306
      %v8311 = vpack.c.b16 %v8307, %v8307
      %v8312 = vpack.c.b16 %v8308, %v8308
      %v8366 = vunpack.c.l.b16 %v8253
      %v8367 = vunpack.c.h.b16 %v8253
      %v8368 = vunpack.c.l.b16 %v8254
      %v8369 = vunpack.c.h.b16 %v8254
      %v8370 = vunpack.c.l.b16 %v8255
      %v8371 = vunpack.c.h.b16 %v8255
      %v8372 = vunpack.c.l.b16 %v8256
      %v8373 = vunpack.c.h.b16 %v8256
      %v8374 = vunpack.c.l.b16 %v8257
      %v8375 = vunpack.c.h.b16 %v8257
      %v8376 = vunpack.c.l.b16 %v8258
      %v8377 = vunpack.c.h.b16 %v8258
      %v8378 = vunpack.c.l.b16 %v8259
      %v8379 = vunpack.c.h.b16 %v8259
      %v8380 = vunpack.c.l.b16 %v8260
      %v8381 = vunpack.c.h.b16 %v8260
      %v8382 = vunpack.c.l.b16 %v8261
      %v8383 = vunpack.c.h.b16 %v8261
      %v8384 = vunpack.c.l.b16 %v8262
      %v8385 = vunpack.c.h.b16 %v8262
      %v8386 = vunpack.c.l.b16 %v8263
      %v8387 = vunpack.c.h.b16 %v8263
      %v8388 = vunpack.c.l.b16 %v8264
      %v8389 = vunpack.c.h.b16 %v8264
      %v8390 = vunpack.c.l.b16 %v8265
      %v8391 = vunpack.c.h.b16 %v8265
      %v8392 = vunpack.c.l.b16 %v8266
      %v8393 = vunpack.c.h.b16 %v8266
      %v8394 = vunpack.c.l.b16 %v8267
      %v8395 = vunpack.c.h.b16 %v8267
      %v8396 = vunpack.c.l.b16 %v8268
      %v8397 = vunpack.c.h.b16 %v8268
      %v8398 = vunpack.c.l.b16 %v8269
      %v8399 = vunpack.c.h.b16 %v8269
      %v8400 = vunpack.c.l.b16 %v8270
      %v8401 = vunpack.c.h.b16 %v8270
      %v8402 = vunpack.c.l.b16 %v8271
      %v8403 = vunpack.c.h.b16 %v8271
      %v8404 = vunpack.c.l.b16 %v8272
      %v8405 = vunpack.c.h.b16 %v8272
      %v8406 = vunpack.c.l.b16 %v8273
      %v8407 = vunpack.c.h.b16 %v8273
      %v8408 = vunpack.c.l.b16 %v8274
      %v8409 = vunpack.c.h.b16 %v8274
      %v8410 = vunpack.c.l.b16 %v8275
      %v8411 = vunpack.c.h.b16 %v8275
      %v8412 = vunpack.c.l.b16 %v8276
      %v8413 = vunpack.c.h.b16 %v8276
      %v8414 = vunpack.c.l.b16 %v8277
      %v8415 = vunpack.c.h.b16 %v8277
      %v8416 = vunpack.c.l.b16 %v8278
      %v8417 = vunpack.c.h.b16 %v8278
      %v8418 = vunpack.c.l.b16 %v8279
      %v8419 = vunpack.c.h.b16 %v8279
      %v8420 = vunpack.c.l.b16 %v8280
      %v8421 = vunpack.c.h.b16 %v8280
      %v8422 = vunpack.c.l.b16 %v8281
      %v8423 = vunpack.c.h.b16 %v8281
      %v8424 = vunpack.c.l.b16 %v8282
      %v8425 = vunpack.c.h.b16 %v8282
      %v8426 = vunpack.c.l.b16 %v8283
      %v8427 = vunpack.c.h.b16 %v8283
      %v8428 = vunpack.c.l.b16 %v8284
      %v8429 = vunpack.c.h.b16 %v8284
      %v8430 = vunpack.c.l.b16 %v8285
      %v8431 = vunpack.c.h.b16 %v8285
      %v8432 = vunpack.c.l.b16 %v8286
      %v8433 = vunpack.c.h.b16 %v8286
      %v8434 = vunpack.c.l.b16 %v8287
      %v8435 = vunpack.c.h.b16 %v8287
      %v8436 = vunpack.c.l.b16 %v8288
      %v8437 = vunpack.c.h.b16 %v8288
      %v8438 = vunpack.c.l.b16 %v8289
      %v8439 = vunpack.c.h.b16 %v8289
      %v8440 = vunpack.c.l.b16 %v8290
      %v8441 = vunpack.c.h.b16 %v8290
      %v8442 = vunpack.c.l.b16 %v8291
      %v8443 = vunpack.c.h.b16 %v8291
      %v8444 = vunpack.c.l.b16 %v8292
      %v8445 = vunpack.c.h.b16 %v8292
      %v8446 = vunpack.c.l.b16 %v8293
      %v8447 = vunpack.c.h.b16 %v8293
      %v8448 = vunpack.c.l.b16 %v8294
      %v8449 = vunpack.c.h.b16 %v8294
      %v8450 = vunpack.c.l.b16 %v8295
      %v8451 = vunpack.c.h.b16 %v8295
      %v8452 = vunpack.c.l.b16 %v8296
      %v8453 = vunpack.c.h.b16 %v8296
      %v8454 = vunpack.c.l.b16 %v8297
      %v8455 = vunpack.c.h.b16 %v8297
      %v8456 = vunpack.c.l.b16 %v8298
      %v8457 = vunpack.c.h.b16 %v8298
      %v8458 = vunpack.c.l.b16 %v8299
      %v8459 = vunpack.c.h.b16 %v8299
      %v8460 = vunpack.c.l.b16 %v8300
      %v8461 = vunpack.c.h.b16 %v8300
      %v8462 = vunpack.c.l.b16 %v8301
      %v8463 = vunpack.c.h.b16 %v8301
      %v8464 = vunpack.c.l.b16 %v8302
      %v8465 = vunpack.c.h.b16 %v8302
      %v8466 = vpack.c.b16 %v8368, %v8366
      %v8467 = vpack.c.b16 %v8369, %v8367
      %v8468 = vpack.c.b16 %v8372, %v8370
      %v8469 = vpack.c.b16 %v8373, %v8371
      %v8470 = vpack.c.b16 %v8376, %v8374
      %v8471 = vpack.c.b16 %v8377, %v8375
      %v8472 = vpack.c.b16 %v8380, %v8378
      %v8473 = vpack.c.b16 %v8381, %v8379
      %v8474 = vpack.c.b16 %v8384, %v8382
      %v8475 = vpack.c.b16 %v8385, %v8383
      %v8476 = vpack.c.b16 %v8388, %v8386
      %v8477 = vpack.c.b16 %v8389, %v8387
      %v8478 = vpack.c.b16 %v8392, %v8390
      %v8479 = vpack.c.b16 %v8393, %v8391
      %v8480 = vpack.c.b16 %v8396, %v8394
      %v8481 = vpack.c.b16 %v8397, %v8395
      %v8482 = vpack.c.b16 %v8400, %v8398
      %v8483 = vpack.c.b16 %v8401, %v8399
      %v8484 = vpack.c.b16 %v8404, %v8402
      %v8485 = vpack.c.b16 %v8405, %v8403
      %v8486 = vpack.c.b16 %v8408, %v8406
      %v8487 = vpack.c.b16 %v8409, %v8407
      %v8488 = vpack.c.b16 %v8412, %v8410
      %v8489 = vpack.c.b16 %v8413, %v8411
      %v8490 = vpack.c.b16 %v8416, %v8414
      %v8491 = vpack.c.b16 %v8417, %v8415
      %v8492 = vpack.c.b16 %v8420, %v8418
      %v8493 = vpack.c.b16 %v8421, %v8419
      %v8494 = vpack.c.b16 %v8424, %v8422
      %v8495 = vpack.c.b16 %v8425, %v8423
      %v8496 = vpack.c.b16 %v8428, %v8426
      %v8497 = vpack.c.b16 %v8429, %v8427
      %v8498 = vpack.c.b16 %v8432, %v8430
      %v8499 = vpack.c.b16 %v8433, %v8431
      %v8500 = vpack.c.b16 %v8436, %v8434
      %v8501 = vpack.c.b16 %v8437, %v8435
      %v8502 = vpack.c.b16 %v8440, %v8438
      %v8503 = vpack.c.b16 %v8441, %v8439
      %v8504 = vpack.c.b16 %v8444, %v8442
      %v8505 = vpack.c.b16 %v8445, %v8443
      %v8506 = vpack.c.b16 %v8448, %v8446
      %v8507 = vpack.c.b16 %v8449, %v8447
      %v8508 = vpack.c.b16 %v8452, %v8450
      %v8509 = vpack.c.b16 %v8453, %v8451
      %v8510 = vpack.c.b16 %v8456, %v8454
      %v8511 = vpack.c.b16 %v8457, %v8455
      %v8512 = vpack.c.b16 %v8460, %v8458
      %v8513 = vpack.c.b16 %v8461, %v8459
      %v8514 = vpack.c.b16 %v8464, %v8462
      %v8515 = vpack.c.b16 %v8465, %v8463
      %vm8566 = vcmask 130048
      %v8568 = vsel %vm8566, %v8312, 0
      %8570 = vmatpush.bf16.msra.mxu0 %v8480
      %8571 = vmatpush.bf16.msra.mxu0 %v8478
      %8572 = vmatpush.bf16.msra.mxu0 %v8476
      %8573 = vmatpush.bf16.msra.mxu0 %v8474
      %8574 = vmatpush.bf16.msra.mxu0 %v8472
      %8575 = vmatpush.bf16.msra.mxu0 %v8470
      %8576 = vmatpush.bf16.msra.mxu0 %v8468
      %8577 = vmatpush.bf16.msra.mxu0 %v8466
      %8578 = vmatmul.bf16.gmra.mxu0 %v8309
      %v8579 = vpop.f32.mrf.mxu0
      %v8580 = vadd.f32 0.0, %v8579
      %v8581 = vpop.f32.mrf.mxu0
      %8582 = vdwg.mxu0
      %8583 = vmatpush.bf16.msra.mxu0 %v8496
      %8584 = vmatpush.bf16.msra.mxu0 %v8494
      %8585 = vmatpush.bf16.msra.mxu0 %v8492
      %8586 = vmatpush.bf16.msra.mxu0 %v8490
      %8587 = vmatpush.bf16.msra.mxu0 %v8488
      %8588 = vmatpush.bf16.msra.mxu0 %v8486
      %8589 = vmatpush.bf16.msra.mxu0 %v8484
      %8590 = vmatpush.bf16.msra.mxu0 %v8482
      %8591 = vmatmul.bf16.gmra.mxu0 %v8310
      %v8592 = vpop.f32.mrf.mxu0
      %v8593 = vadd.f32 %v8580, %v8592
      %v8594 = vpop.f32.mrf.mxu0
      %8595 = vdwg.mxu0
      %8596 = vmatpush.bf16.msra.mxu0 %v8512
      %8597 = vmatpush.bf16.msra.mxu0 %v8510
      %8598 = vmatpush.bf16.msra.mxu0 %v8508
      %8599 = vmatpush.bf16.msra.mxu0 %v8506
      %8600 = vmatpush.bf16.msra.mxu0 %v8504
      %8601 = vmatpush.bf16.msra.mxu0 %v8502
      %8602 = vmatpush.bf16.msra.mxu0 %v8500
      %8603 = vmatpush.bf16.msra.mxu0 %v8498
      %8604 = vmatmul.bf16.gmra.mxu0 %v8311
      %v8605 = vpop.f32.mrf.mxu0
      %v8606 = vadd.f32 %v8593, %v8605
      %v8607 = vpop.f32.mrf.mxu0
      %8608 = vdwg.mxu0
      %8609 = vmatpush.bf16.msra.mxu0 0
      %8610 = vmatpush.bf16.msra.mxu0 0
      %8611 = vmatpush.bf16.msra.mxu0 0
      %8612 = vmatpush.bf16.msra.mxu0 0
      %8613 = vmatpush.bf16.msra.mxu0 0
      %8614 = vmatpush.bf16.msra.mxu0 0
      %8615 = vmatpush.bf16.msra.mxu0 0
      %8616 = vmatpush.bf16.msra.mxu0 %v8514
      %8617 = vmatmul.bf16.gmra.mxu0 %v8568
      %v8618 = vpop.f32.mrf.mxu0
      %v8619 = vadd.f32 %v8606, %v8618
      %v8620 = vpop.f32.mrf.mxu0
      %8621 = vdwg.mxu0
      %8622 = vmatpush.bf16.msra.mxu0 %v8481
      %8623 = vmatpush.bf16.msra.mxu0 %v8479
      %8624 = vmatpush.bf16.msra.mxu0 %v8477
      %8625 = vmatpush.bf16.msra.mxu0 %v8475
      %8626 = vmatpush.bf16.msra.mxu0 %v8473
      %8627 = vmatpush.bf16.msra.mxu0 %v8471
      %8628 = vmatpush.bf16.msra.mxu0 %v8469
      %8629 = vmatpush.bf16.msra.mxu0 %v8467
      %8630 = vmatmul.bf16.gmra.mxu0 %v8309
      %v8631 = vpop.f32.mrf.mxu0
      %v8632 = vadd.f32 0.0, %v8631
      %v8633 = vpop.f32.mrf.mxu0
      %8634 = vdwg.mxu0
      %8635 = vmatpush.bf16.msra.mxu0 %v8497
      %8636 = vmatpush.bf16.msra.mxu0 %v8495
      %8637 = vmatpush.bf16.msra.mxu0 %v8493
      %8638 = vmatpush.bf16.msra.mxu0 %v8491
      %8639 = vmatpush.bf16.msra.mxu0 %v8489
      %8640 = vmatpush.bf16.msra.mxu0 %v8487
      %8641 = vmatpush.bf16.msra.mxu0 %v8485
      %8642 = vmatpush.bf16.msra.mxu0 %v8483
      %8643 = vmatmul.bf16.gmra.mxu0 %v8310
      %v8644 = vpop.f32.mrf.mxu0
      %v8645 = vadd.f32 %v8632, %v8644
      %v8646 = vpop.f32.mrf.mxu0
      %8647 = vdwg.mxu0
      %8648 = vmatpush.bf16.msra.mxu0 %v8513
      %8649 = vmatpush.bf16.msra.mxu0 %v8511
      %8650 = vmatpush.bf16.msra.mxu0 %v8509
      %8651 = vmatpush.bf16.msra.mxu0 %v8507
      %8652 = vmatpush.bf16.msra.mxu0 %v8505
      %8653 = vmatpush.bf16.msra.mxu0 %v8503
      %8654 = vmatpush.bf16.msra.mxu0 %v8501
      %8655 = vmatpush.bf16.msra.mxu0 %v8499
      %8656 = vmatmul.bf16.gmra.mxu0 %v8311
      %v8657 = vpop.f32.mrf.mxu0
      %v8658 = vadd.f32 %v8645, %v8657
      %v8659 = vpop.f32.mrf.mxu0
      %8660 = vdwg.mxu0
      %8661 = vmatpush.bf16.msra.mxu0 0
      %8662 = vmatpush.bf16.msra.mxu0 0
      %8663 = vmatpush.bf16.msra.mxu0 0
      %8664 = vmatpush.bf16.msra.mxu0 0
      %8665 = vmatpush.bf16.msra.mxu0 0
      %8666 = vmatpush.bf16.msra.mxu0 0
      %8667 = vmatpush.bf16.msra.mxu0 0
      %8668 = vmatpush.bf16.msra.mxu0 %v8515
      %8669 = vmatmul.bf16.gmra.mxu0 %v8568
      %v8670 = vpop.f32.mrf.mxu0
      %v8671 = vadd.f32 %v8658, %v8670
      %v8672 = vpop.f32.mrf.mxu0
      %8673 = vdwg.mxu0
      %v8674 = vld [vmem:[%s15] sm:$0xff]
      %8676 = vset.pattern.permute.xlu0 0
      %8677 = vperm.xlu0 %8676, %v8674
      %v8678 = vpop.permute.xlu0 %8677
      %v8680 = vmul.f32 %v8619, %v8678
      %v8681 = vmul.f32 %v8671, %v8678
      %v8682 = vld [vmem:[%s16] sm:$0xff]
      %8684 = vset.pattern.permute.xlu0 0
      %8685 = vperm.xlu0 %8684, %v8682
      %v8686 = vpop.permute.xlu0 %8685
      %v8688 = vadd.f32 %v8680, %v8686
      %v8689 = vadd.f32 %v8681, %v8686
      %vm8690 = vcmp.gt.f32.partialorder %v8688, 0.0
      %vm8691 = vcmp.gt.f32.partialorder %v8689, 0.0
      %v8692 = vmul.f32 %v8688, 0.01
      %v8693 = vmul.f32 %v8689, 0.01
      %v8694 = vsel %vm8690, %v8688, %v8692
      %v8695 = vsel %vm8691, %v8689, %v8693
      %v8696 = vmul.f32 %v8694, %v4196
      %v8697 = vmul.f32 %v8695, %v4197
      %v8698 = vadd.f32 %v8696, %v8697
      %8699 = vadd.xlane.f32.xlu0 %v8698
      %v8700 = vpop.xlane.xlu0 %8699
      %vm8701 = vcmask 1043456
      %v8702 = vsel %vm8701, %v803, 0.0
      %v8703 = vsel %vm8701, %v804, 0.0
      %v8704 = vadd.f32 %v8702, %v8703
      %8705 = vadd.xlane.f32.xlu0 %v8704
      %v8706 = vpop.xlane.xlu0 %8705
      %v8707 = vmul.f32 %v8706, 0.00390625
      %v8708 = vld [vmem:[%s17] sm:$0xf]
      %v8709 = vld [vmem:[%s18] sm:$0xf]
      %vm8710 = vcmask 31744
      %v8712 = vsel %vm8710, %v8708, 0
      %v8715 = vsel %vm8701, %v8707, 0
      %8717 = vmatpush.msra.mxu0 0.0
      %8718 = vmatpush.msra.mxu0 0.0
      %8719 = vmatpush.msra.mxu0 0.0
      %8720 = vmatpush.msra.mxu0 0.0
      %8721 = vmatpush.msra.mxu0 0.0
      %8722 = vmatpush.msra.mxu0 0.0
      %8723 = vmatpush.msra.mxu0 0.0
      %8724 = vmatpush.msra.mxu0 0.0
      %8725 = vmatpush.msra.mxu0 0.0
      %8726 = vmatpush.msra.mxu0 0.0
      %8727 = vmatpush.msra.mxu0 0.0
      %8728 = vmatpush.msra.mxu0 0.0
      %8729 = vmatpush.msra.mxu0 0.0
      %8730 = vmatpush.msra.mxu0 0.0
      %8731 = vmatpush.msra.mxu0 0.0
      %8732 = vmatpush.msra.mxu0 %v8715
      %8733 = vmatmul.f32.gmra.mxu0 %v8712
      %v8734 = vpop.f32.mrf.mxu0
      %v8735 = vadd.f32 %v8709, %v8734
      %8736 = vdwg.mxu0
      %v8737 = vld [vmem:[%s19] sm:$0xff]
      %v8738 = vld [vmem:[%s19 + $0x8] sm:$0xff]
      %v8739 = vld [vmem:[%s19 + $0x10] sm:$0xff]
      %v8740 = vld [vmem:[%s19 + $0x18] sm:$0xff]
      %v8741 = vld [vmem:[%s19 + $0x20] sm:$0xff]
      %v8742 = vld [vmem:[%s19 + $0x28] sm:$0xff]
      %v8743 = vld [vmem:[%s19 + $0x30] sm:$0xff]
      %v8744 = vld [vmem:[%s19 + $0x38] sm:$0xff]
      %v8745 = vld [vmem:[%s20] sm:$0xff]
      %v8746 = vld [vmem:[%s20 + $0x8] sm:$0xff]
      %v8747 = vld [vmem:[%s20 + $0x10] sm:$0xff]
      %v8748 = vld [vmem:[%s20 + $0x18] sm:$0xff]
      %v8749 = vld [vmem:[%s20 + $0x20] sm:$0xff]
      %v8750 = vld [vmem:[%s20 + $0x28] sm:$0xff]
      %v8751 = vld [vmem:[%s20 + $0x30] sm:$0xff]
      %v8752 = vld [vmem:[%s20 + $0x38] sm:$0xff]
      %vm8753 = vcmask 64512
      %v8755 = vsel %vm8753, %v8745, 0
      %v8758 = vsel %vm8753, %v8746, 0
      %v8761 = vsel %vm8753, %v8747, 0
      %v8764 = vsel %vm8753, %v8748, 0
      %v8767 = vsel %vm8753, %v8749, 0
      %v8770 = vsel %vm8753, %v8750, 0
      %v8773 = vsel %vm8753, %v8751, 0
      %v8776 = vsel %vm8753, %v8752, 0
      %8778 = vmatpush.msra.mxu0 0.0
      %8779 = vmatpush.msra.mxu0 0.0
      %8780 = vmatpush.msra.mxu0 0.0
      %8781 = vmatpush.msra.mxu0 0.0
      %8782 = vmatpush.msra.mxu0 0.0
      %8783 = vmatpush.msra.mxu0 0.0
      %8784 = vmatpush.msra.mxu0 0.0
      %8785 = vmatpush.msra.mxu0 0.0
      %8786 = vmatpush.msra.mxu0 0.0
      %8787 = vmatpush.msra.mxu0 0.0
      %8788 = vmatpush.msra.mxu0 0.0
      %8789 = vmatpush.msra.mxu0 0.0
      %8790 = vmatpush.msra.mxu0 0.0
      %8791 = vmatpush.msra.mxu0 0.0
      %8792 = vmatpush.msra.mxu0 0.0
      %8793 = vmatpush.msra.mxu0 %v8700
      %8794 = vmatmul.f32.gmra.mxu0 %v8755
      %v8795 = vpop.f32.mrf.mxu0
      %v8796 = vadd.f32 0.0, %v8795
      %8797 = vmatmul.f32.gmra.mxu0 %v8758
      %v8798 = vpop.f32.mrf.mxu0
      %v8799 = vadd.f32 0.0, %v8798
      %8800 = vmatmul.f32.gmra.mxu0 %v8761
      %v8801 = vpop.f32.mrf.mxu0
      %v8802 = vadd.f32 0.0, %v8801
      %8803 = vmatmul.f32.gmra.mxu0 %v8764
      %v8804 = vpop.f32.mrf.mxu0
      %v8805 = vadd.f32 0.0, %v8804
      %8806 = vmatmul.f32.gmra.mxu0 %v8767
      %v8807 = vpop.f32.mrf.mxu0
      %v8808 = vadd.f32 0.0, %v8807
      %8809 = vmatmul.f32.gmra.mxu0 %v8770
      %v8810 = vpop.f32.mrf.mxu0
      %v8811 = vadd.f32 0.0, %v8810
      %8812 = vmatmul.f32.gmra.mxu0 %v8773
      %v8813 = vpop.f32.mrf.mxu0
      %v8814 = vadd.f32 0.0, %v8813
      %8815 = vmatmul.f32.gmra.mxu0 %v8776
      %v8816 = vpop.f32.mrf.mxu0
      %v8817 = vadd.f32 0.0, %v8816
      %8818 = vdwg.mxu0
      %v8820 = vsel %vm1731, %v8737, 0
      %v8823 = vsel %vm1731, %v8738, 0
      %v8826 = vsel %vm1731, %v8739, 0
      %v8829 = vsel %vm1731, %v8740, 0
      %v8832 = vsel %vm1731, %v8741, 0
      %v8835 = vsel %vm1731, %v8742, 0
      %v8838 = vsel %vm1731, %v8743, 0
      %v8841 = vsel %vm1731, %v8744, 0
      %8843 = vmatpush.msra.mxu0 0.0
      %8844 = vmatpush.msra.mxu0 0.0
      %8845 = vmatpush.msra.mxu0 0.0
      %8846 = vmatpush.msra.mxu0 0.0
      %8847 = vmatpush.msra.mxu0 0.0
      %8848 = vmatpush.msra.mxu0 0.0
      %8849 = vmatpush.msra.mxu0 0.0
      %8850 = vmatpush.msra.mxu0 0.0
      %8851 = vmatpush.msra.mxu0 0.0
      %8852 = vmatpush.msra.mxu0 0.0
      %8853 = vmatpush.msra.mxu0 0.0
      %8854 = vmatpush.msra.mxu0 0.0
      %8855 = vmatpush.msra.mxu0 %v4217
      %8856 = vmatpush.msra.mxu0 %v4214
      %8857 = vmatpush.msra.mxu0 %v4211
      %8858 = vmatpush.msra.mxu0 %v4208
      %8859 = vmatmul.f32.gmra.mxu0 %v8820
      %v8860 = vpop.f32.mrf.mxu0
      %v8861 = vadd.f32 %v8796, %v8860
      %8862 = vmatmul.f32.gmra.mxu0 %v8823
      %v8863 = vpop.f32.mrf.mxu0
      %v8864 = vadd.f32 %v8799, %v8863
      %8865 = vmatmul.f32.gmra.mxu0 %v8826
      %v8866 = vpop.f32.mrf.mxu0
      %v8867 = vadd.f32 %v8802, %v8866
      %8868 = vmatmul.f32.gmra.mxu0 %v8829
      %v8869 = vpop.f32.mrf.mxu0
      %v8870 = vadd.f32 %v8805, %v8869
      %8871 = vmatmul.f32.gmra.mxu0 %v8832
      %v8872 = vpop.f32.mrf.mxu0
      %v8873 = vadd.f32 %v8808, %v8872
      %8874 = vmatmul.f32.gmra.mxu0 %v8835
      %v8875 = vpop.f32.mrf.mxu0
      %v8876 = vadd.f32 %v8811, %v8875
      %8877 = vmatmul.f32.gmra.mxu0 %v8838
      %v8878 = vpop.f32.mrf.mxu0
      %v8879 = vadd.f32 %v8814, %v8878
      %8880 = vmatmul.f32.gmra.mxu0 %v8841
      %v8881 = vpop.f32.mrf.mxu0
      %v8882 = vadd.f32 %v8817, %v8881
      %8883 = vdwg.mxu0
      %v8884 = vld [vmem:[%s21] sm:$0xff]
      %v8885 = vld [vmem:[%s21 + $0x8] sm:$0xff]
      %v8886 = vld [vmem:[%s21 + $0x10] sm:$0xff]
      %v8887 = vld [vmem:[%s21 + $0x18] sm:$0xff]
      %v8888 = vld [vmem:[%s21 + $0x20] sm:$0xff]
      %v8889 = vld [vmem:[%s21 + $0x28] sm:$0xff]
      %v8890 = vld [vmem:[%s21 + $0x30] sm:$0xff]
      %v8891 = vld [vmem:[%s21 + $0x38] sm:$0xff]
      %v8893 = vsel %vm8710, %v8884, 0
      %v8896 = vsel %vm8710, %v8885, 0
      %v8899 = vsel %vm8710, %v8886, 0
      %v8902 = vsel %vm8710, %v8887, 0
      %v8905 = vsel %vm8710, %v8888, 0
      %v8908 = vsel %vm8710, %v8889, 0
      %v8911 = vsel %vm8710, %v8890, 0
      %v8914 = vsel %vm8710, %v8891, 0
      %v8917 = vsel %vm8701, %v8735, 0
      %8919 = vmatpush.msra.mxu0 0.0
      %8920 = vmatpush.msra.mxu0 0.0
      %8921 = vmatpush.msra.mxu0 0.0
      %8922 = vmatpush.msra.mxu0 0.0
      %8923 = vmatpush.msra.mxu0 0.0
      %8924 = vmatpush.msra.mxu0 0.0
      %8925 = vmatpush.msra.mxu0 0.0
      %8926 = vmatpush.msra.mxu0 0.0
      %8927 = vmatpush.msra.mxu0 0.0
      %8928 = vmatpush.msra.mxu0 0.0
      %8929 = vmatpush.msra.mxu0 0.0
      %8930 = vmatpush.msra.mxu0 0.0
      %8931 = vmatpush.msra.mxu0 0.0
      %8932 = vmatpush.msra.mxu0 0.0
      %8933 = vmatpush.msra.mxu0 0.0
      %8934 = vmatpush.msra.mxu0 %v8917
      %8935 = vmatmul.f32.gmra.mxu0 %v8893
      %v8936 = vpop.f32.mrf.mxu0
      %v8937 = vadd.f32 0.0, %v8936
      %8938 = vmatmul.f32.gmra.mxu0 %v8896
      %v8939 = vpop.f32.mrf.mxu0
      %v8940 = vadd.f32 0.0, %v8939
      %8941 = vmatmul.f32.gmra.mxu0 %v8899
      %v8942 = vpop.f32.mrf.mxu0
      %v8943 = vadd.f32 0.0, %v8942
      %8944 = vmatmul.f32.gmra.mxu0 %v8902
      %v8945 = vpop.f32.mrf.mxu0
      %v8946 = vadd.f32 0.0, %v8945
      %8947 = vmatmul.f32.gmra.mxu0 %v8905
      %v8948 = vpop.f32.mrf.mxu0
      %v8949 = vadd.f32 0.0, %v8948
      %8950 = vmatmul.f32.gmra.mxu0 %v8908
      %v8951 = vpop.f32.mrf.mxu0
      %v8952 = vadd.f32 0.0, %v8951
      %8953 = vmatmul.f32.gmra.mxu0 %v8911
      %v8954 = vpop.f32.mrf.mxu0
      %v8955 = vadd.f32 0.0, %v8954
      %8956 = vmatmul.f32.gmra.mxu0 %v8914
      %v8957 = vpop.f32.mrf.mxu0
      %v8958 = vadd.f32 0.0, %v8957
      %8959 = vdwg.mxu0
      %v8960 = vadd.f32 %v8861, %v8937
      %v8961 = vadd.f32 %v8864, %v8940
      %v8962 = vadd.f32 %v8867, %v8943
      %v8963 = vadd.f32 %v8870, %v8946
      %v8964 = vadd.f32 %v8873, %v8949
      %v8965 = vadd.f32 %v8876, %v8952
      %v8966 = vadd.f32 %v8879, %v8955
      %v8967 = vadd.f32 %v8882, %v8958
      %v8968 = vld [vmem:[%s22] sm:$0xff]
      %v8969 = vld [vmem:[%s22 + $0x8] sm:$0xff]
      %v8970 = vld [vmem:[%s22 + $0x10] sm:$0xff]
      %v8971 = vld [vmem:[%s22 + $0x18] sm:$0xff]
      %v8972 = vld [vmem:[%s22 + $0x20] sm:$0xff]
      %v8973 = vld [vmem:[%s22 + $0x28] sm:$0xff]
      %v8974 = vld [vmem:[%s22 + $0x30] sm:$0xff]
      %v8975 = vld [vmem:[%s22 + $0x38] sm:$0xff]
      %v8976 = vadd.f32 %v8960, %v8968
      %v8977 = vadd.f32 %v8961, %v8969
      %v8978 = vadd.f32 %v8962, %v8970
      %v8979 = vadd.f32 %v8963, %v8971
      %v8980 = vadd.f32 %v8964, %v8972
      %v8981 = vadd.f32 %v8965, %v8973
      %v8982 = vadd.f32 %v8966, %v8974
      %v8983 = vadd.f32 %v8967, %v8975
      %vm8984 = vcmp.gt.f32.partialorder %v8976, 0.0
      %vm8985 = vcmp.gt.f32.partialorder %v8977, 0.0
      %vm8986 = vcmp.gt.f32.partialorder %v8978, 0.0
      %vm8987 = vcmp.gt.f32.partialorder %v8979, 0.0
      %vm8988 = vcmp.gt.f32.partialorder %v8980, 0.0
      %vm8989 = vcmp.gt.f32.partialorder %v8981, 0.0
      %vm8990 = vcmp.gt.f32.partialorder %v8982, 0.0
      %vm8991 = vcmp.gt.f32.partialorder %v8983, 0.0
      %v8992 = vmul.f32 %v8976, 0.01
      %v8993 = vmul.f32 %v8977, 0.01
      %v8994 = vmul.f32 %v8978, 0.01
      %v8995 = vmul.f32 %v8979, 0.01
      %v8996 = vmul.f32 %v8980, 0.01
      %v8997 = vmul.f32 %v8981, 0.01
      %v8998 = vmul.f32 %v8982, 0.01
      %v8999 = vmul.f32 %v8983, 0.01
      %v9000 = vsel %vm8984, %v8976, %v8992
      %v9001 = vsel %vm8985, %v8977, %v8993
      %v9002 = vsel %vm8986, %v8978, %v8994
      %v9003 = vsel %vm8987, %v8979, %v8995
      %v9004 = vsel %vm8988, %v8980, %v8996
      %v9005 = vsel %vm8989, %v8981, %v8997
      %v9006 = vsel %vm8990, %v8982, %v8998
      %v9007 = vsel %vm8991, %v8983, %v8999
      %v9008 = vld [vmem:[%s23] sm:$0xff]
      %v9009 = vld [vmem:[%s23 + $0x8] sm:$0xff]
      %v9010 = vld [vmem:[%s23 + $0x10] sm:$0xff]
      %v9011 = vld [vmem:[%s23 + $0x18] sm:$0xff]
      %v9012 = vld [vmem:[%s24] sm:$0xff]
      %v9013 = vld [vmem:[%s24 + $0x8] sm:$0xff]
      %v9014 = vld [vmem:[%s24 + $0x10] sm:$0xff]
      %v9015 = vld [vmem:[%s24 + $0x18] sm:$0xff]
      %vm9016 = vcmask 523264
      %v9018 = vsel %vm9016, %v9008, 0
      %v9021 = vsel %vm9016, %v9009, 0
      %v9024 = vsel %vm9016, %v9010, 0
      %v9027 = vsel %vm9016, %v9011, 0
      %9029 = vmatpush.msra.mxu0 0.0
      %9030 = vmatpush.msra.mxu0 0.0
      %9031 = vmatpush.msra.mxu0 0.0
      %9032 = vmatpush.msra.mxu0 0.0
      %9033 = vmatpush.msra.mxu0 0.0
      %9034 = vmatpush.msra.mxu0 0.0
      %9035 = vmatpush.msra.mxu0 0.0
      %9036 = vmatpush.msra.mxu0 0.0
      %9037 = vmatpush.msra.mxu0 %v9007
      %9038 = vmatpush.msra.mxu0 %v9006
      %9039 = vmatpush.msra.mxu0 %v9005
      %9040 = vmatpush.msra.mxu0 %v9004
      %9041 = vmatpush.msra.mxu0 %v9003
      %9042 = vmatpush.msra.mxu0 %v9002
      %9043 = vmatpush.msra.mxu0 %v9001
      %9044 = vmatpush.msra.mxu0 %v9000
      %9045 = vmatmul.f32.gmra.mxu0 %v9018
      %v9046 = vpop.f32.mrf.mxu0
      %v9047 = vadd.f32 %v9012, %v9046
      %9048 = vmatmul.f32.gmra.mxu0 %v9021
      %v9049 = vpop.f32.mrf.mxu0
      %v9050 = vadd.f32 %v9013, %v9049
      %9051 = vmatmul.f32.gmra.mxu0 %v9024
      %v9052 = vpop.f32.mrf.mxu0
      %v9053 = vadd.f32 %v9014, %v9052
      %9054 = vmatmul.f32.gmra.mxu0 %v9027
      %v9055 = vpop.f32.mrf.mxu0
      %v9056 = vadd.f32 %v9015, %v9055
      %9057 = vdwg.mxu0
      %vm9058 = vcmp.gt.f32.partialorder %v9047, 0.0
      %vm9059 = vcmp.gt.f32.partialorder %v9050, 0.0
      %vm9060 = vcmp.gt.f32.partialorder %v9053, 0.0
      %vm9061 = vcmp.gt.f32.partialorder %v9056, 0.0
      %v9062 = vmul.f32 %v9047, 0.01
      %v9063 = vmul.f32 %v9050, 0.01
      %v9064 = vmul.f32 %v9053, 0.01
      %v9065 = vmul.f32 %v9056, 0.01
      %v9066 = vsel %vm9058, %v9047, %v9062
      %v9067 = vsel %vm9059, %v9050, %v9063
      %v9068 = vsel %vm9060, %v9053, %v9064
      %v9069 = vsel %vm9061, %v9056, %v9065
      %v9070 = vld [vmem:[%s25] sm:$0x1f]
      %v9072 = vsel %vm1731, %v9070, 0
      %9074 = vmatpush.msra.mxu0 0.0
      %9075 = vmatpush.msra.mxu0 0.0
      %9076 = vmatpush.msra.mxu0 0.0
      %9077 = vmatpush.msra.mxu0 0.0
      %9078 = vmatpush.msra.mxu0 0.0
      %9079 = vmatpush.msra.mxu0 0.0
      %9080 = vmatpush.msra.mxu0 0.0
      %9081 = vmatpush.msra.mxu0 0.0
      %9082 = vmatpush.msra.mxu0 0.0
      %9083 = vmatpush.msra.mxu0 0.0
      %9084 = vmatpush.msra.mxu0 0.0
      %9085 = vmatpush.msra.mxu0 0.0
      %9086 = vmatpush.msra.mxu0 %v9069
      %9087 = vmatpush.msra.mxu0 %v9068
      %9088 = vmatpush.msra.mxu0 %v9067
      %9089 = vmatpush.msra.mxu0 %v9066
      %9090 = vmatmul.f32.gmra.mxu0 %v9072
      %v9091 = vpop.f32.mrf.mxu0
      %v9092 = vadd.f32 0.0, %v9091
      %9093 = vdwg.mxu0
      %vm9094 = vcmask 4096
      %9095 = vst.msk [vmem:[%s789] sm:$0x1f] %vm9094, %v9092
      %p9096 = scmp.lt.s32.totalorder %s37, 1
      %s9097 = scalar_select %p9096, %s37, 1
      %s9098 = smul.addr %s9097, 8
      %s9099 = scalar_lea.vmem %s26, %s9098
      // Predicated region
      $region125: #{lux_net_forward.1} parent=123 // pred_check
        %p9100 = pneg %p606
      $region126: #{lux_net_forward.1} parent=123 // pred_check_branch
        %9102 = sbr.rel (%p9100) target = $region128
      $region127: #{lux_net_forward.1} parent=123 // pred_region
        _
      $region128: #{lux_net_forward.1} parent=123 // pred_fallthru
        _
    $region124: #{lux_net_forward.1} parent=5 // pred_fallthru
      _
    %p9103 = scmp.le.s32.totalorder 2, %s32
    // Predicated region
    $region129: #{lux_net_forward.1} parent=5 // pred_check
      %p9104 = pneg %p9103
    $region130: #{lux_net_forward.1} parent=5 // pred_check_branch
      %9106 = sbr.rel (%p9104) target = $region132
    $region131: #{lux_net_forward.1} parent=5 // pred_region
      %s9107 = ssub.s32 %s32, 2
      // Predicated region
      $region133: #{lux_net_forward.1} parent=131 // pred_check
        %p9108 = pneg %p612
      $region134: #{lux_net_forward.1} parent=131 // pred_check_branch
        %9110 = sbr.rel (%p9108) target = $region136
      $region135: #{lux_net_forward.1} parent=131 // pred_region
        %p9111 = scmp.lt.s32.totalorder %s38, 1
        %s9112 = scalar_select %p9111, %s38, 1
        %s9113 = smul.addr %s9112, 8
        %s9114 = scalar_lea.vmem %s26, %s9113
      $region136: #{lux_net_forward.1} parent=131 // pred_fallthru
        _
    $region132: #{lux_net_forward.1} parent=5 // pred_fallthru
      _
  $region6: #{lux_net_forward.1} parent=0 // loop_footer
    %s36 = sadd.s32 1, %s32
  $region7: #{lux_net_forward.1} parent=0 // loop_footer_branch
    %31 = sbr.rel target = $region3
  $region8: #{lux_net_forward.1} parent=0 // loop_exit
    _

</llo_original>
